<compile_context>
chip_gen: v7x
topology: tpu7x:2x2x1
jax: 0.10.0
libtpu: 0.0.40
codegen_flags: <defaults>
</compile_context>

<pallas_src>
import functools

import jax
import jax.numpy as jnp
from jax.experimental import pallas as pl
from jax.experimental.pallas import tpu as pltpu

# Keep wrapper/reference f32 matmuls at full precision so they match the
# Pallas MXU f32 path within tight tolerances.
jax.config.update("jax_default_matmul_precision", "highest")


# ----------------------------------------------------------------------------
# Pallas kernel: full T-step recurrence (mat_GRU_cell weight evolution) plus a
# de-serialized batched GCN pass, single invocation, Q carried in vregs.
# ----------------------------------------------------------------------------
def egcn_seq_kernel(zcat_ref, a_ref, x_ref, q0_ref,
                    wstack_ref, ustack_ref, uh_ref, bcat_ref,
                    out_ref, wout_ref):
    T = x_ref.shape[0]
    R, C = q0_ref.shape

    # Loop-invariant weight loads, hoisted out of the unrolled time loop.
    u_stack = ustack_ref[...]          # (2R, R)  [Uu; Ur]
    u_h = uh_ref[...]                  # (R, R)

    # Hoisted off the serial chain: ONE MXU dot covers the z-side of all three
    # gates for all T timesteps, plus the (tiled) biases.
    #   wz_all[:, t*C:(t+1)*C] == [Wu;Wr;Wh] @ z_t + [bu;br;bh]
    wz_all = jnp.dot(wstack_ref[...], zcat_ref[...],
                     preferred_element_type=jnp.float32) + bcat_ref[...]   # (3R, T*C)

    # ---- Phase 1: serial GRU evolution of the GCN weights Q (tiny, latency
    # bound; only the q-dependent dots remain on the chain). ----
    q = q0_ref[...]                    # (R, C)
    q_list = []
    for t in range(T):                 # T static -> fully unrolled
        lo = t * C
        wz = wz_all[:, lo:lo + C]      # (3R, C) static lane slice

        uq = jnp.dot(u_stack, q, preferred_element_type=jnp.float32)      # (2R, C)
        update = jax.nn.sigmoid(wz[0:R] + uq[0:R])
        reset = jax.nn.sigmoid(wz[R:2 * R] + uq[R:2 * R])
        h_cap = jnp.maximum(
            wz[2 * R:3 * R]
            + jnp.dot(u_h, reset * q, preferred_element_type=jnp.float32),
            0.0)                        # htilda uses ReLU in the source module

        q = (1.0 - update) * q + update * h_cap
        q_list.append(q)

    # Single lane-stacked store of all evolved weights (one (R, T*C) slab)
    # instead of T masked (R, C) stores inside the loop.
    wout_ref[...] = jnp.concatenate(q_list, axis=1)                        # (R, T*C)

    # ---- Phase 2: GCN propagation, independent per timestep (off the serial
    # chain, freely overlappable by the scheduler): relu(A_t @ (X_t @ Q_t)). ----
    outs = []
    for t in range(T):
        xq = jnp.dot(x_ref[t], q_list[t], preferred_element_type=jnp.float32)   # (N, C)
        outs.append(jnp.maximum(
            jnp.dot(a_ref[t], xq, preferred_element_type=jnp.float32), 0.0))
    # Single lane-stacked store (N, T*C) instead of T masked (N, C) stores.
    out_ref[...] = jnp.concatenate(outs, axis=1)                           # (N, T*C)


def egcn_grcu_pallas(z_topk_seq, a_seq, x_seq, q_init, params):
    """Run the full GRCU time loop in one pallas_call.

    z_topk_seq : (T, R, C)   TopK summaries per timestep
    a_seq      : (T, N, N)   normalized adjacency per timestep
    x_seq      : (T, N, R)   node embeddings per timestep
    q_init     : (R, C)      GCN_init_weights
    returns (out_seq (T,N,C), weights_seq (T,R,C))
    """
    T, R, C = z_topk_seq.shape
    N = a_seq.shape[1]

    # Stack gate weights / biases once outside the kernel (constant under jit).
    w_stack = jnp.concatenate([params["Wu"], params["Wr"], params["Wh"]], axis=0)  # (3R, R)
    u_stack = jnp.concatenate([params["Uu"], params["Ur"]], axis=0)                # (2R, R)
    b_stack = jnp.concatenate([params["bu"], params["br"], params["bh"]], axis=0)  # (3R, C)
    b_cat = jnp.tile(b_stack, (1, T))                                              # (3R, T*C)

    # Lane-stack the per-timestep TopK summaries: (T, R, C) -> (R, T*C).
    z_cat = jnp.transpose(z_topk_seq, (1, 0, 2)).reshape(R, T * C)

    def full_block(shape):
        n = len(shape)
        return pl.BlockSpec(shape, lambda i, n=n: (0,) * n)

    grid_spec = pltpu.PrefetchScalarGridSpec(
        num_scalar_prefetch=0,
        grid=(1,),                        # single invocation; whole sequence in VMEM
        in_specs=[
            full_block((R, T * C)),       # lane-stacked z_topk sequence
            full_block((T, N, N)),        # Ahat sequence
            full_block((T, N, R)),        # node embedding sequence
            full_block((R, C)),           # Q init (GCN_init_weights)
            full_block((3 * R, R)),       # stacked [Wu; Wr; Wh]
            full_block((2 * R, R)),       # stacked [Uu; Ur]
            full_block((R, R)),           # Uh
            full_block((3 * R, T * C)),   # stacked + time-tiled biases
        ],
        out_specs=[
            full_block((N, T * C)),       # lane-stacked GCN outputs
            full_block((R, T * C)),       # lane-stacked evolved weights
        ],
    )

    out_cat, w_cat = pl.pallas_call(
        egcn_seq_kernel,
        grid_spec=grid_spec,
        out_shape=(
            jax.ShapeDtypeStruct((N, T * C), jnp.float32),
            jax.ShapeDtypeStruct((R, T * C), jnp.float32),
        ),
        compiler_params=pltpu.CompilerParams(
            dimension_semantics=("arbitrary",)),   # single sequential invocation
    )(z_cat, a_seq, x_seq, q_init, w_stack, u_stack, params["Uh"], b_cat)

    # Undo the lane stacking with cheap XLA reshapes outside the kernel.
    out_seq = jnp.transpose(out_cat.reshape(N, T, C), (1, 0, 2))   # (T, N, C)
    w_seq = jnp.transpose(w_cat.reshape(R, T, C), (1, 0, 2))       # (T, R, C)
    return out_seq, w_seq


# ----------------------------------------------------------------------------
# Plain-JAX glue: TopK node selection (data-dependent top-k + gather, no clean
# Pallas equivalent).  Implements the k <= num_nodes branch of TopK.forward.
# ----------------------------------------------------------------------------
def topk_select(node_embs, mask, scorer, k):
    """node_embs (N, R), mask (N,) with -inf at masked nodes, scorer (R, 1).
    Returns (R, k)."""
    scores = (node_embs @ scorer) / jnp.linalg.norm(scorer)     # (N, 1)
    flat = scores[:, 0] + mask                                  # (N,)
    vals, idx = jax.lax.top_k(flat, k)
    valid = vals > -jnp.inf
    count = jnp.maximum(jnp.sum(valid.astype(jnp.int32)), 1)
    pos = jnp.arange(k)
    sel_pos = jnp.where(pos < count, pos, count - 1)            # pad_with_last_val
    sel_idx = idx[sel_pos]
    selected_nodes = node_embs[sel_idx]                         # (k, R)
    selected_scores = flat[sel_idx]                             # (k,)
    out = selected_nodes * jnp.tanh(selected_scores)[:, None]   # (k, R)
    return out.T                                                # (R, k)


def egcn_forward(A_seq, X_seq, mask_seq, params):
    """EGCN.forward with a single GRCU layer (skipfeats=False)."""
    k = params["GCN_init"].shape[1]
    z_topk_seq = jax.vmap(lambda x, m: topk_select(x, m, params["scorer"], k))(
        X_seq, mask_seq)                                        # (T, R, C)
    out_seq, w_seq = egcn_grcu_pallas(z_topk_seq, A_seq, X_seq,
                                      params["GCN_init"], params)
    return out_seq, w_seq


# ----------------------------------------------------------------------------
# Pure-JAX reference (mirrors the PyTorch code) for a correctness check.
# ----------------------------------------------------------------------------
def egcn_reference(A_seq, X_seq, mask_seq, params):
    k = params["GCN_init"].shape[1]

    def gate(w, u, b, z, h, act):
        return act(w @ z + u @ h + b)

    def step(q, inp):
        a, x, m = inp
        z = topk_select(x, m, params["scorer"], k)
        upd = gate(params["Wu"], params["Uu"], params["bu"], z, q, jax.nn.sigmoid)
        rst = gate(params["Wr"], params["Ur"], params["br"], z, q, jax.nn.sigmoid)
        hcap = gate(params["Wh"], params["Uh"], params["bh"], z, rst * q,
                    lambda v: jnp.maximum(v, 0.0))
        q_new = (1.0 - upd) * q + upd * hcap
        out = jnp.maximum(a @ (x @ q_new), 0.0)
        return q_new, (out, q_new)

    _, (out_seq, w_seq) = jax.lax.scan(step, params["GCN_init"],
                                       (A_seq, X_seq, mask_seq))
    return out_seq, w_seq


# ----------------------------------------------------------------------------
# Deterministic parameter / input construction.
# ----------------------------------------------------------------------------
def init_params(key, R, C):
    ks = jax.random.split(key, 8)
    u = lambda k, shape, stdv: jax.random.uniform(
        k, shape, jnp.float32, -stdv, stdv)
    inv_sqrt = lambda n: 1.0 / jnp.sqrt(jnp.float32(n))
    return {
        "scorer": u(ks[0], (R, 1), inv_sqrt(R)),
        "Wu": u(ks[1], (R, R), inv_sqrt(R)),
        "Uu": u(ks[2], (R, R), inv_sqrt(R)),
        "bu": jnp.zeros((R, C), jnp.float32),
        "Wr": u(ks[3], (R, R), inv_sqrt(R)),
        "Ur": u(ks[4], (R, R), inv_sqrt(R)),
        "br": jnp.zeros((R, C), jnp.float32),
        "Wh": u(ks[5], (R, R), inv_sqrt(R)),
        "Uh": u(ks[6], (R, R), inv_sqrt(R)),
        "bh": jnp.zeros((R, C), jnp.float32),
        "GCN_init": u(ks[7], (R, C), inv_sqrt(C)),
    }


def get_A_hat(adj):
    n = adj.shape[0]
    A_tilde = adj + jnp.eye(n, dtype=jnp.float32)
    A_bin = (A_tilde != 0).astype(jnp.float32)
    d = jnp.sum(A_bin, axis=1)
    d_inv_sqrt = jnp.where(d > 0, 1.0 / jnp.sqrt(d), 0.0)
    return d_inv_sqrt[:, None] * A_tilde * d_inv_sqrt[None, :]


if __name__ == "__main__":
    T, N, R, C = 6, 16, 8, 8   # timesteps, nodes, feats_per_node, layer_1_feats (= k)

    key = jax.random.PRNGKey(0)
    k_par, k_adj, k_x, k_mask = jax.random.split(key, 4)

    params = init_params(k_par, R, C)

    # Per-timestep symmetric 0/1 adjacency -> normalized A_hat.
    adj_bits = jax.random.bernoulli(k_adj, 0.3, (T, N, N)).astype(jnp.float32)
    adj = jnp.clip(adj_bits + jnp.transpose(adj_bits, (0, 2, 1)), 0.0, 1.0)
    adj = adj * (1.0 - jnp.eye(N, dtype=jnp.float32))
    A_seq = jax.vmap(get_A_hat)(adj)                                    # (T, N, N)

    # Per-timestep node embeddings.
    X_seq = jax.random.normal(k_x, (T, N, R), jnp.float32)              # (T, N, R)

    # Mask: 1.0 for visible nodes, -inf for masked nodes (as in create_train_data).
    masked = jax.random.bernoulli(k_mask, 0.25, (T, N))
    mask_seq = jnp.where(masked, -jnp.inf, 1.0).astype(jnp.float32)     # (T, N)

    run = jax.jit(functools.partial(egcn_forward, params=params))
    out_seq, w_seq = run(A_seq, X_seq, mask_seq)
    jax.block_until_ready((out_seq, w_seq))

    # Correctness check against a pure-JAX reference of the PyTorch semantics.
    ref_out, ref_w = jax.jit(
        functools.partial(egcn_reference, params=params))(A_seq, X_seq, mask_seq)
    assert jnp.allclose(out_seq, ref_out, atol=1e-4, rtol=1e-4)
    assert jnp.allclose(w_seq, ref_w, atol=1e-4, rtol=1e-4)

    print("KERNEL_OK")
</pallas_src>

<mosaic_0001>
module attributes {stable_mosaic.version = 11 : i64} {
  func.func @egcn_seq_kernel(%arg0: i32, %arg1: memref<8x48xf32, #tpu.memory_space<vmem>>, %arg2: memref<6x16x16xf32, #tpu.memory_space<vmem>>, %arg3: memref<6x16x8xf32, #tpu.memory_space<vmem>>, %arg4: memref<8x8xf32, #tpu.memory_space<vmem>>, %arg5: memref<24x8xf32, #tpu.memory_space<vmem>>, %arg6: memref<16x8xf32, #tpu.memory_space<vmem>>, %arg7: memref<8x8xf32, #tpu.memory_space<vmem>>, %arg8: memref<24x48xf32, #tpu.memory_space<vmem>>, %arg9: memref<16x48xf32, #tpu.memory_space<vmem>>, %arg10: memref<8x48xf32, #tpu.memory_space<vmem>>) attributes {dimension_semantics = [#tpu.dimension_semantics<arbitrary>], iteration_bounds = array<i64: 1>, scalar_prefetch = 0 : i64, scratch_operands = 0 : i64, tpu.core_type = #tpu.core_type<tc>, window_params = [{pipeline_mode = #tpu.pipeline_mode<synchronous>, transform_indices = @transform_0, window_bounds = array<i64: 8, 48>}, {pipeline_mode = #tpu.pipeline_mode<synchronous>, transform_indices = @transform_1, window_bounds = array<i64: 6, 16, 16>}, {pipeline_mode = #tpu.pipeline_mode<synchronous>, transform_indices = @transform_2, window_bounds = array<i64: 6, 16, 8>}, {pipeline_mode = #tpu.pipeline_mode<synchronous>, transform_indices = @transform_3, window_bounds = array<i64: 8, 8>}, {pipeline_mode = #tpu.pipeline_mode<synchronous>, transform_indices = @transform_4, window_bounds = array<i64: 24, 8>}, {pipeline_mode = #tpu.pipeline_mode<synchronous>, transform_indices = @transform_5, window_bounds = array<i64: 16, 8>}, {pipeline_mode = #tpu.pipeline_mode<synchronous>, transform_indices = @transform_6, window_bounds = array<i64: 8, 8>}, {pipeline_mode = #tpu.pipeline_mode<synchronous>, transform_indices = @transform_7, window_bounds = array<i64: 24, 48>}, {pipeline_mode = #tpu.pipeline_mode<synchronous>, transform_indices = @transform_8, window_bounds = array<i64: 16, 48>}, {pipeline_mode = #tpu.pipeline_mode<synchronous>, transform_indices = @transform_9, window_bounds = array<i64: 8, 48>}]} {
    %c0 = arith.constant 0 : index
    %c0_0 = arith.constant 0 : index
    %0 = vector.load %arg6[%c0, %c0_0] : memref<16x8xf32, #tpu.memory_space<vmem>>, vector<16x8xf32>
    %c0_1 = arith.constant 0 : index
    %c0_2 = arith.constant 0 : index
    %1 = vector.load %arg7[%c0_1, %c0_2] : memref<8x8xf32, #tpu.memory_space<vmem>>, vector<8x8xf32>
    %c0_3 = arith.constant 0 : index
    %c0_4 = arith.constant 0 : index
    %2 = vector.load %arg5[%c0_3, %c0_4] : memref<24x8xf32, #tpu.memory_space<vmem>>, vector<24x8xf32>
    %c0_5 = arith.constant 0 : index
    %c0_6 = arith.constant 0 : index
    %3 = vector.load %arg1[%c0_5, %c0_6] : memref<8x48xf32, #tpu.memory_space<vmem>>, vector<8x48xf32>
    %cst = arith.constant dense<0.000000e+00> : vector<24x48xf32>
    %4 = tpu.matmul %2, %3, %cst {dimension_numbers = #tpu.dot_dimension_numbers<[1], [0], [0], [1], [0, 0, 1, 1], [], []>, precision = #tpu.contract_precision<fp32>} : vector<24x8xf32>, vector<8x48xf32>, vector<24x48xf32> -> vector<24x48xf32>
    %c0_7 = arith.constant 0 : index
    %c0_8 = arith.constant 0 : index
    %5 = vector.load %arg8[%c0_7, %c0_8] : memref<24x48xf32, #tpu.memory_space<vmem>>, vector<24x48xf32>
    %6 = arith.addf %4, %5 : vector<24x48xf32>
    %c0_9 = arith.constant 0 : index
    %c0_10 = arith.constant 0 : index
    %7 = vector.load %arg4[%c0_9, %c0_10] : memref<8x8xf32, #tpu.memory_space<vmem>>, vector<8x8xf32>
    %8 = vector.extract_strided_slice %6 {offsets = [0, 0], sizes = [24, 8], strides = [1, 1]} : vector<24x48xf32> to vector<24x8xf32>
    %cst_11 = arith.constant dense<0.000000e+00> : vector<16x8xf32>
    %9 = tpu.matmul %0, %7, %cst_11 {dimension_numbers = #tpu.dot_dimension_numbers<[1], [0], [0], [1], [0, 0, 1, 1], [], []>, precision = #tpu.contract_precision<fp32>} : vector<16x8xf32>, vector<8x8xf32>, vector<16x8xf32> -> vector<16x8xf32>
    %10 = vector.extract_strided_slice %8 {offsets = [0, 0], sizes = [8, 8], strides = [1, 1]} : vector<24x8xf32> to vector<8x8xf32>
    %11 = vector.extract_strided_slice %9 {offsets = [0, 0], sizes = [8, 8], strides = [1, 1]} : vector<16x8xf32> to vector<8x8xf32>
    %12 = arith.addf %10, %11 : vector<8x8xf32>
    %13 = arith.negf %12 : vector<8x8xf32>
    %14 = math.exp %13 : vector<8x8xf32>
    %cst_12 = arith.constant 1.000000e+00 : f32
    %15 = vector.broadcast %cst_12 : f32 to vector<8x8xf32>
    %16 = arith.addf %15, %14 : vector<8x8xf32>
    %17 = arith.divf %15, %16 : vector<8x8xf32>
    %18 = vector.extract_strided_slice %8 {offsets = [8, 0], sizes = [8, 8], strides = [1, 1]} : vector<24x8xf32> to vector<8x8xf32>
    %19 = vector.extract_strided_slice %9 {offsets = [8, 0], sizes = [8, 8], strides = [1, 1]} : vector<16x8xf32> to vector<8x8xf32>
    %20 = arith.addf %18, %19 : vector<8x8xf32>
    %21 = arith.negf %20 : vector<8x8xf32>
    %22 = math.exp %21 : vector<8x8xf32>
    %cst_13 = arith.constant 1.000000e+00 : f32
    %23 = vector.broadcast %cst_13 : f32 to vector<8x8xf32>
    %24 = arith.addf %23, %22 : vector<8x8xf32>
    %25 = arith.divf %23, %24 : vector<8x8xf32>
    %26 = vector.extract_strided_slice %8 {offsets = [16, 0], sizes = [8, 8], strides = [1, 1]} : vector<24x8xf32> to vector<8x8xf32>
    %27 = arith.mulf %25, %7 : vector<8x8xf32>
    %cst_14 = arith.constant dense<0.000000e+00> : vector<8x8xf32>
    %28 = tpu.matmul %1, %27, %cst_14 {dimension_numbers = #tpu.dot_dimension_numbers<[1], [0], [0], [1], [0, 0, 1, 1], [], []>, precision = #tpu.contract_precision<fp32>} : vector<8x8xf32>, vector<8x8xf32>, vector<8x8xf32> -> vector<8x8xf32>
    %29 = arith.addf %26, %28 : vector<8x8xf32>
    %cst_15 = arith.constant 0.000000e+00 : f32
    %30 = vector.broadcast %cst_15 : f32 to vector<8x8xf32>
    %31 = arith.maximumf %29, %30 : vector<8x8xf32>
    %cst_16 = arith.constant 1.000000e+00 : f32
    %32 = vector.broadcast %cst_16 : f32 to vector<8x8xf32>
    %33 = arith.subf %32, %17 : vector<8x8xf32>
    %34 = arith.mulf %33, %7 : vector<8x8xf32>
    %35 = arith.mulf %17, %31 : vector<8x8xf32>
    %36 = arith.addf %34, %35 : vector<8x8xf32>
    %37 = vector.extract_strided_slice %6 {offsets = [0, 8], sizes = [24, 8], strides = [1, 1]} : vector<24x48xf32> to vector<24x8xf32>
    %cst_17 = arith.constant dense<0.000000e+00> : vector<16x8xf32>
    %38 = tpu.matmul %0, %36, %cst_17 {dimension_numbers = #tpu.dot_dimension_numbers<[1], [0], [0], [1], [0, 0, 1, 1], [], []>, precision = #tpu.contract_precision<fp32>} : vector<16x8xf32>, vector<8x8xf32>, vector<16x8xf32> -> vector<16x8xf32>
    %39 = vector.extract_strided_slice %37 {offsets = [0, 0], sizes = [8, 8], strides = [1, 1]} : vector<24x8xf32> to vector<8x8xf32>
    %40 = vector.extract_strided_slice %38 {offsets = [0, 0], sizes = [8, 8], strides = [1, 1]} : vector<16x8xf32> to vector<8x8xf32>
    %41 = arith.addf %39, %40 : vector<8x8xf32>
    %42 = arith.negf %41 : vector<8x8xf32>
    %43 = math.exp %42 : vector<8x8xf32>
    %cst_18 = arith.constant 1.000000e+00 : f32
    %44 = vector.broadcast %cst_18 : f32 to vector<8x8xf32>
    %45 = arith.addf %44, %43 : vector<8x8xf32>
    %46 = arith.divf %44, %45 : vector<8x8xf32>
    %47 = vector.extract_strided_slice %37 {offsets = [8, 0], sizes = [8, 8], strides = [1, 1]} : vector<24x8xf32> to vector<8x8xf32>
    %48 = vector.extract_strided_slice %38 {offsets = [8, 0], sizes = [8, 8], strides = [1, 1]} : vector<16x8xf32> to vector<8x8xf32>
    %49 = arith.addf %47, %48 : vector<8x8xf32>
    %50 = arith.negf %49 : vector<8x8xf32>
    %51 = math.exp %50 : vector<8x8xf32>
    %cst_19 = arith.constant 1.000000e+00 : f32
    %52 = vector.broadcast %cst_19 : f32 to vector<8x8xf32>
    %53 = arith.addf %52, %51 : vector<8x8xf32>
    %54 = arith.divf %52, %53 : vector<8x8xf32>
    %55 = vector.extract_strided_slice %37 {offsets = [16, 0], sizes = [8, 8], strides = [1, 1]} : vector<24x8xf32> to vector<8x8xf32>
    %56 = arith.mulf %54, %36 : vector<8x8xf32>
    %cst_20 = arith.constant dense<0.000000e+00> : vector<8x8xf32>
    %57 = tpu.matmul %1, %56, %cst_20 {dimension_numbers = #tpu.dot_dimension_numbers<[1], [0], [0], [1], [0, 0, 1, 1], [], []>, precision = #tpu.contract_precision<fp32>} : vector<8x8xf32>, vector<8x8xf32>, vector<8x8xf32> -> vector<8x8xf32>
    %58 = arith.addf %55, %57 : vector<8x8xf32>
    %cst_21 = arith.constant 0.000000e+00 : f32
    %59 = vector.broadcast %cst_21 : f32 to vector<8x8xf32>
    %60 = arith.maximumf %58, %59 : vector<8x8xf32>
    %cst_22 = arith.constant 1.000000e+00 : f32
    %61 = vector.broadcast %cst_22 : f32 to vector<8x8xf32>
    %62 = arith.subf %61, %46 : vector<8x8xf32>
    %63 = arith.mulf %62, %36 : vector<8x8xf32>
    %64 = arith.mulf %46, %60 : vector<8x8xf32>
    %65 = arith.addf %63, %64 : vector<8x8xf32>
    %66 = vector.extract_strided_slice %6 {offsets = [0, 16], sizes = [24, 8], strides = [1, 1]} : vector<24x48xf32> to vector<24x8xf32>
    %cst_23 = arith.constant dense<0.000000e+00> : vector<16x8xf32>
    %67 = tpu.matmul %0, %65, %cst_23 {dimension_numbers = #tpu.dot_dimension_numbers<[1], [0], [0], [1], [0, 0, 1, 1], [], []>, precision = #tpu.contract_precision<fp32>} : vector<16x8xf32>, vector<8x8xf32>, vector<16x8xf32> -> vector<16x8xf32>
    %68 = vector.extract_strided_slice %66 {offsets = [0, 0], sizes = [8, 8], strides = [1, 1]} : vector<24x8xf32> to vector<8x8xf32>
    %69 = vector.extract_strided_slice %67 {offsets = [0, 0], sizes = [8, 8], strides = [1, 1]} : vector<16x8xf32> to vector<8x8xf32>
    %70 = arith.addf %68, %69 : vector<8x8xf32>
    %71 = arith.negf %70 : vector<8x8xf32>
    %72 = math.exp %71 : vector<8x8xf32>
    %cst_24 = arith.constant 1.000000e+00 : f32
    %73 = vector.broadcast %cst_24 : f32 to vector<8x8xf32>
    %74 = arith.addf %73, %72 : vector<8x8xf32>
    %75 = arith.divf %73, %74 : vector<8x8xf32>
    %76 = vector.extract_strided_slice %66 {offsets = [8, 0], sizes = [8, 8], strides = [1, 1]} : vector<24x8xf32> to vector<8x8xf32>
    %77 = vector.extract_strided_slice %67 {offsets = [8, 0], sizes = [8, 8], strides = [1, 1]} : vector<16x8xf32> to vector<8x8xf32>
    %78 = arith.addf %76, %77 : vector<8x8xf32>
    %79 = arith.negf %78 : vector<8x8xf32>
    %80 = math.exp %79 : vector<8x8xf32>
    %cst_25 = arith.constant 1.000000e+00 : f32
    %81 = vector.broadcast %cst_25 : f32 to vector<8x8xf32>
    %82 = arith.addf %81, %80 : vector<8x8xf32>
    %83 = arith.divf %81, %82 : vector<8x8xf32>
    %84 = vector.extract_strided_slice %66 {offsets = [16, 0], sizes = [8, 8], strides = [1, 1]} : vector<24x8xf32> to vector<8x8xf32>
    %85 = arith.mulf %83, %65 : vector<8x8xf32>
    %cst_26 = arith.constant dense<0.000000e+00> : vector<8x8xf32>
    %86 = tpu.matmul %1, %85, %cst_26 {dimension_numbers = #tpu.dot_dimension_numbers<[1], [0], [0], [1], [0, 0, 1, 1], [], []>, precision = #tpu.contract_precision<fp32>} : vector<8x8xf32>, vector<8x8xf32>, vector<8x8xf32> -> vector<8x8xf32>
    %87 = arith.addf %84, %86 : vector<8x8xf32>
    %cst_27 = arith.constant 0.000000e+00 : f32
    %88 = vector.broadcast %cst_27 : f32 to vector<8x8xf32>
    %89 = arith.maximumf %87, %88 : vector<8x8xf32>
    %cst_28 = arith.constant 1.000000e+00 : f32
    %90 = vector.broadcast %cst_28 : f32 to vector<8x8xf32>
    %91 = arith.subf %90, %75 : vector<8x8xf32>
    %92 = arith.mulf %91, %65 : vector<8x8xf32>
    %93 = arith.mulf %75, %89 : vector<8x8xf32>
    %94 = arith.addf %92, %93 : vector<8x8xf32>
    %95 = vector.extract_strided_slice %6 {offsets = [0, 24], sizes = [24, 8], strides = [1, 1]} : vector<24x48xf32> to vector<24x8xf32>
    %cst_29 = arith.constant dense<0.000000e+00> : vector<16x8xf32>
    %96 = tpu.matmul %0, %94, %cst_29 {dimension_numbers = #tpu.dot_dimension_numbers<[1], [0], [0], [1], [0, 0, 1, 1], [], []>, precision = #tpu.contract_precision<fp32>} : vector<16x8xf32>, vector<8x8xf32>, vector<16x8xf32> -> vector<16x8xf32>
    %97 = vector.extract_strided_slice %95 {offsets = [0, 0], sizes = [8, 8], strides = [1, 1]} : vector<24x8xf32> to vector<8x8xf32>
    %98 = vector.extract_strided_slice %96 {offsets = [0, 0], sizes = [8, 8], strides = [1, 1]} : vector<16x8xf32> to vector<8x8xf32>
    %99 = arith.addf %97, %98 : vector<8x8xf32>
    %100 = arith.negf %99 : vector<8x8xf32>
    %101 = math.exp %100 : vector<8x8xf32>
    %cst_30 = arith.constant 1.000000e+00 : f32
    %102 = vector.broadcast %cst_30 : f32 to vector<8x8xf32>
    %103 = arith.addf %102, %101 : vector<8x8xf32>
    %104 = arith.divf %102, %103 : vector<8x8xf32>
    %105 = vector.extract_strided_slice %95 {offsets = [8, 0], sizes = [8, 8], strides = [1, 1]} : vector<24x8xf32> to vector<8x8xf32>
    %106 = vector.extract_strided_slice %96 {offsets = [8, 0], sizes = [8, 8], strides = [1, 1]} : vector<16x8xf32> to vector<8x8xf32>
    %107 = arith.addf %105, %106 : vector<8x8xf32>
    %108 = arith.negf %107 : vector<8x8xf32>
    %109 = math.exp %108 : vector<8x8xf32>
    %cst_31 = arith.constant 1.000000e+00 : f32
    %110 = vector.broadcast %cst_31 : f32 to vector<8x8xf32>
    %111 = arith.addf %110, %109 : vector<8x8xf32>
    %112 = arith.divf %110, %111 : vector<8x8xf32>
    %113 = vector.extract_strided_slice %95 {offsets = [16, 0], sizes = [8, 8], strides = [1, 1]} : vector<24x8xf32> to vector<8x8xf32>
    %114 = arith.mulf %112, %94 : vector<8x8xf32>
    %cst_32 = arith.constant dense<0.000000e+00> : vector<8x8xf32>
    %115 = tpu.matmul %1, %114, %cst_32 {dimension_numbers = #tpu.dot_dimension_numbers<[1], [0], [0], [1], [0, 0, 1, 1], [], []>, precision = #tpu.contract_precision<fp32>} : vector<8x8xf32>, vector<8x8xf32>, vector<8x8xf32> -> vector<8x8xf32>
    %116 = arith.addf %113, %115 : vector<8x8xf32>
    %cst_33 = arith.constant 0.000000e+00 : f32
    %117 = vector.broadcast %cst_33 : f32 to vector<8x8xf32>
    %118 = arith.maximumf %116, %117 : vector<8x8xf32>
    %cst_34 = arith.constant 1.000000e+00 : f32
    %119 = vector.broadcast %cst_34 : f32 to vector<8x8xf32>
    %120 = arith.subf %119, %104 : vector<8x8xf32>
    %121 = arith.mulf %120, %94 : vector<8x8xf32>
    %122 = arith.mulf %104, %118 : vector<8x8xf32>
    %123 = arith.addf %121, %122 : vector<8x8xf32>
    %124 = vector.extract_strided_slice %6 {offsets = [0, 32], sizes = [24, 8], strides = [1, 1]} : vector<24x48xf32> to vector<24x8xf32>
    %cst_35 = arith.constant dense<0.000000e+00> : vector<16x8xf32>
    %125 = tpu.matmul %0, %123, %cst_35 {dimension_numbers = #tpu.dot_dimension_numbers<[1], [0], [0], [1], [0, 0, 1, 1], [], []>, precision = #tpu.contract_precision<fp32>} : vector<16x8xf32>, vector<8x8xf32>, vector<16x8xf32> -> vector<16x8xf32>
    %126 = vector.extract_strided_slice %124 {offsets = [0, 0], sizes = [8, 8], strides = [1, 1]} : vector<24x8xf32> to vector<8x8xf32>
    %127 = vector.extract_strided_slice %125 {offsets = [0, 0], sizes = [8, 8], strides = [1, 1]} : vector<16x8xf32> to vector<8x8xf32>
    %128 = arith.addf %126, %127 : vector<8x8xf32>
    %129 = arith.negf %128 : vector<8x8xf32>
    %130 = math.exp %129 : vector<8x8xf32>
    %cst_36 = arith.constant 1.000000e+00 : f32
    %131 = vector.broadcast %cst_36 : f32 to vector<8x8xf32>
    %132 = arith.addf %131, %130 : vector<8x8xf32>
    %133 = arith.divf %131, %132 : vector<8x8xf32>
    %134 = vector.extract_strided_slice %124 {offsets = [8, 0], sizes = [8, 8], strides = [1, 1]} : vector<24x8xf32> to vector<8x8xf32>
    %135 = vector.extract_strided_slice %125 {offsets = [8, 0], sizes = [8, 8], strides = [1, 1]} : vector<16x8xf32> to vector<8x8xf32>
    %136 = arith.addf %134, %135 : vector<8x8xf32>
    %137 = arith.negf %136 : vector<8x8xf32>
    %138 = math.exp %137 : vector<8x8xf32>
    %cst_37 = arith.constant 1.000000e+00 : f32
    %139 = vector.broadcast %cst_37 : f32 to vector<8x8xf32>
    %140 = arith.addf %139, %138 : vector<8x8xf32>
    %141 = arith.divf %139, %140 : vector<8x8xf32>
    %142 = vector.extract_strided_slice %124 {offsets = [16, 0], sizes = [8, 8], strides = [1, 1]} : vector<24x8xf32> to vector<8x8xf32>
    %143 = arith.mulf %141, %123 : vector<8x8xf32>
    %cst_38 = arith.constant dense<0.000000e+00> : vector<8x8xf32>
    %144 = tpu.matmul %1, %143, %cst_38 {dimension_numbers = #tpu.dot_dimension_numbers<[1], [0], [0], [1], [0, 0, 1, 1], [], []>, precision = #tpu.contract_precision<fp32>} : vector<8x8xf32>, vector<8x8xf32>, vector<8x8xf32> -> vector<8x8xf32>
    %145 = arith.addf %142, %144 : vector<8x8xf32>
    %cst_39 = arith.constant 0.000000e+00 : f32
    %146 = vector.broadcast %cst_39 : f32 to vector<8x8xf32>
    %147 = arith.maximumf %145, %146 : vector<8x8xf32>
    %cst_40 = arith.constant 1.000000e+00 : f32
    %148 = vector.broadcast %cst_40 : f32 to vector<8x8xf32>
    %149 = arith.subf %148, %133 : vector<8x8xf32>
    %150 = arith.mulf %149, %123 : vector<8x8xf32>
    %151 = arith.mulf %133, %147 : vector<8x8xf32>
    %152 = arith.addf %150, %151 : vector<8x8xf32>
    %153 = vector.extract_strided_slice %6 {offsets = [0, 40], sizes = [24, 8], strides = [1, 1]} : vector<24x48xf32> to vector<24x8xf32>
    %cst_41 = arith.constant dense<0.000000e+00> : vector<16x8xf32>
    %154 = tpu.matmul %0, %152, %cst_41 {dimension_numbers = #tpu.dot_dimension_numbers<[1], [0], [0], [1], [0, 0, 1, 1], [], []>, precision = #tpu.contract_precision<fp32>} : vector<16x8xf32>, vector<8x8xf32>, vector<16x8xf32> -> vector<16x8xf32>
    %155 = vector.extract_strided_slice %153 {offsets = [0, 0], sizes = [8, 8], strides = [1, 1]} : vector<24x8xf32> to vector<8x8xf32>
    %156 = vector.extract_strided_slice %154 {offsets = [0, 0], sizes = [8, 8], strides = [1, 1]} : vector<16x8xf32> to vector<8x8xf32>
    %157 = arith.addf %155, %156 : vector<8x8xf32>
    %158 = arith.negf %157 : vector<8x8xf32>
    %159 = math.exp %158 : vector<8x8xf32>
    %cst_42 = arith.constant 1.000000e+00 : f32
    %160 = vector.broadcast %cst_42 : f32 to vector<8x8xf32>
    %161 = arith.addf %160, %159 : vector<8x8xf32>
    %162 = arith.divf %160, %161 : vector<8x8xf32>
    %163 = vector.extract_strided_slice %153 {offsets = [8, 0], sizes = [8, 8], strides = [1, 1]} : vector<24x8xf32> to vector<8x8xf32>
    %164 = vector.extract_strided_slice %154 {offsets = [8, 0], sizes = [8, 8], strides = [1, 1]} : vector<16x8xf32> to vector<8x8xf32>
    %165 = arith.addf %163, %164 : vector<8x8xf32>
    %166 = arith.negf %165 : vector<8x8xf32>
    %167 = math.exp %166 : vector<8x8xf32>
    %cst_43 = arith.constant 1.000000e+00 : f32
    %168 = vector.broadcast %cst_43 : f32 to vector<8x8xf32>
    %169 = arith.addf %168, %167 : vector<8x8xf32>
    %170 = arith.divf %168, %169 : vector<8x8xf32>
    %171 = vector.extract_strided_slice %153 {offsets = [16, 0], sizes = [8, 8], strides = [1, 1]} : vector<24x8xf32> to vector<8x8xf32>
    %172 = arith.mulf %170, %152 : vector<8x8xf32>
    %cst_44 = arith.constant dense<0.000000e+00> : vector<8x8xf32>
    %173 = tpu.matmul %1, %172, %cst_44 {dimension_numbers = #tpu.dot_dimension_numbers<[1], [0], [0], [1], [0, 0, 1, 1], [], []>, precision = #tpu.contract_precision<fp32>} : vector<8x8xf32>, vector<8x8xf32>, vector<8x8xf32> -> vector<8x8xf32>
    %174 = arith.addf %171, %173 : vector<8x8xf32>
    %cst_45 = arith.constant 0.000000e+00 : f32
    %175 = vector.broadcast %cst_45 : f32 to vector<8x8xf32>
    %176 = arith.maximumf %174, %175 : vector<8x8xf32>
    %cst_46 = arith.constant 1.000000e+00 : f32
    %177 = vector.broadcast %cst_46 : f32 to vector<8x8xf32>
    %178 = arith.subf %177, %162 : vector<8x8xf32>
    %179 = arith.mulf %178, %152 : vector<8x8xf32>
    %180 = arith.mulf %162, %176 : vector<8x8xf32>
    %181 = arith.addf %179, %180 : vector<8x8xf32>
    %182 = tpu.concatenate %36, %65, %94, %123, %152, %181 in 1 : vector<8x8xf32>, vector<8x8xf32>, vector<8x8xf32>, vector<8x8xf32>, vector<8x8xf32>, vector<8x8xf32> -> vector<8x48xf32>
    %c0_47 = arith.constant 0 : index
    %c0_48 = arith.constant 0 : index
    %183 = vector.load %arg10[%c0_47, %c0_48] : memref<8x48xf32, #tpu.memory_space<vmem>>, vector<8x48xf32>
    tpu.vector_store %arg10[%c0_47, %c0_48], %182 {strides = array<i32>} : memref<8x48xf32, #tpu.memory_space<vmem>>, vector<8x48xf32>,
    %c0_49 = arith.constant 0 : index
    %c0_50 = arith.constant 0 : index
    %c0_51 = arith.constant 0 : index
    %184 = vector.load %arg3[%c0_49, %c0_50, %c0_51] : memref<6x16x8xf32, #tpu.memory_space<vmem>>, vector<1x16x8xf32>
    %185 = vector.shape_cast %184 : vector<1x16x8xf32> to vector<16x8xf32>
    %cst_52 = arith.constant dense<0.000000e+00> : vector<16x8xf32>
    %186 = tpu.matmul %185, %36, %cst_52 {dimension_numbers = #tpu.dot_dimension_numbers<[1], [0], [0], [1], [0, 0, 1, 1], [], []>, precision = #tpu.contract_precision<fp32>} : vector<16x8xf32>, vector<8x8xf32>, vector<16x8xf32> -> vector<16x8xf32>
    %c0_53 = arith.constant 0 : index
    %c0_54 = arith.constant 0 : index
    %c0_55 = arith.constant 0 : index
    %187 = vector.load %arg2[%c0_53, %c0_54, %c0_55] : memref<6x16x16xf32, #tpu.memory_space<vmem>>, vector<1x16x16xf32>
    %188 = vector.shape_cast %187 : vector<1x16x16xf32> to vector<16x16xf32>
    %cst_56 = arith.constant dense<0.000000e+00> : vector<16x8xf32>
    %189 = tpu.matmul %188, %186, %cst_56 {dimension_numbers = #tpu.dot_dimension_numbers<[1], [0], [0], [1], [0, 0, 1, 1], [], []>, precision = #tpu.contract_precision<fp32>} : vector<16x16xf32>, vector<16x8xf32>, vector<16x8xf32> -> vector<16x8xf32>
    %cst_57 = arith.constant 0.000000e+00 : f32
    %190 = vector.broadcast %cst_57 : f32 to vector<16x8xf32>
    %191 = arith.maximumf %189, %190 : vector<16x8xf32>
    %c1 = arith.constant 1 : index
    %c0_58 = arith.constant 0 : index
    %c0_59 = arith.constant 0 : index
    %192 = vector.load %arg3[%c1, %c0_58, %c0_59] : memref<6x16x8xf32, #tpu.memory_space<vmem>>, vector<1x16x8xf32>
    %193 = vector.shape_cast %192 : vector<1x16x8xf32> to vector<16x8xf32>
    %cst_60 = arith.constant dense<0.000000e+00> : vector<16x8xf32>
    %194 = tpu.matmul %193, %65, %cst_60 {dimension_numbers = #tpu.dot_dimension_numbers<[1], [0], [0], [1], [0, 0, 1, 1], [], []>, precision = #tpu.contract_precision<fp32>} : vector<16x8xf32>, vector<8x8xf32>, vector<16x8xf32> -> vector<16x8xf32>
    %c1_61 = arith.constant 1 : index
    %c0_62 = arith.constant 0 : index
    %c0_63 = arith.constant 0 : index
    %195 = vector.load %arg2[%c1_61, %c0_62, %c0_63] : memref<6x16x16xf32, #tpu.memory_space<vmem>>, vector<1x16x16xf32>
    %196 = vector.shape_cast %195 : vector<1x16x16xf32> to vector<16x16xf32>
    %cst_64 = arith.constant dense<0.000000e+00> : vector<16x8xf32>
    %197 = tpu.matmul %196, %194, %cst_64 {dimension_numbers = #tpu.dot_dimension_numbers<[1], [0], [0], [1], [0, 0, 1, 1], [], []>, precision = #tpu.contract_precision<fp32>} : vector<16x16xf32>, vector<16x8xf32>, vector<16x8xf32> -> vector<16x8xf32>
    %cst_65 = arith.constant 0.000000e+00 : f32
    %198 = vector.broadcast %cst_65 : f32 to vector<16x8xf32>
    %199 = arith.maximumf %197, %198 : vector<16x8xf32>
    %c2 = arith.constant 2 : index
    %c0_66 = arith.constant 0 : index
    %c0_67 = arith.constant 0 : index
    %200 = vector.load %arg3[%c2, %c0_66, %c0_67] : memref<6x16x8xf32, #tpu.memory_space<vmem>>, vector<1x16x8xf32>
    %201 = vector.shape_cast %200 : vector<1x16x8xf32> to vector<16x8xf32>
    %cst_68 = arith.constant dense<0.000000e+00> : vector<16x8xf32>
    %202 = tpu.matmul %201, %94, %cst_68 {dimension_numbers = #tpu.dot_dimension_numbers<[1], [0], [0], [1], [0, 0, 1, 1], [], []>, precision = #tpu.contract_precision<fp32>} : vector<16x8xf32>, vector<8x8xf32>, vector<16x8xf32> -> vector<16x8xf32>
    %c2_69 = arith.constant 2 : index
    %c0_70 = arith.constant 0 : index
    %c0_71 = arith.constant 0 : index
    %203 = vector.load %arg2[%c2_69, %c0_70, %c0_71] : memref<6x16x16xf32, #tpu.memory_space<vmem>>, vector<1x16x16xf32>
    %204 = vector.shape_cast %203 : vector<1x16x16xf32> to vector<16x16xf32>
    %cst_72 = arith.constant dense<0.000000e+00> : vector<16x8xf32>
    %205 = tpu.matmul %204, %202, %cst_72 {dimension_numbers = #tpu.dot_dimension_numbers<[1], [0], [0], [1], [0, 0, 1, 1], [], []>, precision = #tpu.contract_precision<fp32>} : vector<16x16xf32>, vector<16x8xf32>, vector<16x8xf32> -> vector<16x8xf32>
    %cst_73 = arith.constant 0.000000e+00 : f32
    %206 = vector.broadcast %cst_73 : f32 to vector<16x8xf32>
    %207 = arith.maximumf %205, %206 : vector<16x8xf32>
    %c3 = arith.constant 3 : index
    %c0_74 = arith.constant 0 : index
    %c0_75 = arith.constant 0 : index
    %208 = vector.load %arg3[%c3, %c0_74, %c0_75] : memref<6x16x8xf32, #tpu.memory_space<vmem>>, vector<1x16x8xf32>
    %209 = vector.shape_cast %208 : vector<1x16x8xf32> to vector<16x8xf32>
    %cst_76 = arith.constant dense<0.000000e+00> : vector<16x8xf32>
    %210 = tpu.matmul %209, %123, %cst_76 {dimension_numbers = #tpu.dot_dimension_numbers<[1], [0], [0], [1], [0, 0, 1, 1], [], []>, precision = #tpu.contract_precision<fp32>} : vector<16x8xf32>, vector<8x8xf32>, vector<16x8xf32> -> vector<16x8xf32>
    %c3_77 = arith.constant 3 : index
    %c0_78 = arith.constant 0 : index
    %c0_79 = arith.constant 0 : index
    %211 = vector.load %arg2[%c3_77, %c0_78, %c0_79] : memref<6x16x16xf32, #tpu.memory_space<vmem>>, vector<1x16x16xf32>
    %212 = vector.shape_cast %211 : vector<1x16x16xf32> to vector<16x16xf32>
    %cst_80 = arith.constant dense<0.000000e+00> : vector<16x8xf32>
    %213 = tpu.matmul %212, %210, %cst_80 {dimension_numbers = #tpu.dot_dimension_numbers<[1], [0], [0], [1], [0, 0, 1, 1], [], []>, precision = #tpu.contract_precision<fp32>} : vector<16x16xf32>, vector<16x8xf32>, vector<16x8xf32> -> vector<16x8xf32>
    %cst_81 = arith.constant 0.000000e+00 : f32
    %214 = vector.broadcast %cst_81 : f32 to vector<16x8xf32>
    %215 = arith.maximumf %213, %214 : vector<16x8xf32>
    %c4 = arith.constant 4 : index
    %c0_82 = arith.constant 0 : index
    %c0_83 = arith.constant 0 : index
    %216 = vector.load %arg3[%c4, %c0_82, %c0_83] : memref<6x16x8xf32, #tpu.memory_space<vmem>>, vector<1x16x8xf32>
    %217 = vector.shape_cast %216 : vector<1x16x8xf32> to vector<16x8xf32>
    %cst_84 = arith.constant dense<0.000000e+00> : vector<16x8xf32>
    %218 = tpu.matmul %217, %152, %cst_84 {dimension_numbers = #tpu.dot_dimension_numbers<[1], [0], [0], [1], [0, 0, 1, 1], [], []>, precision = #tpu.contract_precision<fp32>} : vector<16x8xf32>, vector<8x8xf32>, vector<16x8xf32> -> vector<16x8xf32>
    %c4_85 = arith.constant 4 : index
    %c0_86 = arith.constant 0 : index
    %c0_87 = arith.constant 0 : index
    %219 = vector.load %arg2[%c4_85, %c0_86, %c0_87] : memref<6x16x16xf32, #tpu.memory_space<vmem>>, vector<1x16x16xf32>
    %220 = vector.shape_cast %219 : vector<1x16x16xf32> to vector<16x16xf32>
    %cst_88 = arith.constant dense<0.000000e+00> : vector<16x8xf32>
    %221 = tpu.matmul %220, %218, %cst_88 {dimension_numbers = #tpu.dot_dimension_numbers<[1], [0], [0], [1], [0, 0, 1, 1], [], []>, precision = #tpu.contract_precision<fp32>} : vector<16x16xf32>, vector<16x8xf32>, vector<16x8xf32> -> vector<16x8xf32>
    %cst_89 = arith.constant 0.000000e+00 : f32
    %222 = vector.broadcast %cst_89 : f32 to vector<16x8xf32>
    %223 = arith.maximumf %221, %222 : vector<16x8xf32>
    %c5 = arith.constant 5 : index
    %c0_90 = arith.constant 0 : index
    %c0_91 = arith.constant 0 : index
    %224 = vector.load %arg3[%c5, %c0_90, %c0_91] : memref<6x16x8xf32, #tpu.memory_space<vmem>>, vector<1x16x8xf32>
    %225 = vector.shape_cast %224 : vector<1x16x8xf32> to vector<16x8xf32>
    %cst_92 = arith.constant dense<0.000000e+00> : vector<16x8xf32>
    %226 = tpu.matmul %225, %181, %cst_92 {dimension_numbers = #tpu.dot_dimension_numbers<[1], [0], [0], [1], [0, 0, 1, 1], [], []>, precision = #tpu.contract_precision<fp32>} : vector<16x8xf32>, vector<8x8xf32>, vector<16x8xf32> -> vector<16x8xf32>
    %c5_93 = arith.constant 5 : index
    %c0_94 = arith.constant 0 : index
    %c0_95 = arith.constant 0 : index
    %227 = vector.load %arg2[%c5_93, %c0_94, %c0_95] : memref<6x16x16xf32, #tpu.memory_space<vmem>>, vector<1x16x16xf32>
    %228 = vector.shape_cast %227 : vector<1x16x16xf32> to vector<16x16xf32>
    %cst_96 = arith.constant dense<0.000000e+00> : vector<16x8xf32>
    %229 = tpu.matmul %228, %226, %cst_96 {dimension_numbers = #tpu.dot_dimension_numbers<[1], [0], [0], [1], [0, 0, 1, 1], [], []>, precision = #tpu.contract_precision<fp32>} : vector<16x16xf32>, vector<16x8xf32>, vector<16x8xf32> -> vector<16x8xf32>
    %cst_97 = arith.constant 0.000000e+00 : f32
    %230 = vector.broadcast %cst_97 : f32 to vector<16x8xf32>
    %231 = arith.maximumf %229, %230 : vector<16x8xf32>
    %232 = tpu.concatenate %191, %199, %207, %215, %223, %231 in 1 : vector<16x8xf32>, vector<16x8xf32>, vector<16x8xf32>, vector<16x8xf32>, vector<16x8xf32>, vector<16x8xf32> -> vector<16x48xf32>
    %c0_98 = arith.constant 0 : index
    %c0_99 = arith.constant 0 : index
    %233 = vector.load %arg9[%c0_98, %c0_99] : memref<16x48xf32, #tpu.memory_space<vmem>>, vector<16x48xf32>
    tpu.vector_store %arg9[%c0_98, %c0_99], %232 {strides = array<i32>} : memref<16x48xf32, #tpu.memory_space<vmem>>, vector<16x48xf32>,
    return
  }
  func.func @transform_0(%arg0: i32) -> (i32, i32) {
    %c0_i32 = arith.constant 0 : i32
    %c0_i32_0 = arith.constant 0 : i32
    %c0_i32_1 = arith.constant 0 : i32
    return %c0_i32, %c0_i32_0 : i32, i32
  }
  func.func @transform_1(%arg0: i32) -> (i32, i32, i32) {
    %c0_i32 = arith.constant 0 : i32
    %c0_i32_0 = arith.constant 0 : i32
    %c0_i32_1 = arith.constant 0 : i32
    %c0_i32_2 = arith.constant 0 : i32
    return %c0_i32, %c0_i32_0, %c0_i32_1 : i32, i32, i32
  }
  func.func @transform_2(%arg0: i32) -> (i32, i32, i32) {
    %c0_i32 = arith.constant 0 : i32
    %c0_i32_0 = arith.constant 0 : i32
    %c0_i32_1 = arith.constant 0 : i32
    %c0_i32_2 = arith.constant 0 : i32
    return %c0_i32, %c0_i32_0, %c0_i32_1 : i32, i32, i32
  }
  func.func @transform_3(%arg0: i32) -> (i32, i32) {
    %c0_i32 = arith.constant 0 : i32
    %c0_i32_0 = arith.constant 0 : i32
    %c0_i32_1 = arith.constant 0 : i32
    return %c0_i32, %c0_i32_0 : i32, i32
  }
  func.func @transform_4(%arg0: i32) -> (i32, i32) {
    %c0_i32 = arith.constant 0 : i32
    %c0_i32_0 = arith.constant 0 : i32
    %c0_i32_1 = arith.constant 0 : i32
    return %c0_i32, %c0_i32_0 : i32, i32
  }
  func.func @transform_5(%arg0: i32) -> (i32, i32) {
    %c0_i32 = arith.constant 0 : i32
    %c0_i32_0 = arith.constant 0 : i32
    %c0_i32_1 = arith.constant 0 : i32
    return %c0_i32, %c0_i32_0 : i32, i32
  }
  func.func @transform_6(%arg0: i32) -> (i32, i32) {
    %c0_i32 = arith.constant 0 : i32
    %c0_i32_0 = arith.constant 0 : i32
    %c0_i32_1 = arith.constant 0 : i32
    return %c0_i32, %c0_i32_0 : i32, i32
  }
  func.func @transform_7(%arg0: i32) -> (i32, i32) {
    %c0_i32 = arith.constant 0 : i32
    %c0_i32_0 = arith.constant 0 : i32
    %c0_i32_1 = arith.constant 0 : i32
    return %c0_i32, %c0_i32_0 : i32, i32
  }
  func.func @transform_8(%arg0: i32) -> (i32, i32) {
    %c0_i32 = arith.constant 0 : i32
    %c0_i32_0 = arith.constant 0 : i32
    %c0_i32_1 = arith.constant 0 : i32
    return %c0_i32, %c0_i32_0 : i32, i32
  }
  func.func @transform_9(%arg0: i32) -> (i32, i32) {
    %c0_i32 = arith.constant 0 : i32
    %c0_i32_0 = arith.constant 0 : i32
    %c0_i32_1 = arith.constant 0 : i32
    return %c0_i32, %c0_i32_0 : i32, i32
  }
}

</mosaic_0001>

<llo_original>
// kernel: tile.1
$region0: #{tile.1}
  #allocation0 [shape = 's32[1]{0}', space=sflag, size = 0x4, scoped, tag = 'scoped memory for tile.1']
  %s0 = inlined_call_operand.<no memory space> [shape: f32[], index: 0, kind: input, shape index: {}]
  %s1 = inlined_call_operand.vmem [shape: f32[24,48], index: 1, kind: output, shape index: {}]
  %v2 = vstv %s0
  %3 = vst [vmem:[%s1] sm:$0xff] %v2
  %s4 = scalar_lea.vmem %s1, 8
  %5 = vst [vmem:[%s4] sm:$0xff] %v2
  %s6 = scalar_lea.vmem %s1, 16
  %7 = vst [vmem:[%s6] sm:$0xff] %v2

// kernel: egcn_forward.1
$region0: #{egcn_forward.1}
  #allocation0 [shape = 'u32[]', space=smem, size = 0x4, offset = 0x4, fixed_abs, tag = 'smem constant byte address 0x4 - core index']
  #allocation1 [shape = 'u32[144,128]{1,0:T(1,128)}', space=vmem, size = 0x12000, scoped, tag = 'internal scratch']
  %s0 = inlined_call_operand.vmem [shape: f32[8,48], index: 0, kind: input, shape index: {}]
  %s1 = inlined_call_operand.vmem [shape: f32[6,16,16], index: 1, kind: input, shape index: {}]
  %s2 = inlined_call_operand.vmem [shape: f32[6,16,8], index: 2, kind: input, shape index: {}]
  %s3 = inlined_call_operand.vmem [shape: f32[8,8], index: 3, kind: input, shape index: {}]
  %s4 = inlined_call_operand.vmem [shape: f32[24,8], index: 4, kind: input, shape index: {}]
  %s5 = inlined_call_operand.vmem [shape: f32[16,8], index: 5, kind: input, shape index: {}]
  %s6 = inlined_call_operand.vmem [shape: f32[8,8], index: 6, kind: input, shape index: {}]
  %s7 = inlined_call_operand.vmem [shape: f32[24,48], index: 7, kind: input, shape index: {}]
  %s8 = inlined_call_operand.vmem [shape: f32[16,48], index: 8, kind: output, shape index: {0}]
  %s9 = inlined_call_operand.vmem [shape: f32[8,48], index: 9, kind: output, shape index: {1}]
  %10 = xla_tuple %s8, %s9
  %s11 = sld [smem:[#allocation0]]
  $region50: #{egcn_forward.1} parent=0
    _
  %s13 = ssub.s32 1, %s11
  %s14 = scalar_select 0, %s13, %s11
  // Predicated region
  $region2: #{egcn_forward.1} parent=0 // pred_check
    _
  $region3: #{egcn_forward.1} parent=0 // pred_check_branch
    %16 = sbr.rel (0) target = $region5
  $region4: #{egcn_forward.1} parent=0 // pred_region
    _
  $region5: #{egcn_forward.1} parent=0 // pred_fallthru
    _
  // Predicated region
  $region6: #{egcn_forward.1} parent=0 // pred_check
    _
  $region7: #{egcn_forward.1} parent=0 // pred_check_branch
    %18 = sbr.rel (0) target = $region9
  $region8: #{egcn_forward.1} parent=0 // pred_region
    _
  $region9: #{egcn_forward.1} parent=0 // pred_fallthru
    _
  // Predicated region
  $region10: #{egcn_forward.1} parent=0 // pred_check
    _
  $region11: #{egcn_forward.1} parent=0 // pred_check_branch
    %20 = sbr.rel (0) target = $region13
  $region12: #{egcn_forward.1} parent=0 // pred_region
    _
  $region13: #{egcn_forward.1} parent=0 // pred_fallthru
    _
  // Predicated region
  $region14: #{egcn_forward.1} parent=0 // pred_check
    _
  $region15: #{egcn_forward.1} parent=0 // pred_check_branch
    %22 = sbr.rel (0) target = $region17
  $region16: #{egcn_forward.1} parent=0 // pred_region
    _
  $region17: #{egcn_forward.1} parent=0 // pred_fallthru
    _
  // Predicated region
  $region18: #{egcn_forward.1} parent=0 // pred_check
    _
  $region19: #{egcn_forward.1} parent=0 // pred_check_branch
    %24 = sbr.rel (0) target = $region21
  $region20: #{egcn_forward.1} parent=0 // pred_region
    _
  $region21: #{egcn_forward.1} parent=0 // pred_fallthru
    _
  // Predicated region
  $region22: #{egcn_forward.1} parent=0 // pred_check
    _
  $region23: #{egcn_forward.1} parent=0 // pred_check_branch
    %26 = sbr.rel (0) target = $region25
  $region24: #{egcn_forward.1} parent=0 // pred_region
    _
  $region25: #{egcn_forward.1} parent=0 // pred_fallthru
    _
  // Predicated region
  $region26: #{egcn_forward.1} parent=0 // pred_check
    _
  $region27: #{egcn_forward.1} parent=0 // pred_check_branch
    %28 = sbr.rel (0) target = $region29
  $region28: #{egcn_forward.1} parent=0 // pred_region
    _
  $region29: #{egcn_forward.1} parent=0 // pred_fallthru
    _
  // Predicated region
  $region30: #{egcn_forward.1} parent=0 // pred_check
    _
  $region31: #{egcn_forward.1} parent=0 // pred_check_branch
    %30 = sbr.rel (0) target = $region33
  $region32: #{egcn_forward.1} parent=0 // pred_region
    _
  $region33: #{egcn_forward.1} parent=0 // pred_fallthru
    _
  %v31 = vld [vmem:[%s5] sm:$0xff]
  %v32 = vld [vmem:[%s5 + $0x8] sm:$0xff]
  %v33 = vld [vmem:[%s6] sm:$0xff]
  %v34 = vld [vmem:[%s4] sm:$0xff]
  %v35 = vld [vmem:[%s4 + $0x8] sm:$0xff]
  %v36 = vld [vmem:[%s4 + $0x10] sm:$0xff]
  %v37 = vld [vmem:[%s0] sm:$0xff]
  %v38 = vld [vmem:[%s7] sm:$0xff]
  %v39 = vld [vmem:[%s7 + $0x8] sm:$0xff]
  %v40 = vld [vmem:[%s7 + $0x10] sm:$0xff]
  %vm41 = vcmask 64512
  %v43 = vsel %vm41, %v34, 0
  %v46 = vsel %vm41, %v35, 0
  %v49 = vsel %vm41, %v36, 0
  %51 = vmatprep.subr.mxu0 0.0
  %v52 = vand.u32 %v37, 4294901760
  %53 = vmatpush1.msra.mxu0 %v52
  %54 = vmatprep.subr.mxu0 0.0
  %55 = vmatpush1.msra.mxu0 0.0
  %56 = vmatprep.subr.mxu0 0.0
  %57 = vmatpush1.msra.mxu0 0.0
  %58 = vmatprep.subr.mxu0 0.0
  %59 = vmatpush1.msra.mxu0 0.0
  %60 = vmatprep.subr.mxu0 0.0
  %61 = vmatpush1.msra.mxu0 0.0
  %62 = vmatprep.subr.mxu0 0.0
  %63 = vmatpush1.msra.mxu0 0.0
  %64 = vmatprep.subr.mxu0 0.0
  %65 = vmatpush1.msra.mxu0 0.0
  %66 = vmatprep.subr.mxu0 0.0
  %67 = vmatpush1.msra.mxu0 0.0
  %68 = vmatprep.subr.mxu0 0.0
  %69 = vmatpush1.msra.mxu0 0.0
  %70 = vmatprep.subr.mxu0 0.0
  %71 = vmatpush1.msra.mxu0 0.0
  %72 = vmatprep.subr.mxu0 0.0
  %73 = vmatpush1.msra.mxu0 0.0
  %74 = vmatprep.subr.mxu0 0.0
  %75 = vmatpush1.msra.mxu0 0.0
  %76 = vmatprep.subr.mxu0 0.0
  %77 = vmatpush1.msra.mxu0 0.0
  %78 = vmatprep.subr.mxu0 0.0
  %79 = vmatpush1.msra.mxu0 0.0
  %80 = vmatprep.subr.mxu0 0.0
  %81 = vmatpush1.msra.mxu0 0.0
  %82 = vmatprep.subr.mxu0 0.0
  %83 = vmatpush1.msra.mxu0 0.0
  %84 = vmatprep.subr.mxu0 0.0
  %85 = vmatpush1.msra.mxu0 0.0
  %86 = vmatprep.subr.mxu0 0.0
  %87 = vmatpush1.msra.mxu0 0.0
  %88 = vmatprep.subr.mxu0 0.0
  %89 = vmatpush1.msra.mxu0 0.0
  %90 = vmatprep.subr.mxu0 0.0
  %91 = vmatpush1.msra.mxu0 0.0
  %92 = vmatprep.subr.mxu0 0.0
  %93 = vmatpush1.msra.mxu0 0.0
  %94 = vmatprep.subr.mxu0 0.0
  %95 = vmatpush1.msra.mxu0 0.0
  %96 = vmatprep.subr.mxu0 0.0
  %97 = vmatpush1.msra.mxu0 0.0
  %98 = vmatprep.subr.mxu0 0.0
  %99 = vmatpush1.msra.mxu0 0.0
  %100 = vmatprep.subr.mxu0 0.0
  %101 = vmatpush1.msra.mxu0 0.0
  %102 = vmatprep.subr.mxu0 0.0
  %103 = vmatpush1.msra.mxu0 0.0
  %104 = vmatprep.subr.mxu0 0.0
  %105 = vmatpush1.msra.mxu0 0.0
  %106 = vmatprep.subr.mxu0 0.0
  %107 = vmatpush1.msra.mxu0 0.0
  %108 = vmatprep.subr.mxu0 0.0
  %109 = vmatpush1.msra.mxu0 0.0
  %110 = vmatprep.subr.mxu0 0.0
  %111 = vmatpush1.msra.mxu0 0.0
  %112 = vmatprep.subr.mxu0 0.0
  %113 = vmatpush1.msra.mxu0 0.0
  %114 = vmatprep.subr.mxu0 0.0
  %115 = vmatpush1.msra.mxu0 0.0
  %116 = vmatprep.mubr.f32.mxu0 0.0
  %v117 = vand.u32 %v43, 4294901760
  %v118 = vsub.f32 %v43, %v117
  %v119 = vand.u32 %v118, 4294901760
  %v120 = vsub.f32 %v118, %v119
  %v121 = vand.u32 %v120, 4294901760
  %122 = vmatmul.mubr.f32.gmra.mrb[0].mxu0 %v121
  %v123 = vpop.f32.mrb[0].mxu0
  %v124 = vadd.f32 %v38, %v123
  %v125 = vpop.f32.mrb[0].mxu0
  %126 = vmatprep.mubr.f32.mxu0 0.0
  %v127 = vand.u32 %v46, 4294901760
  %v128 = vsub.f32 %v46, %v127
  %v129 = vand.u32 %v128, 4294901760
  %v130 = vsub.f32 %v128, %v129
  %v131 = vand.u32 %v130, 4294901760
  %132 = vmatmul.mubr.f32.gmra.mrb[0].mxu0 %v131
  %v133 = vpop.f32.mrb[0].mxu0
  %v134 = vadd.f32 %v39, %v133
  %v135 = vpop.f32.mrb[0].mxu0
  %136 = vmatprep.mubr.f32.mxu0 0.0
  %v137 = vand.u32 %v49, 4294901760
  %v138 = vsub.f32 %v49, %v137
  %v139 = vand.u32 %v138, 4294901760
  %v140 = vsub.f32 %v138, %v139
  %v141 = vand.u32 %v140, 4294901760
  %142 = vmatmul.mubr.f32.gmra.mrb[0].mxu0 %v141
  %v143 = vpop.f32.mrb[0].mxu0
  %v144 = vadd.f32 %v40, %v143
  %v145 = vpop.f32.mrb[0].mxu0
  %146 = vdwg.mxu0
  %147 = vmatprep.subr.mxu0 0.0
  %v148 = vand.u32 %v37, 4294901760
  %v149 = vsub.f32 %v37, %v148
  %v150 = vand.u32 %v149, 4294901760
  %v151 = vsub.f32 %v149, %v150
  %v152 = vand.u32 %v151, 4294901760
  %153 = vmatpush1.msra.mxu0 %v152
  %154 = vmatprep.subr.mxu0 0.0
  %155 = vmatpush1.msra.mxu0 0.0
  %156 = vmatprep.subr.mxu0 0.0
  %157 = vmatpush1.msra.mxu0 0.0
  %158 = vmatprep.subr.mxu0 0.0
  %159 = vmatpush1.msra.mxu0 0.0
  %160 = vmatprep.subr.mxu0 0.0
  %161 = vmatpush1.msra.mxu0 0.0
  %162 = vmatprep.subr.mxu0 0.0
  %163 = vmatpush1.msra.mxu0 0.0
  %164 = vmatprep.subr.mxu0 0.0
  %165 = vmatpush1.msra.mxu0 0.0
  %166 = vmatprep.subr.mxu0 0.0
  %167 = vmatpush1.msra.mxu0 0.0
  %168 = vmatprep.subr.mxu0 0.0
  %169 = vmatpush1.msra.mxu0 0.0
  %170 = vmatprep.subr.mxu0 0.0
  %171 = vmatpush1.msra.mxu0 0.0
  %172 = vmatprep.subr.mxu0 0.0
  %173 = vmatpush1.msra.mxu0 0.0
  %174 = vmatprep.subr.mxu0 0.0
  %175 = vmatpush1.msra.mxu0 0.0
  %176 = vmatprep.subr.mxu0 0.0
  %177 = vmatpush1.msra.mxu0 0.0
  %178 = vmatprep.subr.mxu0 0.0
  %179 = vmatpush1.msra.mxu0 0.0
  %180 = vmatprep.subr.mxu0 0.0
  %181 = vmatpush1.msra.mxu0 0.0
  %182 = vmatprep.subr.mxu0 0.0
  %183 = vmatpush1.msra.mxu0 0.0
  %184 = vmatprep.subr.mxu0 0.0
  %185 = vmatpush1.msra.mxu0 0.0
  %186 = vmatprep.subr.mxu0 0.0
  %187 = vmatpush1.msra.mxu0 0.0
  %188 = vmatprep.subr.mxu0 0.0
  %189 = vmatpush1.msra.mxu0 0.0
  %190 = vmatprep.subr.mxu0 0.0
  %191 = vmatpush1.msra.mxu0 0.0
  %192 = vmatprep.subr.mxu0 0.0
  %193 = vmatpush1.msra.mxu0 0.0
  %194 = vmatprep.subr.mxu0 0.0
  %195 = vmatpush1.msra.mxu0 0.0
  %196 = vmatprep.subr.mxu0 0.0
  %197 = vmatpush1.msra.mxu0 0.0
  %198 = vmatprep.subr.mxu0 0.0
  %199 = vmatpush1.msra.mxu0 0.0
  %200 = vmatprep.subr.mxu0 0.0
  %201 = vmatpush1.msra.mxu0 0.0
  %202 = vmatprep.subr.mxu0 0.0
  %203 = vmatpush1.msra.mxu0 0.0
  %204 = vmatprep.subr.mxu0 0.0
  %205 = vmatpush1.msra.mxu0 0.0
  %206 = vmatprep.subr.mxu0 0.0
  %207 = vmatpush1.msra.mxu0 0.0
  %208 = vmatprep.subr.mxu0 0.0
  %209 = vmatpush1.msra.mxu0 0.0
  %210 = vmatprep.subr.mxu0 0.0
  %211 = vmatpush1.msra.mxu0 0.0
  %212 = vmatprep.subr.mxu0 0.0
  %213 = vmatpush1.msra.mxu0 0.0
  %214 = vmatprep.subr.mxu0 0.0
  %215 = vmatpush1.msra.mxu0 0.0
  %216 = vmatprep.mubr.f32.mxu0 0.0
  %v217 = vand.u32 %v43, 4294901760
  %218 = vmatmul.mubr.f32.gmra.mrb[0].mxu0 %v217
  %v219 = vpop.f32.mrb[0].mxu0
  %v220 = vadd.f32 %v124, %v219
  %v221 = vpop.f32.mrb[0].mxu0
  %222 = vmatprep.mubr.f32.mxu0 0.0
  %v223 = vand.u32 %v46, 4294901760
  %224 = vmatmul.mubr.f32.gmra.mrb[0].mxu0 %v223
  %v225 = vpop.f32.mrb[0].mxu0
  %v226 = vadd.f32 %v134, %v225
  %v227 = vpop.f32.mrb[0].mxu0
  %228 = vmatprep.mubr.f32.mxu0 0.0
  %v229 = vand.u32 %v49, 4294901760
  %230 = vmatmul.mubr.f32.gmra.mrb[0].mxu0 %v229
  %v231 = vpop.f32.mrb[0].mxu0
  %v232 = vadd.f32 %v144, %v231
  %v233 = vpop.f32.mrb[0].mxu0
  %234 = vdwg.mxu0
  %235 = vmatprep.subr.mxu0 0.0
  %v236 = vand.u32 %v37, 4294901760
  %v237 = vsub.f32 %v37, %v236
  %238 = vmatpush1.msra.mxu0 %v237
  %239 = vmatprep.subr.mxu0 0.0
  %240 = vmatpush1.msra.mxu0 0.0
  %241 = vmatprep.subr.mxu0 0.0
  %242 = vmatpush1.msra.mxu0 0.0
  %243 = vmatprep.subr.mxu0 0.0
  %244 = vmatpush1.msra.mxu0 0.0
  %245 = vmatprep.subr.mxu0 0.0
  %246 = vmatpush1.msra.mxu0 0.0
  %247 = vmatprep.subr.mxu0 0.0
  %248 = vmatpush1.msra.mxu0 0.0
  %249 = vmatprep.subr.mxu0 0.0
  %250 = vmatpush1.msra.mxu0 0.0
  %251 = vmatprep.subr.mxu0 0.0
  %252 = vmatpush1.msra.mxu0 0.0
  %253 = vmatprep.subr.mxu0 0.0
  %254 = vmatpush1.msra.mxu0 0.0
  %255 = vmatprep.subr.mxu0 0.0
  %256 = vmatpush1.msra.mxu0 0.0
  %257 = vmatprep.subr.mxu0 0.0
  %258 = vmatpush1.msra.mxu0 0.0
  %259 = vmatprep.subr.mxu0 0.0
  %260 = vmatpush1.msra.mxu0 0.0
  %261 = vmatprep.subr.mxu0 0.0
  %262 = vmatpush1.msra.mxu0 0.0
  %263 = vmatprep.subr.mxu0 0.0
  %264 = vmatpush1.msra.mxu0 0.0
  %265 = vmatprep.subr.mxu0 0.0
  %266 = vmatpush1.msra.mxu0 0.0
  %267 = vmatprep.subr.mxu0 0.0
  %268 = vmatpush1.msra.mxu0 0.0
  %269 = vmatprep.subr.mxu0 0.0
  %270 = vmatpush1.msra.mxu0 0.0
  %271 = vmatprep.subr.mxu0 0.0
  %272 = vmatpush1.msra.mxu0 0.0
  %273 = vmatprep.subr.mxu0 0.0
  %274 = vmatpush1.msra.mxu0 0.0
  %275 = vmatprep.subr.mxu0 0.0
  %276 = vmatpush1.msra.mxu0 0.0
  %277 = vmatprep.subr.mxu0 0.0
  %278 = vmatpush1.msra.mxu0 0.0
  %279 = vmatprep.subr.mxu0 0.0
  %280 = vmatpush1.msra.mxu0 0.0
  %281 = vmatprep.subr.mxu0 0.0
  %282 = vmatpush1.msra.mxu0 0.0
  %283 = vmatprep.subr.mxu0 0.0
  %284 = vmatpush1.msra.mxu0 0.0
  %285 = vmatprep.subr.mxu0 0.0
  %286 = vmatpush1.msra.mxu0 0.0
  %287 = vmatprep.subr.mxu0 0.0
  %288 = vmatpush1.msra.mxu0 0.0
  %289 = vmatprep.subr.mxu0 0.0
  %290 = vmatpush1.msra.mxu0 0.0
  %291 = vmatprep.subr.mxu0 0.0
  %292 = vmatpush1.msra.mxu0 0.0
  %293 = vmatprep.subr.mxu0 0.0
  %294 = vmatpush1.msra.mxu0 0.0
  %295 = vmatprep.subr.mxu0 0.0
  %296 = vmatpush1.msra.mxu0 0.0
  %297 = vmatprep.subr.mxu0 0.0
  %298 = vmatpush1.msra.mxu0 0.0
  %299 = vmatprep.subr.mxu0 0.0
  %300 = vmatpush1.msra.mxu0 0.0
  %301 = vmatprep.mubr.f32.mxu0 0.0
  %v302 = vand.u32 %v43, 4294901760
  %v303 = vsub.f32 %v43, %v302
  %304 = vmatmul.mubr.f32.gmra.mrb[0].mxu0 %v303
  %v305 = vpop.f32.mrb[0].mxu0
  %v306 = vadd.f32 %v220, %v305
  %v307 = vpop.f32.mrb[0].mxu0
  %308 = vmatprep.mubr.f32.mxu0 0.0
  %v309 = vand.u32 %v46, 4294901760
  %v310 = vsub.f32 %v46, %v309
  %311 = vmatmul.mubr.f32.gmra.mrb[0].mxu0 %v310
  %v312 = vpop.f32.mrb[0].mxu0
  %v313 = vadd.f32 %v226, %v312
  %v314 = vpop.f32.mrb[0].mxu0
  %315 = vmatprep.mubr.f32.mxu0 0.0
  %v316 = vand.u32 %v49, 4294901760
  %v317 = vsub.f32 %v49, %v316
  %318 = vmatmul.mubr.f32.gmra.mrb[0].mxu0 %v317
  %v319 = vpop.f32.mrb[0].mxu0
  %v320 = vadd.f32 %v232, %v319
  %v321 = vpop.f32.mrb[0].mxu0
  %322 = vdwg.mxu0
  %323 = vmatprep.subr.mxu0 0.0
  %v324 = vand.u32 %v37, 4294901760
  %325 = vmatpush1.msra.mxu0 %v324
  %326 = vmatprep.subr.mxu0 0.0
  %327 = vmatpush1.msra.mxu0 0.0
  %328 = vmatprep.subr.mxu0 0.0
  %329 = vmatpush1.msra.mxu0 0.0
  %330 = vmatprep.subr.mxu0 0.0
  %331 = vmatpush1.msra.mxu0 0.0
  %332 = vmatprep.subr.mxu0 0.0
  %333 = vmatpush1.msra.mxu0 0.0
  %334 = vmatprep.subr.mxu0 0.0
  %335 = vmatpush1.msra.mxu0 0.0
  %336 = vmatprep.subr.mxu0 0.0
  %337 = vmatpush1.msra.mxu0 0.0
  %338 = vmatprep.subr.mxu0 0.0
  %339 = vmatpush1.msra.mxu0 0.0
  %340 = vmatprep.subr.mxu0 0.0
  %341 = vmatpush1.msra.mxu0 0.0
  %342 = vmatprep.subr.mxu0 0.0
  %343 = vmatpush1.msra.mxu0 0.0
  %344 = vmatprep.subr.mxu0 0.0
  %345 = vmatpush1.msra.mxu0 0.0
  %346 = vmatprep.subr.mxu0 0.0
  %347 = vmatpush1.msra.mxu0 0.0
  %348 = vmatprep.subr.mxu0 0.0
  %349 = vmatpush1.msra.mxu0 0.0
  %350 = vmatprep.subr.mxu0 0.0
  %351 = vmatpush1.msra.mxu0 0.0
  %352 = vmatprep.subr.mxu0 0.0
  %353 = vmatpush1.msra.mxu0 0.0
  %354 = vmatprep.subr.mxu0 0.0
  %355 = vmatpush1.msra.mxu0 0.0
  %356 = vmatprep.subr.mxu0 0.0
  %357 = vmatpush1.msra.mxu0 0.0
  %358 = vmatprep.subr.mxu0 0.0
  %359 = vmatpush1.msra.mxu0 0.0
  %360 = vmatprep.subr.mxu0 0.0
  %361 = vmatpush1.msra.mxu0 0.0
  %362 = vmatprep.subr.mxu0 0.0
  %363 = vmatpush1.msra.mxu0 0.0
  %364 = vmatprep.subr.mxu0 0.0
  %365 = vmatpush1.msra.mxu0 0.0
  %366 = vmatprep.subr.mxu0 0.0
  %367 = vmatpush1.msra.mxu0 0.0
  %368 = vmatprep.subr.mxu0 0.0
  %369 = vmatpush1.msra.mxu0 0.0
  %370 = vmatprep.subr.mxu0 0.0
  %371 = vmatpush1.msra.mxu0 0.0
  %372 = vmatprep.subr.mxu0 0.0
  %373 = vmatpush1.msra.mxu0 0.0
  %374 = vmatprep.subr.mxu0 0.0
  %375 = vmatpush1.msra.mxu0 0.0
  %376 = vmatprep.subr.mxu0 0.0
  %377 = vmatpush1.msra.mxu0 0.0
  %378 = vmatprep.subr.mxu0 0.0
  %379 = vmatpush1.msra.mxu0 0.0
  %380 = vmatprep.subr.mxu0 0.0
  %381 = vmatpush1.msra.mxu0 0.0
  %382 = vmatprep.subr.mxu0 0.0
  %383 = vmatpush1.msra.mxu0 0.0
  %384 = vmatprep.subr.mxu0 0.0
  %385 = vmatpush1.msra.mxu0 0.0
  %386 = vmatprep.subr.mxu0 0.0
  %387 = vmatpush1.msra.mxu0 0.0
  %388 = vmatprep.mubr.f32.mxu0 0.0
  %v389 = vand.u32 %v43, 4294901760
  %v390 = vsub.f32 %v43, %v389
  %v391 = vand.u32 %v390, 4294901760
  %392 = vmatmul.mubr.f32.gmra.mrb[0].mxu0 %v391
  %v393 = vpop.f32.mrb[0].mxu0
  %v394 = vadd.f32 %v306, %v393
  %v395 = vpop.f32.mrb[0].mxu0
  %396 = vmatprep.mubr.f32.mxu0 0.0
  %v397 = vand.u32 %v46, 4294901760
  %v398 = vsub.f32 %v46, %v397
  %v399 = vand.u32 %v398, 4294901760
  %400 = vmatmul.mubr.f32.gmra.mrb[0].mxu0 %v399
  %v401 = vpop.f32.mrb[0].mxu0
  %v402 = vadd.f32 %v313, %v401
  %v403 = vpop.f32.mrb[0].mxu0
  %404 = vmatprep.mubr.f32.mxu0 0.0
  %v405 = vand.u32 %v49, 4294901760
  %v406 = vsub.f32 %v49, %v405
  %v407 = vand.u32 %v406, 4294901760
  %408 = vmatmul.mubr.f32.gmra.mrb[0].mxu0 %v407
  %v409 = vpop.f32.mrb[0].mxu0
  %v410 = vadd.f32 %v320, %v409
  %v411 = vpop.f32.mrb[0].mxu0
  %412 = vdwg.mxu0
  %413 = vmatprep.subr.mxu0 0.0
  %v414 = vand.u32 %v37, 4294901760
  %v415 = vsub.f32 %v37, %v414
  %v416 = vand.u32 %v415, 4294901760
  %417 = vmatpush1.msra.mxu0 %v416
  %418 = vmatprep.subr.mxu0 0.0
  %419 = vmatpush1.msra.mxu0 0.0
  %420 = vmatprep.subr.mxu0 0.0
  %421 = vmatpush1.msra.mxu0 0.0
  %422 = vmatprep.subr.mxu0 0.0
  %423 = vmatpush1.msra.mxu0 0.0
  %424 = vmatprep.subr.mxu0 0.0
  %425 = vmatpush1.msra.mxu0 0.0
  %426 = vmatprep.subr.mxu0 0.0
  %427 = vmatpush1.msra.mxu0 0.0
  %428 = vmatprep.subr.mxu0 0.0
  %429 = vmatpush1.msra.mxu0 0.0
  %430 = vmatprep.subr.mxu0 0.0
  %431 = vmatpush1.msra.mxu0 0.0
  %432 = vmatprep.subr.mxu0 0.0
  %433 = vmatpush1.msra.mxu0 0.0
  %434 = vmatprep.subr.mxu0 0.0
  %435 = vmatpush1.msra.mxu0 0.0
  %436 = vmatprep.subr.mxu0 0.0
  %437 = vmatpush1.msra.mxu0 0.0
  %438 = vmatprep.subr.mxu0 0.0
  %439 = vmatpush1.msra.mxu0 0.0
  %440 = vmatprep.subr.mxu0 0.0
  %441 = vmatpush1.msra.mxu0 0.0
  %442 = vmatprep.subr.mxu0 0.0
  %443 = vmatpush1.msra.mxu0 0.0
  %444 = vmatprep.subr.mxu0 0.0
  %445 = vmatpush1.msra.mxu0 0.0
  %446 = vmatprep.subr.mxu0 0.0
  %447 = vmatpush1.msra.mxu0 0.0
  %448 = vmatprep.subr.mxu0 0.0
  %449 = vmatpush1.msra.mxu0 0.0
  %450 = vmatprep.subr.mxu0 0.0
  %451 = vmatpush1.msra.mxu0 0.0
  %452 = vmatprep.subr.mxu0 0.0
  %453 = vmatpush1.msra.mxu0 0.0
  %454 = vmatprep.subr.mxu0 0.0
  %455 = vmatpush1.msra.mxu0 0.0
  %456 = vmatprep.subr.mxu0 0.0
  %457 = vmatpush1.msra.mxu0 0.0
  %458 = vmatprep.subr.mxu0 0.0
  %459 = vmatpush1.msra.mxu0 0.0
  %460 = vmatprep.subr.mxu0 0.0
  %461 = vmatpush1.msra.mxu0 0.0
  %462 = vmatprep.subr.mxu0 0.0
  %463 = vmatpush1.msra.mxu0 0.0
  %464 = vmatprep.subr.mxu0 0.0
  %465 = vmatpush1.msra.mxu0 0.0
  %466 = vmatprep.subr.mxu0 0.0
  %467 = vmatpush1.msra.mxu0 0.0
  %468 = vmatprep.subr.mxu0 0.0
  %469 = vmatpush1.msra.mxu0 0.0
  %470 = vmatprep.subr.mxu0 0.0
  %471 = vmatpush1.msra.mxu0 0.0
  %472 = vmatprep.subr.mxu0 0.0
  %473 = vmatpush1.msra.mxu0 0.0
  %474 = vmatprep.subr.mxu0 0.0
  %475 = vmatpush1.msra.mxu0 0.0
  %476 = vmatprep.subr.mxu0 0.0
  %477 = vmatpush1.msra.mxu0 0.0
  %478 = vmatprep.subr.mxu0 0.0
  %479 = vmatpush1.msra.mxu0 0.0
  %480 = vmatprep.mubr.f32.mxu0 0.0
  %v481 = vand.u32 %v43, 4294901760
  %482 = vmatmul.mubr.f32.gmra.mrb[0].mxu0 %v481
  %v483 = vpop.f32.mrb[0].mxu0
  %v484 = vadd.f32 %v394, %v483
  %v485 = vpop.f32.mrb[0].mxu0
  %486 = vmatprep.mubr.f32.mxu0 0.0
  %v487 = vand.u32 %v46, 4294901760
  %488 = vmatmul.mubr.f32.gmra.mrb[0].mxu0 %v487
  %v489 = vpop.f32.mrb[0].mxu0
  %v490 = vadd.f32 %v402, %v489
  %v491 = vpop.f32.mrb[0].mxu0
  %492 = vmatprep.mubr.f32.mxu0 0.0
  %v493 = vand.u32 %v49, 4294901760
  %494 = vmatmul.mubr.f32.gmra.mrb[0].mxu0 %v493
  %v495 = vpop.f32.mrb[0].mxu0
  %v496 = vadd.f32 %v410, %v495
  %v497 = vpop.f32.mrb[0].mxu0
  %498 = vdwg.mxu0
  %499 = vmatprep.subr.mxu0 0.0
  %v500 = vand.u32 %v37, 4294901760
  %501 = vmatpush1.msra.mxu0 %v500
  %502 = vmatprep.subr.mxu0 0.0
  %503 = vmatpush1.msra.mxu0 0.0
  %504 = vmatprep.subr.mxu0 0.0
  %505 = vmatpush1.msra.mxu0 0.0
  %506 = vmatprep.subr.mxu0 0.0
  %507 = vmatpush1.msra.mxu0 0.0
  %508 = vmatprep.subr.mxu0 0.0
  %509 = vmatpush1.msra.mxu0 0.0
  %510 = vmatprep.subr.mxu0 0.0
  %511 = vmatpush1.msra.mxu0 0.0
  %512 = vmatprep.subr.mxu0 0.0
  %513 = vmatpush1.msra.mxu0 0.0
  %514 = vmatprep.subr.mxu0 0.0
  %515 = vmatpush1.msra.mxu0 0.0
  %516 = vmatprep.subr.mxu0 0.0
  %517 = vmatpush1.msra.mxu0 0.0
  %518 = vmatprep.subr.mxu0 0.0
  %519 = vmatpush1.msra.mxu0 0.0
  %520 = vmatprep.subr.mxu0 0.0
  %521 = vmatpush1.msra.mxu0 0.0
  %522 = vmatprep.subr.mxu0 0.0
  %523 = vmatpush1.msra.mxu0 0.0
  %524 = vmatprep.subr.mxu0 0.0
  %525 = vmatpush1.msra.mxu0 0.0
  %526 = vmatprep.subr.mxu0 0.0
  %527 = vmatpush1.msra.mxu0 0.0
  %528 = vmatprep.subr.mxu0 0.0
  %529 = vmatpush1.msra.mxu0 0.0
  %530 = vmatprep.subr.mxu0 0.0
  %531 = vmatpush1.msra.mxu0 0.0
  %532 = vmatprep.subr.mxu0 0.0
  %533 = vmatpush1.msra.mxu0 0.0
  %534 = vmatprep.subr.mxu0 0.0
  %535 = vmatpush1.msra.mxu0 0.0
  %536 = vmatprep.subr.mxu0 0.0
  %537 = vmatpush1.msra.mxu0 0.0
  %538 = vmatprep.subr.mxu0 0.0
  %539 = vmatpush1.msra.mxu0 0.0
  %540 = vmatprep.subr.mxu0 0.0
  %541 = vmatpush1.msra.mxu0 0.0
  %542 = vmatprep.subr.mxu0 0.0
  %543 = vmatpush1.msra.mxu0 0.0
  %544 = vmatprep.subr.mxu0 0.0
  %545 = vmatpush1.msra.mxu0 0.0
  %546 = vmatprep.subr.mxu0 0.0
  %547 = vmatpush1.msra.mxu0 0.0
  %548 = vmatprep.subr.mxu0 0.0
  %549 = vmatpush1.msra.mxu0 0.0
  %550 = vmatprep.subr.mxu0 0.0
  %551 = vmatpush1.msra.mxu0 0.0
  %552 = vmatprep.subr.mxu0 0.0
  %553 = vmatpush1.msra.mxu0 0.0
  %554 = vmatprep.subr.mxu0 0.0
  %555 = vmatpush1.msra.mxu0 0.0
  %556 = vmatprep.subr.mxu0 0.0
  %557 = vmatpush1.msra.mxu0 0.0
  %558 = vmatprep.subr.mxu0 0.0
  %559 = vmatpush1.msra.mxu0 0.0
  %560 = vmatprep.subr.mxu0 0.0
  %561 = vmatpush1.msra.mxu0 0.0
  %562 = vmatprep.subr.mxu0 0.0
  %563 = vmatpush1.msra.mxu0 0.0
  %564 = vmatprep.mubr.f32.mxu0 0.0
  %v565 = vand.u32 %v43, 4294901760
  %566 = vmatmul.mubr.f32.gmra.mrb[0].mxu0 %v565
  %v567 = vpop.f32.mrb[0].mxu0
  %v568 = vadd.f32 %v484, %v567
  %v569 = vpop.f32.mrb[0].mxu0
  %570 = vmatprep.mubr.f32.mxu0 0.0
  %v571 = vand.u32 %v46, 4294901760
  %572 = vmatmul.mubr.f32.gmra.mrb[0].mxu0 %v571
  %v573 = vpop.f32.mrb[0].mxu0
  %v574 = vadd.f32 %v490, %v573
  %v575 = vpop.f32.mrb[0].mxu0
  %576 = vmatprep.mubr.f32.mxu0 0.0
  %v577 = vand.u32 %v49, 4294901760
  %578 = vmatmul.mubr.f32.gmra.mrb[0].mxu0 %v577
  %v579 = vpop.f32.mrb[0].mxu0
  %v580 = vadd.f32 %v496, %v579
  %v581 = vpop.f32.mrb[0].mxu0
  %582 = vdwg.mxu0
  %v583 = vld [vmem:[%s3] sm:$0xff]
  %v585 = vsel %vm41, %v31, 0
  %v588 = vsel %vm41, %v32, 0
  %590 = vmatprep.subr.mxu0 0.0
  %v591 = vand.u32 %v583, 4294901760
  %592 = vmatpush1.msra.mxu0 %v591
  %593 = vmatprep.subr.mxu0 0.0
  %594 = vmatpush1.msra.mxu0 0.0
  %595 = vmatprep.subr.mxu0 0.0
  %596 = vmatpush1.msra.mxu0 0.0
  %597 = vmatprep.subr.mxu0 0.0
  %598 = vmatpush1.msra.mxu0 0.0
  %599 = vmatprep.subr.mxu0 0.0
  %600 = vmatpush1.msra.mxu0 0.0
  %601 = vmatprep.subr.mxu0 0.0
  %602 = vmatpush1.msra.mxu0 0.0
  %603 = vmatprep.subr.mxu0 0.0
  %604 = vmatpush1.msra.mxu0 0.0
  %605 = vmatprep.subr.mxu0 0.0
  %606 = vmatpush1.msra.mxu0 0.0
  %607 = vmatprep.subr.mxu0 0.0
  %608 = vmatpush1.msra.mxu0 0.0
  %609 = vmatprep.subr.mxu0 0.0
  %610 = vmatpush1.msra.mxu0 0.0
  %611 = vmatprep.subr.mxu0 0.0
  %612 = vmatpush1.msra.mxu0 0.0
  %613 = vmatprep.subr.mxu0 0.0
  %614 = vmatpush1.msra.mxu0 0.0
  %615 = vmatprep.subr.mxu0 0.0
  %616 = vmatpush1.msra.mxu0 0.0
  %617 = vmatprep.subr.mxu0 0.0
  %618 = vmatpush1.msra.mxu0 0.0
  %619 = vmatprep.subr.mxu0 0.0
  %620 = vmatpush1.msra.mxu0 0.0
  %621 = vmatprep.subr.mxu0 0.0
  %622 = vmatpush1.msra.mxu0 0.0
  %623 = vmatprep.subr.mxu0 0.0
  %624 = vmatpush1.msra.mxu0 0.0
  %625 = vmatprep.subr.mxu0 0.0
  %626 = vmatpush1.msra.mxu0 0.0
  %627 = vmatprep.subr.mxu0 0.0
  %628 = vmatpush1.msra.mxu0 0.0
  %629 = vmatprep.subr.mxu0 0.0
  %630 = vmatpush1.msra.mxu0 0.0
  %631 = vmatprep.subr.mxu0 0.0
  %632 = vmatpush1.msra.mxu0 0.0
  %633 = vmatprep.subr.mxu0 0.0
  %634 = vmatpush1.msra.mxu0 0.0
  %635 = vmatprep.subr.mxu0 0.0
  %636 = vmatpush1.msra.mxu0 0.0
  %637 = vmatprep.subr.mxu0 0.0
  %638 = vmatpush1.msra.mxu0 0.0
  %639 = vmatprep.subr.mxu0 0.0
  %640 = vmatpush1.msra.mxu0 0.0
  %641 = vmatprep.subr.mxu0 0.0
  %642 = vmatpush1.msra.mxu0 0.0
  %643 = vmatprep.subr.mxu0 0.0
  %644 = vmatpush1.msra.mxu0 0.0
  %645 = vmatprep.subr.mxu0 0.0
  %646 = vmatpush1.msra.mxu0 0.0
  %647 = vmatprep.subr.mxu0 0.0
  %648 = vmatpush1.msra.mxu0 0.0
  %649 = vmatprep.subr.mxu0 0.0
  %650 = vmatpush1.msra.mxu0 0.0
  %651 = vmatprep.subr.mxu0 0.0
  %652 = vmatpush1.msra.mxu0 0.0
  %653 = vmatprep.subr.mxu0 0.0
  %654 = vmatpush1.msra.mxu0 0.0
  %655 = vmatprep.mubr.f32.mxu0 0.0
  %v656 = vand.u32 %v585, 4294901760
  %v657 = vsub.f32 %v585, %v656
  %v658 = vand.u32 %v657, 4294901760
  %v659 = vsub.f32 %v657, %v658
  %v660 = vand.u32 %v659, 4294901760
  %661 = vmatmul.mubr.f32.gmra.mrb[0].mxu0 %v660
  %v662 = vpop.f32.mrb[0].mxu0
  %v663 = vadd.f32 0.0, %v662
  %v664 = vpop.f32.mrb[0].mxu0
  %665 = vmatprep.mubr.f32.mxu0 0.0
  %v666 = vand.u32 %v588, 4294901760
  %v667 = vsub.f32 %v588, %v666
  %v668 = vand.u32 %v667, 4294901760
  %v669 = vsub.f32 %v667, %v668
  %v670 = vand.u32 %v669, 4294901760
  %671 = vmatmul.mubr.f32.gmra.mrb[0].mxu0 %v670
  %v672 = vpop.f32.mrb[0].mxu0
  %v673 = vadd.f32 0.0, %v672
  %v674 = vpop.f32.mrb[0].mxu0
  %675 = vdwg.mxu0
  %676 = vmatprep.subr.mxu0 0.0
  %v677 = vand.u32 %v583, 4294901760
  %v678 = vsub.f32 %v583, %v677
  %v679 = vand.u32 %v678, 4294901760
  %v680 = vsub.f32 %v678, %v679
  %v681 = vand.u32 %v680, 4294901760
  %682 = vmatpush1.msra.mxu0 %v681
  %683 = vmatprep.subr.mxu0 0.0
  %684 = vmatpush1.msra.mxu0 0.0
  %685 = vmatprep.subr.mxu0 0.0
  %686 = vmatpush1.msra.mxu0 0.0
  %687 = vmatprep.subr.mxu0 0.0
  %688 = vmatpush1.msra.mxu0 0.0
  %689 = vmatprep.subr.mxu0 0.0
  %690 = vmatpush1.msra.mxu0 0.0
  %691 = vmatprep.subr.mxu0 0.0
  %692 = vmatpush1.msra.mxu0 0.0
  %693 = vmatprep.subr.mxu0 0.0
  %694 = vmatpush1.msra.mxu0 0.0
  %695 = vmatprep.subr.mxu0 0.0
  %696 = vmatpush1.msra.mxu0 0.0
  %697 = vmatprep.subr.mxu0 0.0
  %698 = vmatpush1.msra.mxu0 0.0
  %699 = vmatprep.subr.mxu0 0.0
  %700 = vmatpush1.msra.mxu0 0.0
  %701 = vmatprep.subr.mxu0 0.0
  %702 = vmatpush1.msra.mxu0 0.0
  %703 = vmatprep.subr.mxu0 0.0
  %704 = vmatpush1.msra.mxu0 0.0
  %705 = vmatprep.subr.mxu0 0.0
  %706 = vmatpush1.msra.mxu0 0.0
  %707 = vmatprep.subr.mxu0 0.0
  %708 = vmatpush1.msra.mxu0 0.0
  %709 = vmatprep.subr.mxu0 0.0
  %710 = vmatpush1.msra.mxu0 0.0
  %711 = vmatprep.subr.mxu0 0.0
  %712 = vmatpush1.msra.mxu0 0.0
  %713 = vmatprep.subr.mxu0 0.0
  %714 = vmatpush1.msra.mxu0 0.0
  %715 = vmatprep.subr.mxu0 0.0
  %716 = vmatpush1.msra.mxu0 0.0
  %717 = vmatprep.subr.mxu0 0.0
  %718 = vmatpush1.msra.mxu0 0.0
  %719 = vmatprep.subr.mxu0 0.0
  %720 = vmatpush1.msra.mxu0 0.0
  %721 = vmatprep.subr.mxu0 0.0
  %722 = vmatpush1.msra.mxu0 0.0
  %723 = vmatprep.subr.mxu0 0.0
  %724 = vmatpush1.msra.mxu0 0.0
  %725 = vmatprep.subr.mxu0 0.0
  %726 = vmatpush1.msra.mxu0 0.0
  %727 = vmatprep.subr.mxu0 0.0
  %728 = vmatpush1.msra.mxu0 0.0
  %729 = vmatprep.subr.mxu0 0.0
  %730 = vmatpush1.msra.mxu0 0.0
  %731 = vmatprep.subr.mxu0 0.0
  %732 = vmatpush1.msra.mxu0 0.0
  %733 = vmatprep.subr.mxu0 0.0
  %734 = vmatpush1.msra.mxu0 0.0
  %735 = vmatprep.subr.mxu0 0.0
  %736 = vmatpush1.msra.mxu0 0.0
  %737 = vmatprep.subr.mxu0 0.0
  %738 = vmatpush1.msra.mxu0 0.0
  %739 = vmatprep.subr.mxu0 0.0
  %740 = vmatpush1.msra.mxu0 0.0
  %741 = vmatprep.subr.mxu0 0.0
  %742 = vmatpush1.msra.mxu0 0.0
  %743 = vmatprep.subr.mxu0 0.0
  %744 = vmatpush1.msra.mxu0 0.0
  %745 = vmatprep.mubr.f32.mxu0 0.0
  %v746 = vand.u32 %v585, 4294901760
  %747 = vmatmul.mubr.f32.gmra.mrb[0].mxu0 %v746
  %v748 = vpop.f32.mrb[0].mxu0
  %v749 = vadd.f32 %v663, %v748
  %v750 = vpop.f32.mrb[0].mxu0
  %751 = vmatprep.mubr.f32.mxu0 0.0
  %v752 = vand.u32 %v588, 4294901760
  %753 = vmatmul.mubr.f32.gmra.mrb[0].mxu0 %v752
  %v754 = vpop.f32.mrb[0].mxu0
  %v755 = vadd.f32 %v673, %v754
  %v756 = vpop.f32.mrb[0].mxu0
  %757 = vdwg.mxu0
  %758 = vmatprep.subr.mxu0 0.0
  %v759 = vand.u32 %v583, 4294901760
  %v760 = vsub.f32 %v583, %v759
  %761 = vmatpush1.msra.mxu0 %v760
  %762 = vmatprep.subr.mxu0 0.0
  %763 = vmatpush1.msra.mxu0 0.0
  %764 = vmatprep.subr.mxu0 0.0
  %765 = vmatpush1.msra.mxu0 0.0
  %766 = vmatprep.subr.mxu0 0.0
  %767 = vmatpush1.msra.mxu0 0.0
  %768 = vmatprep.subr.mxu0 0.0
  %769 = vmatpush1.msra.mxu0 0.0
  %770 = vmatprep.subr.mxu0 0.0
  %771 = vmatpush1.msra.mxu0 0.0
  %772 = vmatprep.subr.mxu0 0.0
  %773 = vmatpush1.msra.mxu0 0.0
  %774 = vmatprep.subr.mxu0 0.0
  %775 = vmatpush1.msra.mxu0 0.0
  %776 = vmatprep.subr.mxu0 0.0
  %777 = vmatpush1.msra.mxu0 0.0
  %778 = vmatprep.subr.mxu0 0.0
  %779 = vmatpush1.msra.mxu0 0.0
  %780 = vmatprep.subr.mxu0 0.0
  %781 = vmatpush1.msra.mxu0 0.0
  %782 = vmatprep.subr.mxu0 0.0
  %783 = vmatpush1.msra.mxu0 0.0
  %784 = vmatprep.subr.mxu0 0.0
  %785 = vmatpush1.msra.mxu0 0.0
  %786 = vmatprep.subr.mxu0 0.0
  %787 = vmatpush1.msra.mxu0 0.0
  %788 = vmatprep.subr.mxu0 0.0
  %789 = vmatpush1.msra.mxu0 0.0
  %790 = vmatprep.subr.mxu0 0.0
  %791 = vmatpush1.msra.mxu0 0.0
  %792 = vmatprep.subr.mxu0 0.0
  %793 = vmatpush1.msra.mxu0 0.0
  %794 = vmatprep.subr.mxu0 0.0
  %795 = vmatpush1.msra.mxu0 0.0
  %796 = vmatprep.subr.mxu0 0.0
  %797 = vmatpush1.msra.mxu0 0.0
  %798 = vmatprep.subr.mxu0 0.0
  %799 = vmatpush1.msra.mxu0 0.0
  %800 = vmatprep.subr.mxu0 0.0
  %801 = vmatpush1.msra.mxu0 0.0
  %802 = vmatprep.subr.mxu0 0.0
  %803 = vmatpush1.msra.mxu0 0.0
  %804 = vmatprep.subr.mxu0 0.0
  %805 = vmatpush1.msra.mxu0 0.0
  %806 = vmatprep.subr.mxu0 0.0
  %807 = vmatpush1.msra.mxu0 0.0
  %808 = vmatprep.subr.mxu0 0.0
  %809 = vmatpush1.msra.mxu0 0.0
  %810 = vmatprep.subr.mxu0 0.0
  %811 = vmatpush1.msra.mxu0 0.0
  %812 = vmatprep.subr.mxu0 0.0
  %813 = vmatpush1.msra.mxu0 0.0
  %814 = vmatprep.subr.mxu0 0.0
  %815 = vmatpush1.msra.mxu0 0.0
  %816 = vmatprep.subr.mxu0 0.0
  %817 = vmatpush1.msra.mxu0 0.0
  %818 = vmatprep.subr.mxu0 0.0
  %819 = vmatpush1.msra.mxu0 0.0
  %820 = vmatprep.subr.mxu0 0.0
  %821 = vmatpush1.msra.mxu0 0.0
  %822 = vmatprep.subr.mxu0 0.0
  %823 = vmatpush1.msra.mxu0 0.0
  %824 = vmatprep.mubr.f32.mxu0 0.0
  %v825 = vand.u32 %v585, 4294901760
  %v826 = vsub.f32 %v585, %v825
  %827 = vmatmul.mubr.f32.gmra.mrb[0].mxu0 %v826
  %v828 = vpop.f32.mrb[0].mxu0
  %v829 = vadd.f32 %v749, %v828
  %v830 = vpop.f32.mrb[0].mxu0
  %831 = vmatprep.mubr.f32.mxu0 0.0
  %v832 = vand.u32 %v588, 4294901760
  %v833 = vsub.f32 %v588, %v832
  %834 = vmatmul.mubr.f32.gmra.mrb[0].mxu0 %v833
  %v835 = vpop.f32.mrb[0].mxu0
  %v836 = vadd.f32 %v755, %v835
  %v837 = vpop.f32.mrb[0].mxu0
  %838 = vdwg.mxu0
  %839 = vmatprep.subr.mxu0 0.0
  %v840 = vand.u32 %v583, 4294901760
  %841 = vmatpush1.msra.mxu0 %v840
  %842 = vmatprep.subr.mxu0 0.0
  %843 = vmatpush1.msra.mxu0 0.0
  %844 = vmatprep.subr.mxu0 0.0
  %845 = vmatpush1.msra.mxu0 0.0
  %846 = vmatprep.subr.mxu0 0.0
  %847 = vmatpush1.msra.mxu0 0.0
  %848 = vmatprep.subr.mxu0 0.0
  %849 = vmatpush1.msra.mxu0 0.0
  %850 = vmatprep.subr.mxu0 0.0
  %851 = vmatpush1.msra.mxu0 0.0
  %852 = vmatprep.subr.mxu0 0.0
  %853 = vmatpush1.msra.mxu0 0.0
  %854 = vmatprep.subr.mxu0 0.0
  %855 = vmatpush1.msra.mxu0 0.0
  %856 = vmatprep.subr.mxu0 0.0
  %857 = vmatpush1.msra.mxu0 0.0
  %858 = vmatprep.subr.mxu0 0.0
  %859 = vmatpush1.msra.mxu0 0.0
  %860 = vmatprep.subr.mxu0 0.0
  %861 = vmatpush1.msra.mxu0 0.0
  %862 = vmatprep.subr.mxu0 0.0
  %863 = vmatpush1.msra.mxu0 0.0
  %864 = vmatprep.subr.mxu0 0.0
  %865 = vmatpush1.msra.mxu0 0.0
  %866 = vmatprep.subr.mxu0 0.0
  %867 = vmatpush1.msra.mxu0 0.0
  %868 = vmatprep.subr.mxu0 0.0
  %869 = vmatpush1.msra.mxu0 0.0
  %870 = vmatprep.subr.mxu0 0.0
  %871 = vmatpush1.msra.mxu0 0.0
  %872 = vmatprep.subr.mxu0 0.0
  %873 = vmatpush1.msra.mxu0 0.0
  %874 = vmatprep.subr.mxu0 0.0
  %875 = vmatpush1.msra.mxu0 0.0
  %876 = vmatprep.subr.mxu0 0.0
  %877 = vmatpush1.msra.mxu0 0.0
  %878 = vmatprep.subr.mxu0 0.0
  %879 = vmatpush1.msra.mxu0 0.0
  %880 = vmatprep.subr.mxu0 0.0
  %881 = vmatpush1.msra.mxu0 0.0
  %882 = vmatprep.subr.mxu0 0.0
  %883 = vmatpush1.msra.mxu0 0.0
  %884 = vmatprep.subr.mxu0 0.0
  %885 = vmatpush1.msra.mxu0 0.0
  %886 = vmatprep.subr.mxu0 0.0
  %887 = vmatpush1.msra.mxu0 0.0
  %888 = vmatprep.subr.mxu0 0.0
  %889 = vmatpush1.msra.mxu0 0.0
  %890 = vmatprep.subr.mxu0 0.0
  %891 = vmatpush1.msra.mxu0 0.0
  %892 = vmatprep.subr.mxu0 0.0
  %893 = vmatpush1.msra.mxu0 0.0
  %894 = vmatprep.subr.mxu0 0.0
  %895 = vmatpush1.msra.mxu0 0.0
  %896 = vmatprep.subr.mxu0 0.0
  %897 = vmatpush1.msra.mxu0 0.0
  %898 = vmatprep.subr.mxu0 0.0
  %899 = vmatpush1.msra.mxu0 0.0
  %900 = vmatprep.subr.mxu0 0.0
  %901 = vmatpush1.msra.mxu0 0.0
  %902 = vmatprep.subr.mxu0 0.0
  %903 = vmatpush1.msra.mxu0 0.0
  %904 = vmatprep.mubr.f32.mxu0 0.0
  %v905 = vand.u32 %v585, 4294901760
  %v906 = vsub.f32 %v585, %v905
  %v907 = vand.u32 %v906, 4294901760
  %908 = vmatmul.mubr.f32.gmra.mrb[0].mxu0 %v907
  %v909 = vpop.f32.mrb[0].mxu0
  %v910 = vadd.f32 %v829, %v909
  %v911 = vpop.f32.mrb[0].mxu0
  %912 = vmatprep.mubr.f32.mxu0 0.0
  %v913 = vand.u32 %v588, 4294901760
  %v914 = vsub.f32 %v588, %v913
  %v915 = vand.u32 %v914, 4294901760
  %916 = vmatmul.mubr.f32.gmra.mrb[0].mxu0 %v915
  %v917 = vpop.f32.mrb[0].mxu0
  %v918 = vadd.f32 %v836, %v917
  %v919 = vpop.f32.mrb[0].mxu0
  %920 = vdwg.mxu0
  %921 = vmatprep.subr.mxu0 0.0
  %v922 = vand.u32 %v583, 4294901760
  %v923 = vsub.f32 %v583, %v922
  %v924 = vand.u32 %v923, 4294901760
  %925 = vmatpush1.msra.mxu0 %v924
  %926 = vmatprep.subr.mxu0 0.0
  %927 = vmatpush1.msra.mxu0 0.0
  %928 = vmatprep.subr.mxu0 0.0
  %929 = vmatpush1.msra.mxu0 0.0
  %930 = vmatprep.subr.mxu0 0.0
  %931 = vmatpush1.msra.mxu0 0.0
  %932 = vmatprep.subr.mxu0 0.0
  %933 = vmatpush1.msra.mxu0 0.0
  %934 = vmatprep.subr.mxu0 0.0
  %935 = vmatpush1.msra.mxu0 0.0
  %936 = vmatprep.subr.mxu0 0.0
  %937 = vmatpush1.msra.mxu0 0.0
  %938 = vmatprep.subr.mxu0 0.0
  %939 = vmatpush1.msra.mxu0 0.0
  %940 = vmatprep.subr.mxu0 0.0
  %941 = vmatpush1.msra.mxu0 0.0
  %942 = vmatprep.subr.mxu0 0.0
  %943 = vmatpush1.msra.mxu0 0.0
  %944 = vmatprep.subr.mxu0 0.0
  %945 = vmatpush1.msra.mxu0 0.0
  %946 = vmatprep.subr.mxu0 0.0
  %947 = vmatpush1.msra.mxu0 0.0
  %948 = vmatprep.subr.mxu0 0.0
  %949 = vmatpush1.msra.mxu0 0.0
  %950 = vmatprep.subr.mxu0 0.0
  %951 = vmatpush1.msra.mxu0 0.0
  %952 = vmatprep.subr.mxu0 0.0
  %953 = vmatpush1.msra.mxu0 0.0
  %954 = vmatprep.subr.mxu0 0.0
  %955 = vmatpush1.msra.mxu0 0.0
  %956 = vmatprep.subr.mxu0 0.0
  %957 = vmatpush1.msra.mxu0 0.0
  %958 = vmatprep.subr.mxu0 0.0
  %959 = vmatpush1.msra.mxu0 0.0
  %960 = vmatprep.subr.mxu0 0.0
  %961 = vmatpush1.msra.mxu0 0.0
  %962 = vmatprep.subr.mxu0 0.0
  %963 = vmatpush1.msra.mxu0 0.0
  %964 = vmatprep.subr.mxu0 0.0
  %965 = vmatpush1.msra.mxu0 0.0
  %966 = vmatprep.subr.mxu0 0.0
  %967 = vmatpush1.msra.mxu0 0.0
  %968 = vmatprep.subr.mxu0 0.0
  %969 = vmatpush1.msra.mxu0 0.0
  %970 = vmatprep.subr.mxu0 0.0
  %971 = vmatpush1.msra.mxu0 0.0
  %972 = vmatprep.subr.mxu0 0.0
  %973 = vmatpush1.msra.mxu0 0.0
  %974 = vmatprep.subr.mxu0 0.0
  %975 = vmatpush1.msra.mxu0 0.0
  %976 = vmatprep.subr.mxu0 0.0
  %977 = vmatpush1.msra.mxu0 0.0
  %978 = vmatprep.subr.mxu0 0.0
  %979 = vmatpush1.msra.mxu0 0.0
  %980 = vmatprep.subr.mxu0 0.0
  %981 = vmatpush1.msra.mxu0 0.0
  %982 = vmatprep.subr.mxu0 0.0
  %983 = vmatpush1.msra.mxu0 0.0
  %984 = vmatprep.subr.mxu0 0.0
  %985 = vmatpush1.msra.mxu0 0.0
  %986 = vmatprep.subr.mxu0 0.0
  %987 = vmatpush1.msra.mxu0 0.0
  %988 = vmatprep.mubr.f32.mxu0 0.0
  %v989 = vand.u32 %v585, 4294901760
  %990 = vmatmul.mubr.f32.gmra.mrb[0].mxu0 %v989
  %v991 = vpop.f32.mrb[0].mxu0
  %v992 = vadd.f32 %v910, %v991
  %v993 = vpop.f32.mrb[0].mxu0
  %994 = vmatprep.mubr.f32.mxu0 0.0
  %v995 = vand.u32 %v588, 4294901760
  %996 = vmatmul.mubr.f32.gmra.mrb[0].mxu0 %v995
  %v997 = vpop.f32.mrb[0].mxu0
  %v998 = vadd.f32 %v918, %v997
  %v999 = vpop.f32.mrb[0].mxu0
  %1000 = vdwg.mxu0
  %1001 = vmatprep.subr.mxu0 0.0
  %v1002 = vand.u32 %v583, 4294901760
  %1003 = vmatpush1.msra.mxu0 %v1002
  %1004 = vmatprep.subr.mxu0 0.0
  %1005 = vmatpush1.msra.mxu0 0.0
  %1006 = vmatprep.subr.mxu0 0.0
  %1007 = vmatpush1.msra.mxu0 0.0
  %1008 = vmatprep.subr.mxu0 0.0
  %1009 = vmatpush1.msra.mxu0 0.0
  %1010 = vmatprep.subr.mxu0 0.0
  %1011 = vmatpush1.msra.mxu0 0.0
  %1012 = vmatprep.subr.mxu0 0.0
  %1013 = vmatpush1.msra.mxu0 0.0
  %1014 = vmatprep.subr.mxu0 0.0
  %1015 = vmatpush1.msra.mxu0 0.0
  %1016 = vmatprep.subr.mxu0 0.0
  %1017 = vmatpush1.msra.mxu0 0.0
  %1018 = vmatprep.subr.mxu0 0.0
  %1019 = vmatpush1.msra.mxu0 0.0
  %1020 = vmatprep.subr.mxu0 0.0
  %1021 = vmatpush1.msra.mxu0 0.0
  %1022 = vmatprep.subr.mxu0 0.0
  %1023 = vmatpush1.msra.mxu0 0.0
  %1024 = vmatprep.subr.mxu0 0.0
  %1025 = vmatpush1.msra.mxu0 0.0
  %1026 = vmatprep.subr.mxu0 0.0
  %1027 = vmatpush1.msra.mxu0 0.0
  %1028 = vmatprep.subr.mxu0 0.0
  %1029 = vmatpush1.msra.mxu0 0.0
  %1030 = vmatprep.subr.mxu0 0.0
  %1031 = vmatpush1.msra.mxu0 0.0
  %1032 = vmatprep.subr.mxu0 0.0
  %1033 = vmatpush1.msra.mxu0 0.0
  %1034 = vmatprep.subr.mxu0 0.0
  %1035 = vmatpush1.msra.mxu0 0.0
  %1036 = vmatprep.subr.mxu0 0.0
  %1037 = vmatpush1.msra.mxu0 0.0
  %1038 = vmatprep.subr.mxu0 0.0
  %1039 = vmatpush1.msra.mxu0 0.0
  %1040 = vmatprep.subr.mxu0 0.0
  %1041 = vmatpush1.msra.mxu0 0.0
  %1042 = vmatprep.subr.mxu0 0.0
  %1043 = vmatpush1.msra.mxu0 0.0
  %1044 = vmatprep.subr.mxu0 0.0
  %1045 = vmatpush1.msra.mxu0 0.0
  %1046 = vmatprep.subr.mxu0 0.0
  %1047 = vmatpush1.msra.mxu0 0.0
  %1048 = vmatprep.subr.mxu0 0.0
  %1049 = vmatpush1.msra.mxu0 0.0
  %1050 = vmatprep.subr.mxu0 0.0
  %1051 = vmatpush1.msra.mxu0 0.0
  %1052 = vmatprep.subr.mxu0 0.0
  %1053 = vmatpush1.msra.mxu0 0.0
  %1054 = vmatprep.subr.mxu0 0.0
  %1055 = vmatpush1.msra.mxu0 0.0
  %1056 = vmatprep.subr.mxu0 0.0
  %1057 = vmatpush1.msra.mxu0 0.0
  %1058 = vmatprep.subr.mxu0 0.0
  %1059 = vmatpush1.msra.mxu0 0.0
  %1060 = vmatprep.subr.mxu0 0.0
  %1061 = vmatpush1.msra.mxu0 0.0
  %1062 = vmatprep.subr.mxu0 0.0
  %1063 = vmatpush1.msra.mxu0 0.0
  %1064 = vmatprep.subr.mxu0 0.0
  %1065 = vmatpush1.msra.mxu0 0.0
  %1066 = vmatprep.mubr.f32.mxu0 0.0
  %v1067 = vand.u32 %v585, 4294901760
  %1068 = vmatmul.mubr.f32.gmra.mrb[0].mxu0 %v1067
  %v1069 = vpop.f32.mrb[0].mxu0
  %v1070 = vadd.f32 %v992, %v1069
  %v1071 = vpop.f32.mrb[0].mxu0
  %1072 = vmatprep.mubr.f32.mxu0 0.0
  %v1073 = vand.u32 %v588, 4294901760
  %1074 = vmatmul.mubr.f32.gmra.mrb[0].mxu0 %v1073
  %v1075 = vpop.f32.mrb[0].mxu0
  %v1076 = vadd.f32 %v998, %v1075
  %v1077 = vpop.f32.mrb[0].mxu0
  %1078 = vdwg.mxu0
  %v1079 = vadd.f32 %v568, %v1070
  %v1080 = vxor.u32 %v1079, 2147483648
  %v1081 = vmul.f32 %v1080, 1.442695
  %v1082 = vpow.pop %v1081
  %v1083 = vadd.f32 %v1082, 1.0
  %v1084 = vrcp.pop %v1083
  %v1085 = vmul.f32 1.0, %v1084
  %v1086 = vadd.f32 %v574, %v1076
  %v1087 = vxor.u32 %v1086, 2147483648
  %v1088 = vmul.f32 %v1087, 1.442695
  %v1089 = vpow.pop %v1088
  %v1090 = vadd.f32 %v1089, 1.0
  %v1091 = vrcp.pop %v1090
  %v1092 = vmul.f32 1.0, %v1091
  %v1093 = vmul.f32 %v1092, %v583
  %v1095 = vsel %vm41, %v33, 0
  %1097 = vmatprep.subr.mxu0 0.0
  %v1098 = vand.u32 %v1093, 4294901760
  %1099 = vmatpush1.msra.mxu0 %v1098
  %1100 = vmatprep.subr.mxu0 0.0
  %1101 = vmatpush1.msra.mxu0 0.0
  %1102 = vmatprep.subr.mxu0 0.0
  %1103 = vmatpush1.msra.mxu0 0.0
  %1104 = vmatprep.subr.mxu0 0.0
  %1105 = vmatpush1.msra.mxu0 0.0
  %1106 = vmatprep.subr.mxu0 0.0
  %1107 = vmatpush1.msra.mxu0 0.0
  %1108 = vmatprep.subr.mxu0 0.0
  %1109 = vmatpush1.msra.mxu0 0.0
  %1110 = vmatprep.subr.mxu0 0.0
  %1111 = vmatpush1.msra.mxu0 0.0
  %1112 = vmatprep.subr.mxu0 0.0
  %1113 = vmatpush1.msra.mxu0 0.0
  %1114 = vmatprep.subr.mxu0 0.0
  %1115 = vmatpush1.msra.mxu0 0.0
  %1116 = vmatprep.subr.mxu0 0.0
  %1117 = vmatpush1.msra.mxu0 0.0
  %1118 = vmatprep.subr.mxu0 0.0
  %1119 = vmatpush1.msra.mxu0 0.0
  %1120 = vmatprep.subr.mxu0 0.0
  %1121 = vmatpush1.msra.mxu0 0.0
  %1122 = vmatprep.subr.mxu0 0.0
  %1123 = vmatpush1.msra.mxu0 0.0
  %1124 = vmatprep.subr.mxu0 0.0
  %1125 = vmatpush1.msra.mxu0 0.0
  %1126 = vmatprep.subr.mxu0 0.0
  %1127 = vmatpush1.msra.mxu0 0.0
  %1128 = vmatprep.subr.mxu0 0.0
  %1129 = vmatpush1.msra.mxu0 0.0
  %1130 = vmatprep.subr.mxu0 0.0
  %1131 = vmatpush1.msra.mxu0 0.0
  %1132 = vmatprep.subr.mxu0 0.0
  %1133 = vmatpush1.msra.mxu0 0.0
  %1134 = vmatprep.subr.mxu0 0.0
  %1135 = vmatpush1.msra.mxu0 0.0
  %1136 = vmatprep.subr.mxu0 0.0
  %1137 = vmatpush1.msra.mxu0 0.0
  %1138 = vmatprep.subr.mxu0 0.0
  %1139 = vmatpush1.msra.mxu0 0.0
  %1140 = vmatprep.subr.mxu0 0.0
  %1141 = vmatpush1.msra.mxu0 0.0
  %1142 = vmatprep.subr.mxu0 0.0
  %1143 = vmatpush1.msra.mxu0 0.0
  %1144 = vmatprep.subr.mxu0 0.0
  %1145 = vmatpush1.msra.mxu0 0.0
  %1146 = vmatprep.subr.mxu0 0.0
  %1147 = vmatpush1.msra.mxu0 0.0
  %1148 = vmatprep.subr.mxu0 0.0
  %1149 = vmatpush1.msra.mxu0 0.0
  %1150 = vmatprep.subr.mxu0 0.0
  %1151 = vmatpush1.msra.mxu0 0.0
  %1152 = vmatprep.subr.mxu0 0.0
  %1153 = vmatpush1.msra.mxu0 0.0
  %1154 = vmatprep.subr.mxu0 0.0
  %1155 = vmatpush1.msra.mxu0 0.0
  %1156 = vmatprep.subr.mxu0 0.0
  %1157 = vmatpush1.msra.mxu0 0.0
  %1158 = vmatprep.subr.mxu0 0.0
  %1159 = vmatpush1.msra.mxu0 0.0
  %1160 = vmatprep.subr.mxu0 0.0
  %1161 = vmatpush1.msra.mxu0 0.0
  %1162 = vmatprep.mubr.f32.mxu0 0.0
  %v1163 = vand.u32 %v1095, 4294901760
  %v1164 = vsub.f32 %v1095, %v1163
  %v1165 = vand.u32 %v1164, 4294901760
  %v1166 = vsub.f32 %v1164, %v1165
  %v1167 = vand.u32 %v1166, 4294901760
  %1168 = vmatmul.mubr.f32.gmra.mrb[0].mxu0 %v1167
  %v1169 = vpop.f32.mrb[0].mxu0
  %v1170 = vadd.f32 0.0, %v1169
  %v1171 = vpop.f32.mrb[0].mxu0
  %1172 = vdwg.mxu0
  %1173 = vmatprep.subr.mxu0 0.0
  %v1174 = vand.u32 %v1093, 4294901760
  %v1175 = vsub.f32 %v1093, %v1174
  %v1176 = vand.u32 %v1175, 4294901760
  %v1177 = vsub.f32 %v1175, %v1176
  %v1178 = vand.u32 %v1177, 4294901760
  %1179 = vmatpush1.msra.mxu0 %v1178
  %1180 = vmatprep.subr.mxu0 0.0
  %1181 = vmatpush1.msra.mxu0 0.0
  %1182 = vmatprep.subr.mxu0 0.0
  %1183 = vmatpush1.msra.mxu0 0.0
  %1184 = vmatprep.subr.mxu0 0.0
  %1185 = vmatpush1.msra.mxu0 0.0
  %1186 = vmatprep.subr.mxu0 0.0
  %1187 = vmatpush1.msra.mxu0 0.0
  %1188 = vmatprep.subr.mxu0 0.0
  %1189 = vmatpush1.msra.mxu0 0.0
  %1190 = vmatprep.subr.mxu0 0.0
  %1191 = vmatpush1.msra.mxu0 0.0
  %1192 = vmatprep.subr.mxu0 0.0
  %1193 = vmatpush1.msra.mxu0 0.0
  %1194 = vmatprep.subr.mxu0 0.0
  %1195 = vmatpush1.msra.mxu0 0.0
  %1196 = vmatprep.subr.mxu0 0.0
  %1197 = vmatpush1.msra.mxu0 0.0
  %1198 = vmatprep.subr.mxu0 0.0
  %1199 = vmatpush1.msra.mxu0 0.0
  %1200 = vmatprep.subr.mxu0 0.0
  %1201 = vmatpush1.msra.mxu0 0.0
  %1202 = vmatprep.subr.mxu0 0.0
  %1203 = vmatpush1.msra.mxu0 0.0
  %1204 = vmatprep.subr.mxu0 0.0
  %1205 = vmatpush1.msra.mxu0 0.0
  %1206 = vmatprep.subr.mxu0 0.0
  %1207 = vmatpush1.msra.mxu0 0.0
  %1208 = vmatprep.subr.mxu0 0.0
  %1209 = vmatpush1.msra.mxu0 0.0
  %1210 = vmatprep.subr.mxu0 0.0
  %1211 = vmatpush1.msra.mxu0 0.0
  %1212 = vmatprep.subr.mxu0 0.0
  %1213 = vmatpush1.msra.mxu0 0.0
  %1214 = vmatprep.subr.mxu0 0.0
  %1215 = vmatpush1.msra.mxu0 0.0
  %1216 = vmatprep.subr.mxu0 0.0
  %1217 = vmatpush1.msra.mxu0 0.0
  %1218 = vmatprep.subr.mxu0 0.0
  %1219 = vmatpush1.msra.mxu0 0.0
  %1220 = vmatprep.subr.mxu0 0.0
  %1221 = vmatpush1.msra.mxu0 0.0
  %1222 = vmatprep.subr.mxu0 0.0
  %1223 = vmatpush1.msra.mxu0 0.0
  %1224 = vmatprep.subr.mxu0 0.0
  %1225 = vmatpush1.msra.mxu0 0.0
  %1226 = vmatprep.subr.mxu0 0.0
  %1227 = vmatpush1.msra.mxu0 0.0
  %1228 = vmatprep.subr.mxu0 0.0
  %1229 = vmatpush1.msra.mxu0 0.0
  %1230 = vmatprep.subr.mxu0 0.0
  %1231 = vmatpush1.msra.mxu0 0.0
  %1232 = vmatprep.subr.mxu0 0.0
  %1233 = vmatpush1.msra.mxu0 0.0
  %1234 = vmatprep.subr.mxu0 0.0
  %1235 = vmatpush1.msra.mxu0 0.0
  %1236 = vmatprep.subr.mxu0 0.0
  %1237 = vmatpush1.msra.mxu0 0.0
  %1238 = vmatprep.subr.mxu0 0.0
  %1239 = vmatpush1.msra.mxu0 0.0
  %1240 = vmatprep.subr.mxu0 0.0
  %1241 = vmatpush1.msra.mxu0 0.0
  %1242 = vmatprep.mubr.f32.mxu0 0.0
  %v1243 = vand.u32 %v1095, 4294901760
  %1244 = vmatmul.mubr.f32.gmra.mrb[0].mxu0 %v1243
  %v1245 = vpop.f32.mrb[0].mxu0
  %v1246 = vadd.f32 %v1170, %v1245
  %v1247 = vpop.f32.mrb[0].mxu0
  %1248 = vdwg.mxu0
  %1249 = vmatprep.subr.mxu0 0.0
  %v1250 = vand.u32 %v1093, 4294901760
  %v1251 = vsub.f32 %v1093, %v1250
  %1252 = vmatpush1.msra.mxu0 %v1251
  %1253 = vmatprep.subr.mxu0 0.0
  %1254 = vmatpush1.msra.mxu0 0.0
  %1255 = vmatprep.subr.mxu0 0.0
  %1256 = vmatpush1.msra.mxu0 0.0
  %1257 = vmatprep.subr.mxu0 0.0
  %1258 = vmatpush1.msra.mxu0 0.0
  %1259 = vmatprep.subr.mxu0 0.0
  %1260 = vmatpush1.msra.mxu0 0.0
  %1261 = vmatprep.subr.mxu0 0.0
  %1262 = vmatpush1.msra.mxu0 0.0
  %1263 = vmatprep.subr.mxu0 0.0
  %1264 = vmatpush1.msra.mxu0 0.0
  %1265 = vmatprep.subr.mxu0 0.0
  %1266 = vmatpush1.msra.mxu0 0.0
  %1267 = vmatprep.subr.mxu0 0.0
  %1268 = vmatpush1.msra.mxu0 0.0
  %1269 = vmatprep.subr.mxu0 0.0
  %1270 = vmatpush1.msra.mxu0 0.0
  %1271 = vmatprep.subr.mxu0 0.0
  %1272 = vmatpush1.msra.mxu0 0.0
  %1273 = vmatprep.subr.mxu0 0.0
  %1274 = vmatpush1.msra.mxu0 0.0
  %1275 = vmatprep.subr.mxu0 0.0
  %1276 = vmatpush1.msra.mxu0 0.0
  %1277 = vmatprep.subr.mxu0 0.0
  %1278 = vmatpush1.msra.mxu0 0.0
  %1279 = vmatprep.subr.mxu0 0.0
  %1280 = vmatpush1.msra.mxu0 0.0
  %1281 = vmatprep.subr.mxu0 0.0
  %1282 = vmatpush1.msra.mxu0 0.0
  %1283 = vmatprep.subr.mxu0 0.0
  %1284 = vmatpush1.msra.mxu0 0.0
  %1285 = vmatprep.subr.mxu0 0.0
  %1286 = vmatpush1.msra.mxu0 0.0
  %1287 = vmatprep.subr.mxu0 0.0
  %1288 = vmatpush1.msra.mxu0 0.0
  %1289 = vmatprep.subr.mxu0 0.0
  %1290 = vmatpush1.msra.mxu0 0.0
  %1291 = vmatprep.subr.mxu0 0.0
  %1292 = vmatpush1.msra.mxu0 0.0
  %1293 = vmatprep.subr.mxu0 0.0
  %1294 = vmatpush1.msra.mxu0 0.0
  %1295 = vmatprep.subr.mxu0 0.0
  %1296 = vmatpush1.msra.mxu0 0.0
  %1297 = vmatprep.subr.mxu0 0.0
  %1298 = vmatpush1.msra.mxu0 0.0
  %1299 = vmatprep.subr.mxu0 0.0
  %1300 = vmatpush1.msra.mxu0 0.0
  %1301 = vmatprep.subr.mxu0 0.0
  %1302 = vmatpush1.msra.mxu0 0.0
  %1303 = vmatprep.subr.mxu0 0.0
  %1304 = vmatpush1.msra.mxu0 0.0
  %1305 = vmatprep.subr.mxu0 0.0
  %1306 = vmatpush1.msra.mxu0 0.0
  %1307 = vmatprep.subr.mxu0 0.0
  %1308 = vmatpush1.msra.mxu0 0.0
  %1309 = vmatprep.subr.mxu0 0.0
  %1310 = vmatpush1.msra.mxu0 0.0
  %1311 = vmatprep.subr.mxu0 0.0
  %1312 = vmatpush1.msra.mxu0 0.0
  %1313 = vmatprep.subr.mxu0 0.0
  %1314 = vmatpush1.msra.mxu0 0.0
  %1315 = vmatprep.mubr.f32.mxu0 0.0
  %v1316 = vand.u32 %v1095, 4294901760
  %v1317 = vsub.f32 %v1095, %v1316
  %1318 = vmatmul.mubr.f32.gmra.mrb[0].mxu0 %v1317
  %v1319 = vpop.f32.mrb[0].mxu0
  %v1320 = vadd.f32 %v1246, %v1319
  %v1321 = vpop.f32.mrb[0].mxu0
  %1322 = vdwg.mxu0
  %1323 = vmatprep.subr.mxu0 0.0
  %v1324 = vand.u32 %v1093, 4294901760
  %1325 = vmatpush1.msra.mxu0 %v1324
  %1326 = vmatprep.subr.mxu0 0.0
  %1327 = vmatpush1.msra.mxu0 0.0
  %1328 = vmatprep.subr.mxu0 0.0
  %1329 = vmatpush1.msra.mxu0 0.0
  %1330 = vmatprep.subr.mxu0 0.0
  %1331 = vmatpush1.msra.mxu0 0.0
  %1332 = vmatprep.subr.mxu0 0.0
  %1333 = vmatpush1.msra.mxu0 0.0
  %1334 = vmatprep.subr.mxu0 0.0
  %1335 = vmatpush1.msra.mxu0 0.0
  %1336 = vmatprep.subr.mxu0 0.0
  %1337 = vmatpush1.msra.mxu0 0.0
  %1338 = vmatprep.subr.mxu0 0.0
  %1339 = vmatpush1.msra.mxu0 0.0
  %1340 = vmatprep.subr.mxu0 0.0
  %1341 = vmatpush1.msra.mxu0 0.0
  %1342 = vmatprep.subr.mxu0 0.0
  %1343 = vmatpush1.msra.mxu0 0.0
  %1344 = vmatprep.subr.mxu0 0.0
  %1345 = vmatpush1.msra.mxu0 0.0
  %1346 = vmatprep.subr.mxu0 0.0
  %1347 = vmatpush1.msra.mxu0 0.0
  %1348 = vmatprep.subr.mxu0 0.0
  %1349 = vmatpush1.msra.mxu0 0.0
  %1350 = vmatprep.subr.mxu0 0.0
  %1351 = vmatpush1.msra.mxu0 0.0
  %1352 = vmatprep.subr.mxu0 0.0
  %1353 = vmatpush1.msra.mxu0 0.0
  %1354 = vmatprep.subr.mxu0 0.0
  %1355 = vmatpush1.msra.mxu0 0.0
  %1356 = vmatprep.subr.mxu0 0.0
  %1357 = vmatpush1.msra.mxu0 0.0
  %1358 = vmatprep.subr.mxu0 0.0
  %1359 = vmatpush1.msra.mxu0 0.0
  %1360 = vmatprep.subr.mxu0 0.0
  %1361 = vmatpush1.msra.mxu0 0.0
  %1362 = vmatprep.subr.mxu0 0.0
  %1363 = vmatpush1.msra.mxu0 0.0
  %1364 = vmatprep.subr.mxu0 0.0
  %1365 = vmatpush1.msra.mxu0 0.0
  %1366 = vmatprep.subr.mxu0 0.0
  %1367 = vmatpush1.msra.mxu0 0.0
  %1368 = vmatprep.subr.mxu0 0.0
  %1369 = vmatpush1.msra.mxu0 0.0
  %1370 = vmatprep.subr.mxu0 0.0
  %1371 = vmatpush1.msra.mxu0 0.0
  %1372 = vmatprep.subr.mxu0 0.0
  %1373 = vmatpush1.msra.mxu0 0.0
  %1374 = vmatprep.subr.mxu0 0.0
  %1375 = vmatpush1.msra.mxu0 0.0
  %1376 = vmatprep.subr.mxu0 0.0
  %1377 = vmatpush1.msra.mxu0 0.0
  %1378 = vmatprep.subr.mxu0 0.0
  %1379 = vmatpush1.msra.mxu0 0.0
  %1380 = vmatprep.subr.mxu0 0.0
  %1381 = vmatpush1.msra.mxu0 0.0
  %1382 = vmatprep.subr.mxu0 0.0
  %1383 = vmatpush1.msra.mxu0 0.0
  %1384 = vmatprep.subr.mxu0 0.0
  %1385 = vmatpush1.msra.mxu0 0.0
  %1386 = vmatprep.subr.mxu0 0.0
  %1387 = vmatpush1.msra.mxu0 0.0
  %1388 = vmatprep.mubr.f32.mxu0 0.0
  %v1389 = vand.u32 %v1095, 4294901760
  %v1390 = vsub.f32 %v1095, %v1389
  %v1391 = vand.u32 %v1390, 4294901760
  %1392 = vmatmul.mubr.f32.gmra.mrb[0].mxu0 %v1391
  %v1393 = vpop.f32.mrb[0].mxu0
  %v1394 = vadd.f32 %v1320, %v1393
  %v1395 = vpop.f32.mrb[0].mxu0
  %1396 = vdwg.mxu0
  %1397 = vmatprep.subr.mxu0 0.0
  %v1398 = vand.u32 %v1093, 4294901760
  %v1399 = vsub.f32 %v1093, %v1398
  %v1400 = vand.u32 %v1399, 4294901760
  %1401 = vmatpush1.msra.mxu0 %v1400
  %1402 = vmatprep.subr.mxu0 0.0
  %1403 = vmatpush1.msra.mxu0 0.0
  %1404 = vmatprep.subr.mxu0 0.0
  %1405 = vmatpush1.msra.mxu0 0.0
  %1406 = vmatprep.subr.mxu0 0.0
  %1407 = vmatpush1.msra.mxu0 0.0
  %1408 = vmatprep.subr.mxu0 0.0
  %1409 = vmatpush1.msra.mxu0 0.0
  %1410 = vmatprep.subr.mxu0 0.0
  %1411 = vmatpush1.msra.mxu0 0.0
  %1412 = vmatprep.subr.mxu0 0.0
  %1413 = vmatpush1.msra.mxu0 0.0
  %1414 = vmatprep.subr.mxu0 0.0
  %1415 = vmatpush1.msra.mxu0 0.0
  %1416 = vmatprep.subr.mxu0 0.0
  %1417 = vmatpush1.msra.mxu0 0.0
  %1418 = vmatprep.subr.mxu0 0.0
  %1419 = vmatpush1.msra.mxu0 0.0
  %1420 = vmatprep.subr.mxu0 0.0
  %1421 = vmatpush1.msra.mxu0 0.0
  %1422 = vmatprep.subr.mxu0 0.0
  %1423 = vmatpush1.msra.mxu0 0.0
  %1424 = vmatprep.subr.mxu0 0.0
  %1425 = vmatpush1.msra.mxu0 0.0
  %1426 = vmatprep.subr.mxu0 0.0
  %1427 = vmatpush1.msra.mxu0 0.0
  %1428 = vmatprep.subr.mxu0 0.0
  %1429 = vmatpush1.msra.mxu0 0.0
  %1430 = vmatprep.subr.mxu0 0.0
  %1431 = vmatpush1.msra.mxu0 0.0
  %1432 = vmatprep.subr.mxu0 0.0
  %1433 = vmatpush1.msra.mxu0 0.0
  %1434 = vmatprep.subr.mxu0 0.0
  %1435 = vmatpush1.msra.mxu0 0.0
  %1436 = vmatprep.subr.mxu0 0.0
  %1437 = vmatpush1.msra.mxu0 0.0
  %1438 = vmatprep.subr.mxu0 0.0
  %1439 = vmatpush1.msra.mxu0 0.0
  %1440 = vmatprep.subr.mxu0 0.0
  %1441 = vmatpush1.msra.mxu0 0.0
  %1442 = vmatprep.subr.mxu0 0.0
  %1443 = vmatpush1.msra.mxu0 0.0
  %1444 = vmatprep.subr.mxu0 0.0
  %1445 = vmatpush1.msra.mxu0 0.0
  %1446 = vmatprep.subr.mxu0 0.0
  %1447 = vmatpush1.msra.mxu0 0.0
  %1448 = vmatprep.subr.mxu0 0.0
  %1449 = vmatpush1.msra.mxu0 0.0
  %1450 = vmatprep.subr.mxu0 0.0
  %1451 = vmatpush1.msra.mxu0 0.0
  %1452 = vmatprep.subr.mxu0 0.0
  %1453 = vmatpush1.msra.mxu0 0.0
  %1454 = vmatprep.subr.mxu0 0.0
  %1455 = vmatpush1.msra.mxu0 0.0
  %1456 = vmatprep.subr.mxu0 0.0
  %1457 = vmatpush1.msra.mxu0 0.0
  %1458 = vmatprep.subr.mxu0 0.0
  %1459 = vmatpush1.msra.mxu0 0.0
  %1460 = vmatprep.subr.mxu0 0.0
  %1461 = vmatpush1.msra.mxu0 0.0
  %1462 = vmatprep.subr.mxu0 0.0
  %1463 = vmatpush1.msra.mxu0 0.0
  %1464 = vmatprep.mubr.f32.mxu0 0.0
  %v1465 = vand.u32 %v1095, 4294901760
  %1466 = vmatmul.mubr.f32.gmra.mrb[0].mxu0 %v1465
  %v1467 = vpop.f32.mrb[0].mxu0
  %v1468 = vadd.f32 %v1394, %v1467
  %v1469 = vpop.f32.mrb[0].mxu0
  %1470 = vdwg.mxu0
  %1471 = vmatprep.subr.mxu0 0.0
  %v1472 = vand.u32 %v1093, 4294901760
  %1473 = vmatpush1.msra.mxu0 %v1472
  %1474 = vmatprep.subr.mxu0 0.0
  %1475 = vmatpush1.msra.mxu0 0.0
  %1476 = vmatprep.subr.mxu0 0.0
  %1477 = vmatpush1.msra.mxu0 0.0
  %1478 = vmatprep.subr.mxu0 0.0
  %1479 = vmatpush1.msra.mxu0 0.0
  %1480 = vmatprep.subr.mxu0 0.0
  %1481 = vmatpush1.msra.mxu0 0.0
  %1482 = vmatprep.subr.mxu0 0.0
  %1483 = vmatpush1.msra.mxu0 0.0
  %1484 = vmatprep.subr.mxu0 0.0
  %1485 = vmatpush1.msra.mxu0 0.0
  %1486 = vmatprep.subr.mxu0 0.0
  %1487 = vmatpush1.msra.mxu0 0.0
  %1488 = vmatprep.subr.mxu0 0.0
  %1489 = vmatpush1.msra.mxu0 0.0
  %1490 = vmatprep.subr.mxu0 0.0
  %1491 = vmatpush1.msra.mxu0 0.0
  %1492 = vmatprep.subr.mxu0 0.0
  %1493 = vmatpush1.msra.mxu0 0.0
  %1494 = vmatprep.subr.mxu0 0.0
  %1495 = vmatpush1.msra.mxu0 0.0
  %1496 = vmatprep.subr.mxu0 0.0
  %1497 = vmatpush1.msra.mxu0 0.0
  %1498 = vmatprep.subr.mxu0 0.0
  %1499 = vmatpush1.msra.mxu0 0.0
  %1500 = vmatprep.subr.mxu0 0.0
  %1501 = vmatpush1.msra.mxu0 0.0
  %1502 = vmatprep.subr.mxu0 0.0
  %1503 = vmatpush1.msra.mxu0 0.0
  %1504 = vmatprep.subr.mxu0 0.0
  %1505 = vmatpush1.msra.mxu0 0.0
  %1506 = vmatprep.subr.mxu0 0.0
  %1507 = vmatpush1.msra.mxu0 0.0
  %1508 = vmatprep.subr.mxu0 0.0
  %1509 = vmatpush1.msra.mxu0 0.0
  %1510 = vmatprep.subr.mxu0 0.0
  %1511 = vmatpush1.msra.mxu0 0.0
  %1512 = vmatprep.subr.mxu0 0.0
  %1513 = vmatpush1.msra.mxu0 0.0
  %1514 = vmatprep.subr.mxu0 0.0
  %1515 = vmatpush1.msra.mxu0 0.0
  %1516 = vmatprep.subr.mxu0 0.0
  %1517 = vmatpush1.msra.mxu0 0.0
  %1518 = vmatprep.subr.mxu0 0.0
  %1519 = vmatpush1.msra.mxu0 0.0
  %1520 = vmatprep.subr.mxu0 0.0
  %1521 = vmatpush1.msra.mxu0 0.0
  %1522 = vmatprep.subr.mxu0 0.0
  %1523 = vmatpush1.msra.mxu0 0.0
  %1524 = vmatprep.subr.mxu0 0.0
  %1525 = vmatpush1.msra.mxu0 0.0
  %1526 = vmatprep.subr.mxu0 0.0
  %1527 = vmatpush1.msra.mxu0 0.0
  %1528 = vmatprep.subr.mxu0 0.0
  %1529 = vmatpush1.msra.mxu0 0.0
  %1530 = vmatprep.subr.mxu0 0.0
  %1531 = vmatpush1.msra.mxu0 0.0
  %1532 = vmatprep.subr.mxu0 0.0
  %1533 = vmatpush1.msra.mxu0 0.0
  %1534 = vmatprep.subr.mxu0 0.0
  %1535 = vmatpush1.msra.mxu0 0.0
  %1536 = vmatprep.mubr.f32.mxu0 0.0
  %v1537 = vand.u32 %v1095, 4294901760
  %1538 = vmatmul.mubr.f32.gmra.mrb[0].mxu0 %v1537
  %v1539 = vpop.f32.mrb[0].mxu0
  %v1540 = vadd.f32 %v1468, %v1539
  %v1541 = vpop.f32.mrb[0].mxu0
  %1542 = vdwg.mxu0
  %v1543 = vadd.f32 %v580, %v1540
  %v1544 = vmax.f32 %v1543, 0.0
  %v1545 = vsub.f32 1.0, %v1085
  %v1546 = vmul.f32 %v1545, %v583
  %v1547 = vmul.f32 %v1085, %v1544
  %v1548 = vadd.f32 %v1546, %v1547
  %1549 = vmatprep.subr.mxu0 0.0
  %v1550 = vand.u32 %v1548, 4294901760
  %1551 = vmatpush1.msra.mxu0 %v1550
  %1552 = vmatprep.subr.mxu0 0.0
  %1553 = vmatpush1.msra.mxu0 0.0
  %1554 = vmatprep.subr.mxu0 0.0
  %1555 = vmatpush1.msra.mxu0 0.0
  %1556 = vmatprep.subr.mxu0 0.0
  %1557 = vmatpush1.msra.mxu0 0.0
  %1558 = vmatprep.subr.mxu0 0.0
  %1559 = vmatpush1.msra.mxu0 0.0
  %1560 = vmatprep.subr.mxu0 0.0
  %1561 = vmatpush1.msra.mxu0 0.0
  %1562 = vmatprep.subr.mxu0 0.0
  %1563 = vmatpush1.msra.mxu0 0.0
  %1564 = vmatprep.subr.mxu0 0.0
  %1565 = vmatpush1.msra.mxu0 0.0
  %1566 = vmatprep.subr.mxu0 0.0
  %1567 = vmatpush1.msra.mxu0 0.0
  %1568 = vmatprep.subr.mxu0 0.0
  %1569 = vmatpush1.msra.mxu0 0.0
  %1570 = vmatprep.subr.mxu0 0.0
  %1571 = vmatpush1.msra.mxu0 0.0
  %1572 = vmatprep.subr.mxu0 0.0
  %1573 = vmatpush1.msra.mxu0 0.0
  %1574 = vmatprep.subr.mxu0 0.0
  %1575 = vmatpush1.msra.mxu0 0.0
  %1576 = vmatprep.subr.mxu0 0.0
  %1577 = vmatpush1.msra.mxu0 0.0
  %1578 = vmatprep.subr.mxu0 0.0
  %1579 = vmatpush1.msra.mxu0 0.0
  %1580 = vmatprep.subr.mxu0 0.0
  %1581 = vmatpush1.msra.mxu0 0.0
  %1582 = vmatprep.subr.mxu0 0.0
  %1583 = vmatpush1.msra.mxu0 0.0
  %1584 = vmatprep.subr.mxu0 0.0
  %1585 = vmatpush1.msra.mxu0 0.0
  %1586 = vmatprep.subr.mxu0 0.0
  %1587 = vmatpush1.msra.mxu0 0.0
  %1588 = vmatprep.subr.mxu0 0.0
  %1589 = vmatpush1.msra.mxu0 0.0
  %1590 = vmatprep.subr.mxu0 0.0
  %1591 = vmatpush1.msra.mxu0 0.0
  %1592 = vmatprep.subr.mxu0 0.0
  %1593 = vmatpush1.msra.mxu0 0.0
  %1594 = vmatprep.subr.mxu0 0.0
  %1595 = vmatpush1.msra.mxu0 0.0
  %1596 = vmatprep.subr.mxu0 0.0
  %1597 = vmatpush1.msra.mxu0 0.0
  %1598 = vmatprep.subr.mxu0 0.0
  %1599 = vmatpush1.msra.mxu0 0.0
  %1600 = vmatprep.subr.mxu0 0.0
  %1601 = vmatpush1.msra.mxu0 0.0
  %1602 = vmatprep.subr.mxu0 0.0
  %1603 = vmatpush1.msra.mxu0 0.0
  %1604 = vmatprep.subr.mxu0 0.0
  %1605 = vmatpush1.msra.mxu0 0.0
  %1606 = vmatprep.subr.mxu0 0.0
  %1607 = vmatpush1.msra.mxu0 0.0
  %1608 = vmatprep.subr.mxu0 0.0
  %1609 = vmatpush1.msra.mxu0 0.0
  %1610 = vmatprep.subr.mxu0 0.0
  %1611 = vmatpush1.msra.mxu0 0.0
  %1612 = vmatprep.subr.mxu0 0.0
  %1613 = vmatpush1.msra.mxu0 0.0
  %1614 = vmatprep.mubr.f32.mxu0 0.0
  %v1615 = vand.u32 %v585, 4294901760
  %v1616 = vsub.f32 %v585, %v1615
  %v1617 = vand.u32 %v1616, 4294901760
  %v1618 = vsub.f32 %v1616, %v1617
  %v1619 = vand.u32 %v1618, 4294901760
  %1620 = vmatmul.mubr.f32.gmra.mrb[0].mxu0 %v1619
  %v1621 = vpop.f32.mrb[0].mxu0
  %v1622 = vadd.f32 0.0, %v1621
  %v1623 = vpop.f32.mrb[0].mxu0
  %1624 = vmatprep.mubr.f32.mxu0 0.0
  %v1625 = vand.u32 %v588, 4294901760
  %v1626 = vsub.f32 %v588, %v1625
  %v1627 = vand.u32 %v1626, 4294901760
  %v1628 = vsub.f32 %v1626, %v1627
  %v1629 = vand.u32 %v1628, 4294901760
  %1630 = vmatmul.mubr.f32.gmra.mrb[0].mxu0 %v1629
  %v1631 = vpop.f32.mrb[0].mxu0
  %v1632 = vadd.f32 0.0, %v1631
  %v1633 = vpop.f32.mrb[0].mxu0
  %1634 = vdwg.mxu0
  %1635 = vmatprep.subr.mxu0 0.0
  %v1636 = vand.u32 %v1548, 4294901760
  %v1637 = vsub.f32 %v1548, %v1636
  %v1638 = vand.u32 %v1637, 4294901760
  %v1639 = vsub.f32 %v1637, %v1638
  %v1640 = vand.u32 %v1639, 4294901760
  %1641 = vmatpush1.msra.mxu0 %v1640
  %1642 = vmatprep.subr.mxu0 0.0
  %1643 = vmatpush1.msra.mxu0 0.0
  %1644 = vmatprep.subr.mxu0 0.0
  %1645 = vmatpush1.msra.mxu0 0.0
  %1646 = vmatprep.subr.mxu0 0.0
  %1647 = vmatpush1.msra.mxu0 0.0
  %1648 = vmatprep.subr.mxu0 0.0
  %1649 = vmatpush1.msra.mxu0 0.0
  %1650 = vmatprep.subr.mxu0 0.0
  %1651 = vmatpush1.msra.mxu0 0.0
  %1652 = vmatprep.subr.mxu0 0.0
  %1653 = vmatpush1.msra.mxu0 0.0
  %1654 = vmatprep.subr.mxu0 0.0
  %1655 = vmatpush1.msra.mxu0 0.0
  %1656 = vmatprep.subr.mxu0 0.0
  %1657 = vmatpush1.msra.mxu0 0.0
  %1658 = vmatprep.subr.mxu0 0.0
  %1659 = vmatpush1.msra.mxu0 0.0
  %1660 = vmatprep.subr.mxu0 0.0
  %1661 = vmatpush1.msra.mxu0 0.0
  %1662 = vmatprep.subr.mxu0 0.0
  %1663 = vmatpush1.msra.mxu0 0.0
  %1664 = vmatprep.subr.mxu0 0.0
  %1665 = vmatpush1.msra.mxu0 0.0
  %1666 = vmatprep.subr.mxu0 0.0
  %1667 = vmatpush1.msra.mxu0 0.0
  %1668 = vmatprep.subr.mxu0 0.0
  %1669 = vmatpush1.msra.mxu0 0.0
  %1670 = vmatprep.subr.mxu0 0.0
  %1671 = vmatpush1.msra.mxu0 0.0
  %1672 = vmatprep.subr.mxu0 0.0
  %1673 = vmatpush1.msra.mxu0 0.0
  %1674 = vmatprep.subr.mxu0 0.0
  %1675 = vmatpush1.msra.mxu0 0.0
  %1676 = vmatprep.subr.mxu0 0.0
  %1677 = vmatpush1.msra.mxu0 0.0
  %1678 = vmatprep.subr.mxu0 0.0
  %1679 = vmatpush1.msra.mxu0 0.0
  %1680 = vmatprep.subr.mxu0 0.0
  %1681 = vmatpush1.msra.mxu0 0.0
  %1682 = vmatprep.subr.mxu0 0.0
  %1683 = vmatpush1.msra.mxu0 0.0
  %1684 = vmatprep.subr.mxu0 0.0
  %1685 = vmatpush1.msra.mxu0 0.0
  %1686 = vmatprep.subr.mxu0 0.0
  %1687 = vmatpush1.msra.mxu0 0.0
  %1688 = vmatprep.subr.mxu0 0.0
  %1689 = vmatpush1.msra.mxu0 0.0
  %1690 = vmatprep.subr.mxu0 0.0
  %1691 = vmatpush1.msra.mxu0 0.0
  %1692 = vmatprep.subr.mxu0 0.0
  %1693 = vmatpush1.msra.mxu0 0.0
  %1694 = vmatprep.subr.mxu0 0.0
  %1695 = vmatpush1.msra.mxu0 0.0
  %1696 = vmatprep.subr.mxu0 0.0
  %1697 = vmatpush1.msra.mxu0 0.0
  %1698 = vmatprep.subr.mxu0 0.0
  %1699 = vmatpush1.msra.mxu0 0.0
  %1700 = vmatprep.subr.mxu0 0.0
  %1701 = vmatpush1.msra.mxu0 0.0
  %1702 = vmatprep.subr.mxu0 0.0
  %1703 = vmatpush1.msra.mxu0 0.0
  %1704 = vmatprep.mubr.f32.mxu0 0.0
  %v1705 = vand.u32 %v585, 4294901760
  %1706 = vmatmul.mubr.f32.gmra.mrb[0].mxu0 %v1705
  %v1707 = vpop.f32.mrb[0].mxu0
  %v1708 = vadd.f32 %v1622, %v1707
  %v1709 = vpop.f32.mrb[0].mxu0
  %1710 = vmatprep.mubr.f32.mxu0 0.0
  %v1711 = vand.u32 %v588, 4294901760
  %1712 = vmatmul.mubr.f32.gmra.mrb[0].mxu0 %v1711
  %v1713 = vpop.f32.mrb[0].mxu0
  %v1714 = vadd.f32 %v1632, %v1713
  %v1715 = vpop.f32.mrb[0].mxu0
  %1716 = vdwg.mxu0
  %1717 = vmatprep.subr.mxu0 0.0
  %v1718 = vand.u32 %v1548, 4294901760
  %v1719 = vsub.f32 %v1548, %v1718
  %1720 = vmatpush1.msra.mxu0 %v1719
  %1721 = vmatprep.subr.mxu0 0.0
  %1722 = vmatpush1.msra.mxu0 0.0
  %1723 = vmatprep.subr.mxu0 0.0
  %1724 = vmatpush1.msra.mxu0 0.0
  %1725 = vmatprep.subr.mxu0 0.0
  %1726 = vmatpush1.msra.mxu0 0.0
  %1727 = vmatprep.subr.mxu0 0.0
  %1728 = vmatpush1.msra.mxu0 0.0
  %1729 = vmatprep.subr.mxu0 0.0
  %1730 = vmatpush1.msra.mxu0 0.0
  %1731 = vmatprep.subr.mxu0 0.0
  %1732 = vmatpush1.msra.mxu0 0.0
  %1733 = vmatprep.subr.mxu0 0.0
  %1734 = vmatpush1.msra.mxu0 0.0
  %1735 = vmatprep.subr.mxu0 0.0
  %1736 = vmatpush1.msra.mxu0 0.0
  %1737 = vmatprep.subr.mxu0 0.0
  %1738 = vmatpush1.msra.mxu0 0.0
  %1739 = vmatprep.subr.mxu0 0.0
  %1740 = vmatpush1.msra.mxu0 0.0
  %1741 = vmatprep.subr.mxu0 0.0
  %1742 = vmatpush1.msra.mxu0 0.0
  %1743 = vmatprep.subr.mxu0 0.0
  %1744 = vmatpush1.msra.mxu0 0.0
  %1745 = vmatprep.subr.mxu0 0.0
  %1746 = vmatpush1.msra.mxu0 0.0
  %1747 = vmatprep.subr.mxu0 0.0
  %1748 = vmatpush1.msra.mxu0 0.0
  %1749 = vmatprep.subr.mxu0 0.0
  %1750 = vmatpush1.msra.mxu0 0.0
  %1751 = vmatprep.subr.mxu0 0.0
  %1752 = vmatpush1.msra.mxu0 0.0
  %1753 = vmatprep.subr.mxu0 0.0
  %1754 = vmatpush1.msra.mxu0 0.0
  %1755 = vmatprep.subr.mxu0 0.0
  %1756 = vmatpush1.msra.mxu0 0.0
  %1757 = vmatprep.subr.mxu0 0.0
  %1758 = vmatpush1.msra.mxu0 0.0
  %1759 = vmatprep.subr.mxu0 0.0
  %1760 = vmatpush1.msra.mxu0 0.0
  %1761 = vmatprep.subr.mxu0 0.0
  %1762 = vmatpush1.msra.mxu0 0.0
  %1763 = vmatprep.subr.mxu0 0.0
  %1764 = vmatpush1.msra.mxu0 0.0
  %1765 = vmatprep.subr.mxu0 0.0
  %1766 = vmatpush1.msra.mxu0 0.0
  %1767 = vmatprep.subr.mxu0 0.0
  %1768 = vmatpush1.msra.mxu0 0.0
  %1769 = vmatprep.subr.mxu0 0.0
  %1770 = vmatpush1.msra.mxu0 0.0
  %1771 = vmatprep.subr.mxu0 0.0
  %1772 = vmatpush1.msra.mxu0 0.0
  %1773 = vmatprep.subr.mxu0 0.0
  %1774 = vmatpush1.msra.mxu0 0.0
  %1775 = vmatprep.subr.mxu0 0.0
  %1776 = vmatpush1.msra.mxu0 0.0
  %1777 = vmatprep.subr.mxu0 0.0
  %1778 = vmatpush1.msra.mxu0 0.0
  %1779 = vmatprep.subr.mxu0 0.0
  %1780 = vmatpush1.msra.mxu0 0.0
  %1781 = vmatprep.subr.mxu0 0.0
  %1782 = vmatpush1.msra.mxu0 0.0
  %1783 = vmatprep.mubr.f32.mxu0 0.0
  %v1784 = vand.u32 %v585, 4294901760
  %v1785 = vsub.f32 %v585, %v1784
  %1786 = vmatmul.mubr.f32.gmra.mrb[0].mxu0 %v1785
  %v1787 = vpop.f32.mrb[0].mxu0
  %v1788 = vadd.f32 %v1708, %v1787
  %v1789 = vpop.f32.mrb[0].mxu0
  %1790 = vmatprep.mubr.f32.mxu0 0.0
  %v1791 = vand.u32 %v588, 4294901760
  %v1792 = vsub.f32 %v588, %v1791
  %1793 = vmatmul.mubr.f32.gmra.mrb[0].mxu0 %v1792
  %v1794 = vpop.f32.mrb[0].mxu0
  %v1795 = vadd.f32 %v1714, %v1794
  %v1796 = vpop.f32.mrb[0].mxu0
  %1797 = vdwg.mxu0
  %1798 = vmatprep.subr.mxu0 0.0
  %v1799 = vand.u32 %v1548, 4294901760
  %1800 = vmatpush1.msra.mxu0 %v1799
  %1801 = vmatprep.subr.mxu0 0.0
  %1802 = vmatpush1.msra.mxu0 0.0
  %1803 = vmatprep.subr.mxu0 0.0
  %1804 = vmatpush1.msra.mxu0 0.0
  %1805 = vmatprep.subr.mxu0 0.0
  %1806 = vmatpush1.msra.mxu0 0.0
  %1807 = vmatprep.subr.mxu0 0.0
  %1808 = vmatpush1.msra.mxu0 0.0
  %1809 = vmatprep.subr.mxu0 0.0
  %1810 = vmatpush1.msra.mxu0 0.0
  %1811 = vmatprep.subr.mxu0 0.0
  %1812 = vmatpush1.msra.mxu0 0.0
  %1813 = vmatprep.subr.mxu0 0.0
  %1814 = vmatpush1.msra.mxu0 0.0
  %1815 = vmatprep.subr.mxu0 0.0
  %1816 = vmatpush1.msra.mxu0 0.0
  %1817 = vmatprep.subr.mxu0 0.0
  %1818 = vmatpush1.msra.mxu0 0.0
  %1819 = vmatprep.subr.mxu0 0.0
  %1820 = vmatpush1.msra.mxu0 0.0
  %1821 = vmatprep.subr.mxu0 0.0
  %1822 = vmatpush1.msra.mxu0 0.0
  %1823 = vmatprep.subr.mxu0 0.0
  %1824 = vmatpush1.msra.mxu0 0.0
  %1825 = vmatprep.subr.mxu0 0.0
  %1826 = vmatpush1.msra.mxu0 0.0
  %1827 = vmatprep.subr.mxu0 0.0
  %1828 = vmatpush1.msra.mxu0 0.0
  %1829 = vmatprep.subr.mxu0 0.0
  %1830 = vmatpush1.msra.mxu0 0.0
  %1831 = vmatprep.subr.mxu0 0.0
  %1832 = vmatpush1.msra.mxu0 0.0
  %1833 = vmatprep.subr.mxu0 0.0
  %1834 = vmatpush1.msra.mxu0 0.0
  %1835 = vmatprep.subr.mxu0 0.0
  %1836 = vmatpush1.msra.mxu0 0.0
  %1837 = vmatprep.subr.mxu0 0.0
  %1838 = vmatpush1.msra.mxu0 0.0
  %1839 = vmatprep.subr.mxu0 0.0
  %1840 = vmatpush1.msra.mxu0 0.0
  %1841 = vmatprep.subr.mxu0 0.0
  %1842 = vmatpush1.msra.mxu0 0.0
  %1843 = vmatprep.subr.mxu0 0.0
  %1844 = vmatpush1.msra.mxu0 0.0
  %1845 = vmatprep.subr.mxu0 0.0
  %1846 = vmatpush1.msra.mxu0 0.0
  %1847 = vmatprep.subr.mxu0 0.0
  %1848 = vmatpush1.msra.mxu0 0.0
  %1849 = vmatprep.subr.mxu0 0.0
  %1850 = vmatpush1.msra.mxu0 0.0
  %1851 = vmatprep.subr.mxu0 0.0
  %1852 = vmatpush1.msra.mxu0 0.0
  %1853 = vmatprep.subr.mxu0 0.0
  %1854 = vmatpush1.msra.mxu0 0.0
  %1855 = vmatprep.subr.mxu0 0.0
  %1856 = vmatpush1.msra.mxu0 0.0
  %1857 = vmatprep.subr.mxu0 0.0
  %1858 = vmatpush1.msra.mxu0 0.0
  %1859 = vmatprep.subr.mxu0 0.0
  %1860 = vmatpush1.msra.mxu0 0.0
  %1861 = vmatprep.subr.mxu0 0.0
  %1862 = vmatpush1.msra.mxu0 0.0
  %1863 = vmatprep.mubr.f32.mxu0 0.0
  %v1864 = vand.u32 %v585, 4294901760
  %v1865 = vsub.f32 %v585, %v1864
  %v1866 = vand.u32 %v1865, 4294901760
  %1867 = vmatmul.mubr.f32.gmra.mrb[0].mxu0 %v1866
  %v1868 = vpop.f32.mrb[0].mxu0
  %v1869 = vadd.f32 %v1788, %v1868
  %v1870 = vpop.f32.mrb[0].mxu0
  %1871 = vmatprep.mubr.f32.mxu0 0.0
  %v1872 = vand.u32 %v588, 4294901760
  %v1873 = vsub.f32 %v588, %v1872
  %v1874 = vand.u32 %v1873, 4294901760
  %1875 = vmatmul.mubr.f32.gmra.mrb[0].mxu0 %v1874
  %v1876 = vpop.f32.mrb[0].mxu0
  %v1877 = vadd.f32 %v1795, %v1876
  %v1878 = vpop.f32.mrb[0].mxu0
  %1879 = vdwg.mxu0
  %1880 = vmatprep.subr.mxu0 0.0
  %v1881 = vand.u32 %v1548, 4294901760
  %v1882 = vsub.f32 %v1548, %v1881
  %v1883 = vand.u32 %v1882, 4294901760
  %1884 = vmatpush1.msra.mxu0 %v1883
  %1885 = vmatprep.subr.mxu0 0.0
  %1886 = vmatpush1.msra.mxu0 0.0
  %1887 = vmatprep.subr.mxu0 0.0
  %1888 = vmatpush1.msra.mxu0 0.0
  %1889 = vmatprep.subr.mxu0 0.0
  %1890 = vmatpush1.msra.mxu0 0.0
  %1891 = vmatprep.subr.mxu0 0.0
  %1892 = vmatpush1.msra.mxu0 0.0
  %1893 = vmatprep.subr.mxu0 0.0
  %1894 = vmatpush1.msra.mxu0 0.0
  %1895 = vmatprep.subr.mxu0 0.0
  %1896 = vmatpush1.msra.mxu0 0.0
  %1897 = vmatprep.subr.mxu0 0.0
  %1898 = vmatpush1.msra.mxu0 0.0
  %1899 = vmatprep.subr.mxu0 0.0
  %1900 = vmatpush1.msra.mxu0 0.0
  %1901 = vmatprep.subr.mxu0 0.0
  %1902 = vmatpush1.msra.mxu0 0.0
  %1903 = vmatprep.subr.mxu0 0.0
  %1904 = vmatpush1.msra.mxu0 0.0
  %1905 = vmatprep.subr.mxu0 0.0
  %1906 = vmatpush1.msra.mxu0 0.0
  %1907 = vmatprep.subr.mxu0 0.0
  %1908 = vmatpush1.msra.mxu0 0.0
  %1909 = vmatprep.subr.mxu0 0.0
  %1910 = vmatpush1.msra.mxu0 0.0
  %1911 = vmatprep.subr.mxu0 0.0
  %1912 = vmatpush1.msra.mxu0 0.0
  %1913 = vmatprep.subr.mxu0 0.0
  %1914 = vmatpush1.msra.mxu0 0.0
  %1915 = vmatprep.subr.mxu0 0.0
  %1916 = vmatpush1.msra.mxu0 0.0
  %1917 = vmatprep.subr.mxu0 0.0
  %1918 = vmatpush1.msra.mxu0 0.0
  %1919 = vmatprep.subr.mxu0 0.0
  %1920 = vmatpush1.msra.mxu0 0.0
  %1921 = vmatprep.subr.mxu0 0.0
  %1922 = vmatpush1.msra.mxu0 0.0
  %1923 = vmatprep.subr.mxu0 0.0
  %1924 = vmatpush1.msra.mxu0 0.0
  %1925 = vmatprep.subr.mxu0 0.0
  %1926 = vmatpush1.msra.mxu0 0.0
  %1927 = vmatprep.subr.mxu0 0.0
  %1928 = vmatpush1.msra.mxu0 0.0
  %1929 = vmatprep.subr.mxu0 0.0
  %1930 = vmatpush1.msra.mxu0 0.0
  %1931 = vmatprep.subr.mxu0 0.0
  %1932 = vmatpush1.msra.mxu0 0.0
  %1933 = vmatprep.subr.mxu0 0.0
  %1934 = vmatpush1.msra.mxu0 0.0
  %1935 = vmatprep.subr.mxu0 0.0
  %1936 = vmatpush1.msra.mxu0 0.0
  %1937 = vmatprep.subr.mxu0 0.0
  %1938 = vmatpush1.msra.mxu0 0.0
  %1939 = vmatprep.subr.mxu0 0.0
  %1940 = vmatpush1.msra.mxu0 0.0
  %1941 = vmatprep.subr.mxu0 0.0
  %1942 = vmatpush1.msra.mxu0 0.0
  %1943 = vmatprep.subr.mxu0 0.0
  %1944 = vmatpush1.msra.mxu0 0.0
  %1945 = vmatprep.subr.mxu0 0.0
  %1946 = vmatpush1.msra.mxu0 0.0
  %1947 = vmatprep.mubr.f32.mxu0 0.0
  %v1948 = vand.u32 %v585, 4294901760
  %1949 = vmatmul.mubr.f32.gmra.mrb[0].mxu0 %v1948
  %v1950 = vpop.f32.mrb[0].mxu0
  %v1951 = vadd.f32 %v1869, %v1950
  %v1952 = vpop.f32.mrb[0].mxu0
  %1953 = vmatprep.mubr.f32.mxu0 0.0
  %v1954 = vand.u32 %v588, 4294901760
  %1955 = vmatmul.mubr.f32.gmra.mrb[0].mxu0 %v1954
  %v1956 = vpop.f32.mrb[0].mxu0
  %v1957 = vadd.f32 %v1877, %v1956
  %v1958 = vpop.f32.mrb[0].mxu0
  %1959 = vdwg.mxu0
  %1960 = vmatprep.subr.mxu0 0.0
  %v1961 = vand.u32 %v1548, 4294901760
  %1962 = vmatpush1.msra.mxu0 %v1961
  %1963 = vmatprep.subr.mxu0 0.0
  %1964 = vmatpush1.msra.mxu0 0.0
  %1965 = vmatprep.subr.mxu0 0.0
  %1966 = vmatpush1.msra.mxu0 0.0
  %1967 = vmatprep.subr.mxu0 0.0
  %1968 = vmatpush1.msra.mxu0 0.0
  %1969 = vmatprep.subr.mxu0 0.0
  %1970 = vmatpush1.msra.mxu0 0.0
  %1971 = vmatprep.subr.mxu0 0.0
  %1972 = vmatpush1.msra.mxu0 0.0
  %1973 = vmatprep.subr.mxu0 0.0
  %1974 = vmatpush1.msra.mxu0 0.0
  %1975 = vmatprep.subr.mxu0 0.0
  %1976 = vmatpush1.msra.mxu0 0.0
  %1977 = vmatprep.subr.mxu0 0.0
  %1978 = vmatpush1.msra.mxu0 0.0
  %1979 = vmatprep.subr.mxu0 0.0
  %1980 = vmatpush1.msra.mxu0 0.0
  %1981 = vmatprep.subr.mxu0 0.0
  %1982 = vmatpush1.msra.mxu0 0.0
  %1983 = vmatprep.subr.mxu0 0.0
  %1984 = vmatpush1.msra.mxu0 0.0
  %1985 = vmatprep.subr.mxu0 0.0
  %1986 = vmatpush1.msra.mxu0 0.0
  %1987 = vmatprep.subr.mxu0 0.0
  %1988 = vmatpush1.msra.mxu0 0.0
  %1989 = vmatprep.subr.mxu0 0.0
  %1990 = vmatpush1.msra.mxu0 0.0
  %1991 = vmatprep.subr.mxu0 0.0
  %1992 = vmatpush1.msra.mxu0 0.0
  %1993 = vmatprep.subr.mxu0 0.0
  %1994 = vmatpush1.msra.mxu0 0.0
  %1995 = vmatprep.subr.mxu0 0.0
  %1996 = vmatpush1.msra.mxu0 0.0
  %1997 = vmatprep.subr.mxu0 0.0
  %1998 = vmatpush1.msra.mxu0 0.0
  %1999 = vmatprep.subr.mxu0 0.0
  %2000 = vmatpush1.msra.mxu0 0.0
  %2001 = vmatprep.subr.mxu0 0.0
  %2002 = vmatpush1.msra.mxu0 0.0
  %2003 = vmatprep.subr.mxu0 0.0
  %2004 = vmatpush1.msra.mxu0 0.0
  %2005 = vmatprep.subr.mxu0 0.0
  %2006 = vmatpush1.msra.mxu0 0.0
  %2007 = vmatprep.subr.mxu0 0.0
  %2008 = vmatpush1.msra.mxu0 0.0
  %2009 = vmatprep.subr.mxu0 0.0
  %2010 = vmatpush1.msra.mxu0 0.0
  %2011 = vmatprep.subr.mxu0 0.0
  %2012 = vmatpush1.msra.mxu0 0.0
  %2013 = vmatprep.subr.mxu0 0.0
  %2014 = vmatpush1.msra.mxu0 0.0
  %2015 = vmatprep.subr.mxu0 0.0
  %2016 = vmatpush1.msra.mxu0 0.0
  %2017 = vmatprep.subr.mxu0 0.0
  %2018 = vmatpush1.msra.mxu0 0.0
  %2019 = vmatprep.subr.mxu0 0.0
  %2020 = vmatpush1.msra.mxu0 0.0
  %2021 = vmatprep.subr.mxu0 0.0
  %2022 = vmatpush1.msra.mxu0 0.0
  %2023 = vmatprep.subr.mxu0 0.0
  %2024 = vmatpush1.msra.mxu0 0.0
  %2025 = vmatprep.mubr.f32.mxu0 0.0
  %v2026 = vand.u32 %v585, 4294901760
  %2027 = vmatmul.mubr.f32.gmra.mrb[0].mxu0 %v2026
  %v2028 = vpop.f32.mrb[0].mxu0
  %v2029 = vadd.f32 %v1951, %v2028
  %v2030 = vpop.f32.mrb[0].mxu0
  %2031 = vmatprep.mubr.f32.mxu0 0.0
  %v2032 = vand.u32 %v588, 4294901760
  %2033 = vmatmul.mubr.f32.gmra.mrb[0].mxu0 %v2032
  %v2034 = vpop.f32.mrb[0].mxu0
  %v2035 = vadd.f32 %v1957, %v2034
  %v2036 = vpop.f32.mrb[0].mxu0
  %2037 = vdwg.mxu0
  %2039 = vrot.lane.b32.xlu0 %v2029, 8
  %v2040 = vpop.permute.xlu0 %2039
  %v2042 = vadd.f32 %v568, %v2040
  %v2043 = vxor.u32 %v2042, 2147483648
  %v2044 = vmul.f32 %v2043, 1.442695
  %v2045 = vpow.pop %v2044
  %v2046 = vadd.f32 %v2045, 1.0
  %v2047 = vrcp.pop %v2046
  %v2048 = vmul.f32 1.0, %v2047
  %2050 = vrot.lane.b32.xlu0 %v2035, 8
  %v2051 = vpop.permute.xlu0 %2050
  %v2053 = vadd.f32 %v574, %v2051
  %v2054 = vxor.u32 %v2053, 2147483648
  %v2055 = vmul.f32 %v2054, 1.442695
  %v2056 = vpow.pop %v2055
  %v2057 = vadd.f32 %v2056, 1.0
  %v2058 = vrcp.pop %v2057
  %v2059 = vmul.f32 1.0, %v2058
  %2061 = vrot.lane.b32.xlu0 %v1548, 8
  %v2062 = vpop.permute.xlu0 %2061
  %v2064 = vmul.f32 %v2059, %v2062
  %2066 = vrot.lane.b32.xlu0 %v2064, 120
  %v2067 = vpop.permute.xlu0 %2066
  %2069 = vmatprep.subr.mxu0 0.0
  %v2070 = vand.u32 %v2067, 4294901760
  %2071 = vmatpush1.msra.mxu0 %v2070
  %2072 = vmatprep.subr.mxu0 0.0
  %2073 = vmatpush1.msra.mxu0 0.0
  %2074 = vmatprep.subr.mxu0 0.0
  %2075 = vmatpush1.msra.mxu0 0.0
  %2076 = vmatprep.subr.mxu0 0.0
  %2077 = vmatpush1.msra.mxu0 0.0
  %2078 = vmatprep.subr.mxu0 0.0
  %2079 = vmatpush1.msra.mxu0 0.0
  %2080 = vmatprep.subr.mxu0 0.0
  %2081 = vmatpush1.msra.mxu0 0.0
  %2082 = vmatprep.subr.mxu0 0.0
  %2083 = vmatpush1.msra.mxu0 0.0
  %2084 = vmatprep.subr.mxu0 0.0
  %2085 = vmatpush1.msra.mxu0 0.0
  %2086 = vmatprep.subr.mxu0 0.0
  %2087 = vmatpush1.msra.mxu0 0.0
  %2088 = vmatprep.subr.mxu0 0.0
  %2089 = vmatpush1.msra.mxu0 0.0
  %2090 = vmatprep.subr.mxu0 0.0
  %2091 = vmatpush1.msra.mxu0 0.0
  %2092 = vmatprep.subr.mxu0 0.0
  %2093 = vmatpush1.msra.mxu0 0.0
  %2094 = vmatprep.subr.mxu0 0.0
  %2095 = vmatpush1.msra.mxu0 0.0
  %2096 = vmatprep.subr.mxu0 0.0
  %2097 = vmatpush1.msra.mxu0 0.0
  %2098 = vmatprep.subr.mxu0 0.0
  %2099 = vmatpush1.msra.mxu0 0.0
  %2100 = vmatprep.subr.mxu0 0.0
  %2101 = vmatpush1.msra.mxu0 0.0
  %2102 = vmatprep.subr.mxu0 0.0
  %2103 = vmatpush1.msra.mxu0 0.0
  %2104 = vmatprep.subr.mxu0 0.0
  %2105 = vmatpush1.msra.mxu0 0.0
  %2106 = vmatprep.subr.mxu0 0.0
  %2107 = vmatpush1.msra.mxu0 0.0
  %2108 = vmatprep.subr.mxu0 0.0
  %2109 = vmatpush1.msra.mxu0 0.0
  %2110 = vmatprep.subr.mxu0 0.0
  %2111 = vmatpush1.msra.mxu0 0.0
  %2112 = vmatprep.subr.mxu0 0.0
  %2113 = vmatpush1.msra.mxu0 0.0
  %2114 = vmatprep.subr.mxu0 0.0
  %2115 = vmatpush1.msra.mxu0 0.0
  %2116 = vmatprep.subr.mxu0 0.0
  %2117 = vmatpush1.msra.mxu0 0.0
  %2118 = vmatprep.subr.mxu0 0.0
  %2119 = vmatpush1.msra.mxu0 0.0
  %2120 = vmatprep.subr.mxu0 0.0
  %2121 = vmatpush1.msra.mxu0 0.0
  %2122 = vmatprep.subr.mxu0 0.0
  %2123 = vmatpush1.msra.mxu0 0.0
  %2124 = vmatprep.subr.mxu0 0.0
  %2125 = vmatpush1.msra.mxu0 0.0
  %2126 = vmatprep.subr.mxu0 0.0
  %2127 = vmatpush1.msra.mxu0 0.0
  %2128 = vmatprep.subr.mxu0 0.0
  %2129 = vmatpush1.msra.mxu0 0.0
  %2130 = vmatprep.subr.mxu0 0.0
  %2131 = vmatpush1.msra.mxu0 0.0
  %2132 = vmatprep.subr.mxu0 0.0
  %2133 = vmatpush1.msra.mxu0 0.0
  %2134 = vmatprep.mubr.f32.mxu0 0.0
  %v2135 = vand.u32 %v1095, 4294901760
  %v2136 = vsub.f32 %v1095, %v2135
  %v2137 = vand.u32 %v2136, 4294901760
  %v2138 = vsub.f32 %v2136, %v2137
  %v2139 = vand.u32 %v2138, 4294901760
  %2140 = vmatmul.mubr.f32.gmra.mrb[0].mxu0 %v2139
  %v2141 = vpop.f32.mrb[0].mxu0
  %v2142 = vadd.f32 0.0, %v2141
  %v2143 = vpop.f32.mrb[0].mxu0
  %2144 = vdwg.mxu0
  %2145 = vmatprep.subr.mxu0 0.0
  %v2146 = vand.u32 %v2067, 4294901760
  %v2147 = vsub.f32 %v2067, %v2146
  %v2148 = vand.u32 %v2147, 4294901760
  %v2149 = vsub.f32 %v2147, %v2148
  %v2150 = vand.u32 %v2149, 4294901760
  %2151 = vmatpush1.msra.mxu0 %v2150
  %2152 = vmatprep.subr.mxu0 0.0
  %2153 = vmatpush1.msra.mxu0 0.0
  %2154 = vmatprep.subr.mxu0 0.0
  %2155 = vmatpush1.msra.mxu0 0.0
  %2156 = vmatprep.subr.mxu0 0.0
  %2157 = vmatpush1.msra.mxu0 0.0
  %2158 = vmatprep.subr.mxu0 0.0
  %2159 = vmatpush1.msra.mxu0 0.0
  %2160 = vmatprep.subr.mxu0 0.0
  %2161 = vmatpush1.msra.mxu0 0.0
  %2162 = vmatprep.subr.mxu0 0.0
  %2163 = vmatpush1.msra.mxu0 0.0
  %2164 = vmatprep.subr.mxu0 0.0
  %2165 = vmatpush1.msra.mxu0 0.0
  %2166 = vmatprep.subr.mxu0 0.0
  %2167 = vmatpush1.msra.mxu0 0.0
  %2168 = vmatprep.subr.mxu0 0.0
  %2169 = vmatpush1.msra.mxu0 0.0
  %2170 = vmatprep.subr.mxu0 0.0
  %2171 = vmatpush1.msra.mxu0 0.0
  %2172 = vmatprep.subr.mxu0 0.0
  %2173 = vmatpush1.msra.mxu0 0.0
  %2174 = vmatprep.subr.mxu0 0.0
  %2175 = vmatpush1.msra.mxu0 0.0
  %2176 = vmatprep.subr.mxu0 0.0
  %2177 = vmatpush1.msra.mxu0 0.0
  %2178 = vmatprep.subr.mxu0 0.0
  %2179 = vmatpush1.msra.mxu0 0.0
  %2180 = vmatprep.subr.mxu0 0.0
  %2181 = vmatpush1.msra.mxu0 0.0
  %2182 = vmatprep.subr.mxu0 0.0
  %2183 = vmatpush1.msra.mxu0 0.0
  %2184 = vmatprep.subr.mxu0 0.0
  %2185 = vmatpush1.msra.mxu0 0.0
  %2186 = vmatprep.subr.mxu0 0.0
  %2187 = vmatpush1.msra.mxu0 0.0
  %2188 = vmatprep.subr.mxu0 0.0
  %2189 = vmatpush1.msra.mxu0 0.0
  %2190 = vmatprep.subr.mxu0 0.0
  %2191 = vmatpush1.msra.mxu0 0.0
  %2192 = vmatprep.subr.mxu0 0.0
  %2193 = vmatpush1.msra.mxu0 0.0
  %2194 = vmatprep.subr.mxu0 0.0
  %2195 = vmatpush1.msra.mxu0 0.0
  %2196 = vmatprep.subr.mxu0 0.0
  %2197 = vmatpush1.msra.mxu0 0.0
  %2198 = vmatprep.subr.mxu0 0.0
  %2199 = vmatpush1.msra.mxu0 0.0
  %2200 = vmatprep.subr.mxu0 0.0
  %2201 = vmatpush1.msra.mxu0 0.0
  %2202 = vmatprep.subr.mxu0 0.0
  %2203 = vmatpush1.msra.mxu0 0.0
  %2204 = vmatprep.subr.mxu0 0.0
  %2205 = vmatpush1.msra.mxu0 0.0
  %2206 = vmatprep.subr.mxu0 0.0
  %2207 = vmatpush1.msra.mxu0 0.0
  %2208 = vmatprep.subr.mxu0 0.0
  %2209 = vmatpush1.msra.mxu0 0.0
  %2210 = vmatprep.subr.mxu0 0.0
  %2211 = vmatpush1.msra.mxu0 0.0
  %2212 = vmatprep.subr.mxu0 0.0
  %2213 = vmatpush1.msra.mxu0 0.0
  %2214 = vmatprep.mubr.f32.mxu0 0.0
  %v2215 = vand.u32 %v1095, 4294901760
  %2216 = vmatmul.mubr.f32.gmra.mrb[0].mxu0 %v2215
  %v2217 = vpop.f32.mrb[0].mxu0
  %v2218 = vadd.f32 %v2142, %v2217
  %v2219 = vpop.f32.mrb[0].mxu0
  %2220 = vdwg.mxu0
  %2221 = vmatprep.subr.mxu0 0.0
  %v2222 = vand.u32 %v2067, 4294901760
  %v2223 = vsub.f32 %v2067, %v2222
  %2224 = vmatpush1.msra.mxu0 %v2223
  %2225 = vmatprep.subr.mxu0 0.0
  %2226 = vmatpush1.msra.mxu0 0.0
  %2227 = vmatprep.subr.mxu0 0.0
  %2228 = vmatpush1.msra.mxu0 0.0
  %2229 = vmatprep.subr.mxu0 0.0
  %2230 = vmatpush1.msra.mxu0 0.0
  %2231 = vmatprep.subr.mxu0 0.0
  %2232 = vmatpush1.msra.mxu0 0.0
  %2233 = vmatprep.subr.mxu0 0.0
  %2234 = vmatpush1.msra.mxu0 0.0
  %2235 = vmatprep.subr.mxu0 0.0
  %2236 = vmatpush1.msra.mxu0 0.0
  %2237 = vmatprep.subr.mxu0 0.0
  %2238 = vmatpush1.msra.mxu0 0.0
  %2239 = vmatprep.subr.mxu0 0.0
  %2240 = vmatpush1.msra.mxu0 0.0
  %2241 = vmatprep.subr.mxu0 0.0
  %2242 = vmatpush1.msra.mxu0 0.0
  %2243 = vmatprep.subr.mxu0 0.0
  %2244 = vmatpush1.msra.mxu0 0.0
  %2245 = vmatprep.subr.mxu0 0.0
  %2246 = vmatpush1.msra.mxu0 0.0
  %2247 = vmatprep.subr.mxu0 0.0
  %2248 = vmatpush1.msra.mxu0 0.0
  %2249 = vmatprep.subr.mxu0 0.0
  %2250 = vmatpush1.msra.mxu0 0.0
  %2251 = vmatprep.subr.mxu0 0.0
  %2252 = vmatpush1.msra.mxu0 0.0
  %2253 = vmatprep.subr.mxu0 0.0
  %2254 = vmatpush1.msra.mxu0 0.0
  %2255 = vmatprep.subr.mxu0 0.0
  %2256 = vmatpush1.msra.mxu0 0.0
  %2257 = vmatprep.subr.mxu0 0.0
  %2258 = vmatpush1.msra.mxu0 0.0
  %2259 = vmatprep.subr.mxu0 0.0
  %2260 = vmatpush1.msra.mxu0 0.0
  %2261 = vmatprep.subr.mxu0 0.0
  %2262 = vmatpush1.msra.mxu0 0.0
  %2263 = vmatprep.subr.mxu0 0.0
  %2264 = vmatpush1.msra.mxu0 0.0
  %2265 = vmatprep.subr.mxu0 0.0
  %2266 = vmatpush1.msra.mxu0 0.0
  %2267 = vmatprep.subr.mxu0 0.0
  %2268 = vmatpush1.msra.mxu0 0.0
  %2269 = vmatprep.subr.mxu0 0.0
  %2270 = vmatpush1.msra.mxu0 0.0
  %2271 = vmatprep.subr.mxu0 0.0
  %2272 = vmatpush1.msra.mxu0 0.0
  %2273 = vmatprep.subr.mxu0 0.0
  %2274 = vmatpush1.msra.mxu0 0.0
  %2275 = vmatprep.subr.mxu0 0.0
  %2276 = vmatpush1.msra.mxu0 0.0
  %2277 = vmatprep.subr.mxu0 0.0
  %2278 = vmatpush1.msra.mxu0 0.0
  %2279 = vmatprep.subr.mxu0 0.0
  %2280 = vmatpush1.msra.mxu0 0.0
  %2281 = vmatprep.subr.mxu0 0.0
  %2282 = vmatpush1.msra.mxu0 0.0
  %2283 = vmatprep.subr.mxu0 0.0
  %2284 = vmatpush1.msra.mxu0 0.0
  %2285 = vmatprep.subr.mxu0 0.0
  %2286 = vmatpush1.msra.mxu0 0.0
  %2287 = vmatprep.mubr.f32.mxu0 0.0
  %v2288 = vand.u32 %v1095, 4294901760
  %v2289 = vsub.f32 %v1095, %v2288
  %2290 = vmatmul.mubr.f32.gmra.mrb[0].mxu0 %v2289
  %v2291 = vpop.f32.mrb[0].mxu0
  %v2292 = vadd.f32 %v2218, %v2291
  %v2293 = vpop.f32.mrb[0].mxu0
  %2294 = vdwg.mxu0
  %2295 = vmatprep.subr.mxu0 0.0
  %v2296 = vand.u32 %v2067, 4294901760
  %2297 = vmatpush1.msra.mxu0 %v2296
  %2298 = vmatprep.subr.mxu0 0.0
  %2299 = vmatpush1.msra.mxu0 0.0
  %2300 = vmatprep.subr.mxu0 0.0
  %2301 = vmatpush1.msra.mxu0 0.0
  %2302 = vmatprep.subr.mxu0 0.0
  %2303 = vmatpush1.msra.mxu0 0.0
  %2304 = vmatprep.subr.mxu0 0.0
  %2305 = vmatpush1.msra.mxu0 0.0
  %2306 = vmatprep.subr.mxu0 0.0
  %2307 = vmatpush1.msra.mxu0 0.0
  %2308 = vmatprep.subr.mxu0 0.0
  %2309 = vmatpush1.msra.mxu0 0.0
  %2310 = vmatprep.subr.mxu0 0.0
  %2311 = vmatpush1.msra.mxu0 0.0
  %2312 = vmatprep.subr.mxu0 0.0
  %2313 = vmatpush1.msra.mxu0 0.0
  %2314 = vmatprep.subr.mxu0 0.0
  %2315 = vmatpush1.msra.mxu0 0.0
  %2316 = vmatprep.subr.mxu0 0.0
  %2317 = vmatpush1.msra.mxu0 0.0
  %2318 = vmatprep.subr.mxu0 0.0
  %2319 = vmatpush1.msra.mxu0 0.0
  %2320 = vmatprep.subr.mxu0 0.0
  %2321 = vmatpush1.msra.mxu0 0.0
  %2322 = vmatprep.subr.mxu0 0.0
  %2323 = vmatpush1.msra.mxu0 0.0
  %2324 = vmatprep.subr.mxu0 0.0
  %2325 = vmatpush1.msra.mxu0 0.0
  %2326 = vmatprep.subr.mxu0 0.0
  %2327 = vmatpush1.msra.mxu0 0.0
  %2328 = vmatprep.subr.mxu0 0.0
  %2329 = vmatpush1.msra.mxu0 0.0
  %2330 = vmatprep.subr.mxu0 0.0
  %2331 = vmatpush1.msra.mxu0 0.0
  %2332 = vmatprep.subr.mxu0 0.0
  %2333 = vmatpush1.msra.mxu0 0.0
  %2334 = vmatprep.subr.mxu0 0.0
  %2335 = vmatpush1.msra.mxu0 0.0
  %2336 = vmatprep.subr.mxu0 0.0
  %2337 = vmatpush1.msra.mxu0 0.0
  %2338 = vmatprep.subr.mxu0 0.0
  %2339 = vmatpush1.msra.mxu0 0.0
  %2340 = vmatprep.subr.mxu0 0.0
  %2341 = vmatpush1.msra.mxu0 0.0
  %2342 = vmatprep.subr.mxu0 0.0
  %2343 = vmatpush1.msra.mxu0 0.0
  %2344 = vmatprep.subr.mxu0 0.0
  %2345 = vmatpush1.msra.mxu0 0.0
  %2346 = vmatprep.subr.mxu0 0.0
  %2347 = vmatpush1.msra.mxu0 0.0
  %2348 = vmatprep.subr.mxu0 0.0
  %2349 = vmatpush1.msra.mxu0 0.0
  %2350 = vmatprep.subr.mxu0 0.0
  %2351 = vmatpush1.msra.mxu0 0.0
  %2352 = vmatprep.subr.mxu0 0.0
  %2353 = vmatpush1.msra.mxu0 0.0
  %2354 = vmatprep.subr.mxu0 0.0
  %2355 = vmatpush1.msra.mxu0 0.0
  %2356 = vmatprep.subr.mxu0 0.0
  %2357 = vmatpush1.msra.mxu0 0.0
  %2358 = vmatprep.subr.mxu0 0.0
  %2359 = vmatpush1.msra.mxu0 0.0
  %2360 = vmatprep.mubr.f32.mxu0 0.0
  %v2361 = vand.u32 %v1095, 4294901760
  %v2362 = vsub.f32 %v1095, %v2361
  %v2363 = vand.u32 %v2362, 4294901760
  %2364 = vmatmul.mubr.f32.gmra.mrb[0].mxu0 %v2363
  %v2365 = vpop.f32.mrb[0].mxu0
  %v2366 = vadd.f32 %v2292, %v2365
  %v2367 = vpop.f32.mrb[0].mxu0
  %2368 = vdwg.mxu0
  %2369 = vmatprep.subr.mxu0 0.0
  %v2370 = vand.u32 %v2067, 4294901760
  %v2371 = vsub.f32 %v2067, %v2370
  %v2372 = vand.u32 %v2371, 4294901760
  %2373 = vmatpush1.msra.mxu0 %v2372
  %2374 = vmatprep.subr.mxu0 0.0
  %2375 = vmatpush1.msra.mxu0 0.0
  %2376 = vmatprep.subr.mxu0 0.0
  %2377 = vmatpush1.msra.mxu0 0.0
  %2378 = vmatprep.subr.mxu0 0.0
  %2379 = vmatpush1.msra.mxu0 0.0
  %2380 = vmatprep.subr.mxu0 0.0
  %2381 = vmatpush1.msra.mxu0 0.0
  %2382 = vmatprep.subr.mxu0 0.0
  %2383 = vmatpush1.msra.mxu0 0.0
  %2384 = vmatprep.subr.mxu0 0.0
  %2385 = vmatpush1.msra.mxu0 0.0
  %2386 = vmatprep.subr.mxu0 0.0
  %2387 = vmatpush1.msra.mxu0 0.0
  %2388 = vmatprep.subr.mxu0 0.0
  %2389 = vmatpush1.msra.mxu0 0.0
  %2390 = vmatprep.subr.mxu0 0.0
  %2391 = vmatpush1.msra.mxu0 0.0
  %2392 = vmatprep.subr.mxu0 0.0
  %2393 = vmatpush1.msra.mxu0 0.0
  %2394 = vmatprep.subr.mxu0 0.0
  %2395 = vmatpush1.msra.mxu0 0.0
  %2396 = vmatprep.subr.mxu0 0.0
  %2397 = vmatpush1.msra.mxu0 0.0
  %2398 = vmatprep.subr.mxu0 0.0
  %2399 = vmatpush1.msra.mxu0 0.0
  %2400 = vmatprep.subr.mxu0 0.0
  %2401 = vmatpush1.msra.mxu0 0.0
  %2402 = vmatprep.subr.mxu0 0.0
  %2403 = vmatpush1.msra.mxu0 0.0
  %2404 = vmatprep.subr.mxu0 0.0
  %2405 = vmatpush1.msra.mxu0 0.0
  %2406 = vmatprep.subr.mxu0 0.0
  %2407 = vmatpush1.msra.mxu0 0.0
  %2408 = vmatprep.subr.mxu0 0.0
  %2409 = vmatpush1.msra.mxu0 0.0
  %2410 = vmatprep.subr.mxu0 0.0
  %2411 = vmatpush1.msra.mxu0 0.0
  %2412 = vmatprep.subr.mxu0 0.0
  %2413 = vmatpush1.msra.mxu0 0.0
  %2414 = vmatprep.subr.mxu0 0.0
  %2415 = vmatpush1.msra.mxu0 0.0
  %2416 = vmatprep.subr.mxu0 0.0
  %2417 = vmatpush1.msra.mxu0 0.0
  %2418 = vmatprep.subr.mxu0 0.0
  %2419 = vmatpush1.msra.mxu0 0.0
  %2420 = vmatprep.subr.mxu0 0.0
  %2421 = vmatpush1.msra.mxu0 0.0
  %2422 = vmatprep.subr.mxu0 0.0
  %2423 = vmatpush1.msra.mxu0 0.0
  %2424 = vmatprep.subr.mxu0 0.0
  %2425 = vmatpush1.msra.mxu0 0.0
  %2426 = vmatprep.subr.mxu0 0.0
  %2427 = vmatpush1.msra.mxu0 0.0
  %2428 = vmatprep.subr.mxu0 0.0
  %2429 = vmatpush1.msra.mxu0 0.0
  %2430 = vmatprep.subr.mxu0 0.0
  %2431 = vmatpush1.msra.mxu0 0.0
  %2432 = vmatprep.subr.mxu0 0.0
  %2433 = vmatpush1.msra.mxu0 0.0
  %2434 = vmatprep.subr.mxu0 0.0
  %2435 = vmatpush1.msra.mxu0 0.0
  %2436 = vmatprep.mubr.f32.mxu0 0.0
  %v2437 = vand.u32 %v1095, 4294901760
  %2438 = vmatmul.mubr.f32.gmra.mrb[0].mxu0 %v2437
  %v2439 = vpop.f32.mrb[0].mxu0
  %v2440 = vadd.f32 %v2366, %v2439
  %v2441 = vpop.f32.mrb[0].mxu0
  %2442 = vdwg.mxu0
  %2443 = vmatprep.subr.mxu0 0.0
  %v2444 = vand.u32 %v2067, 4294901760
  %2445 = vmatpush1.msra.mxu0 %v2444
  %2446 = vmatprep.subr.mxu0 0.0
  %2447 = vmatpush1.msra.mxu0 0.0
  %2448 = vmatprep.subr.mxu0 0.0
  %2449 = vmatpush1.msra.mxu0 0.0
  %2450 = vmatprep.subr.mxu0 0.0
  %2451 = vmatpush1.msra.mxu0 0.0
  %2452 = vmatprep.subr.mxu0 0.0
  %2453 = vmatpush1.msra.mxu0 0.0
  %2454 = vmatprep.subr.mxu0 0.0
  %2455 = vmatpush1.msra.mxu0 0.0
  %2456 = vmatprep.subr.mxu0 0.0
  %2457 = vmatpush1.msra.mxu0 0.0
  %2458 = vmatprep.subr.mxu0 0.0
  %2459 = vmatpush1.msra.mxu0 0.0
  %2460 = vmatprep.subr.mxu0 0.0
  %2461 = vmatpush1.msra.mxu0 0.0
  %2462 = vmatprep.subr.mxu0 0.0
  %2463 = vmatpush1.msra.mxu0 0.0
  %2464 = vmatprep.subr.mxu0 0.0
  %2465 = vmatpush1.msra.mxu0 0.0
  %2466 = vmatprep.subr.mxu0 0.0
  %2467 = vmatpush1.msra.mxu0 0.0
  %2468 = vmatprep.subr.mxu0 0.0
  %2469 = vmatpush1.msra.mxu0 0.0
  %2470 = vmatprep.subr.mxu0 0.0
  %2471 = vmatpush1.msra.mxu0 0.0
  %2472 = vmatprep.subr.mxu0 0.0
  %2473 = vmatpush1.msra.mxu0 0.0
  %2474 = vmatprep.subr.mxu0 0.0
  %2475 = vmatpush1.msra.mxu0 0.0
  %2476 = vmatprep.subr.mxu0 0.0
  %2477 = vmatpush1.msra.mxu0 0.0
  %2478 = vmatprep.subr.mxu0 0.0
  %2479 = vmatpush1.msra.mxu0 0.0
  %2480 = vmatprep.subr.mxu0 0.0
  %2481 = vmatpush1.msra.mxu0 0.0
  %2482 = vmatprep.subr.mxu0 0.0
  %2483 = vmatpush1.msra.mxu0 0.0
  %2484 = vmatprep.subr.mxu0 0.0
  %2485 = vmatpush1.msra.mxu0 0.0
  %2486 = vmatprep.subr.mxu0 0.0
  %2487 = vmatpush1.msra.mxu0 0.0
  %2488 = vmatprep.subr.mxu0 0.0
  %2489 = vmatpush1.msra.mxu0 0.0
  %2490 = vmatprep.subr.mxu0 0.0
  %2491 = vmatpush1.msra.mxu0 0.0
  %2492 = vmatprep.subr.mxu0 0.0
  %2493 = vmatpush1.msra.mxu0 0.0
  %2494 = vmatprep.subr.mxu0 0.0
  %2495 = vmatpush1.msra.mxu0 0.0
  %2496 = vmatprep.subr.mxu0 0.0
  %2497 = vmatpush1.msra.mxu0 0.0
  %2498 = vmatprep.subr.mxu0 0.0
  %2499 = vmatpush1.msra.mxu0 0.0
  %2500 = vmatprep.subr.mxu0 0.0
  %2501 = vmatpush1.msra.mxu0 0.0
  %2502 = vmatprep.subr.mxu0 0.0
  %2503 = vmatpush1.msra.mxu0 0.0
  %2504 = vmatprep.subr.mxu0 0.0
  %2505 = vmatpush1.msra.mxu0 0.0
  %2506 = vmatprep.subr.mxu0 0.0
  %2507 = vmatpush1.msra.mxu0 0.0
  %2508 = vmatprep.mubr.f32.mxu0 0.0
  %v2509 = vand.u32 %v1095, 4294901760
  %2510 = vmatmul.mubr.f32.gmra.mrb[0].mxu0 %v2509
  %v2511 = vpop.f32.mrb[0].mxu0
  %v2512 = vadd.f32 %v2440, %v2511
  %v2513 = vpop.f32.mrb[0].mxu0
  %2514 = vdwg.mxu0
  %2516 = vrot.lane.b32.xlu0 %v2512, 8
  %v2517 = vpop.permute.xlu0 %2516
  %v2519 = vadd.f32 %v580, %v2517
  %v2520 = vmax.f32 %v2519, 0.0
  %v2521 = vsub.f32 1.0, %v2048
  %v2522 = vmul.f32 %v2521, %v2062
  %v2523 = vmul.f32 %v2048, %v2520
  %v2524 = vadd.f32 %v2522, %v2523
  %2526 = vrot.lane.b32.xlu0 %v2524, 120
  %v2527 = vpop.permute.xlu0 %2526
  %2529 = vmatprep.subr.mxu0 0.0
  %v2530 = vand.u32 %v2527, 4294901760
  %2531 = vmatpush1.msra.mxu0 %v2530
  %2532 = vmatprep.subr.mxu0 0.0
  %2533 = vmatpush1.msra.mxu0 0.0
  %2534 = vmatprep.subr.mxu0 0.0
  %2535 = vmatpush1.msra.mxu0 0.0
  %2536 = vmatprep.subr.mxu0 0.0
  %2537 = vmatpush1.msra.mxu0 0.0
  %2538 = vmatprep.subr.mxu0 0.0
  %2539 = vmatpush1.msra.mxu0 0.0
  %2540 = vmatprep.subr.mxu0 0.0
  %2541 = vmatpush1.msra.mxu0 0.0
  %2542 = vmatprep.subr.mxu0 0.0
  %2543 = vmatpush1.msra.mxu0 0.0
  %2544 = vmatprep.subr.mxu0 0.0
  %2545 = vmatpush1.msra.mxu0 0.0
  %2546 = vmatprep.subr.mxu0 0.0
  %2547 = vmatpush1.msra.mxu0 0.0
  %2548 = vmatprep.subr.mxu0 0.0
  %2549 = vmatpush1.msra.mxu0 0.0
  %2550 = vmatprep.subr.mxu0 0.0
  %2551 = vmatpush1.msra.mxu0 0.0
  %2552 = vmatprep.subr.mxu0 0.0
  %2553 = vmatpush1.msra.mxu0 0.0
  %2554 = vmatprep.subr.mxu0 0.0
  %2555 = vmatpush1.msra.mxu0 0.0
  %2556 = vmatprep.subr.mxu0 0.0
  %2557 = vmatpush1.msra.mxu0 0.0
  %2558 = vmatprep.subr.mxu0 0.0
  %2559 = vmatpush1.msra.mxu0 0.0
  %2560 = vmatprep.subr.mxu0 0.0
  %2561 = vmatpush1.msra.mxu0 0.0
  %2562 = vmatprep.subr.mxu0 0.0
  %2563 = vmatpush1.msra.mxu0 0.0
  %2564 = vmatprep.subr.mxu0 0.0
  %2565 = vmatpush1.msra.mxu0 0.0
  %2566 = vmatprep.subr.mxu0 0.0
  %2567 = vmatpush1.msra.mxu0 0.0
  %2568 = vmatprep.subr.mxu0 0.0
  %2569 = vmatpush1.msra.mxu0 0.0
  %2570 = vmatprep.subr.mxu0 0.0
  %2571 = vmatpush1.msra.mxu0 0.0
  %2572 = vmatprep.subr.mxu0 0.0
  %2573 = vmatpush1.msra.mxu0 0.0
  %2574 = vmatprep.subr.mxu0 0.0
  %2575 = vmatpush1.msra.mxu0 0.0
  %2576 = vmatprep.subr.mxu0 0.0
  %2577 = vmatpush1.msra.mxu0 0.0
  %2578 = vmatprep.subr.mxu0 0.0
  %2579 = vmatpush1.msra.mxu0 0.0
  %2580 = vmatprep.subr.mxu0 0.0
  %2581 = vmatpush1.msra.mxu0 0.0
  %2582 = vmatprep.subr.mxu0 0.0
  %2583 = vmatpush1.msra.mxu0 0.0
  %2584 = vmatprep.subr.mxu0 0.0
  %2585 = vmatpush1.msra.mxu0 0.0
  %2586 = vmatprep.subr.mxu0 0.0
  %2587 = vmatpush1.msra.mxu0 0.0
  %2588 = vmatprep.subr.mxu0 0.0
  %2589 = vmatpush1.msra.mxu0 0.0
  %2590 = vmatprep.subr.mxu0 0.0
  %2591 = vmatpush1.msra.mxu0 0.0
  %2592 = vmatprep.subr.mxu0 0.0
  %2593 = vmatpush1.msra.mxu0 0.0
  %2594 = vmatprep.mubr.f32.mxu0 0.0
  %v2595 = vand.u32 %v585, 4294901760
  %v2596 = vsub.f32 %v585, %v2595
  %v2597 = vand.u32 %v2596, 4294901760
  %v2598 = vsub.f32 %v2596, %v2597
  %v2599 = vand.u32 %v2598, 4294901760
  %2600 = vmatmul.mubr.f32.gmra.mrb[0].mxu0 %v2599
  %v2601 = vpop.f32.mrb[0].mxu0
  %v2602 = vadd.f32 0.0, %v2601
  %v2603 = vpop.f32.mrb[0].mxu0
  %2604 = vmatprep.mubr.f32.mxu0 0.0
  %v2605 = vand.u32 %v588, 4294901760
  %v2606 = vsub.f32 %v588, %v2605
  %v2607 = vand.u32 %v2606, 4294901760
  %v2608 = vsub.f32 %v2606, %v2607
  %v2609 = vand.u32 %v2608, 4294901760
  %2610 = vmatmul.mubr.f32.gmra.mrb[0].mxu0 %v2609
  %v2611 = vpop.f32.mrb[0].mxu0
  %v2612 = vadd.f32 0.0, %v2611
  %v2613 = vpop.f32.mrb[0].mxu0
  %2614 = vdwg.mxu0
  %2615 = vmatprep.subr.mxu0 0.0
  %v2616 = vand.u32 %v2527, 4294901760
  %v2617 = vsub.f32 %v2527, %v2616
  %v2618 = vand.u32 %v2617, 4294901760
  %v2619 = vsub.f32 %v2617, %v2618
  %v2620 = vand.u32 %v2619, 4294901760
  %2621 = vmatpush1.msra.mxu0 %v2620
  %2622 = vmatprep.subr.mxu0 0.0
  %2623 = vmatpush1.msra.mxu0 0.0
  %2624 = vmatprep.subr.mxu0 0.0
  %2625 = vmatpush1.msra.mxu0 0.0
  %2626 = vmatprep.subr.mxu0 0.0
  %2627 = vmatpush1.msra.mxu0 0.0
  %2628 = vmatprep.subr.mxu0 0.0
  %2629 = vmatpush1.msra.mxu0 0.0
  %2630 = vmatprep.subr.mxu0 0.0
  %2631 = vmatpush1.msra.mxu0 0.0
  %2632 = vmatprep.subr.mxu0 0.0
  %2633 = vmatpush1.msra.mxu0 0.0
  %2634 = vmatprep.subr.mxu0 0.0
  %2635 = vmatpush1.msra.mxu0 0.0
  %2636 = vmatprep.subr.mxu0 0.0
  %2637 = vmatpush1.msra.mxu0 0.0
  %2638 = vmatprep.subr.mxu0 0.0
  %2639 = vmatpush1.msra.mxu0 0.0
  %2640 = vmatprep.subr.mxu0 0.0
  %2641 = vmatpush1.msra.mxu0 0.0
  %2642 = vmatprep.subr.mxu0 0.0
  %2643 = vmatpush1.msra.mxu0 0.0
  %2644 = vmatprep.subr.mxu0 0.0
  %2645 = vmatpush1.msra.mxu0 0.0
  %2646 = vmatprep.subr.mxu0 0.0
  %2647 = vmatpush1.msra.mxu0 0.0
  %2648 = vmatprep.subr.mxu0 0.0
  %2649 = vmatpush1.msra.mxu0 0.0
  %2650 = vmatprep.subr.mxu0 0.0
  %2651 = vmatpush1.msra.mxu0 0.0
  %2652 = vmatprep.subr.mxu0 0.0
  %2653 = vmatpush1.msra.mxu0 0.0
  %2654 = vmatprep.subr.mxu0 0.0
  %2655 = vmatpush1.msra.mxu0 0.0
  %2656 = vmatprep.subr.mxu0 0.0
  %2657 = vmatpush1.msra.mxu0 0.0
  %2658 = vmatprep.subr.mxu0 0.0
  %2659 = vmatpush1.msra.mxu0 0.0
  %2660 = vmatprep.subr.mxu0 0.0
  %2661 = vmatpush1.msra.mxu0 0.0
  %2662 = vmatprep.subr.mxu0 0.0
  %2663 = vmatpush1.msra.mxu0 0.0
  %2664 = vmatprep.subr.mxu0 0.0
  %2665 = vmatpush1.msra.mxu0 0.0
  %2666 = vmatprep.subr.mxu0 0.0
  %2667 = vmatpush1.msra.mxu0 0.0
  %2668 = vmatprep.subr.mxu0 0.0
  %2669 = vmatpush1.msra.mxu0 0.0
  %2670 = vmatprep.subr.mxu0 0.0
  %2671 = vmatpush1.msra.mxu0 0.0
  %2672 = vmatprep.subr.mxu0 0.0
  %2673 = vmatpush1.msra.mxu0 0.0
  %2674 = vmatprep.subr.mxu0 0.0
  %2675 = vmatpush1.msra.mxu0 0.0
  %2676 = vmatprep.subr.mxu0 0.0
  %2677 = vmatpush1.msra.mxu0 0.0
  %2678 = vmatprep.subr.mxu0 0.0
  %2679 = vmatpush1.msra.mxu0 0.0
  %2680 = vmatprep.subr.mxu0 0.0
  %2681 = vmatpush1.msra.mxu0 0.0
  %2682 = vmatprep.subr.mxu0 0.0
  %2683 = vmatpush1.msra.mxu0 0.0
  %2684 = vmatprep.mubr.f32.mxu0 0.0
  %v2685 = vand.u32 %v585, 4294901760
  %2686 = vmatmul.mubr.f32.gmra.mrb[0].mxu0 %v2685
  %v2687 = vpop.f32.mrb[0].mxu0
  %v2688 = vadd.f32 %v2602, %v2687
  %v2689 = vpop.f32.mrb[0].mxu0
  %2690 = vmatprep.mubr.f32.mxu0 0.0
  %v2691 = vand.u32 %v588, 4294901760
  %2692 = vmatmul.mubr.f32.gmra.mrb[0].mxu0 %v2691
  %v2693 = vpop.f32.mrb[0].mxu0
  %v2694 = vadd.f32 %v2612, %v2693
  %v2695 = vpop.f32.mrb[0].mxu0
  %2696 = vdwg.mxu0
  %2697 = vmatprep.subr.mxu0 0.0
  %v2698 = vand.u32 %v2527, 4294901760
  %v2699 = vsub.f32 %v2527, %v2698
  %2700 = vmatpush1.msra.mxu0 %v2699
  %2701 = vmatprep.subr.mxu0 0.0
  %2702 = vmatpush1.msra.mxu0 0.0
  %2703 = vmatprep.subr.mxu0 0.0
  %2704 = vmatpush1.msra.mxu0 0.0
  %2705 = vmatprep.subr.mxu0 0.0
  %2706 = vmatpush1.msra.mxu0 0.0
  %2707 = vmatprep.subr.mxu0 0.0
  %2708 = vmatpush1.msra.mxu0 0.0
  %2709 = vmatprep.subr.mxu0 0.0
  %2710 = vmatpush1.msra.mxu0 0.0
  %2711 = vmatprep.subr.mxu0 0.0
  %2712 = vmatpush1.msra.mxu0 0.0
  %2713 = vmatprep.subr.mxu0 0.0
  %2714 = vmatpush1.msra.mxu0 0.0
  %2715 = vmatprep.subr.mxu0 0.0
  %2716 = vmatpush1.msra.mxu0 0.0
  %2717 = vmatprep.subr.mxu0 0.0
  %2718 = vmatpush1.msra.mxu0 0.0
  %2719 = vmatprep.subr.mxu0 0.0
  %2720 = vmatpush1.msra.mxu0 0.0
  %2721 = vmatprep.subr.mxu0 0.0
  %2722 = vmatpush1.msra.mxu0 0.0
  %2723 = vmatprep.subr.mxu0 0.0
  %2724 = vmatpush1.msra.mxu0 0.0
  %2725 = vmatprep.subr.mxu0 0.0
  %2726 = vmatpush1.msra.mxu0 0.0
  %2727 = vmatprep.subr.mxu0 0.0
  %2728 = vmatpush1.msra.mxu0 0.0
  %2729 = vmatprep.subr.mxu0 0.0
  %2730 = vmatpush1.msra.mxu0 0.0
  %2731 = vmatprep.subr.mxu0 0.0
  %2732 = vmatpush1.msra.mxu0 0.0
  %2733 = vmatprep.subr.mxu0 0.0
  %2734 = vmatpush1.msra.mxu0 0.0
  %2735 = vmatprep.subr.mxu0 0.0
  %2736 = vmatpush1.msra.mxu0 0.0
  %2737 = vmatprep.subr.mxu0 0.0
  %2738 = vmatpush1.msra.mxu0 0.0
  %2739 = vmatprep.subr.mxu0 0.0
  %2740 = vmatpush1.msra.mxu0 0.0
  %2741 = vmatprep.subr.mxu0 0.0
  %2742 = vmatpush1.msra.mxu0 0.0
  %2743 = vmatprep.subr.mxu0 0.0
  %2744 = vmatpush1.msra.mxu0 0.0
  %2745 = vmatprep.subr.mxu0 0.0
  %2746 = vmatpush1.msra.mxu0 0.0
  %2747 = vmatprep.subr.mxu0 0.0
  %2748 = vmatpush1.msra.mxu0 0.0
  %2749 = vmatprep.subr.mxu0 0.0
  %2750 = vmatpush1.msra.mxu0 0.0
  %2751 = vmatprep.subr.mxu0 0.0
  %2752 = vmatpush1.msra.mxu0 0.0
  %2753 = vmatprep.subr.mxu0 0.0
  %2754 = vmatpush1.msra.mxu0 0.0
  %2755 = vmatprep.subr.mxu0 0.0
  %2756 = vmatpush1.msra.mxu0 0.0
  %2757 = vmatprep.subr.mxu0 0.0
  %2758 = vmatpush1.msra.mxu0 0.0
  %2759 = vmatprep.subr.mxu0 0.0
  %2760 = vmatpush1.msra.mxu0 0.0
  %2761 = vmatprep.subr.mxu0 0.0
  %2762 = vmatpush1.msra.mxu0 0.0
  %2763 = vmatprep.mubr.f32.mxu0 0.0
  %v2764 = vand.u32 %v585, 4294901760
  %v2765 = vsub.f32 %v585, %v2764
  %2766 = vmatmul.mubr.f32.gmra.mrb[0].mxu0 %v2765
  %v2767 = vpop.f32.mrb[0].mxu0
  %v2768 = vadd.f32 %v2688, %v2767
  %v2769 = vpop.f32.mrb[0].mxu0
  %2770 = vmatprep.mubr.f32.mxu0 0.0
  %v2771 = vand.u32 %v588, 4294901760
  %v2772 = vsub.f32 %v588, %v2771
  %2773 = vmatmul.mubr.f32.gmra.mrb[0].mxu0 %v2772
  %v2774 = vpop.f32.mrb[0].mxu0
  %v2775 = vadd.f32 %v2694, %v2774
  %v2776 = vpop.f32.mrb[0].mxu0
  %2777 = vdwg.mxu0
  %2778 = vmatprep.subr.mxu0 0.0
  %v2779 = vand.u32 %v2527, 4294901760
  %2780 = vmatpush1.msra.mxu0 %v2779
  %2781 = vmatprep.subr.mxu0 0.0
  %2782 = vmatpush1.msra.mxu0 0.0
  %2783 = vmatprep.subr.mxu0 0.0
  %2784 = vmatpush1.msra.mxu0 0.0
  %2785 = vmatprep.subr.mxu0 0.0
  %2786 = vmatpush1.msra.mxu0 0.0
  %2787 = vmatprep.subr.mxu0 0.0
  %2788 = vmatpush1.msra.mxu0 0.0
  %2789 = vmatprep.subr.mxu0 0.0
  %2790 = vmatpush1.msra.mxu0 0.0
  %2791 = vmatprep.subr.mxu0 0.0
  %2792 = vmatpush1.msra.mxu0 0.0
  %2793 = vmatprep.subr.mxu0 0.0
  %2794 = vmatpush1.msra.mxu0 0.0
  %2795 = vmatprep.subr.mxu0 0.0
  %2796 = vmatpush1.msra.mxu0 0.0
  %2797 = vmatprep.subr.mxu0 0.0
  %2798 = vmatpush1.msra.mxu0 0.0
  %2799 = vmatprep.subr.mxu0 0.0
  %2800 = vmatpush1.msra.mxu0 0.0
  %2801 = vmatprep.subr.mxu0 0.0
  %2802 = vmatpush1.msra.mxu0 0.0
  %2803 = vmatprep.subr.mxu0 0.0
  %2804 = vmatpush1.msra.mxu0 0.0
  %2805 = vmatprep.subr.mxu0 0.0
  %2806 = vmatpush1.msra.mxu0 0.0
  %2807 = vmatprep.subr.mxu0 0.0
  %2808 = vmatpush1.msra.mxu0 0.0
  %2809 = vmatprep.subr.mxu0 0.0
  %2810 = vmatpush1.msra.mxu0 0.0
  %2811 = vmatprep.subr.mxu0 0.0
  %2812 = vmatpush1.msra.mxu0 0.0
  %2813 = vmatprep.subr.mxu0 0.0
  %2814 = vmatpush1.msra.mxu0 0.0
  %2815 = vmatprep.subr.mxu0 0.0
  %2816 = vmatpush1.msra.mxu0 0.0
  %2817 = vmatprep.subr.mxu0 0.0
  %2818 = vmatpush1.msra.mxu0 0.0
  %2819 = vmatprep.subr.mxu0 0.0
  %2820 = vmatpush1.msra.mxu0 0.0
  %2821 = vmatprep.subr.mxu0 0.0
  %2822 = vmatpush1.msra.mxu0 0.0
  %2823 = vmatprep.subr.mxu0 0.0
  %2824 = vmatpush1.msra.mxu0 0.0
  %2825 = vmatprep.subr.mxu0 0.0
  %2826 = vmatpush1.msra.mxu0 0.0
  %2827 = vmatprep.subr.mxu0 0.0
  %2828 = vmatpush1.msra.mxu0 0.0
  %2829 = vmatprep.subr.mxu0 0.0
  %2830 = vmatpush1.msra.mxu0 0.0
  %2831 = vmatprep.subr.mxu0 0.0
  %2832 = vmatpush1.msra.mxu0 0.0
  %2833 = vmatprep.subr.mxu0 0.0
  %2834 = vmatpush1.msra.mxu0 0.0
  %2835 = vmatprep.subr.mxu0 0.0
  %2836 = vmatpush1.msra.mxu0 0.0
  %2837 = vmatprep.subr.mxu0 0.0
  %2838 = vmatpush1.msra.mxu0 0.0
  %2839 = vmatprep.subr.mxu0 0.0
  %2840 = vmatpush1.msra.mxu0 0.0
  %2841 = vmatprep.subr.mxu0 0.0
  %2842 = vmatpush1.msra.mxu0 0.0
  %2843 = vmatprep.mubr.f32.mxu0 0.0
  %v2844 = vand.u32 %v585, 4294901760
  %v2845 = vsub.f32 %v585, %v2844
  %v2846 = vand.u32 %v2845, 4294901760
  %2847 = vmatmul.mubr.f32.gmra.mrb[0].mxu0 %v2846
  %v2848 = vpop.f32.mrb[0].mxu0
  %v2849 = vadd.f32 %v2768, %v2848
  %v2850 = vpop.f32.mrb[0].mxu0
  %2851 = vmatprep.mubr.f32.mxu0 0.0
  %v2852 = vand.u32 %v588, 4294901760
  %v2853 = vsub.f32 %v588, %v2852
  %v2854 = vand.u32 %v2853, 4294901760
  %2855 = vmatmul.mubr.f32.gmra.mrb[0].mxu0 %v2854
  %v2856 = vpop.f32.mrb[0].mxu0
  %v2857 = vadd.f32 %v2775, %v2856
  %v2858 = vpop.f32.mrb[0].mxu0
  %2859 = vdwg.mxu0
  %2860 = vmatprep.subr.mxu0 0.0
  %v2861 = vand.u32 %v2527, 4294901760
  %v2862 = vsub.f32 %v2527, %v2861
  %v2863 = vand.u32 %v2862, 4294901760
  %2864 = vmatpush1.msra.mxu0 %v2863
  %2865 = vmatprep.subr.mxu0 0.0
  %2866 = vmatpush1.msra.mxu0 0.0
  %2867 = vmatprep.subr.mxu0 0.0
  %2868 = vmatpush1.msra.mxu0 0.0
  %2869 = vmatprep.subr.mxu0 0.0
  %2870 = vmatpush1.msra.mxu0 0.0
  %2871 = vmatprep.subr.mxu0 0.0
  %2872 = vmatpush1.msra.mxu0 0.0
  %2873 = vmatprep.subr.mxu0 0.0
  %2874 = vmatpush1.msra.mxu0 0.0
  %2875 = vmatprep.subr.mxu0 0.0
  %2876 = vmatpush1.msra.mxu0 0.0
  %2877 = vmatprep.subr.mxu0 0.0
  %2878 = vmatpush1.msra.mxu0 0.0
  %2879 = vmatprep.subr.mxu0 0.0
  %2880 = vmatpush1.msra.mxu0 0.0
  %2881 = vmatprep.subr.mxu0 0.0
  %2882 = vmatpush1.msra.mxu0 0.0
  %2883 = vmatprep.subr.mxu0 0.0
  %2884 = vmatpush1.msra.mxu0 0.0
  %2885 = vmatprep.subr.mxu0 0.0
  %2886 = vmatpush1.msra.mxu0 0.0
  %2887 = vmatprep.subr.mxu0 0.0
  %2888 = vmatpush1.msra.mxu0 0.0
  %2889 = vmatprep.subr.mxu0 0.0
  %2890 = vmatpush1.msra.mxu0 0.0
  %2891 = vmatprep.subr.mxu0 0.0
  %2892 = vmatpush1.msra.mxu0 0.0
  %2893 = vmatprep.subr.mxu0 0.0
  %2894 = vmatpush1.msra.mxu0 0.0
  %2895 = vmatprep.subr.mxu0 0.0
  %2896 = vmatpush1.msra.mxu0 0.0
  %2897 = vmatprep.subr.mxu0 0.0
  %2898 = vmatpush1.msra.mxu0 0.0
  %2899 = vmatprep.subr.mxu0 0.0
  %2900 = vmatpush1.msra.mxu0 0.0
  %2901 = vmatprep.subr.mxu0 0.0
  %2902 = vmatpush1.msra.mxu0 0.0
  %2903 = vmatprep.subr.mxu0 0.0
  %2904 = vmatpush1.msra.mxu0 0.0
  %2905 = vmatprep.subr.mxu0 0.0
  %2906 = vmatpush1.msra.mxu0 0.0
  %2907 = vmatprep.subr.mxu0 0.0
  %2908 = vmatpush1.msra.mxu0 0.0
  %2909 = vmatprep.subr.mxu0 0.0
  %2910 = vmatpush1.msra.mxu0 0.0
  %2911 = vmatprep.subr.mxu0 0.0
  %2912 = vmatpush1.msra.mxu0 0.0
  %2913 = vmatprep.subr.mxu0 0.0
  %2914 = vmatpush1.msra.mxu0 0.0
  %2915 = vmatprep.subr.mxu0 0.0
  %2916 = vmatpush1.msra.mxu0 0.0
  %2917 = vmatprep.subr.mxu0 0.0
  %2918 = vmatpush1.msra.mxu0 0.0
  %2919 = vmatprep.subr.mxu0 0.0
  %2920 = vmatpush1.msra.mxu0 0.0
  %2921 = vmatprep.subr.mxu0 0.0
  %2922 = vmatpush1.msra.mxu0 0.0
  %2923 = vmatprep.subr.mxu0 0.0
  %2924 = vmatpush1.msra.mxu0 0.0
  %2925 = vmatprep.subr.mxu0 0.0
  %2926 = vmatpush1.msra.mxu0 0.0
  %2927 = vmatprep.mubr.f32.mxu0 0.0
  %v2928 = vand.u32 %v585, 4294901760
  %2929 = vmatmul.mubr.f32.gmra.mrb[0].mxu0 %v2928
  %v2930 = vpop.f32.mrb[0].mxu0
  %v2931 = vadd.f32 %v2849, %v2930
  %v2932 = vpop.f32.mrb[0].mxu0
  %2933 = vmatprep.mubr.f32.mxu0 0.0
  %v2934 = vand.u32 %v588, 4294901760
  %2935 = vmatmul.mubr.f32.gmra.mrb[0].mxu0 %v2934
  %v2936 = vpop.f32.mrb[0].mxu0
  %v2937 = vadd.f32 %v2857, %v2936
  %v2938 = vpop.f32.mrb[0].mxu0
  %2939 = vdwg.mxu0
  %2940 = vmatprep.subr.mxu0 0.0
  %v2941 = vand.u32 %v2527, 4294901760
  %2942 = vmatpush1.msra.mxu0 %v2941
  %2943 = vmatprep.subr.mxu0 0.0
  %2944 = vmatpush1.msra.mxu0 0.0
  %2945 = vmatprep.subr.mxu0 0.0
  %2946 = vmatpush1.msra.mxu0 0.0
  %2947 = vmatprep.subr.mxu0 0.0
  %2948 = vmatpush1.msra.mxu0 0.0
  %2949 = vmatprep.subr.mxu0 0.0
  %2950 = vmatpush1.msra.mxu0 0.0
  %2951 = vmatprep.subr.mxu0 0.0
  %2952 = vmatpush1.msra.mxu0 0.0
  %2953 = vmatprep.subr.mxu0 0.0
  %2954 = vmatpush1.msra.mxu0 0.0
  %2955 = vmatprep.subr.mxu0 0.0
  %2956 = vmatpush1.msra.mxu0 0.0
  %2957 = vmatprep.subr.mxu0 0.0
  %2958 = vmatpush1.msra.mxu0 0.0
  %2959 = vmatprep.subr.mxu0 0.0
  %2960 = vmatpush1.msra.mxu0 0.0
  %2961 = vmatprep.subr.mxu0 0.0
  %2962 = vmatpush1.msra.mxu0 0.0
  %2963 = vmatprep.subr.mxu0 0.0
  %2964 = vmatpush1.msra.mxu0 0.0
  %2965 = vmatprep.subr.mxu0 0.0
  %2966 = vmatpush1.msra.mxu0 0.0
  %2967 = vmatprep.subr.mxu0 0.0
  %2968 = vmatpush1.msra.mxu0 0.0
  %2969 = vmatprep.subr.mxu0 0.0
  %2970 = vmatpush1.msra.mxu0 0.0
  %2971 = vmatprep.subr.mxu0 0.0
  %2972 = vmatpush1.msra.mxu0 0.0
  %2973 = vmatprep.subr.mxu0 0.0
  %2974 = vmatpush1.msra.mxu0 0.0
  %2975 = vmatprep.subr.mxu0 0.0
  %2976 = vmatpush1.msra.mxu0 0.0
  %2977 = vmatprep.subr.mxu0 0.0
  %2978 = vmatpush1.msra.mxu0 0.0
  %2979 = vmatprep.subr.mxu0 0.0
  %2980 = vmatpush1.msra.mxu0 0.0
  %2981 = vmatprep.subr.mxu0 0.0
  %2982 = vmatpush1.msra.mxu0 0.0
  %2983 = vmatprep.subr.mxu0 0.0
  %2984 = vmatpush1.msra.mxu0 0.0
  %2985 = vmatprep.subr.mxu0 0.0
  %2986 = vmatpush1.msra.mxu0 0.0
  %2987 = vmatprep.subr.mxu0 0.0
  %2988 = vmatpush1.msra.mxu0 0.0
  %2989 = vmatprep.subr.mxu0 0.0
  %2990 = vmatpush1.msra.mxu0 0.0
  %2991 = vmatprep.subr.mxu0 0.0
  %2992 = vmatpush1.msra.mxu0 0.0
  %2993 = vmatprep.subr.mxu0 0.0
  %2994 = vmatpush1.msra.mxu0 0.0
  %2995 = vmatprep.subr.mxu0 0.0
  %2996 = vmatpush1.msra.mxu0 0.0
  %2997 = vmatprep.subr.mxu0 0.0
  %2998 = vmatpush1.msra.mxu0 0.0
  %2999 = vmatprep.subr.mxu0 0.0
  %3000 = vmatpush1.msra.mxu0 0.0
  %3001 = vmatprep.subr.mxu0 0.0
  %3002 = vmatpush1.msra.mxu0 0.0
  %3003 = vmatprep.subr.mxu0 0.0
  %3004 = vmatpush1.msra.mxu0 0.0
  %3005 = vmatprep.mubr.f32.mxu0 0.0
  %v3006 = vand.u32 %v585, 4294901760
  %3007 = vmatmul.mubr.f32.gmra.mrb[0].mxu0 %v3006
  %v3008 = vpop.f32.mrb[0].mxu0
  %v3009 = vadd.f32 %v2931, %v3008
  %v3010 = vpop.f32.mrb[0].mxu0
  %3011 = vmatprep.mubr.f32.mxu0 0.0
  %v3012 = vand.u32 %v588, 4294901760
  %3013 = vmatmul.mubr.f32.gmra.mrb[0].mxu0 %v3012
  %v3014 = vpop.f32.mrb[0].mxu0
  %v3015 = vadd.f32 %v2937, %v3014
  %v3016 = vpop.f32.mrb[0].mxu0
  %3017 = vdwg.mxu0
  %3019 = vrot.lane.b32.xlu0 %v3009, 16
  %v3020 = vpop.permute.xlu0 %3019
  %v3022 = vadd.f32 %v568, %v3020
  %v3023 = vxor.u32 %v3022, 2147483648
  %v3024 = vmul.f32 %v3023, 1.442695
  %v3025 = vpow.pop %v3024
  %v3026 = vadd.f32 %v3025, 1.0
  %v3027 = vrcp.pop %v3026
  %v3028 = vmul.f32 1.0, %v3027
  %3030 = vrot.lane.b32.xlu0 %v3015, 16
  %v3031 = vpop.permute.xlu0 %3030
  %v3033 = vadd.f32 %v574, %v3031
  %v3034 = vxor.u32 %v3033, 2147483648
  %v3035 = vmul.f32 %v3034, 1.442695
  %v3036 = vpow.pop %v3035
  %v3037 = vadd.f32 %v3036, 1.0
  %v3038 = vrcp.pop %v3037
  %v3039 = vmul.f32 1.0, %v3038
  %3040 = vrot.lane.b32.xlu0 %v2524, 8
  %v3041 = vpop.permute.xlu0 %3040
  %v3043 = vmul.f32 %v3039, %v3041
  %3045 = vrot.lane.b32.xlu0 %v3043, 112
  %v3046 = vpop.permute.xlu0 %3045
  %3048 = vmatprep.subr.mxu0 0.0
  %v3049 = vand.u32 %v3046, 4294901760
  %3050 = vmatpush1.msra.mxu0 %v3049
  %3051 = vmatprep.subr.mxu0 0.0
  %3052 = vmatpush1.msra.mxu0 0.0
  %3053 = vmatprep.subr.mxu0 0.0
  %3054 = vmatpush1.msra.mxu0 0.0
  %3055 = vmatprep.subr.mxu0 0.0
  %3056 = vmatpush1.msra.mxu0 0.0
  %3057 = vmatprep.subr.mxu0 0.0
  %3058 = vmatpush1.msra.mxu0 0.0
  %3059 = vmatprep.subr.mxu0 0.0
  %3060 = vmatpush1.msra.mxu0 0.0
  %3061 = vmatprep.subr.mxu0 0.0
  %3062 = vmatpush1.msra.mxu0 0.0
  %3063 = vmatprep.subr.mxu0 0.0
  %3064 = vmatpush1.msra.mxu0 0.0
  %3065 = vmatprep.subr.mxu0 0.0
  %3066 = vmatpush1.msra.mxu0 0.0
  %3067 = vmatprep.subr.mxu0 0.0
  %3068 = vmatpush1.msra.mxu0 0.0
  %3069 = vmatprep.subr.mxu0 0.0
  %3070 = vmatpush1.msra.mxu0 0.0
  %3071 = vmatprep.subr.mxu0 0.0
  %3072 = vmatpush1.msra.mxu0 0.0
  %3073 = vmatprep.subr.mxu0 0.0
  %3074 = vmatpush1.msra.mxu0 0.0
  %3075 = vmatprep.subr.mxu0 0.0
  %3076 = vmatpush1.msra.mxu0 0.0
  %3077 = vmatprep.subr.mxu0 0.0
  %3078 = vmatpush1.msra.mxu0 0.0
  %3079 = vmatprep.subr.mxu0 0.0
  %3080 = vmatpush1.msra.mxu0 0.0
  %3081 = vmatprep.subr.mxu0 0.0
  %3082 = vmatpush1.msra.mxu0 0.0
  %3083 = vmatprep.subr.mxu0 0.0
  %3084 = vmatpush1.msra.mxu0 0.0
  %3085 = vmatprep.subr.mxu0 0.0
  %3086 = vmatpush1.msra.mxu0 0.0
  %3087 = vmatprep.subr.mxu0 0.0
  %3088 = vmatpush1.msra.mxu0 0.0
  %3089 = vmatprep.subr.mxu0 0.0
  %3090 = vmatpush1.msra.mxu0 0.0
  %3091 = vmatprep.subr.mxu0 0.0
  %3092 = vmatpush1.msra.mxu0 0.0
  %3093 = vmatprep.subr.mxu0 0.0
  %3094 = vmatpush1.msra.mxu0 0.0
  %3095 = vmatprep.subr.mxu0 0.0
  %3096 = vmatpush1.msra.mxu0 0.0
  %3097 = vmatprep.subr.mxu0 0.0
  %3098 = vmatpush1.msra.mxu0 0.0
  %3099 = vmatprep.subr.mxu0 0.0
  %3100 = vmatpush1.msra.mxu0 0.0
  %3101 = vmatprep.subr.mxu0 0.0
  %3102 = vmatpush1.msra.mxu0 0.0
  %3103 = vmatprep.subr.mxu0 0.0
  %3104 = vmatpush1.msra.mxu0 0.0
  %3105 = vmatprep.subr.mxu0 0.0
  %3106 = vmatpush1.msra.mxu0 0.0
  %3107 = vmatprep.subr.mxu0 0.0
  %3108 = vmatpush1.msra.mxu0 0.0
  %3109 = vmatprep.subr.mxu0 0.0
  %3110 = vmatpush1.msra.mxu0 0.0
  %3111 = vmatprep.subr.mxu0 0.0
  %3112 = vmatpush1.msra.mxu0 0.0
  %3113 = vmatprep.mubr.f32.mxu0 0.0
  %v3114 = vand.u32 %v1095, 4294901760
  %v3115 = vsub.f32 %v1095, %v3114
  %v3116 = vand.u32 %v3115, 4294901760
  %v3117 = vsub.f32 %v3115, %v3116
  %v3118 = vand.u32 %v3117, 4294901760
  %3119 = vmatmul.mubr.f32.gmra.mrb[0].mxu0 %v3118
  %v3120 = vpop.f32.mrb[0].mxu0
  %v3121 = vadd.f32 0.0, %v3120
  %v3122 = vpop.f32.mrb[0].mxu0
  %3123 = vdwg.mxu0
  %3124 = vmatprep.subr.mxu0 0.0
  %v3125 = vand.u32 %v3046, 4294901760
  %v3126 = vsub.f32 %v3046, %v3125
  %v3127 = vand.u32 %v3126, 4294901760
  %v3128 = vsub.f32 %v3126, %v3127
  %v3129 = vand.u32 %v3128, 4294901760
  %3130 = vmatpush1.msra.mxu0 %v3129
  %3131 = vmatprep.subr.mxu0 0.0
  %3132 = vmatpush1.msra.mxu0 0.0
  %3133 = vmatprep.subr.mxu0 0.0
  %3134 = vmatpush1.msra.mxu0 0.0
  %3135 = vmatprep.subr.mxu0 0.0
  %3136 = vmatpush1.msra.mxu0 0.0
  %3137 = vmatprep.subr.mxu0 0.0
  %3138 = vmatpush1.msra.mxu0 0.0
  %3139 = vmatprep.subr.mxu0 0.0
  %3140 = vmatpush1.msra.mxu0 0.0
  %3141 = vmatprep.subr.mxu0 0.0
  %3142 = vmatpush1.msra.mxu0 0.0
  %3143 = vmatprep.subr.mxu0 0.0
  %3144 = vmatpush1.msra.mxu0 0.0
  %3145 = vmatprep.subr.mxu0 0.0
  %3146 = vmatpush1.msra.mxu0 0.0
  %3147 = vmatprep.subr.mxu0 0.0
  %3148 = vmatpush1.msra.mxu0 0.0
  %3149 = vmatprep.subr.mxu0 0.0
  %3150 = vmatpush1.msra.mxu0 0.0
  %3151 = vmatprep.subr.mxu0 0.0
  %3152 = vmatpush1.msra.mxu0 0.0
  %3153 = vmatprep.subr.mxu0 0.0
  %3154 = vmatpush1.msra.mxu0 0.0
  %3155 = vmatprep.subr.mxu0 0.0
  %3156 = vmatpush1.msra.mxu0 0.0
  %3157 = vmatprep.subr.mxu0 0.0
  %3158 = vmatpush1.msra.mxu0 0.0
  %3159 = vmatprep.subr.mxu0 0.0
  %3160 = vmatpush1.msra.mxu0 0.0
  %3161 = vmatprep.subr.mxu0 0.0
  %3162 = vmatpush1.msra.mxu0 0.0
  %3163 = vmatprep.subr.mxu0 0.0
  %3164 = vmatpush1.msra.mxu0 0.0
  %3165 = vmatprep.subr.mxu0 0.0
  %3166 = vmatpush1.msra.mxu0 0.0
  %3167 = vmatprep.subr.mxu0 0.0
  %3168 = vmatpush1.msra.mxu0 0.0
  %3169 = vmatprep.subr.mxu0 0.0
  %3170 = vmatpush1.msra.mxu0 0.0
  %3171 = vmatprep.subr.mxu0 0.0
  %3172 = vmatpush1.msra.mxu0 0.0
  %3173 = vmatprep.subr.mxu0 0.0
  %3174 = vmatpush1.msra.mxu0 0.0
  %3175 = vmatprep.subr.mxu0 0.0
  %3176 = vmatpush1.msra.mxu0 0.0
  %3177 = vmatprep.subr.mxu0 0.0
  %3178 = vmatpush1.msra.mxu0 0.0
  %3179 = vmatprep.subr.mxu0 0.0
  %3180 = vmatpush1.msra.mxu0 0.0
  %3181 = vmatprep.subr.mxu0 0.0
  %3182 = vmatpush1.msra.mxu0 0.0
  %3183 = vmatprep.subr.mxu0 0.0
  %3184 = vmatpush1.msra.mxu0 0.0
  %3185 = vmatprep.subr.mxu0 0.0
  %3186 = vmatpush1.msra.mxu0 0.0
  %3187 = vmatprep.subr.mxu0 0.0
  %3188 = vmatpush1.msra.mxu0 0.0
  %3189 = vmatprep.subr.mxu0 0.0
  %3190 = vmatpush1.msra.mxu0 0.0
  %3191 = vmatprep.subr.mxu0 0.0
  %3192 = vmatpush1.msra.mxu0 0.0
  %3193 = vmatprep.mubr.f32.mxu0 0.0
  %v3194 = vand.u32 %v1095, 4294901760
  %3195 = vmatmul.mubr.f32.gmra.mrb[0].mxu0 %v3194
  %v3196 = vpop.f32.mrb[0].mxu0
  %v3197 = vadd.f32 %v3121, %v3196
  %v3198 = vpop.f32.mrb[0].mxu0
  %3199 = vdwg.mxu0
  %3200 = vmatprep.subr.mxu0 0.0
  %v3201 = vand.u32 %v3046, 4294901760
  %v3202 = vsub.f32 %v3046, %v3201
  %3203 = vmatpush1.msra.mxu0 %v3202
  %3204 = vmatprep.subr.mxu0 0.0
  %3205 = vmatpush1.msra.mxu0 0.0
  %3206 = vmatprep.subr.mxu0 0.0
  %3207 = vmatpush1.msra.mxu0 0.0
  %3208 = vmatprep.subr.mxu0 0.0
  %3209 = vmatpush1.msra.mxu0 0.0
  %3210 = vmatprep.subr.mxu0 0.0
  %3211 = vmatpush1.msra.mxu0 0.0
  %3212 = vmatprep.subr.mxu0 0.0
  %3213 = vmatpush1.msra.mxu0 0.0
  %3214 = vmatprep.subr.mxu0 0.0
  %3215 = vmatpush1.msra.mxu0 0.0
  %3216 = vmatprep.subr.mxu0 0.0
  %3217 = vmatpush1.msra.mxu0 0.0
  %3218 = vmatprep.subr.mxu0 0.0
  %3219 = vmatpush1.msra.mxu0 0.0
  %3220 = vmatprep.subr.mxu0 0.0
  %3221 = vmatpush1.msra.mxu0 0.0
  %3222 = vmatprep.subr.mxu0 0.0
  %3223 = vmatpush1.msra.mxu0 0.0
  %3224 = vmatprep.subr.mxu0 0.0
  %3225 = vmatpush1.msra.mxu0 0.0
  %3226 = vmatprep.subr.mxu0 0.0
  %3227 = vmatpush1.msra.mxu0 0.0
  %3228 = vmatprep.subr.mxu0 0.0
  %3229 = vmatpush1.msra.mxu0 0.0
  %3230 = vmatprep.subr.mxu0 0.0
  %3231 = vmatpush1.msra.mxu0 0.0
  %3232 = vmatprep.subr.mxu0 0.0
  %3233 = vmatpush1.msra.mxu0 0.0
  %3234 = vmatprep.subr.mxu0 0.0
  %3235 = vmatpush1.msra.mxu0 0.0
  %3236 = vmatprep.subr.mxu0 0.0
  %3237 = vmatpush1.msra.mxu0 0.0
  %3238 = vmatprep.subr.mxu0 0.0
  %3239 = vmatpush1.msra.mxu0 0.0
  %3240 = vmatprep.subr.mxu0 0.0
  %3241 = vmatpush1.msra.mxu0 0.0
  %3242 = vmatprep.subr.mxu0 0.0
  %3243 = vmatpush1.msra.mxu0 0.0
  %3244 = vmatprep.subr.mxu0 0.0
  %3245 = vmatpush1.msra.mxu0 0.0
  %3246 = vmatprep.subr.mxu0 0.0
  %3247 = vmatpush1.msra.mxu0 0.0
  %3248 = vmatprep.subr.mxu0 0.0
  %3249 = vmatpush1.msra.mxu0 0.0
  %3250 = vmatprep.subr.mxu0 0.0
  %3251 = vmatpush1.msra.mxu0 0.0
  %3252 = vmatprep.subr.mxu0 0.0
  %3253 = vmatpush1.msra.mxu0 0.0
  %3254 = vmatprep.subr.mxu0 0.0
  %3255 = vmatpush1.msra.mxu0 0.0
  %3256 = vmatprep.subr.mxu0 0.0
  %3257 = vmatpush1.msra.mxu0 0.0
  %3258 = vmatprep.subr.mxu0 0.0
  %3259 = vmatpush1.msra.mxu0 0.0
  %3260 = vmatprep.subr.mxu0 0.0
  %3261 = vmatpush1.msra.mxu0 0.0
  %3262 = vmatprep.subr.mxu0 0.0
  %3263 = vmatpush1.msra.mxu0 0.0
  %3264 = vmatprep.subr.mxu0 0.0
  %3265 = vmatpush1.msra.mxu0 0.0
  %3266 = vmatprep.mubr.f32.mxu0 0.0
  %v3267 = vand.u32 %v1095, 4294901760
  %v3268 = vsub.f32 %v1095, %v3267
  %3269 = vmatmul.mubr.f32.gmra.mrb[0].mxu0 %v3268
  %v3270 = vpop.f32.mrb[0].mxu0
  %v3271 = vadd.f32 %v3197, %v3270
  %v3272 = vpop.f32.mrb[0].mxu0
  %3273 = vdwg.mxu0
  %3274 = vmatprep.subr.mxu0 0.0
  %v3275 = vand.u32 %v3046, 4294901760
  %3276 = vmatpush1.msra.mxu0 %v3275
  %3277 = vmatprep.subr.mxu0 0.0
  %3278 = vmatpush1.msra.mxu0 0.0
  %3279 = vmatprep.subr.mxu0 0.0
  %3280 = vmatpush1.msra.mxu0 0.0
  %3281 = vmatprep.subr.mxu0 0.0
  %3282 = vmatpush1.msra.mxu0 0.0
  %3283 = vmatprep.subr.mxu0 0.0
  %3284 = vmatpush1.msra.mxu0 0.0
  %3285 = vmatprep.subr.mxu0 0.0
  %3286 = vmatpush1.msra.mxu0 0.0
  %3287 = vmatprep.subr.mxu0 0.0
  %3288 = vmatpush1.msra.mxu0 0.0
  %3289 = vmatprep.subr.mxu0 0.0
  %3290 = vmatpush1.msra.mxu0 0.0
  %3291 = vmatprep.subr.mxu0 0.0
  %3292 = vmatpush1.msra.mxu0 0.0
  %3293 = vmatprep.subr.mxu0 0.0
  %3294 = vmatpush1.msra.mxu0 0.0
  %3295 = vmatprep.subr.mxu0 0.0
  %3296 = vmatpush1.msra.mxu0 0.0
  %3297 = vmatprep.subr.mxu0 0.0
  %3298 = vmatpush1.msra.mxu0 0.0
  %3299 = vmatprep.subr.mxu0 0.0
  %3300 = vmatpush1.msra.mxu0 0.0
  %3301 = vmatprep.subr.mxu0 0.0
  %3302 = vmatpush1.msra.mxu0 0.0
  %3303 = vmatprep.subr.mxu0 0.0
  %3304 = vmatpush1.msra.mxu0 0.0
  %3305 = vmatprep.subr.mxu0 0.0
  %3306 = vmatpush1.msra.mxu0 0.0
  %3307 = vmatprep.subr.mxu0 0.0
  %3308 = vmatpush1.msra.mxu0 0.0
  %3309 = vmatprep.subr.mxu0 0.0
  %3310 = vmatpush1.msra.mxu0 0.0
  %3311 = vmatprep.subr.mxu0 0.0
  %3312 = vmatpush1.msra.mxu0 0.0
  %3313 = vmatprep.subr.mxu0 0.0
  %3314 = vmatpush1.msra.mxu0 0.0
  %3315 = vmatprep.subr.mxu0 0.0
  %3316 = vmatpush1.msra.mxu0 0.0
  %3317 = vmatprep.subr.mxu0 0.0
  %3318 = vmatpush1.msra.mxu0 0.0
  %3319 = vmatprep.subr.mxu0 0.0
  %3320 = vmatpush1.msra.mxu0 0.0
  %3321 = vmatprep.subr.mxu0 0.0
  %3322 = vmatpush1.msra.mxu0 0.0
  %3323 = vmatprep.subr.mxu0 0.0
  %3324 = vmatpush1.msra.mxu0 0.0
  %3325 = vmatprep.subr.mxu0 0.0
  %3326 = vmatpush1.msra.mxu0 0.0
  %3327 = vmatprep.subr.mxu0 0.0
  %3328 = vmatpush1.msra.mxu0 0.0
  %3329 = vmatprep.subr.mxu0 0.0
  %3330 = vmatpush1.msra.mxu0 0.0
  %3331 = vmatprep.subr.mxu0 0.0
  %3332 = vmatpush1.msra.mxu0 0.0
  %3333 = vmatprep.subr.mxu0 0.0
  %3334 = vmatpush1.msra.mxu0 0.0
  %3335 = vmatprep.subr.mxu0 0.0
  %3336 = vmatpush1.msra.mxu0 0.0
  %3337 = vmatprep.subr.mxu0 0.0
  %3338 = vmatpush1.msra.mxu0 0.0
  %3339 = vmatprep.mubr.f32.mxu0 0.0
  %v3340 = vand.u32 %v1095, 4294901760
  %v3341 = vsub.f32 %v1095, %v3340
  %v3342 = vand.u32 %v3341, 4294901760
  %3343 = vmatmul.mubr.f32.gmra.mrb[0].mxu0 %v3342
  %v3344 = vpop.f32.mrb[0].mxu0
  %v3345 = vadd.f32 %v3271, %v3344
  %v3346 = vpop.f32.mrb[0].mxu0
  %3347 = vdwg.mxu0
  %3348 = vmatprep.subr.mxu0 0.0
  %v3349 = vand.u32 %v3046, 4294901760
  %v3350 = vsub.f32 %v3046, %v3349
  %v3351 = vand.u32 %v3350, 4294901760
  %3352 = vmatpush1.msra.mxu0 %v3351
  %3353 = vmatprep.subr.mxu0 0.0
  %3354 = vmatpush1.msra.mxu0 0.0
  %3355 = vmatprep.subr.mxu0 0.0
  %3356 = vmatpush1.msra.mxu0 0.0
  %3357 = vmatprep.subr.mxu0 0.0
  %3358 = vmatpush1.msra.mxu0 0.0
  %3359 = vmatprep.subr.mxu0 0.0
  %3360 = vmatpush1.msra.mxu0 0.0
  %3361 = vmatprep.subr.mxu0 0.0
  %3362 = vmatpush1.msra.mxu0 0.0
  %3363 = vmatprep.subr.mxu0 0.0
  %3364 = vmatpush1.msra.mxu0 0.0
  %3365 = vmatprep.subr.mxu0 0.0
  %3366 = vmatpush1.msra.mxu0 0.0
  %3367 = vmatprep.subr.mxu0 0.0
  %3368 = vmatpush1.msra.mxu0 0.0
  %3369 = vmatprep.subr.mxu0 0.0
  %3370 = vmatpush1.msra.mxu0 0.0
  %3371 = vmatprep.subr.mxu0 0.0
  %3372 = vmatpush1.msra.mxu0 0.0
  %3373 = vmatprep.subr.mxu0 0.0
  %3374 = vmatpush1.msra.mxu0 0.0
  %3375 = vmatprep.subr.mxu0 0.0
  %3376 = vmatpush1.msra.mxu0 0.0
  %3377 = vmatprep.subr.mxu0 0.0
  %3378 = vmatpush1.msra.mxu0 0.0
  %3379 = vmatprep.subr.mxu0 0.0
  %3380 = vmatpush1.msra.mxu0 0.0
  %3381 = vmatprep.subr.mxu0 0.0
  %3382 = vmatpush1.msra.mxu0 0.0
  %3383 = vmatprep.subr.mxu0 0.0
  %3384 = vmatpush1.msra.mxu0 0.0
  %3385 = vmatprep.subr.mxu0 0.0
  %3386 = vmatpush1.msra.mxu0 0.0
  %3387 = vmatprep.subr.mxu0 0.0
  %3388 = vmatpush1.msra.mxu0 0.0
  %3389 = vmatprep.subr.mxu0 0.0
  %3390 = vmatpush1.msra.mxu0 0.0
  %3391 = vmatprep.subr.mxu0 0.0
  %3392 = vmatpush1.msra.mxu0 0.0
  %3393 = vmatprep.subr.mxu0 0.0
  %3394 = vmatpush1.msra.mxu0 0.0
  %3395 = vmatprep.subr.mxu0 0.0
  %3396 = vmatpush1.msra.mxu0 0.0
  %3397 = vmatprep.subr.mxu0 0.0
  %3398 = vmatpush1.msra.mxu0 0.0
  %3399 = vmatprep.subr.mxu0 0.0
  %3400 = vmatpush1.msra.mxu0 0.0
  %3401 = vmatprep.subr.mxu0 0.0
  %3402 = vmatpush1.msra.mxu0 0.0
  %3403 = vmatprep.subr.mxu0 0.0
  %3404 = vmatpush1.msra.mxu0 0.0
  %3405 = vmatprep.subr.mxu0 0.0
  %3406 = vmatpush1.msra.mxu0 0.0
  %3407 = vmatprep.subr.mxu0 0.0
  %3408 = vmatpush1.msra.mxu0 0.0
  %3409 = vmatprep.subr.mxu0 0.0
  %3410 = vmatpush1.msra.mxu0 0.0
  %3411 = vmatprep.subr.mxu0 0.0
  %3412 = vmatpush1.msra.mxu0 0.0
  %3413 = vmatprep.subr.mxu0 0.0
  %3414 = vmatpush1.msra.mxu0 0.0
  %3415 = vmatprep.mubr.f32.mxu0 0.0
  %v3416 = vand.u32 %v1095, 4294901760
  %3417 = vmatmul.mubr.f32.gmra.mrb[0].mxu0 %v3416
  %v3418 = vpop.f32.mrb[0].mxu0
  %v3419 = vadd.f32 %v3345, %v3418
  %v3420 = vpop.f32.mrb[0].mxu0
  %3421 = vdwg.mxu0
  %3422 = vmatprep.subr.mxu0 0.0
  %v3423 = vand.u32 %v3046, 4294901760
  %3424 = vmatpush1.msra.mxu0 %v3423
  %3425 = vmatprep.subr.mxu0 0.0
  %3426 = vmatpush1.msra.mxu0 0.0
  %3427 = vmatprep.subr.mxu0 0.0
  %3428 = vmatpush1.msra.mxu0 0.0
  %3429 = vmatprep.subr.mxu0 0.0
  %3430 = vmatpush1.msra.mxu0 0.0
  %3431 = vmatprep.subr.mxu0 0.0
  %3432 = vmatpush1.msra.mxu0 0.0
  %3433 = vmatprep.subr.mxu0 0.0
  %3434 = vmatpush1.msra.mxu0 0.0
  %3435 = vmatprep.subr.mxu0 0.0
  %3436 = vmatpush1.msra.mxu0 0.0
  %3437 = vmatprep.subr.mxu0 0.0
  %3438 = vmatpush1.msra.mxu0 0.0
  %3439 = vmatprep.subr.mxu0 0.0
  %3440 = vmatpush1.msra.mxu0 0.0
  %3441 = vmatprep.subr.mxu0 0.0
  %3442 = vmatpush1.msra.mxu0 0.0
  %3443 = vmatprep.subr.mxu0 0.0
  %3444 = vmatpush1.msra.mxu0 0.0
  %3445 = vmatprep.subr.mxu0 0.0
  %3446 = vmatpush1.msra.mxu0 0.0
  %3447 = vmatprep.subr.mxu0 0.0
  %3448 = vmatpush1.msra.mxu0 0.0
  %3449 = vmatprep.subr.mxu0 0.0
  %3450 = vmatpush1.msra.mxu0 0.0
  %3451 = vmatprep.subr.mxu0 0.0
  %3452 = vmatpush1.msra.mxu0 0.0
  %3453 = vmatprep.subr.mxu0 0.0
  %3454 = vmatpush1.msra.mxu0 0.0
  %3455 = vmatprep.subr.mxu0 0.0
  %3456 = vmatpush1.msra.mxu0 0.0
  %3457 = vmatprep.subr.mxu0 0.0
  %3458 = vmatpush1.msra.mxu0 0.0
  %3459 = vmatprep.subr.mxu0 0.0
  %3460 = vmatpush1.msra.mxu0 0.0
  %3461 = vmatprep.subr.mxu0 0.0
  %3462 = vmatpush1.msra.mxu0 0.0
  %3463 = vmatprep.subr.mxu0 0.0
  %3464 = vmatpush1.msra.mxu0 0.0
  %3465 = vmatprep.subr.mxu0 0.0
  %3466 = vmatpush1.msra.mxu0 0.0
  %3467 = vmatprep.subr.mxu0 0.0
  %3468 = vmatpush1.msra.mxu0 0.0
  %3469 = vmatprep.subr.mxu0 0.0
  %3470 = vmatpush1.msra.mxu0 0.0
  %3471 = vmatprep.subr.mxu0 0.0
  %3472 = vmatpush1.msra.mxu0 0.0
  %3473 = vmatprep.subr.mxu0 0.0
  %3474 = vmatpush1.msra.mxu0 0.0
  %3475 = vmatprep.subr.mxu0 0.0
  %3476 = vmatpush1.msra.mxu0 0.0
  %3477 = vmatprep.subr.mxu0 0.0
  %3478 = vmatpush1.msra.mxu0 0.0
  %3479 = vmatprep.subr.mxu0 0.0
  %3480 = vmatpush1.msra.mxu0 0.0
  %3481 = vmatprep.subr.mxu0 0.0
  %3482 = vmatpush1.msra.mxu0 0.0
  %3483 = vmatprep.subr.mxu0 0.0
  %3484 = vmatpush1.msra.mxu0 0.0
  %3485 = vmatprep.subr.mxu0 0.0
  %3486 = vmatpush1.msra.mxu0 0.0
  %3487 = vmatprep.mubr.f32.mxu0 0.0
  %v3488 = vand.u32 %v1095, 4294901760
  %3489 = vmatmul.mubr.f32.gmra.mrb[0].mxu0 %v3488
  %v3490 = vpop.f32.mrb[0].mxu0
  %v3491 = vadd.f32 %v3419, %v3490
  %v3492 = vpop.f32.mrb[0].mxu0
  %3493 = vdwg.mxu0
  %3495 = vrot.lane.b32.xlu0 %v3491, 16
  %v3496 = vpop.permute.xlu0 %3495
  %v3498 = vadd.f32 %v580, %v3496
  %v3499 = vmax.f32 %v3498, 0.0
  %v3500 = vsub.f32 1.0, %v3028
  %v3501 = vmul.f32 %v3500, %v3041
  %v3502 = vmul.f32 %v3028, %v3499
  %v3503 = vadd.f32 %v3501, %v3502
  %3505 = vrot.lane.b32.xlu0 %v3503, 112
  %v3506 = vpop.permute.xlu0 %3505
  %3508 = vmatprep.subr.mxu0 0.0
  %v3509 = vand.u32 %v3506, 4294901760
  %3510 = vmatpush1.msra.mxu0 %v3509
  %3511 = vmatprep.subr.mxu0 0.0
  %3512 = vmatpush1.msra.mxu0 0.0
  %3513 = vmatprep.subr.mxu0 0.0
  %3514 = vmatpush1.msra.mxu0 0.0
  %3515 = vmatprep.subr.mxu0 0.0
  %3516 = vmatpush1.msra.mxu0 0.0
  %3517 = vmatprep.subr.mxu0 0.0
  %3518 = vmatpush1.msra.mxu0 0.0
  %3519 = vmatprep.subr.mxu0 0.0
  %3520 = vmatpush1.msra.mxu0 0.0
  %3521 = vmatprep.subr.mxu0 0.0
  %3522 = vmatpush1.msra.mxu0 0.0
  %3523 = vmatprep.subr.mxu0 0.0
  %3524 = vmatpush1.msra.mxu0 0.0
  %3525 = vmatprep.subr.mxu0 0.0
  %3526 = vmatpush1.msra.mxu0 0.0
  %3527 = vmatprep.subr.mxu0 0.0
  %3528 = vmatpush1.msra.mxu0 0.0
  %3529 = vmatprep.subr.mxu0 0.0
  %3530 = vmatpush1.msra.mxu0 0.0
  %3531 = vmatprep.subr.mxu0 0.0
  %3532 = vmatpush1.msra.mxu0 0.0
  %3533 = vmatprep.subr.mxu0 0.0
  %3534 = vmatpush1.msra.mxu0 0.0
  %3535 = vmatprep.subr.mxu0 0.0
  %3536 = vmatpush1.msra.mxu0 0.0
  %3537 = vmatprep.subr.mxu0 0.0
  %3538 = vmatpush1.msra.mxu0 0.0
  %3539 = vmatprep.subr.mxu0 0.0
  %3540 = vmatpush1.msra.mxu0 0.0
  %3541 = vmatprep.subr.mxu0 0.0
  %3542 = vmatpush1.msra.mxu0 0.0
  %3543 = vmatprep.subr.mxu0 0.0
  %3544 = vmatpush1.msra.mxu0 0.0
  %3545 = vmatprep.subr.mxu0 0.0
  %3546 = vmatpush1.msra.mxu0 0.0
  %3547 = vmatprep.subr.mxu0 0.0
  %3548 = vmatpush1.msra.mxu0 0.0
  %3549 = vmatprep.subr.mxu0 0.0
  %3550 = vmatpush1.msra.mxu0 0.0
  %3551 = vmatprep.subr.mxu0 0.0
  %3552 = vmatpush1.msra.mxu0 0.0
  %3553 = vmatprep.subr.mxu0 0.0
  %3554 = vmatpush1.msra.mxu0 0.0
  %3555 = vmatprep.subr.mxu0 0.0
  %3556 = vmatpush1.msra.mxu0 0.0
  %3557 = vmatprep.subr.mxu0 0.0
  %3558 = vmatpush1.msra.mxu0 0.0
  %3559 = vmatprep.subr.mxu0 0.0
  %3560 = vmatpush1.msra.mxu0 0.0
  %3561 = vmatprep.subr.mxu0 0.0
  %3562 = vmatpush1.msra.mxu0 0.0
  %3563 = vmatprep.subr.mxu0 0.0
  %3564 = vmatpush1.msra.mxu0 0.0
  %3565 = vmatprep.subr.mxu0 0.0
  %3566 = vmatpush1.msra.mxu0 0.0
  %3567 = vmatprep.subr.mxu0 0.0
  %3568 = vmatpush1.msra.mxu0 0.0
  %3569 = vmatprep.subr.mxu0 0.0
  %3570 = vmatpush1.msra.mxu0 0.0
  %3571 = vmatprep.subr.mxu0 0.0
  %3572 = vmatpush1.msra.mxu0 0.0
  %3573 = vmatprep.mubr.f32.mxu0 0.0
  %v3574 = vand.u32 %v585, 4294901760
  %v3575 = vsub.f32 %v585, %v3574
  %v3576 = vand.u32 %v3575, 4294901760
  %v3577 = vsub.f32 %v3575, %v3576
  %v3578 = vand.u32 %v3577, 4294901760
  %3579 = vmatmul.mubr.f32.gmra.mrb[0].mxu0 %v3578
  %v3580 = vpop.f32.mrb[0].mxu0
  %v3581 = vadd.f32 0.0, %v3580
  %v3582 = vpop.f32.mrb[0].mxu0
  %3583 = vmatprep.mubr.f32.mxu0 0.0
  %v3584 = vand.u32 %v588, 4294901760
  %v3585 = vsub.f32 %v588, %v3584
  %v3586 = vand.u32 %v3585, 4294901760
  %v3587 = vsub.f32 %v3585, %v3586
  %v3588 = vand.u32 %v3587, 4294901760
  %3589 = vmatmul.mubr.f32.gmra.mrb[0].mxu0 %v3588
  %v3590 = vpop.f32.mrb[0].mxu0
  %v3591 = vadd.f32 0.0, %v3590
  %v3592 = vpop.f32.mrb[0].mxu0
  %3593 = vdwg.mxu0
  %3594 = vmatprep.subr.mxu0 0.0
  %v3595 = vand.u32 %v3506, 4294901760
  %v3596 = vsub.f32 %v3506, %v3595
  %v3597 = vand.u32 %v3596, 4294901760
  %v3598 = vsub.f32 %v3596, %v3597
  %v3599 = vand.u32 %v3598, 4294901760
  %3600 = vmatpush1.msra.mxu0 %v3599
  %3601 = vmatprep.subr.mxu0 0.0
  %3602 = vmatpush1.msra.mxu0 0.0
  %3603 = vmatprep.subr.mxu0 0.0
  %3604 = vmatpush1.msra.mxu0 0.0
  %3605 = vmatprep.subr.mxu0 0.0
  %3606 = vmatpush1.msra.mxu0 0.0
  %3607 = vmatprep.subr.mxu0 0.0
  %3608 = vmatpush1.msra.mxu0 0.0
  %3609 = vmatprep.subr.mxu0 0.0
  %3610 = vmatpush1.msra.mxu0 0.0
  %3611 = vmatprep.subr.mxu0 0.0
  %3612 = vmatpush1.msra.mxu0 0.0
  %3613 = vmatprep.subr.mxu0 0.0
  %3614 = vmatpush1.msra.mxu0 0.0
  %3615 = vmatprep.subr.mxu0 0.0
  %3616 = vmatpush1.msra.mxu0 0.0
  %3617 = vmatprep.subr.mxu0 0.0
  %3618 = vmatpush1.msra.mxu0 0.0
  %3619 = vmatprep.subr.mxu0 0.0
  %3620 = vmatpush1.msra.mxu0 0.0
  %3621 = vmatprep.subr.mxu0 0.0
  %3622 = vmatpush1.msra.mxu0 0.0
  %3623 = vmatprep.subr.mxu0 0.0
  %3624 = vmatpush1.msra.mxu0 0.0
  %3625 = vmatprep.subr.mxu0 0.0
  %3626 = vmatpush1.msra.mxu0 0.0
  %3627 = vmatprep.subr.mxu0 0.0
  %3628 = vmatpush1.msra.mxu0 0.0
  %3629 = vmatprep.subr.mxu0 0.0
  %3630 = vmatpush1.msra.mxu0 0.0
  %3631 = vmatprep.subr.mxu0 0.0
  %3632 = vmatpush1.msra.mxu0 0.0
  %3633 = vmatprep.subr.mxu0 0.0
  %3634 = vmatpush1.msra.mxu0 0.0
  %3635 = vmatprep.subr.mxu0 0.0
  %3636 = vmatpush1.msra.mxu0 0.0
  %3637 = vmatprep.subr.mxu0 0.0
  %3638 = vmatpush1.msra.mxu0 0.0
  %3639 = vmatprep.subr.mxu0 0.0
  %3640 = vmatpush1.msra.mxu0 0.0
  %3641 = vmatprep.subr.mxu0 0.0
  %3642 = vmatpush1.msra.mxu0 0.0
  %3643 = vmatprep.subr.mxu0 0.0
  %3644 = vmatpush1.msra.mxu0 0.0
  %3645 = vmatprep.subr.mxu0 0.0
  %3646 = vmatpush1.msra.mxu0 0.0
  %3647 = vmatprep.subr.mxu0 0.0
  %3648 = vmatpush1.msra.mxu0 0.0
  %3649 = vmatprep.subr.mxu0 0.0
  %3650 = vmatpush1.msra.mxu0 0.0
  %3651 = vmatprep.subr.mxu0 0.0
  %3652 = vmatpush1.msra.mxu0 0.0
  %3653 = vmatprep.subr.mxu0 0.0
  %3654 = vmatpush1.msra.mxu0 0.0
  %3655 = vmatprep.subr.mxu0 0.0
  %3656 = vmatpush1.msra.mxu0 0.0
  %3657 = vmatprep.subr.mxu0 0.0
  %3658 = vmatpush1.msra.mxu0 0.0
  %3659 = vmatprep.subr.mxu0 0.0
  %3660 = vmatpush1.msra.mxu0 0.0
  %3661 = vmatprep.subr.mxu0 0.0
  %3662 = vmatpush1.msra.mxu0 0.0
  %3663 = vmatprep.mubr.f32.mxu0 0.0
  %v3664 = vand.u32 %v585, 4294901760
  %3665 = vmatmul.mubr.f32.gmra.mrb[0].mxu0 %v3664
  %v3666 = vpop.f32.mrb[0].mxu0
  %v3667 = vadd.f32 %v3581, %v3666
  %v3668 = vpop.f32.mrb[0].mxu0
  %3669 = vmatprep.mubr.f32.mxu0 0.0
  %v3670 = vand.u32 %v588, 4294901760
  %3671 = vmatmul.mubr.f32.gmra.mrb[0].mxu0 %v3670
  %v3672 = vpop.f32.mrb[0].mxu0
  %v3673 = vadd.f32 %v3591, %v3672
  %v3674 = vpop.f32.mrb[0].mxu0
  %3675 = vdwg.mxu0
  %3676 = vmatprep.subr.mxu0 0.0
  %v3677 = vand.u32 %v3506, 4294901760
  %v3678 = vsub.f32 %v3506, %v3677
  %3679 = vmatpush1.msra.mxu0 %v3678
  %3680 = vmatprep.subr.mxu0 0.0
  %3681 = vmatpush1.msra.mxu0 0.0
  %3682 = vmatprep.subr.mxu0 0.0
  %3683 = vmatpush1.msra.mxu0 0.0
  %3684 = vmatprep.subr.mxu0 0.0
  %3685 = vmatpush1.msra.mxu0 0.0
  %3686 = vmatprep.subr.mxu0 0.0
  %3687 = vmatpush1.msra.mxu0 0.0
  %3688 = vmatprep.subr.mxu0 0.0
  %3689 = vmatpush1.msra.mxu0 0.0
  %3690 = vmatprep.subr.mxu0 0.0
  %3691 = vmatpush1.msra.mxu0 0.0
  %3692 = vmatprep.subr.mxu0 0.0
  %3693 = vmatpush1.msra.mxu0 0.0
  %3694 = vmatprep.subr.mxu0 0.0
  %3695 = vmatpush1.msra.mxu0 0.0
  %3696 = vmatprep.subr.mxu0 0.0
  %3697 = vmatpush1.msra.mxu0 0.0
  %3698 = vmatprep.subr.mxu0 0.0
  %3699 = vmatpush1.msra.mxu0 0.0
  %3700 = vmatprep.subr.mxu0 0.0
  %3701 = vmatpush1.msra.mxu0 0.0
  %3702 = vmatprep.subr.mxu0 0.0
  %3703 = vmatpush1.msra.mxu0 0.0
  %3704 = vmatprep.subr.mxu0 0.0
  %3705 = vmatpush1.msra.mxu0 0.0
  %3706 = vmatprep.subr.mxu0 0.0
  %3707 = vmatpush1.msra.mxu0 0.0
  %3708 = vmatprep.subr.mxu0 0.0
  %3709 = vmatpush1.msra.mxu0 0.0
  %3710 = vmatprep.subr.mxu0 0.0
  %3711 = vmatpush1.msra.mxu0 0.0
  %3712 = vmatprep.subr.mxu0 0.0
  %3713 = vmatpush1.msra.mxu0 0.0
  %3714 = vmatprep.subr.mxu0 0.0
  %3715 = vmatpush1.msra.mxu0 0.0
  %3716 = vmatprep.subr.mxu0 0.0
  %3717 = vmatpush1.msra.mxu0 0.0
  %3718 = vmatprep.subr.mxu0 0.0
  %3719 = vmatpush1.msra.mxu0 0.0
  %3720 = vmatprep.subr.mxu0 0.0
  %3721 = vmatpush1.msra.mxu0 0.0
  %3722 = vmatprep.subr.mxu0 0.0
  %3723 = vmatpush1.msra.mxu0 0.0
  %3724 = vmatprep.subr.mxu0 0.0
  %3725 = vmatpush1.msra.mxu0 0.0
  %3726 = vmatprep.subr.mxu0 0.0
  %3727 = vmatpush1.msra.mxu0 0.0
  %3728 = vmatprep.subr.mxu0 0.0
  %3729 = vmatpush1.msra.mxu0 0.0
  %3730 = vmatprep.subr.mxu0 0.0
  %3731 = vmatpush1.msra.mxu0 0.0
  %3732 = vmatprep.subr.mxu0 0.0
  %3733 = vmatpush1.msra.mxu0 0.0
  %3734 = vmatprep.subr.mxu0 0.0
  %3735 = vmatpush1.msra.mxu0 0.0
  %3736 = vmatprep.subr.mxu0 0.0
  %3737 = vmatpush1.msra.mxu0 0.0
  %3738 = vmatprep.subr.mxu0 0.0
  %3739 = vmatpush1.msra.mxu0 0.0
  %3740 = vmatprep.subr.mxu0 0.0
  %3741 = vmatpush1.msra.mxu0 0.0
  %3742 = vmatprep.mubr.f32.mxu0 0.0
  %v3743 = vand.u32 %v585, 4294901760
  %v3744 = vsub.f32 %v585, %v3743
  %3745 = vmatmul.mubr.f32.gmra.mrb[0].mxu0 %v3744
  %v3746 = vpop.f32.mrb[0].mxu0
  %v3747 = vadd.f32 %v3667, %v3746
  %v3748 = vpop.f32.mrb[0].mxu0
  %3749 = vmatprep.mubr.f32.mxu0 0.0
  %v3750 = vand.u32 %v588, 4294901760
  %v3751 = vsub.f32 %v588, %v3750
  %3752 = vmatmul.mubr.f32.gmra.mrb[0].mxu0 %v3751
  %v3753 = vpop.f32.mrb[0].mxu0
  %v3754 = vadd.f32 %v3673, %v3753
  %v3755 = vpop.f32.mrb[0].mxu0
  %3756 = vdwg.mxu0
  %3757 = vmatprep.subr.mxu0 0.0
  %v3758 = vand.u32 %v3506, 4294901760
  %3759 = vmatpush1.msra.mxu0 %v3758
  %3760 = vmatprep.subr.mxu0 0.0
  %3761 = vmatpush1.msra.mxu0 0.0
  %3762 = vmatprep.subr.mxu0 0.0
  %3763 = vmatpush1.msra.mxu0 0.0
  %3764 = vmatprep.subr.mxu0 0.0
  %3765 = vmatpush1.msra.mxu0 0.0
  %3766 = vmatprep.subr.mxu0 0.0
  %3767 = vmatpush1.msra.mxu0 0.0
  %3768 = vmatprep.subr.mxu0 0.0
  %3769 = vmatpush1.msra.mxu0 0.0
  %3770 = vmatprep.subr.mxu0 0.0
  %3771 = vmatpush1.msra.mxu0 0.0
  %3772 = vmatprep.subr.mxu0 0.0
  %3773 = vmatpush1.msra.mxu0 0.0
  %3774 = vmatprep.subr.mxu0 0.0
  %3775 = vmatpush1.msra.mxu0 0.0
  %3776 = vmatprep.subr.mxu0 0.0
  %3777 = vmatpush1.msra.mxu0 0.0
  %3778 = vmatprep.subr.mxu0 0.0
  %3779 = vmatpush1.msra.mxu0 0.0
  %3780 = vmatprep.subr.mxu0 0.0
  %3781 = vmatpush1.msra.mxu0 0.0
  %3782 = vmatprep.subr.mxu0 0.0
  %3783 = vmatpush1.msra.mxu0 0.0
  %3784 = vmatprep.subr.mxu0 0.0
  %3785 = vmatpush1.msra.mxu0 0.0
  %3786 = vmatprep.subr.mxu0 0.0
  %3787 = vmatpush1.msra.mxu0 0.0
  %3788 = vmatprep.subr.mxu0 0.0
  %3789 = vmatpush1.msra.mxu0 0.0
  %3790 = vmatprep.subr.mxu0 0.0
  %3791 = vmatpush1.msra.mxu0 0.0
  %3792 = vmatprep.subr.mxu0 0.0
  %3793 = vmatpush1.msra.mxu0 0.0
  %3794 = vmatprep.subr.mxu0 0.0
  %3795 = vmatpush1.msra.mxu0 0.0
  %3796 = vmatprep.subr.mxu0 0.0
  %3797 = vmatpush1.msra.mxu0 0.0
  %3798 = vmatprep.subr.mxu0 0.0
  %3799 = vmatpush1.msra.mxu0 0.0
  %3800 = vmatprep.subr.mxu0 0.0
  %3801 = vmatpush1.msra.mxu0 0.0
  %3802 = vmatprep.subr.mxu0 0.0
  %3803 = vmatpush1.msra.mxu0 0.0
  %3804 = vmatprep.subr.mxu0 0.0
  %3805 = vmatpush1.msra.mxu0 0.0
  %3806 = vmatprep.subr.mxu0 0.0
  %3807 = vmatpush1.msra.mxu0 0.0
  %3808 = vmatprep.subr.mxu0 0.0
  %3809 = vmatpush1.msra.mxu0 0.0
  %3810 = vmatprep.subr.mxu0 0.0
  %3811 = vmatpush1.msra.mxu0 0.0
  %3812 = vmatprep.subr.mxu0 0.0
  %3813 = vmatpush1.msra.mxu0 0.0
  %3814 = vmatprep.subr.mxu0 0.0
  %3815 = vmatpush1.msra.mxu0 0.0
  %3816 = vmatprep.subr.mxu0 0.0
  %3817 = vmatpush1.msra.mxu0 0.0
  %3818 = vmatprep.subr.mxu0 0.0
  %3819 = vmatpush1.msra.mxu0 0.0
  %3820 = vmatprep.subr.mxu0 0.0
  %3821 = vmatpush1.msra.mxu0 0.0
  %3822 = vmatprep.mubr.f32.mxu0 0.0
  %v3823 = vand.u32 %v585, 4294901760
  %v3824 = vsub.f32 %v585, %v3823
  %v3825 = vand.u32 %v3824, 4294901760
  %3826 = vmatmul.mubr.f32.gmra.mrb[0].mxu0 %v3825
  %v3827 = vpop.f32.mrb[0].mxu0
  %v3828 = vadd.f32 %v3747, %v3827
  %v3829 = vpop.f32.mrb[0].mxu0
  %3830 = vmatprep.mubr.f32.mxu0 0.0
  %v3831 = vand.u32 %v588, 4294901760
  %v3832 = vsub.f32 %v588, %v3831
  %v3833 = vand.u32 %v3832, 4294901760
  %3834 = vmatmul.mubr.f32.gmra.mrb[0].mxu0 %v3833
  %v3835 = vpop.f32.mrb[0].mxu0
  %v3836 = vadd.f32 %v3754, %v3835
  %v3837 = vpop.f32.mrb[0].mxu0
  %3838 = vdwg.mxu0
  %3839 = vmatprep.subr.mxu0 0.0
  %v3840 = vand.u32 %v3506, 4294901760
  %v3841 = vsub.f32 %v3506, %v3840
  %v3842 = vand.u32 %v3841, 4294901760
  %3843 = vmatpush1.msra.mxu0 %v3842
  %3844 = vmatprep.subr.mxu0 0.0
  %3845 = vmatpush1.msra.mxu0 0.0
  %3846 = vmatprep.subr.mxu0 0.0
  %3847 = vmatpush1.msra.mxu0 0.0
  %3848 = vmatprep.subr.mxu0 0.0
  %3849 = vmatpush1.msra.mxu0 0.0
  %3850 = vmatprep.subr.mxu0 0.0
  %3851 = vmatpush1.msra.mxu0 0.0
  %3852 = vmatprep.subr.mxu0 0.0
  %3853 = vmatpush1.msra.mxu0 0.0
  %3854 = vmatprep.subr.mxu0 0.0
  %3855 = vmatpush1.msra.mxu0 0.0
  %3856 = vmatprep.subr.mxu0 0.0
  %3857 = vmatpush1.msra.mxu0 0.0
  %3858 = vmatprep.subr.mxu0 0.0
  %3859 = vmatpush1.msra.mxu0 0.0
  %3860 = vmatprep.subr.mxu0 0.0
  %3861 = vmatpush1.msra.mxu0 0.0
  %3862 = vmatprep.subr.mxu0 0.0
  %3863 = vmatpush1.msra.mxu0 0.0
  %3864 = vmatprep.subr.mxu0 0.0
  %3865 = vmatpush1.msra.mxu0 0.0
  %3866 = vmatprep.subr.mxu0 0.0
  %3867 = vmatpush1.msra.mxu0 0.0
  %3868 = vmatprep.subr.mxu0 0.0
  %3869 = vmatpush1.msra.mxu0 0.0
  %3870 = vmatprep.subr.mxu0 0.0
  %3871 = vmatpush1.msra.mxu0 0.0
  %3872 = vmatprep.subr.mxu0 0.0
  %3873 = vmatpush1.msra.mxu0 0.0
  %3874 = vmatprep.subr.mxu0 0.0
  %3875 = vmatpush1.msra.mxu0 0.0
  %3876 = vmatprep.subr.mxu0 0.0
  %3877 = vmatpush1.msra.mxu0 0.0
  %3878 = vmatprep.subr.mxu0 0.0
  %3879 = vmatpush1.msra.mxu0 0.0
  %3880 = vmatprep.subr.mxu0 0.0
  %3881 = vmatpush1.msra.mxu0 0.0
  %3882 = vmatprep.subr.mxu0 0.0
  %3883 = vmatpush1.msra.mxu0 0.0
  %3884 = vmatprep.subr.mxu0 0.0
  %3885 = vmatpush1.msra.mxu0 0.0
  %3886 = vmatprep.subr.mxu0 0.0
  %3887 = vmatpush1.msra.mxu0 0.0
  %3888 = vmatprep.subr.mxu0 0.0
  %3889 = vmatpush1.msra.mxu0 0.0
  %3890 = vmatprep.subr.mxu0 0.0
  %3891 = vmatpush1.msra.mxu0 0.0
  %3892 = vmatprep.subr.mxu0 0.0
  %3893 = vmatpush1.msra.mxu0 0.0
  %3894 = vmatprep.subr.mxu0 0.0
  %3895 = vmatpush1.msra.mxu0 0.0
  %3896 = vmatprep.subr.mxu0 0.0
  %3897 = vmatpush1.msra.mxu0 0.0
  %3898 = vmatprep.subr.mxu0 0.0
  %3899 = vmatpush1.msra.mxu0 0.0
  %3900 = vmatprep.subr.mxu0 0.0
  %3901 = vmatpush1.msra.mxu0 0.0
  %3902 = vmatprep.subr.mxu0 0.0
  %3903 = vmatpush1.msra.mxu0 0.0
  %3904 = vmatprep.subr.mxu0 0.0
  %3905 = vmatpush1.msra.mxu0 0.0
  %3906 = vmatprep.mubr.f32.mxu0 0.0
  %v3907 = vand.u32 %v585, 4294901760
  %3908 = vmatmul.mubr.f32.gmra.mrb[0].mxu0 %v3907
  %v3909 = vpop.f32.mrb[0].mxu0
  %v3910 = vadd.f32 %v3828, %v3909
  %v3911 = vpop.f32.mrb[0].mxu0
  %3912 = vmatprep.mubr.f32.mxu0 0.0
  %v3913 = vand.u32 %v588, 4294901760
  %3914 = vmatmul.mubr.f32.gmra.mrb[0].mxu0 %v3913
  %v3915 = vpop.f32.mrb[0].mxu0
  %v3916 = vadd.f32 %v3836, %v3915
  %v3917 = vpop.f32.mrb[0].mxu0
  %3918 = vdwg.mxu0
  %3919 = vmatprep.subr.mxu0 0.0
  %v3920 = vand.u32 %v3506, 4294901760
  %3921 = vmatpush1.msra.mxu0 %v3920
  %3922 = vmatprep.subr.mxu0 0.0
  %3923 = vmatpush1.msra.mxu0 0.0
  %3924 = vmatprep.subr.mxu0 0.0
  %3925 = vmatpush1.msra.mxu0 0.0
  %3926 = vmatprep.subr.mxu0 0.0
  %3927 = vmatpush1.msra.mxu0 0.0
  %3928 = vmatprep.subr.mxu0 0.0
  %3929 = vmatpush1.msra.mxu0 0.0
  %3930 = vmatprep.subr.mxu0 0.0
  %3931 = vmatpush1.msra.mxu0 0.0
  %3932 = vmatprep.subr.mxu0 0.0
  %3933 = vmatpush1.msra.mxu0 0.0
  %3934 = vmatprep.subr.mxu0 0.0
  %3935 = vmatpush1.msra.mxu0 0.0
  %3936 = vmatprep.subr.mxu0 0.0
  %3937 = vmatpush1.msra.mxu0 0.0
  %3938 = vmatprep.subr.mxu0 0.0
  %3939 = vmatpush1.msra.mxu0 0.0
  %3940 = vmatprep.subr.mxu0 0.0
  %3941 = vmatpush1.msra.mxu0 0.0
  %3942 = vmatprep.subr.mxu0 0.0
  %3943 = vmatpush1.msra.mxu0 0.0
  %3944 = vmatprep.subr.mxu0 0.0
  %3945 = vmatpush1.msra.mxu0 0.0
  %3946 = vmatprep.subr.mxu0 0.0
  %3947 = vmatpush1.msra.mxu0 0.0
  %3948 = vmatprep.subr.mxu0 0.0
  %3949 = vmatpush1.msra.mxu0 0.0
  %3950 = vmatprep.subr.mxu0 0.0
  %3951 = vmatpush1.msra.mxu0 0.0
  %3952 = vmatprep.subr.mxu0 0.0
  %3953 = vmatpush1.msra.mxu0 0.0
  %3954 = vmatprep.subr.mxu0 0.0
  %3955 = vmatpush1.msra.mxu0 0.0
  %3956 = vmatprep.subr.mxu0 0.0
  %3957 = vmatpush1.msra.mxu0 0.0
  %3958 = vmatprep.subr.mxu0 0.0
  %3959 = vmatpush1.msra.mxu0 0.0
  %3960 = vmatprep.subr.mxu0 0.0
  %3961 = vmatpush1.msra.mxu0 0.0
  %3962 = vmatprep.subr.mxu0 0.0
  %3963 = vmatpush1.msra.mxu0 0.0
  %3964 = vmatprep.subr.mxu0 0.0
  %3965 = vmatpush1.msra.mxu0 0.0
  %3966 = vmatprep.subr.mxu0 0.0
  %3967 = vmatpush1.msra.mxu0 0.0
  %3968 = vmatprep.subr.mxu0 0.0
  %3969 = vmatpush1.msra.mxu0 0.0
  %3970 = vmatprep.subr.mxu0 0.0
  %3971 = vmatpush1.msra.mxu0 0.0
  %3972 = vmatprep.subr.mxu0 0.0
  %3973 = vmatpush1.msra.mxu0 0.0
  %3974 = vmatprep.subr.mxu0 0.0
  %3975 = vmatpush1.msra.mxu0 0.0
  %3976 = vmatprep.subr.mxu0 0.0
  %3977 = vmatpush1.msra.mxu0 0.0
  %3978 = vmatprep.subr.mxu0 0.0
  %3979 = vmatpush1.msra.mxu0 0.0
  %3980 = vmatprep.subr.mxu0 0.0
  %3981 = vmatpush1.msra.mxu0 0.0
  %3982 = vmatprep.subr.mxu0 0.0
  %3983 = vmatpush1.msra.mxu0 0.0
  %3984 = vmatprep.mubr.f32.mxu0 0.0
  %v3985 = vand.u32 %v585, 4294901760
  %3986 = vmatmul.mubr.f32.gmra.mrb[0].mxu0 %v3985
  %v3987 = vpop.f32.mrb[0].mxu0
  %v3988 = vadd.f32 %v3910, %v3987
  %v3989 = vpop.f32.mrb[0].mxu0
  %3990 = vmatprep.mubr.f32.mxu0 0.0
  %v3991 = vand.u32 %v588, 4294901760
  %3992 = vmatmul.mubr.f32.gmra.mrb[0].mxu0 %v3991
  %v3993 = vpop.f32.mrb[0].mxu0
  %v3994 = vadd.f32 %v3916, %v3993
  %v3995 = vpop.f32.mrb[0].mxu0
  %3996 = vdwg.mxu0
  %3998 = vrot.lane.b32.xlu0 %v3988, 24
  %v3999 = vpop.permute.xlu0 %3998
  %v4001 = vadd.f32 %v568, %v3999
  %v4002 = vxor.u32 %v4001, 2147483648
  %v4003 = vmul.f32 %v4002, 1.442695
  %v4004 = vpow.pop %v4003
  %v4005 = vadd.f32 %v4004, 1.0
  %v4006 = vrcp.pop %v4005
  %v4007 = vmul.f32 1.0, %v4006
  %4009 = vrot.lane.b32.xlu0 %v3994, 24
  %v4010 = vpop.permute.xlu0 %4009
  %v4012 = vadd.f32 %v574, %v4010
  %v4013 = vxor.u32 %v4012, 2147483648
  %v4014 = vmul.f32 %v4013, 1.442695
  %v4015 = vpow.pop %v4014
  %v4016 = vadd.f32 %v4015, 1.0
  %v4017 = vrcp.pop %v4016
  %v4018 = vmul.f32 1.0, %v4017
  %4019 = vrot.lane.b32.xlu0 %v3503, 8
  %v4020 = vpop.permute.xlu0 %4019
  %v4022 = vmul.f32 %v4018, %v4020
  %4024 = vrot.lane.b32.xlu0 %v4022, 104
  %v4025 = vpop.permute.xlu0 %4024
  %4027 = vmatprep.subr.mxu0 0.0
  %v4028 = vand.u32 %v4025, 4294901760
  %4029 = vmatpush1.msra.mxu0 %v4028
  %4030 = vmatprep.subr.mxu0 0.0
  %4031 = vmatpush1.msra.mxu0 0.0
  %4032 = vmatprep.subr.mxu0 0.0
  %4033 = vmatpush1.msra.mxu0 0.0
  %4034 = vmatprep.subr.mxu0 0.0
  %4035 = vmatpush1.msra.mxu0 0.0
  %4036 = vmatprep.subr.mxu0 0.0
  %4037 = vmatpush1.msra.mxu0 0.0
  %4038 = vmatprep.subr.mxu0 0.0
  %4039 = vmatpush1.msra.mxu0 0.0
  %4040 = vmatprep.subr.mxu0 0.0
  %4041 = vmatpush1.msra.mxu0 0.0
  %4042 = vmatprep.subr.mxu0 0.0
  %4043 = vmatpush1.msra.mxu0 0.0
  %4044 = vmatprep.subr.mxu0 0.0
  %4045 = vmatpush1.msra.mxu0 0.0
  %4046 = vmatprep.subr.mxu0 0.0
  %4047 = vmatpush1.msra.mxu0 0.0
  %4048 = vmatprep.subr.mxu0 0.0
  %4049 = vmatpush1.msra.mxu0 0.0
  %4050 = vmatprep.subr.mxu0 0.0
  %4051 = vmatpush1.msra.mxu0 0.0
  %4052 = vmatprep.subr.mxu0 0.0
  %4053 = vmatpush1.msra.mxu0 0.0
  %4054 = vmatprep.subr.mxu0 0.0
  %4055 = vmatpush1.msra.mxu0 0.0
  %4056 = vmatprep.subr.mxu0 0.0
  %4057 = vmatpush1.msra.mxu0 0.0
  %4058 = vmatprep.subr.mxu0 0.0
  %4059 = vmatpush1.msra.mxu0 0.0
  %4060 = vmatprep.subr.mxu0 0.0
  %4061 = vmatpush1.msra.mxu0 0.0
  %4062 = vmatprep.subr.mxu0 0.0
  %4063 = vmatpush1.msra.mxu0 0.0
  %4064 = vmatprep.subr.mxu0 0.0
  %4065 = vmatpush1.msra.mxu0 0.0
  %4066 = vmatprep.subr.mxu0 0.0
  %4067 = vmatpush1.msra.mxu0 0.0
  %4068 = vmatprep.subr.mxu0 0.0
  %4069 = vmatpush1.msra.mxu0 0.0
  %4070 = vmatprep.subr.mxu0 0.0
  %4071 = vmatpush1.msra.mxu0 0.0
  %4072 = vmatprep.subr.mxu0 0.0
  %4073 = vmatpush1.msra.mxu0 0.0
  %4074 = vmatprep.subr.mxu0 0.0
  %4075 = vmatpush1.msra.mxu0 0.0
  %4076 = vmatprep.subr.mxu0 0.0
  %4077 = vmatpush1.msra.mxu0 0.0
  %4078 = vmatprep.subr.mxu0 0.0
  %4079 = vmatpush1.msra.mxu0 0.0
  %4080 = vmatprep.subr.mxu0 0.0
  %4081 = vmatpush1.msra.mxu0 0.0
  %4082 = vmatprep.subr.mxu0 0.0
  %4083 = vmatpush1.msra.mxu0 0.0
  %4084 = vmatprep.subr.mxu0 0.0
  %4085 = vmatpush1.msra.mxu0 0.0
  %4086 = vmatprep.subr.mxu0 0.0
  %4087 = vmatpush1.msra.mxu0 0.0
  %4088 = vmatprep.subr.mxu0 0.0
  %4089 = vmatpush1.msra.mxu0 0.0
  %4090 = vmatprep.subr.mxu0 0.0
  %4091 = vmatpush1.msra.mxu0 0.0
  %4092 = vmatprep.mubr.f32.mxu0 0.0
  %v4093 = vand.u32 %v1095, 4294901760
  %v4094 = vsub.f32 %v1095, %v4093
  %v4095 = vand.u32 %v4094, 4294901760
  %v4096 = vsub.f32 %v4094, %v4095
  %v4097 = vand.u32 %v4096, 4294901760
  %4098 = vmatmul.mubr.f32.gmra.mrb[0].mxu0 %v4097
  %v4099 = vpop.f32.mrb[0].mxu0
  %v4100 = vadd.f32 0.0, %v4099
  %v4101 = vpop.f32.mrb[0].mxu0
  %4102 = vdwg.mxu0
  %4103 = vmatprep.subr.mxu0 0.0
  %v4104 = vand.u32 %v4025, 4294901760
  %v4105 = vsub.f32 %v4025, %v4104
  %v4106 = vand.u32 %v4105, 4294901760
  %v4107 = vsub.f32 %v4105, %v4106
  %v4108 = vand.u32 %v4107, 4294901760
  %4109 = vmatpush1.msra.mxu0 %v4108
  %4110 = vmatprep.subr.mxu0 0.0
  %4111 = vmatpush1.msra.mxu0 0.0
  %4112 = vmatprep.subr.mxu0 0.0
  %4113 = vmatpush1.msra.mxu0 0.0
  %4114 = vmatprep.subr.mxu0 0.0
  %4115 = vmatpush1.msra.mxu0 0.0
  %4116 = vmatprep.subr.mxu0 0.0
  %4117 = vmatpush1.msra.mxu0 0.0
  %4118 = vmatprep.subr.mxu0 0.0
  %4119 = vmatpush1.msra.mxu0 0.0
  %4120 = vmatprep.subr.mxu0 0.0
  %4121 = vmatpush1.msra.mxu0 0.0
  %4122 = vmatprep.subr.mxu0 0.0
  %4123 = vmatpush1.msra.mxu0 0.0
  %4124 = vmatprep.subr.mxu0 0.0
  %4125 = vmatpush1.msra.mxu0 0.0
  %4126 = vmatprep.subr.mxu0 0.0
  %4127 = vmatpush1.msra.mxu0 0.0
  %4128 = vmatprep.subr.mxu0 0.0
  %4129 = vmatpush1.msra.mxu0 0.0
  %4130 = vmatprep.subr.mxu0 0.0
  %4131 = vmatpush1.msra.mxu0 0.0
  %4132 = vmatprep.subr.mxu0 0.0
  %4133 = vmatpush1.msra.mxu0 0.0
  %4134 = vmatprep.subr.mxu0 0.0
  %4135 = vmatpush1.msra.mxu0 0.0
  %4136 = vmatprep.subr.mxu0 0.0
  %4137 = vmatpush1.msra.mxu0 0.0
  %4138 = vmatprep.subr.mxu0 0.0
  %4139 = vmatpush1.msra.mxu0 0.0
  %4140 = vmatprep.subr.mxu0 0.0
  %4141 = vmatpush1.msra.mxu0 0.0
  %4142 = vmatprep.subr.mxu0 0.0
  %4143 = vmatpush1.msra.mxu0 0.0
  %4144 = vmatprep.subr.mxu0 0.0
  %4145 = vmatpush1.msra.mxu0 0.0
  %4146 = vmatprep.subr.mxu0 0.0
  %4147 = vmatpush1.msra.mxu0 0.0
  %4148 = vmatprep.subr.mxu0 0.0
  %4149 = vmatpush1.msra.mxu0 0.0
  %4150 = vmatprep.subr.mxu0 0.0
  %4151 = vmatpush1.msra.mxu0 0.0
  %4152 = vmatprep.subr.mxu0 0.0
  %4153 = vmatpush1.msra.mxu0 0.0
  %4154 = vmatprep.subr.mxu0 0.0
  %4155 = vmatpush1.msra.mxu0 0.0
  %4156 = vmatprep.subr.mxu0 0.0
  %4157 = vmatpush1.msra.mxu0 0.0
  %4158 = vmatprep.subr.mxu0 0.0
  %4159 = vmatpush1.msra.mxu0 0.0
  %4160 = vmatprep.subr.mxu0 0.0
  %4161 = vmatpush1.msra.mxu0 0.0
  %4162 = vmatprep.subr.mxu0 0.0
  %4163 = vmatpush1.msra.mxu0 0.0
  %4164 = vmatprep.subr.mxu0 0.0
  %4165 = vmatpush1.msra.mxu0 0.0
  %4166 = vmatprep.subr.mxu0 0.0
  %4167 = vmatpush1.msra.mxu0 0.0
  %4168 = vmatprep.subr.mxu0 0.0
  %4169 = vmatpush1.msra.mxu0 0.0
  %4170 = vmatprep.subr.mxu0 0.0
  %4171 = vmatpush1.msra.mxu0 0.0
  %4172 = vmatprep.mubr.f32.mxu0 0.0
  %v4173 = vand.u32 %v1095, 4294901760
  %4174 = vmatmul.mubr.f32.gmra.mrb[0].mxu0 %v4173
  %v4175 = vpop.f32.mrb[0].mxu0
  %v4176 = vadd.f32 %v4100, %v4175
  %v4177 = vpop.f32.mrb[0].mxu0
  %4178 = vdwg.mxu0
  %4179 = vmatprep.subr.mxu0 0.0
  %v4180 = vand.u32 %v4025, 4294901760
  %v4181 = vsub.f32 %v4025, %v4180
  %4182 = vmatpush1.msra.mxu0 %v4181
  %4183 = vmatprep.subr.mxu0 0.0
  %4184 = vmatpush1.msra.mxu0 0.0
  %4185 = vmatprep.subr.mxu0 0.0
  %4186 = vmatpush1.msra.mxu0 0.0
  %4187 = vmatprep.subr.mxu0 0.0
  %4188 = vmatpush1.msra.mxu0 0.0
  %4189 = vmatprep.subr.mxu0 0.0
  %4190 = vmatpush1.msra.mxu0 0.0
  %4191 = vmatprep.subr.mxu0 0.0
  %4192 = vmatpush1.msra.mxu0 0.0
  %4193 = vmatprep.subr.mxu0 0.0
  %4194 = vmatpush1.msra.mxu0 0.0
  %4195 = vmatprep.subr.mxu0 0.0
  %4196 = vmatpush1.msra.mxu0 0.0
  %4197 = vmatprep.subr.mxu0 0.0
  %4198 = vmatpush1.msra.mxu0 0.0
  %4199 = vmatprep.subr.mxu0 0.0
  %4200 = vmatpush1.msra.mxu0 0.0
  %4201 = vmatprep.subr.mxu0 0.0
  %4202 = vmatpush1.msra.mxu0 0.0
  %4203 = vmatprep.subr.mxu0 0.0
  %4204 = vmatpush1.msra.mxu0 0.0
  %4205 = vmatprep.subr.mxu0 0.0
  %4206 = vmatpush1.msra.mxu0 0.0
  %4207 = vmatprep.subr.mxu0 0.0
  %4208 = vmatpush1.msra.mxu0 0.0
  %4209 = vmatprep.subr.mxu0 0.0
  %4210 = vmatpush1.msra.mxu0 0.0
  %4211 = vmatprep.subr.mxu0 0.0
  %4212 = vmatpush1.msra.mxu0 0.0
  %4213 = vmatprep.subr.mxu0 0.0
  %4214 = vmatpush1.msra.mxu0 0.0
  %4215 = vmatprep.subr.mxu0 0.0
  %4216 = vmatpush1.msra.mxu0 0.0
  %4217 = vmatprep.subr.mxu0 0.0
  %4218 = vmatpush1.msra.mxu0 0.0
  %4219 = vmatprep.subr.mxu0 0.0
  %4220 = vmatpush1.msra.mxu0 0.0
  %4221 = vmatprep.subr.mxu0 0.0
  %4222 = vmatpush1.msra.mxu0 0.0
  %4223 = vmatprep.subr.mxu0 0.0
  %4224 = vmatpush1.msra.mxu0 0.0
  %4225 = vmatprep.subr.mxu0 0.0
  %4226 = vmatpush1.msra.mxu0 0.0
  %4227 = vmatprep.subr.mxu0 0.0
  %4228 = vmatpush1.msra.mxu0 0.0
  %4229 = vmatprep.subr.mxu0 0.0
  %4230 = vmatpush1.msra.mxu0 0.0
  %4231 = vmatprep.subr.mxu0 0.0
  %4232 = vmatpush1.msra.mxu0 0.0
  %4233 = vmatprep.subr.mxu0 0.0
  %4234 = vmatpush1.msra.mxu0 0.0
  %4235 = vmatprep.subr.mxu0 0.0
  %4236 = vmatpush1.msra.mxu0 0.0
  %4237 = vmatprep.subr.mxu0 0.0
  %4238 = vmatpush1.msra.mxu0 0.0
  %4239 = vmatprep.subr.mxu0 0.0
  %4240 = vmatpush1.msra.mxu0 0.0
  %4241 = vmatprep.subr.mxu0 0.0
  %4242 = vmatpush1.msra.mxu0 0.0
  %4243 = vmatprep.subr.mxu0 0.0
  %4244 = vmatpush1.msra.mxu0 0.0
  %4245 = vmatprep.mubr.f32.mxu0 0.0
  %v4246 = vand.u32 %v1095, 4294901760
  %v4247 = vsub.f32 %v1095, %v4246
  %4248 = vmatmul.mubr.f32.gmra.mrb[0].mxu0 %v4247
  %v4249 = vpop.f32.mrb[0].mxu0
  %v4250 = vadd.f32 %v4176, %v4249
  %v4251 = vpop.f32.mrb[0].mxu0
  %4252 = vdwg.mxu0
  %4253 = vmatprep.subr.mxu0 0.0
  %v4254 = vand.u32 %v4025, 4294901760
  %4255 = vmatpush1.msra.mxu0 %v4254
  %4256 = vmatprep.subr.mxu0 0.0
  %4257 = vmatpush1.msra.mxu0 0.0
  %4258 = vmatprep.subr.mxu0 0.0
  %4259 = vmatpush1.msra.mxu0 0.0
  %4260 = vmatprep.subr.mxu0 0.0
  %4261 = vmatpush1.msra.mxu0 0.0
  %4262 = vmatprep.subr.mxu0 0.0
  %4263 = vmatpush1.msra.mxu0 0.0
  %4264 = vmatprep.subr.mxu0 0.0
  %4265 = vmatpush1.msra.mxu0 0.0
  %4266 = vmatprep.subr.mxu0 0.0
  %4267 = vmatpush1.msra.mxu0 0.0
  %4268 = vmatprep.subr.mxu0 0.0
  %4269 = vmatpush1.msra.mxu0 0.0
  %4270 = vmatprep.subr.mxu0 0.0
  %4271 = vmatpush1.msra.mxu0 0.0
  %4272 = vmatprep.subr.mxu0 0.0
  %4273 = vmatpush1.msra.mxu0 0.0
  %4274 = vmatprep.subr.mxu0 0.0
  %4275 = vmatpush1.msra.mxu0 0.0
  %4276 = vmatprep.subr.mxu0 0.0
  %4277 = vmatpush1.msra.mxu0 0.0
  %4278 = vmatprep.subr.mxu0 0.0
  %4279 = vmatpush1.msra.mxu0 0.0
  %4280 = vmatprep.subr.mxu0 0.0
  %4281 = vmatpush1.msra.mxu0 0.0
  %4282 = vmatprep.subr.mxu0 0.0
  %4283 = vmatpush1.msra.mxu0 0.0
  %4284 = vmatprep.subr.mxu0 0.0
  %4285 = vmatpush1.msra.mxu0 0.0
  %4286 = vmatprep.subr.mxu0 0.0
  %4287 = vmatpush1.msra.mxu0 0.0
  %4288 = vmatprep.subr.mxu0 0.0
  %4289 = vmatpush1.msra.mxu0 0.0
  %4290 = vmatprep.subr.mxu0 0.0
  %4291 = vmatpush1.msra.mxu0 0.0
  %4292 = vmatprep.subr.mxu0 0.0
  %4293 = vmatpush1.msra.mxu0 0.0
  %4294 = vmatprep.subr.mxu0 0.0
  %4295 = vmatpush1.msra.mxu0 0.0
  %4296 = vmatprep.subr.mxu0 0.0
  %4297 = vmatpush1.msra.mxu0 0.0
  %4298 = vmatprep.subr.mxu0 0.0
  %4299 = vmatpush1.msra.mxu0 0.0
  %4300 = vmatprep.subr.mxu0 0.0
  %4301 = vmatpush1.msra.mxu0 0.0
  %4302 = vmatprep.subr.mxu0 0.0
  %4303 = vmatpush1.msra.mxu0 0.0
  %4304 = vmatprep.subr.mxu0 0.0
  %4305 = vmatpush1.msra.mxu0 0.0
  %4306 = vmatprep.subr.mxu0 0.0
  %4307 = vmatpush1.msra.mxu0 0.0
  %4308 = vmatprep.subr.mxu0 0.0
  %4309 = vmatpush1.msra.mxu0 0.0
  %4310 = vmatprep.subr.mxu0 0.0
  %4311 = vmatpush1.msra.mxu0 0.0
  %4312 = vmatprep.subr.mxu0 0.0
  %4313 = vmatpush1.msra.mxu0 0.0
  %4314 = vmatprep.subr.mxu0 0.0
  %4315 = vmatpush1.msra.mxu0 0.0
  %4316 = vmatprep.subr.mxu0 0.0
  %4317 = vmatpush1.msra.mxu0 0.0
  %4318 = vmatprep.mubr.f32.mxu0 0.0
  %v4319 = vand.u32 %v1095, 4294901760
  %v4320 = vsub.f32 %v1095, %v4319
  %v4321 = vand.u32 %v4320, 4294901760
  %4322 = vmatmul.mubr.f32.gmra.mrb[0].mxu0 %v4321
  %v4323 = vpop.f32.mrb[0].mxu0
  %v4324 = vadd.f32 %v4250, %v4323
  %v4325 = vpop.f32.mrb[0].mxu0
  %4326 = vdwg.mxu0
  %4327 = vmatprep.subr.mxu0 0.0
  %v4328 = vand.u32 %v4025, 4294901760
  %v4329 = vsub.f32 %v4025, %v4328
  %v4330 = vand.u32 %v4329, 4294901760
  %4331 = vmatpush1.msra.mxu0 %v4330
  %4332 = vmatprep.subr.mxu0 0.0
  %4333 = vmatpush1.msra.mxu0 0.0
  %4334 = vmatprep.subr.mxu0 0.0
  %4335 = vmatpush1.msra.mxu0 0.0
  %4336 = vmatprep.subr.mxu0 0.0
  %4337 = vmatpush1.msra.mxu0 0.0
  %4338 = vmatprep.subr.mxu0 0.0
  %4339 = vmatpush1.msra.mxu0 0.0
  %4340 = vmatprep.subr.mxu0 0.0
  %4341 = vmatpush1.msra.mxu0 0.0
  %4342 = vmatprep.subr.mxu0 0.0
  %4343 = vmatpush1.msra.mxu0 0.0
  %4344 = vmatprep.subr.mxu0 0.0
  %4345 = vmatpush1.msra.mxu0 0.0
  %4346 = vmatprep.subr.mxu0 0.0
  %4347 = vmatpush1.msra.mxu0 0.0
  %4348 = vmatprep.subr.mxu0 0.0
  %4349 = vmatpush1.msra.mxu0 0.0
  %4350 = vmatprep.subr.mxu0 0.0
  %4351 = vmatpush1.msra.mxu0 0.0
  %4352 = vmatprep.subr.mxu0 0.0
  %4353 = vmatpush1.msra.mxu0 0.0
  %4354 = vmatprep.subr.mxu0 0.0
  %4355 = vmatpush1.msra.mxu0 0.0
  %4356 = vmatprep.subr.mxu0 0.0
  %4357 = vmatpush1.msra.mxu0 0.0
  %4358 = vmatprep.subr.mxu0 0.0
  %4359 = vmatpush1.msra.mxu0 0.0
  %4360 = vmatprep.subr.mxu0 0.0
  %4361 = vmatpush1.msra.mxu0 0.0
  %4362 = vmatprep.subr.mxu0 0.0
  %4363 = vmatpush1.msra.mxu0 0.0
  %4364 = vmatprep.subr.mxu0 0.0
  %4365 = vmatpush1.msra.mxu0 0.0
  %4366 = vmatprep.subr.mxu0 0.0
  %4367 = vmatpush1.msra.mxu0 0.0
  %4368 = vmatprep.subr.mxu0 0.0
  %4369 = vmatpush1.msra.mxu0 0.0
  %4370 = vmatprep.subr.mxu0 0.0
  %4371 = vmatpush1.msra.mxu0 0.0
  %4372 = vmatprep.subr.mxu0 0.0
  %4373 = vmatpush1.msra.mxu0 0.0
  %4374 = vmatprep.subr.mxu0 0.0
  %4375 = vmatpush1.msra.mxu0 0.0
  %4376 = vmatprep.subr.mxu0 0.0
  %4377 = vmatpush1.msra.mxu0 0.0
  %4378 = vmatprep.subr.mxu0 0.0
  %4379 = vmatpush1.msra.mxu0 0.0
  %4380 = vmatprep.subr.mxu0 0.0
  %4381 = vmatpush1.msra.mxu0 0.0
  %4382 = vmatprep.subr.mxu0 0.0
  %4383 = vmatpush1.msra.mxu0 0.0
  %4384 = vmatprep.subr.mxu0 0.0
  %4385 = vmatpush1.msra.mxu0 0.0
  %4386 = vmatprep.subr.mxu0 0.0
  %4387 = vmatpush1.msra.mxu0 0.0
  %4388 = vmatprep.subr.mxu0 0.0
  %4389 = vmatpush1.msra.mxu0 0.0
  %4390 = vmatprep.subr.mxu0 0.0
  %4391 = vmatpush1.msra.mxu0 0.0
  %4392 = vmatprep.subr.mxu0 0.0
  %4393 = vmatpush1.msra.mxu0 0.0
  %4394 = vmatprep.mubr.f32.mxu0 0.0
  %v4395 = vand.u32 %v1095, 4294901760
  %4396 = vmatmul.mubr.f32.gmra.mrb[0].mxu0 %v4395
  %v4397 = vpop.f32.mrb[0].mxu0
  %v4398 = vadd.f32 %v4324, %v4397
  %v4399 = vpop.f32.mrb[0].mxu0
  %4400 = vdwg.mxu0
  %4401 = vmatprep.subr.mxu0 0.0
  %v4402 = vand.u32 %v4025, 4294901760
  %4403 = vmatpush1.msra.mxu0 %v4402
  %4404 = vmatprep.subr.mxu0 0.0
  %4405 = vmatpush1.msra.mxu0 0.0
  %4406 = vmatprep.subr.mxu0 0.0
  %4407 = vmatpush1.msra.mxu0 0.0
  %4408 = vmatprep.subr.mxu0 0.0
  %4409 = vmatpush1.msra.mxu0 0.0
  %4410 = vmatprep.subr.mxu0 0.0
  %4411 = vmatpush1.msra.mxu0 0.0
  %4412 = vmatprep.subr.mxu0 0.0
  %4413 = vmatpush1.msra.mxu0 0.0
  %4414 = vmatprep.subr.mxu0 0.0
  %4415 = vmatpush1.msra.mxu0 0.0
  %4416 = vmatprep.subr.mxu0 0.0
  %4417 = vmatpush1.msra.mxu0 0.0
  %4418 = vmatprep.subr.mxu0 0.0
  %4419 = vmatpush1.msra.mxu0 0.0
  %4420 = vmatprep.subr.mxu0 0.0
  %4421 = vmatpush1.msra.mxu0 0.0
  %4422 = vmatprep.subr.mxu0 0.0
  %4423 = vmatpush1.msra.mxu0 0.0
  %4424 = vmatprep.subr.mxu0 0.0
  %4425 = vmatpush1.msra.mxu0 0.0
  %4426 = vmatprep.subr.mxu0 0.0
  %4427 = vmatpush1.msra.mxu0 0.0
  %4428 = vmatprep.subr.mxu0 0.0
  %4429 = vmatpush1.msra.mxu0 0.0
  %4430 = vmatprep.subr.mxu0 0.0
  %4431 = vmatpush1.msra.mxu0 0.0
  %4432 = vmatprep.subr.mxu0 0.0
  %4433 = vmatpush1.msra.mxu0 0.0
  %4434 = vmatprep.subr.mxu0 0.0
  %4435 = vmatpush1.msra.mxu0 0.0
  %4436 = vmatprep.subr.mxu0 0.0
  %4437 = vmatpush1.msra.mxu0 0.0
  %4438 = vmatprep.subr.mxu0 0.0
  %4439 = vmatpush1.msra.mxu0 0.0
  %4440 = vmatprep.subr.mxu0 0.0
  %4441 = vmatpush1.msra.mxu0 0.0
  %4442 = vmatprep.subr.mxu0 0.0
  %4443 = vmatpush1.msra.mxu0 0.0
  %4444 = vmatprep.subr.mxu0 0.0
  %4445 = vmatpush1.msra.mxu0 0.0
  %4446 = vmatprep.subr.mxu0 0.0
  %4447 = vmatpush1.msra.mxu0 0.0
  %4448 = vmatprep.subr.mxu0 0.0
  %4449 = vmatpush1.msra.mxu0 0.0
  %4450 = vmatprep.subr.mxu0 0.0
  %4451 = vmatpush1.msra.mxu0 0.0
  %4452 = vmatprep.subr.mxu0 0.0
  %4453 = vmatpush1.msra.mxu0 0.0
  %4454 = vmatprep.subr.mxu0 0.0
  %4455 = vmatpush1.msra.mxu0 0.0
  %4456 = vmatprep.subr.mxu0 0.0
  %4457 = vmatpush1.msra.mxu0 0.0
  %4458 = vmatprep.subr.mxu0 0.0
  %4459 = vmatpush1.msra.mxu0 0.0
  %4460 = vmatprep.subr.mxu0 0.0
  %4461 = vmatpush1.msra.mxu0 0.0
  %4462 = vmatprep.subr.mxu0 0.0
  %4463 = vmatpush1.msra.mxu0 0.0
  %4464 = vmatprep.subr.mxu0 0.0
  %4465 = vmatpush1.msra.mxu0 0.0
  %4466 = vmatprep.mubr.f32.mxu0 0.0
  %v4467 = vand.u32 %v1095, 4294901760
  %4468 = vmatmul.mubr.f32.gmra.mrb[0].mxu0 %v4467
  %v4469 = vpop.f32.mrb[0].mxu0
  %v4470 = vadd.f32 %v4398, %v4469
  %v4471 = vpop.f32.mrb[0].mxu0
  %4472 = vdwg.mxu0
  %4474 = vrot.lane.b32.xlu0 %v4470, 24
  %v4475 = vpop.permute.xlu0 %4474
  %v4477 = vadd.f32 %v580, %v4475
  %v4478 = vmax.f32 %v4477, 0.0
  %v4479 = vsub.f32 1.0, %v4007
  %v4480 = vmul.f32 %v4479, %v4020
  %v4481 = vmul.f32 %v4007, %v4478
  %v4482 = vadd.f32 %v4480, %v4481
  %4484 = vrot.lane.b32.xlu0 %v4482, 104
  %v4485 = vpop.permute.xlu0 %4484
  %4487 = vmatprep.subr.mxu0 0.0
  %v4488 = vand.u32 %v4485, 4294901760
  %4489 = vmatpush1.msra.mxu0 %v4488
  %4490 = vmatprep.subr.mxu0 0.0
  %4491 = vmatpush1.msra.mxu0 0.0
  %4492 = vmatprep.subr.mxu0 0.0
  %4493 = vmatpush1.msra.mxu0 0.0
  %4494 = vmatprep.subr.mxu0 0.0
  %4495 = vmatpush1.msra.mxu0 0.0
  %4496 = vmatprep.subr.mxu0 0.0
  %4497 = vmatpush1.msra.mxu0 0.0
  %4498 = vmatprep.subr.mxu0 0.0
  %4499 = vmatpush1.msra.mxu0 0.0
  %4500 = vmatprep.subr.mxu0 0.0
  %4501 = vmatpush1.msra.mxu0 0.0
  %4502 = vmatprep.subr.mxu0 0.0
  %4503 = vmatpush1.msra.mxu0 0.0
  %4504 = vmatprep.subr.mxu0 0.0
  %4505 = vmatpush1.msra.mxu0 0.0
  %4506 = vmatprep.subr.mxu0 0.0
  %4507 = vmatpush1.msra.mxu0 0.0
  %4508 = vmatprep.subr.mxu0 0.0
  %4509 = vmatpush1.msra.mxu0 0.0
  %4510 = vmatprep.subr.mxu0 0.0
  %4511 = vmatpush1.msra.mxu0 0.0
  %4512 = vmatprep.subr.mxu0 0.0
  %4513 = vmatpush1.msra.mxu0 0.0
  %4514 = vmatprep.subr.mxu0 0.0
  %4515 = vmatpush1.msra.mxu0 0.0
  %4516 = vmatprep.subr.mxu0 0.0
  %4517 = vmatpush1.msra.mxu0 0.0
  %4518 = vmatprep.subr.mxu0 0.0
  %4519 = vmatpush1.msra.mxu0 0.0
  %4520 = vmatprep.subr.mxu0 0.0
  %4521 = vmatpush1.msra.mxu0 0.0
  %4522 = vmatprep.subr.mxu0 0.0
  %4523 = vmatpush1.msra.mxu0 0.0
  %4524 = vmatprep.subr.mxu0 0.0
  %4525 = vmatpush1.msra.mxu0 0.0
  %4526 = vmatprep.subr.mxu0 0.0
  %4527 = vmatpush1.msra.mxu0 0.0
  %4528 = vmatprep.subr.mxu0 0.0
  %4529 = vmatpush1.msra.mxu0 0.0
  %4530 = vmatprep.subr.mxu0 0.0
  %4531 = vmatpush1.msra.mxu0 0.0
  %4532 = vmatprep.subr.mxu0 0.0
  %4533 = vmatpush1.msra.mxu0 0.0
  %4534 = vmatprep.subr.mxu0 0.0
  %4535 = vmatpush1.msra.mxu0 0.0
  %4536 = vmatprep.subr.mxu0 0.0
  %4537 = vmatpush1.msra.mxu0 0.0
  %4538 = vmatprep.subr.mxu0 0.0
  %4539 = vmatpush1.msra.mxu0 0.0
  %4540 = vmatprep.subr.mxu0 0.0
  %4541 = vmatpush1.msra.mxu0 0.0
  %4542 = vmatprep.subr.mxu0 0.0
  %4543 = vmatpush1.msra.mxu0 0.0
  %4544 = vmatprep.subr.mxu0 0.0
  %4545 = vmatpush1.msra.mxu0 0.0
  %4546 = vmatprep.subr.mxu0 0.0
  %4547 = vmatpush1.msra.mxu0 0.0
  %4548 = vmatprep.subr.mxu0 0.0
  %4549 = vmatpush1.msra.mxu0 0.0
  %4550 = vmatprep.subr.mxu0 0.0
  %4551 = vmatpush1.msra.mxu0 0.0
  %4552 = vmatprep.mubr.f32.mxu0 0.0
  %v4553 = vand.u32 %v585, 4294901760
  %v4554 = vsub.f32 %v585, %v4553
  %v4555 = vand.u32 %v4554, 4294901760
  %v4556 = vsub.f32 %v4554, %v4555
  %v4557 = vand.u32 %v4556, 4294901760
  %4558 = vmatmul.mubr.f32.gmra.mrb[0].mxu0 %v4557
  %v4559 = vpop.f32.mrb[0].mxu0
  %v4560 = vadd.f32 0.0, %v4559
  %v4561 = vpop.f32.mrb[0].mxu0
  %4562 = vmatprep.mubr.f32.mxu0 0.0
  %v4563 = vand.u32 %v588, 4294901760
  %v4564 = vsub.f32 %v588, %v4563
  %v4565 = vand.u32 %v4564, 4294901760
  %v4566 = vsub.f32 %v4564, %v4565
  %v4567 = vand.u32 %v4566, 4294901760
  %4568 = vmatmul.mubr.f32.gmra.mrb[0].mxu0 %v4567
  %v4569 = vpop.f32.mrb[0].mxu0
  %v4570 = vadd.f32 0.0, %v4569
  %v4571 = vpop.f32.mrb[0].mxu0
  %4572 = vdwg.mxu0
  %4573 = vmatprep.subr.mxu0 0.0
  %v4574 = vand.u32 %v4485, 4294901760
  %v4575 = vsub.f32 %v4485, %v4574
  %v4576 = vand.u32 %v4575, 4294901760
  %v4577 = vsub.f32 %v4575, %v4576
  %v4578 = vand.u32 %v4577, 4294901760
  %4579 = vmatpush1.msra.mxu0 %v4578
  %4580 = vmatprep.subr.mxu0 0.0
  %4581 = vmatpush1.msra.mxu0 0.0
  %4582 = vmatprep.subr.mxu0 0.0
  %4583 = vmatpush1.msra.mxu0 0.0
  %4584 = vmatprep.subr.mxu0 0.0
  %4585 = vmatpush1.msra.mxu0 0.0
  %4586 = vmatprep.subr.mxu0 0.0
  %4587 = vmatpush1.msra.mxu0 0.0
  %4588 = vmatprep.subr.mxu0 0.0
  %4589 = vmatpush1.msra.mxu0 0.0
  %4590 = vmatprep.subr.mxu0 0.0
  %4591 = vmatpush1.msra.mxu0 0.0
  %4592 = vmatprep.subr.mxu0 0.0
  %4593 = vmatpush1.msra.mxu0 0.0
  %4594 = vmatprep.subr.mxu0 0.0
  %4595 = vmatpush1.msra.mxu0 0.0
  %4596 = vmatprep.subr.mxu0 0.0
  %4597 = vmatpush1.msra.mxu0 0.0
  %4598 = vmatprep.subr.mxu0 0.0
  %4599 = vmatpush1.msra.mxu0 0.0
  %4600 = vmatprep.subr.mxu0 0.0
  %4601 = vmatpush1.msra.mxu0 0.0
  %4602 = vmatprep.subr.mxu0 0.0
  %4603 = vmatpush1.msra.mxu0 0.0
  %4604 = vmatprep.subr.mxu0 0.0
  %4605 = vmatpush1.msra.mxu0 0.0
  %4606 = vmatprep.subr.mxu0 0.0
  %4607 = vmatpush1.msra.mxu0 0.0
  %4608 = vmatprep.subr.mxu0 0.0
  %4609 = vmatpush1.msra.mxu0 0.0
  %4610 = vmatprep.subr.mxu0 0.0
  %4611 = vmatpush1.msra.mxu0 0.0
  %4612 = vmatprep.subr.mxu0 0.0
  %4613 = vmatpush1.msra.mxu0 0.0
  %4614 = vmatprep.subr.mxu0 0.0
  %4615 = vmatpush1.msra.mxu0 0.0
  %4616 = vmatprep.subr.mxu0 0.0
  %4617 = vmatpush1.msra.mxu0 0.0
  %4618 = vmatprep.subr.mxu0 0.0
  %4619 = vmatpush1.msra.mxu0 0.0
  %4620 = vmatprep.subr.mxu0 0.0
  %4621 = vmatpush1.msra.mxu0 0.0
  %4622 = vmatprep.subr.mxu0 0.0
  %4623 = vmatpush1.msra.mxu0 0.0
  %4624 = vmatprep.subr.mxu0 0.0
  %4625 = vmatpush1.msra.mxu0 0.0
  %4626 = vmatprep.subr.mxu0 0.0
  %4627 = vmatpush1.msra.mxu0 0.0
  %4628 = vmatprep.subr.mxu0 0.0
  %4629 = vmatpush1.msra.mxu0 0.0
  %4630 = vmatprep.subr.mxu0 0.0
  %4631 = vmatpush1.msra.mxu0 0.0
  %4632 = vmatprep.subr.mxu0 0.0
  %4633 = vmatpush1.msra.mxu0 0.0
  %4634 = vmatprep.subr.mxu0 0.0
  %4635 = vmatpush1.msra.mxu0 0.0
  %4636 = vmatprep.subr.mxu0 0.0
  %4637 = vmatpush1.msra.mxu0 0.0
  %4638 = vmatprep.subr.mxu0 0.0
  %4639 = vmatpush1.msra.mxu0 0.0
  %4640 = vmatprep.subr.mxu0 0.0
  %4641 = vmatpush1.msra.mxu0 0.0
  %4642 = vmatprep.mubr.f32.mxu0 0.0
  %v4643 = vand.u32 %v585, 4294901760
  %4644 = vmatmul.mubr.f32.gmra.mrb[0].mxu0 %v4643
  %v4645 = vpop.f32.mrb[0].mxu0
  %v4646 = vadd.f32 %v4560, %v4645
  %v4647 = vpop.f32.mrb[0].mxu0
  %4648 = vmatprep.mubr.f32.mxu0 0.0
  %v4649 = vand.u32 %v588, 4294901760
  %4650 = vmatmul.mubr.f32.gmra.mrb[0].mxu0 %v4649
  %v4651 = vpop.f32.mrb[0].mxu0
  %v4652 = vadd.f32 %v4570, %v4651
  %v4653 = vpop.f32.mrb[0].mxu0
  %4654 = vdwg.mxu0
  %4655 = vmatprep.subr.mxu0 0.0
  %v4656 = vand.u32 %v4485, 4294901760
  %v4657 = vsub.f32 %v4485, %v4656
  %4658 = vmatpush1.msra.mxu0 %v4657
  %4659 = vmatprep.subr.mxu0 0.0
  %4660 = vmatpush1.msra.mxu0 0.0
  %4661 = vmatprep.subr.mxu0 0.0
  %4662 = vmatpush1.msra.mxu0 0.0
  %4663 = vmatprep.subr.mxu0 0.0
  %4664 = vmatpush1.msra.mxu0 0.0
  %4665 = vmatprep.subr.mxu0 0.0
  %4666 = vmatpush1.msra.mxu0 0.0
  %4667 = vmatprep.subr.mxu0 0.0
  %4668 = vmatpush1.msra.mxu0 0.0
  %4669 = vmatprep.subr.mxu0 0.0
  %4670 = vmatpush1.msra.mxu0 0.0
  %4671 = vmatprep.subr.mxu0 0.0
  %4672 = vmatpush1.msra.mxu0 0.0
  %4673 = vmatprep.subr.mxu0 0.0
  %4674 = vmatpush1.msra.mxu0 0.0
  %4675 = vmatprep.subr.mxu0 0.0
  %4676 = vmatpush1.msra.mxu0 0.0
  %4677 = vmatprep.subr.mxu0 0.0
  %4678 = vmatpush1.msra.mxu0 0.0
  %4679 = vmatprep.subr.mxu0 0.0
  %4680 = vmatpush1.msra.mxu0 0.0
  %4681 = vmatprep.subr.mxu0 0.0
  %4682 = vmatpush1.msra.mxu0 0.0
  %4683 = vmatprep.subr.mxu0 0.0
  %4684 = vmatpush1.msra.mxu0 0.0
  %4685 = vmatprep.subr.mxu0 0.0
  %4686 = vmatpush1.msra.mxu0 0.0
  %4687 = vmatprep.subr.mxu0 0.0
  %4688 = vmatpush1.msra.mxu0 0.0
  %4689 = vmatprep.subr.mxu0 0.0
  %4690 = vmatpush1.msra.mxu0 0.0
  %4691 = vmatprep.subr.mxu0 0.0
  %4692 = vmatpush1.msra.mxu0 0.0
  %4693 = vmatprep.subr.mxu0 0.0
  %4694 = vmatpush1.msra.mxu0 0.0
  %4695 = vmatprep.subr.mxu0 0.0
  %4696 = vmatpush1.msra.mxu0 0.0
  %4697 = vmatprep.subr.mxu0 0.0
  %4698 = vmatpush1.msra.mxu0 0.0
  %4699 = vmatprep.subr.mxu0 0.0
  %4700 = vmatpush1.msra.mxu0 0.0
  %4701 = vmatprep.subr.mxu0 0.0
  %4702 = vmatpush1.msra.mxu0 0.0
  %4703 = vmatprep.subr.mxu0 0.0
  %4704 = vmatpush1.msra.mxu0 0.0
  %4705 = vmatprep.subr.mxu0 0.0
  %4706 = vmatpush1.msra.mxu0 0.0
  %4707 = vmatprep.subr.mxu0 0.0
  %4708 = vmatpush1.msra.mxu0 0.0
  %4709 = vmatprep.subr.mxu0 0.0
  %4710 = vmatpush1.msra.mxu0 0.0
  %4711 = vmatprep.subr.mxu0 0.0
  %4712 = vmatpush1.msra.mxu0 0.0
  %4713 = vmatprep.subr.mxu0 0.0
  %4714 = vmatpush1.msra.mxu0 0.0
  %4715 = vmatprep.subr.mxu0 0.0
  %4716 = vmatpush1.msra.mxu0 0.0
  %4717 = vmatprep.subr.mxu0 0.0
  %4718 = vmatpush1.msra.mxu0 0.0
  %4719 = vmatprep.subr.mxu0 0.0
  %4720 = vmatpush1.msra.mxu0 0.0
  %4721 = vmatprep.mubr.f32.mxu0 0.0
  %v4722 = vand.u32 %v585, 4294901760
  %v4723 = vsub.f32 %v585, %v4722
  %4724 = vmatmul.mubr.f32.gmra.mrb[0].mxu0 %v4723
  %v4725 = vpop.f32.mrb[0].mxu0
  %v4726 = vadd.f32 %v4646, %v4725
  %v4727 = vpop.f32.mrb[0].mxu0
  %4728 = vmatprep.mubr.f32.mxu0 0.0
  %v4729 = vand.u32 %v588, 4294901760
  %v4730 = vsub.f32 %v588, %v4729
  %4731 = vmatmul.mubr.f32.gmra.mrb[0].mxu0 %v4730
  %v4732 = vpop.f32.mrb[0].mxu0
  %v4733 = vadd.f32 %v4652, %v4732
  %v4734 = vpop.f32.mrb[0].mxu0
  %4735 = vdwg.mxu0
  %4736 = vmatprep.subr.mxu0 0.0
  %v4737 = vand.u32 %v4485, 4294901760
  %4738 = vmatpush1.msra.mxu0 %v4737
  %4739 = vmatprep.subr.mxu0 0.0
  %4740 = vmatpush1.msra.mxu0 0.0
  %4741 = vmatprep.subr.mxu0 0.0
  %4742 = vmatpush1.msra.mxu0 0.0
  %4743 = vmatprep.subr.mxu0 0.0
  %4744 = vmatpush1.msra.mxu0 0.0
  %4745 = vmatprep.subr.mxu0 0.0
  %4746 = vmatpush1.msra.mxu0 0.0
  %4747 = vmatprep.subr.mxu0 0.0
  %4748 = vmatpush1.msra.mxu0 0.0
  %4749 = vmatprep.subr.mxu0 0.0
  %4750 = vmatpush1.msra.mxu0 0.0
  %4751 = vmatprep.subr.mxu0 0.0
  %4752 = vmatpush1.msra.mxu0 0.0
  %4753 = vmatprep.subr.mxu0 0.0
  %4754 = vmatpush1.msra.mxu0 0.0
  %4755 = vmatprep.subr.mxu0 0.0
  %4756 = vmatpush1.msra.mxu0 0.0
  %4757 = vmatprep.subr.mxu0 0.0
  %4758 = vmatpush1.msra.mxu0 0.0
  %4759 = vmatprep.subr.mxu0 0.0
  %4760 = vmatpush1.msra.mxu0 0.0
  %4761 = vmatprep.subr.mxu0 0.0
  %4762 = vmatpush1.msra.mxu0 0.0
  %4763 = vmatprep.subr.mxu0 0.0
  %4764 = vmatpush1.msra.mxu0 0.0
  %4765 = vmatprep.subr.mxu0 0.0
  %4766 = vmatpush1.msra.mxu0 0.0
  %4767 = vmatprep.subr.mxu0 0.0
  %4768 = vmatpush1.msra.mxu0 0.0
  %4769 = vmatprep.subr.mxu0 0.0
  %4770 = vmatpush1.msra.mxu0 0.0
  %4771 = vmatprep.subr.mxu0 0.0
  %4772 = vmatpush1.msra.mxu0 0.0
  %4773 = vmatprep.subr.mxu0 0.0
  %4774 = vmatpush1.msra.mxu0 0.0
  %4775 = vmatprep.subr.mxu0 0.0
  %4776 = vmatpush1.msra.mxu0 0.0
  %4777 = vmatprep.subr.mxu0 0.0
  %4778 = vmatpush1.msra.mxu0 0.0
  %4779 = vmatprep.subr.mxu0 0.0
  %4780 = vmatpush1.msra.mxu0 0.0
  %4781 = vmatprep.subr.mxu0 0.0
  %4782 = vmatpush1.msra.mxu0 0.0
  %4783 = vmatprep.subr.mxu0 0.0
  %4784 = vmatpush1.msra.mxu0 0.0
  %4785 = vmatprep.subr.mxu0 0.0
  %4786 = vmatpush1.msra.mxu0 0.0
  %4787 = vmatprep.subr.mxu0 0.0
  %4788 = vmatpush1.msra.mxu0 0.0
  %4789 = vmatprep.subr.mxu0 0.0
  %4790 = vmatpush1.msra.mxu0 0.0
  %4791 = vmatprep.subr.mxu0 0.0
  %4792 = vmatpush1.msra.mxu0 0.0
  %4793 = vmatprep.subr.mxu0 0.0
  %4794 = vmatpush1.msra.mxu0 0.0
  %4795 = vmatprep.subr.mxu0 0.0
  %4796 = vmatpush1.msra.mxu0 0.0
  %4797 = vmatprep.subr.mxu0 0.0
  %4798 = vmatpush1.msra.mxu0 0.0
  %4799 = vmatprep.subr.mxu0 0.0
  %4800 = vmatpush1.msra.mxu0 0.0
  %4801 = vmatprep.mubr.f32.mxu0 0.0
  %v4802 = vand.u32 %v585, 4294901760
  %v4803 = vsub.f32 %v585, %v4802
  %v4804 = vand.u32 %v4803, 4294901760
  %4805 = vmatmul.mubr.f32.gmra.mrb[0].mxu0 %v4804
  %v4806 = vpop.f32.mrb[0].mxu0
  %v4807 = vadd.f32 %v4726, %v4806
  %v4808 = vpop.f32.mrb[0].mxu0
  %4809 = vmatprep.mubr.f32.mxu0 0.0
  %v4810 = vand.u32 %v588, 4294901760
  %v4811 = vsub.f32 %v588, %v4810
  %v4812 = vand.u32 %v4811, 4294901760
  %4813 = vmatmul.mubr.f32.gmra.mrb[0].mxu0 %v4812
  %v4814 = vpop.f32.mrb[0].mxu0
  %v4815 = vadd.f32 %v4733, %v4814
  %v4816 = vpop.f32.mrb[0].mxu0
  %4817 = vdwg.mxu0
  %4818 = vmatprep.subr.mxu0 0.0
  %v4819 = vand.u32 %v4485, 4294901760
  %v4820 = vsub.f32 %v4485, %v4819
  %v4821 = vand.u32 %v4820, 4294901760
  %4822 = vmatpush1.msra.mxu0 %v4821
  %4823 = vmatprep.subr.mxu0 0.0
  %4824 = vmatpush1.msra.mxu0 0.0
  %4825 = vmatprep.subr.mxu0 0.0
  %4826 = vmatpush1.msra.mxu0 0.0
  %4827 = vmatprep.subr.mxu0 0.0
  %4828 = vmatpush1.msra.mxu0 0.0
  %4829 = vmatprep.subr.mxu0 0.0
  %4830 = vmatpush1.msra.mxu0 0.0
  %4831 = vmatprep.subr.mxu0 0.0
  %4832 = vmatpush1.msra.mxu0 0.0
  %4833 = vmatprep.subr.mxu0 0.0
  %4834 = vmatpush1.msra.mxu0 0.0
  %4835 = vmatprep.subr.mxu0 0.0
  %4836 = vmatpush1.msra.mxu0 0.0
  %4837 = vmatprep.subr.mxu0 0.0
  %4838 = vmatpush1.msra.mxu0 0.0
  %4839 = vmatprep.subr.mxu0 0.0
  %4840 = vmatpush1.msra.mxu0 0.0
  %4841 = vmatprep.subr.mxu0 0.0
  %4842 = vmatpush1.msra.mxu0 0.0
  %4843 = vmatprep.subr.mxu0 0.0
  %4844 = vmatpush1.msra.mxu0 0.0
  %4845 = vmatprep.subr.mxu0 0.0
  %4846 = vmatpush1.msra.mxu0 0.0
  %4847 = vmatprep.subr.mxu0 0.0
  %4848 = vmatpush1.msra.mxu0 0.0
  %4849 = vmatprep.subr.mxu0 0.0
  %4850 = vmatpush1.msra.mxu0 0.0
  %4851 = vmatprep.subr.mxu0 0.0
  %4852 = vmatpush1.msra.mxu0 0.0
  %4853 = vmatprep.subr.mxu0 0.0
  %4854 = vmatpush1.msra.mxu0 0.0
  %4855 = vmatprep.subr.mxu0 0.0
  %4856 = vmatpush1.msra.mxu0 0.0
  %4857 = vmatprep.subr.mxu0 0.0
  %4858 = vmatpush1.msra.mxu0 0.0
  %4859 = vmatprep.subr.mxu0 0.0
  %4860 = vmatpush1.msra.mxu0 0.0
  %4861 = vmatprep.subr.mxu0 0.0
  %4862 = vmatpush1.msra.mxu0 0.0
  %4863 = vmatprep.subr.mxu0 0.0
  %4864 = vmatpush1.msra.mxu0 0.0
  %4865 = vmatprep.subr.mxu0 0.0
  %4866 = vmatpush1.msra.mxu0 0.0
  %4867 = vmatprep.subr.mxu0 0.0
  %4868 = vmatpush1.msra.mxu0 0.0
  %4869 = vmatprep.subr.mxu0 0.0
  %4870 = vmatpush1.msra.mxu0 0.0
  %4871 = vmatprep.subr.mxu0 0.0
  %4872 = vmatpush1.msra.mxu0 0.0
  %4873 = vmatprep.subr.mxu0 0.0
  %4874 = vmatpush1.msra.mxu0 0.0
  %4875 = vmatprep.subr.mxu0 0.0
  %4876 = vmatpush1.msra.mxu0 0.0
  %4877 = vmatprep.subr.mxu0 0.0
  %4878 = vmatpush1.msra.mxu0 0.0
  %4879 = vmatprep.subr.mxu0 0.0
  %4880 = vmatpush1.msra.mxu0 0.0
  %4881 = vmatprep.subr.mxu0 0.0
  %4882 = vmatpush1.msra.mxu0 0.0
  %4883 = vmatprep.subr.mxu0 0.0
  %4884 = vmatpush1.msra.mxu0 0.0
  %4885 = vmatprep.mubr.f32.mxu0 0.0
  %v4886 = vand.u32 %v585, 4294901760
  %4887 = vmatmul.mubr.f32.gmra.mrb[0].mxu0 %v4886
  %v4888 = vpop.f32.mrb[0].mxu0
  %v4889 = vadd.f32 %v4807, %v4888
  %v4890 = vpop.f32.mrb[0].mxu0
  %4891 = vmatprep.mubr.f32.mxu0 0.0
  %v4892 = vand.u32 %v588, 4294901760
  %4893 = vmatmul.mubr.f32.gmra.mrb[0].mxu0 %v4892
  %v4894 = vpop.f32.mrb[0].mxu0
  %v4895 = vadd.f32 %v4815, %v4894
  %v4896 = vpop.f32.mrb[0].mxu0
  %4897 = vdwg.mxu0
  %4898 = vmatprep.subr.mxu0 0.0
  %v4899 = vand.u32 %v4485, 4294901760
  %4900 = vmatpush1.msra.mxu0 %v4899
  %4901 = vmatprep.subr.mxu0 0.0
  %4902 = vmatpush1.msra.mxu0 0.0
  %4903 = vmatprep.subr.mxu0 0.0
  %4904 = vmatpush1.msra.mxu0 0.0
  %4905 = vmatprep.subr.mxu0 0.0
  %4906 = vmatpush1.msra.mxu0 0.0
  %4907 = vmatprep.subr.mxu0 0.0
  %4908 = vmatpush1.msra.mxu0 0.0
  %4909 = vmatprep.subr.mxu0 0.0
  %4910 = vmatpush1.msra.mxu0 0.0
  %4911 = vmatprep.subr.mxu0 0.0
  %4912 = vmatpush1.msra.mxu0 0.0
  %4913 = vmatprep.subr.mxu0 0.0
  %4914 = vmatpush1.msra.mxu0 0.0
  %4915 = vmatprep.subr.mxu0 0.0
  %4916 = vmatpush1.msra.mxu0 0.0
  %4917 = vmatprep.subr.mxu0 0.0
  %4918 = vmatpush1.msra.mxu0 0.0
  %4919 = vmatprep.subr.mxu0 0.0
  %4920 = vmatpush1.msra.mxu0 0.0
  %4921 = vmatprep.subr.mxu0 0.0
  %4922 = vmatpush1.msra.mxu0 0.0
  %4923 = vmatprep.subr.mxu0 0.0
  %4924 = vmatpush1.msra.mxu0 0.0
  %4925 = vmatprep.subr.mxu0 0.0
  %4926 = vmatpush1.msra.mxu0 0.0
  %4927 = vmatprep.subr.mxu0 0.0
  %4928 = vmatpush1.msra.mxu0 0.0
  %4929 = vmatprep.subr.mxu0 0.0
  %4930 = vmatpush1.msra.mxu0 0.0
  %4931 = vmatprep.subr.mxu0 0.0
  %4932 = vmatpush1.msra.mxu0 0.0
  %4933 = vmatprep.subr.mxu0 0.0
  %4934 = vmatpush1.msra.mxu0 0.0
  %4935 = vmatprep.subr.mxu0 0.0
  %4936 = vmatpush1.msra.mxu0 0.0
  %4937 = vmatprep.subr.mxu0 0.0
  %4938 = vmatpush1.msra.mxu0 0.0
  %4939 = vmatprep.subr.mxu0 0.0
  %4940 = vmatpush1.msra.mxu0 0.0
  %4941 = vmatprep.subr.mxu0 0.0
  %4942 = vmatpush1.msra.mxu0 0.0
  %4943 = vmatprep.subr.mxu0 0.0
  %4944 = vmatpush1.msra.mxu0 0.0
  %4945 = vmatprep.subr.mxu0 0.0
  %4946 = vmatpush1.msra.mxu0 0.0
  %4947 = vmatprep.subr.mxu0 0.0
  %4948 = vmatpush1.msra.mxu0 0.0
  %4949 = vmatprep.subr.mxu0 0.0
  %4950 = vmatpush1.msra.mxu0 0.0
  %4951 = vmatprep.subr.mxu0 0.0
  %4952 = vmatpush1.msra.mxu0 0.0
  %4953 = vmatprep.subr.mxu0 0.0
  %4954 = vmatpush1.msra.mxu0 0.0
  %4955 = vmatprep.subr.mxu0 0.0
  %4956 = vmatpush1.msra.mxu0 0.0
  %4957 = vmatprep.subr.mxu0 0.0
  %4958 = vmatpush1.msra.mxu0 0.0
  %4959 = vmatprep.subr.mxu0 0.0
  %4960 = vmatpush1.msra.mxu0 0.0
  %4961 = vmatprep.subr.mxu0 0.0
  %4962 = vmatpush1.msra.mxu0 0.0
  %4963 = vmatprep.mubr.f32.mxu0 0.0
  %v4964 = vand.u32 %v585, 4294901760
  %4965 = vmatmul.mubr.f32.gmra.mrb[0].mxu0 %v4964
  %v4966 = vpop.f32.mrb[0].mxu0
  %v4967 = vadd.f32 %v4889, %v4966
  %v4968 = vpop.f32.mrb[0].mxu0
  %4969 = vmatprep.mubr.f32.mxu0 0.0
  %v4970 = vand.u32 %v588, 4294901760
  %4971 = vmatmul.mubr.f32.gmra.mrb[0].mxu0 %v4970
  %v4972 = vpop.f32.mrb[0].mxu0
  %v4973 = vadd.f32 %v4895, %v4972
  %v4974 = vpop.f32.mrb[0].mxu0
  %4975 = vdwg.mxu0
  %4977 = vrot.lane.b32.xlu0 %v4967, 32
  %v4978 = vpop.permute.xlu0 %4977
  %v4980 = vadd.f32 %v568, %v4978
  %v4981 = vxor.u32 %v4980, 2147483648
  %v4982 = vmul.f32 %v4981, 1.442695
  %v4983 = vpow.pop %v4982
  %v4984 = vadd.f32 %v4983, 1.0
  %v4985 = vrcp.pop %v4984
  %v4986 = vmul.f32 1.0, %v4985
  %4988 = vrot.lane.b32.xlu0 %v4973, 32
  %v4989 = vpop.permute.xlu0 %4988
  %v4991 = vadd.f32 %v574, %v4989
  %v4992 = vxor.u32 %v4991, 2147483648
  %v4993 = vmul.f32 %v4992, 1.442695
  %v4994 = vpow.pop %v4993
  %v4995 = vadd.f32 %v4994, 1.0
  %v4996 = vrcp.pop %v4995
  %v4997 = vmul.f32 1.0, %v4996
  %4998 = vrot.lane.b32.xlu0 %v4482, 8
  %v4999 = vpop.permute.xlu0 %4998
  %v5001 = vmul.f32 %v4997, %v4999
  %5003 = vrot.lane.b32.xlu0 %v5001, 96
  %v5004 = vpop.permute.xlu0 %5003
  %5006 = vmatprep.subr.mxu0 0.0
  %v5007 = vand.u32 %v5004, 4294901760
  %5008 = vmatpush1.msra.mxu0 %v5007
  %5009 = vmatprep.subr.mxu0 0.0
  %5010 = vmatpush1.msra.mxu0 0.0
  %5011 = vmatprep.subr.mxu0 0.0
  %5012 = vmatpush1.msra.mxu0 0.0
  %5013 = vmatprep.subr.mxu0 0.0
  %5014 = vmatpush1.msra.mxu0 0.0
  %5015 = vmatprep.subr.mxu0 0.0
  %5016 = vmatpush1.msra.mxu0 0.0
  %5017 = vmatprep.subr.mxu0 0.0
  %5018 = vmatpush1.msra.mxu0 0.0
  %5019 = vmatprep.subr.mxu0 0.0
  %5020 = vmatpush1.msra.mxu0 0.0
  %5021 = vmatprep.subr.mxu0 0.0
  %5022 = vmatpush1.msra.mxu0 0.0
  %5023 = vmatprep.subr.mxu0 0.0
  %5024 = vmatpush1.msra.mxu0 0.0
  %5025 = vmatprep.subr.mxu0 0.0
  %5026 = vmatpush1.msra.mxu0 0.0
  %5027 = vmatprep.subr.mxu0 0.0
  %5028 = vmatpush1.msra.mxu0 0.0
  %5029 = vmatprep.subr.mxu0 0.0
  %5030 = vmatpush1.msra.mxu0 0.0
  %5031 = vmatprep.subr.mxu0 0.0
  %5032 = vmatpush1.msra.mxu0 0.0
  %5033 = vmatprep.subr.mxu0 0.0
  %5034 = vmatpush1.msra.mxu0 0.0
  %5035 = vmatprep.subr.mxu0 0.0
  %5036 = vmatpush1.msra.mxu0 0.0
  %5037 = vmatprep.subr.mxu0 0.0
  %5038 = vmatpush1.msra.mxu0 0.0
  %5039 = vmatprep.subr.mxu0 0.0
  %5040 = vmatpush1.msra.mxu0 0.0
  %5041 = vmatprep.subr.mxu0 0.0
  %5042 = vmatpush1.msra.mxu0 0.0
  %5043 = vmatprep.subr.mxu0 0.0
  %5044 = vmatpush1.msra.mxu0 0.0
  %5045 = vmatprep.subr.mxu0 0.0
  %5046 = vmatpush1.msra.mxu0 0.0
  %5047 = vmatprep.subr.mxu0 0.0
  %5048 = vmatpush1.msra.mxu0 0.0
  %5049 = vmatprep.subr.mxu0 0.0
  %5050 = vmatpush1.msra.mxu0 0.0
  %5051 = vmatprep.subr.mxu0 0.0
  %5052 = vmatpush1.msra.mxu0 0.0
  %5053 = vmatprep.subr.mxu0 0.0
  %5054 = vmatpush1.msra.mxu0 0.0
  %5055 = vmatprep.subr.mxu0 0.0
  %5056 = vmatpush1.msra.mxu0 0.0
  %5057 = vmatprep.subr.mxu0 0.0
  %5058 = vmatpush1.msra.mxu0 0.0
  %5059 = vmatprep.subr.mxu0 0.0
  %5060 = vmatpush1.msra.mxu0 0.0
  %5061 = vmatprep.subr.mxu0 0.0
  %5062 = vmatpush1.msra.mxu0 0.0
  %5063 = vmatprep.subr.mxu0 0.0
  %5064 = vmatpush1.msra.mxu0 0.0
  %5065 = vmatprep.subr.mxu0 0.0
  %5066 = vmatpush1.msra.mxu0 0.0
  %5067 = vmatprep.subr.mxu0 0.0
  %5068 = vmatpush1.msra.mxu0 0.0
  %5069 = vmatprep.subr.mxu0 0.0
  %5070 = vmatpush1.msra.mxu0 0.0
  %5071 = vmatprep.mubr.f32.mxu0 0.0
  %v5072 = vand.u32 %v1095, 4294901760
  %v5073 = vsub.f32 %v1095, %v5072
  %v5074 = vand.u32 %v5073, 4294901760
  %v5075 = vsub.f32 %v5073, %v5074
  %v5076 = vand.u32 %v5075, 4294901760
  %5077 = vmatmul.mubr.f32.gmra.mrb[0].mxu0 %v5076
  %v5078 = vpop.f32.mrb[0].mxu0
  %v5079 = vadd.f32 0.0, %v5078
  %v5080 = vpop.f32.mrb[0].mxu0
  %5081 = vdwg.mxu0
  %5082 = vmatprep.subr.mxu0 0.0
  %v5083 = vand.u32 %v5004, 4294901760
  %v5084 = vsub.f32 %v5004, %v5083
  %v5085 = vand.u32 %v5084, 4294901760
  %v5086 = vsub.f32 %v5084, %v5085
  %v5087 = vand.u32 %v5086, 4294901760
  %5088 = vmatpush1.msra.mxu0 %v5087
  %5089 = vmatprep.subr.mxu0 0.0
  %5090 = vmatpush1.msra.mxu0 0.0
  %5091 = vmatprep.subr.mxu0 0.0
  %5092 = vmatpush1.msra.mxu0 0.0
  %5093 = vmatprep.subr.mxu0 0.0
  %5094 = vmatpush1.msra.mxu0 0.0
  %5095 = vmatprep.subr.mxu0 0.0
  %5096 = vmatpush1.msra.mxu0 0.0
  %5097 = vmatprep.subr.mxu0 0.0
  %5098 = vmatpush1.msra.mxu0 0.0
  %5099 = vmatprep.subr.mxu0 0.0
  %5100 = vmatpush1.msra.mxu0 0.0
  %5101 = vmatprep.subr.mxu0 0.0
  %5102 = vmatpush1.msra.mxu0 0.0
  %5103 = vmatprep.subr.mxu0 0.0
  %5104 = vmatpush1.msra.mxu0 0.0
  %5105 = vmatprep.subr.mxu0 0.0
  %5106 = vmatpush1.msra.mxu0 0.0
  %5107 = vmatprep.subr.mxu0 0.0
  %5108 = vmatpush1.msra.mxu0 0.0
  %5109 = vmatprep.subr.mxu0 0.0
  %5110 = vmatpush1.msra.mxu0 0.0
  %5111 = vmatprep.subr.mxu0 0.0
  %5112 = vmatpush1.msra.mxu0 0.0
  %5113 = vmatprep.subr.mxu0 0.0
  %5114 = vmatpush1.msra.mxu0 0.0
  %5115 = vmatprep.subr.mxu0 0.0
  %5116 = vmatpush1.msra.mxu0 0.0
  %5117 = vmatprep.subr.mxu0 0.0
  %5118 = vmatpush1.msra.mxu0 0.0
  %5119 = vmatprep.subr.mxu0 0.0
  %5120 = vmatpush1.msra.mxu0 0.0
  %5121 = vmatprep.subr.mxu0 0.0
  %5122 = vmatpush1.msra.mxu0 0.0
  %5123 = vmatprep.subr.mxu0 0.0
  %5124 = vmatpush1.msra.mxu0 0.0
  %5125 = vmatprep.subr.mxu0 0.0
  %5126 = vmatpush1.msra.mxu0 0.0
  %5127 = vmatprep.subr.mxu0 0.0
  %5128 = vmatpush1.msra.mxu0 0.0
  %5129 = vmatprep.subr.mxu0 0.0
  %5130 = vmatpush1.msra.mxu0 0.0
  %5131 = vmatprep.subr.mxu0 0.0
  %5132 = vmatpush1.msra.mxu0 0.0
  %5133 = vmatprep.subr.mxu0 0.0
  %5134 = vmatpush1.msra.mxu0 0.0
  %5135 = vmatprep.subr.mxu0 0.0
  %5136 = vmatpush1.msra.mxu0 0.0
  %5137 = vmatprep.subr.mxu0 0.0
  %5138 = vmatpush1.msra.mxu0 0.0
  %5139 = vmatprep.subr.mxu0 0.0
  %5140 = vmatpush1.msra.mxu0 0.0
  %5141 = vmatprep.subr.mxu0 0.0
  %5142 = vmatpush1.msra.mxu0 0.0
  %5143 = vmatprep.subr.mxu0 0.0
  %5144 = vmatpush1.msra.mxu0 0.0
  %5145 = vmatprep.subr.mxu0 0.0
  %5146 = vmatpush1.msra.mxu0 0.0
  %5147 = vmatprep.subr.mxu0 0.0
  %5148 = vmatpush1.msra.mxu0 0.0
  %5149 = vmatprep.subr.mxu0 0.0
  %5150 = vmatpush1.msra.mxu0 0.0
  %5151 = vmatprep.mubr.f32.mxu0 0.0
  %v5152 = vand.u32 %v1095, 4294901760
  %5153 = vmatmul.mubr.f32.gmra.mrb[0].mxu0 %v5152
  %v5154 = vpop.f32.mrb[0].mxu0
  %v5155 = vadd.f32 %v5079, %v5154
  %v5156 = vpop.f32.mrb[0].mxu0
  %5157 = vdwg.mxu0
  %5158 = vmatprep.subr.mxu0 0.0
  %v5159 = vand.u32 %v5004, 4294901760
  %v5160 = vsub.f32 %v5004, %v5159
  %5161 = vmatpush1.msra.mxu0 %v5160
  %5162 = vmatprep.subr.mxu0 0.0
  %5163 = vmatpush1.msra.mxu0 0.0
  %5164 = vmatprep.subr.mxu0 0.0
  %5165 = vmatpush1.msra.mxu0 0.0
  %5166 = vmatprep.subr.mxu0 0.0
  %5167 = vmatpush1.msra.mxu0 0.0
  %5168 = vmatprep.subr.mxu0 0.0
  %5169 = vmatpush1.msra.mxu0 0.0
  %5170 = vmatprep.subr.mxu0 0.0
  %5171 = vmatpush1.msra.mxu0 0.0
  %5172 = vmatprep.subr.mxu0 0.0
  %5173 = vmatpush1.msra.mxu0 0.0
  %5174 = vmatprep.subr.mxu0 0.0
  %5175 = vmatpush1.msra.mxu0 0.0
  %5176 = vmatprep.subr.mxu0 0.0
  %5177 = vmatpush1.msra.mxu0 0.0
  %5178 = vmatprep.subr.mxu0 0.0
  %5179 = vmatpush1.msra.mxu0 0.0
  %5180 = vmatprep.subr.mxu0 0.0
  %5181 = vmatpush1.msra.mxu0 0.0
  %5182 = vmatprep.subr.mxu0 0.0
  %5183 = vmatpush1.msra.mxu0 0.0
  %5184 = vmatprep.subr.mxu0 0.0
  %5185 = vmatpush1.msra.mxu0 0.0
  %5186 = vmatprep.subr.mxu0 0.0
  %5187 = vmatpush1.msra.mxu0 0.0
  %5188 = vmatprep.subr.mxu0 0.0
  %5189 = vmatpush1.msra.mxu0 0.0
  %5190 = vmatprep.subr.mxu0 0.0
  %5191 = vmatpush1.msra.mxu0 0.0
  %5192 = vmatprep.subr.mxu0 0.0
  %5193 = vmatpush1.msra.mxu0 0.0
  %5194 = vmatprep.subr.mxu0 0.0
  %5195 = vmatpush1.msra.mxu0 0.0
  %5196 = vmatprep.subr.mxu0 0.0
  %5197 = vmatpush1.msra.mxu0 0.0
  %5198 = vmatprep.subr.mxu0 0.0
  %5199 = vmatpush1.msra.mxu0 0.0
  %5200 = vmatprep.subr.mxu0 0.0
  %5201 = vmatpush1.msra.mxu0 0.0
  %5202 = vmatprep.subr.mxu0 0.0
  %5203 = vmatpush1.msra.mxu0 0.0
  %5204 = vmatprep.subr.mxu0 0.0
  %5205 = vmatpush1.msra.mxu0 0.0
  %5206 = vmatprep.subr.mxu0 0.0
  %5207 = vmatpush1.msra.mxu0 0.0
  %5208 = vmatprep.subr.mxu0 0.0
  %5209 = vmatpush1.msra.mxu0 0.0
  %5210 = vmatprep.subr.mxu0 0.0
  %5211 = vmatpush1.msra.mxu0 0.0
  %5212 = vmatprep.subr.mxu0 0.0
  %5213 = vmatpush1.msra.mxu0 0.0
  %5214 = vmatprep.subr.mxu0 0.0
  %5215 = vmatpush1.msra.mxu0 0.0
  %5216 = vmatprep.subr.mxu0 0.0
  %5217 = vmatpush1.msra.mxu0 0.0
  %5218 = vmatprep.subr.mxu0 0.0
  %5219 = vmatpush1.msra.mxu0 0.0
  %5220 = vmatprep.subr.mxu0 0.0
  %5221 = vmatpush1.msra.mxu0 0.0
  %5222 = vmatprep.subr.mxu0 0.0
  %5223 = vmatpush1.msra.mxu0 0.0
  %5224 = vmatprep.mubr.f32.mxu0 0.0
  %v5225 = vand.u32 %v1095, 4294901760
  %v5226 = vsub.f32 %v1095, %v5225
  %5227 = vmatmul.mubr.f32.gmra.mrb[0].mxu0 %v5226
  %v5228 = vpop.f32.mrb[0].mxu0
  %v5229 = vadd.f32 %v5155, %v5228
  %v5230 = vpop.f32.mrb[0].mxu0
  %5231 = vdwg.mxu0
  %5232 = vmatprep.subr.mxu0 0.0
  %v5233 = vand.u32 %v5004, 4294901760
  %5234 = vmatpush1.msra.mxu0 %v5233
  %5235 = vmatprep.subr.mxu0 0.0
  %5236 = vmatpush1.msra.mxu0 0.0
  %5237 = vmatprep.subr.mxu0 0.0
  %5238 = vmatpush1.msra.mxu0 0.0
  %5239 = vmatprep.subr.mxu0 0.0
  %5240 = vmatpush1.msra.mxu0 0.0
  %5241 = vmatprep.subr.mxu0 0.0
  %5242 = vmatpush1.msra.mxu0 0.0
  %5243 = vmatprep.subr.mxu0 0.0
  %5244 = vmatpush1.msra.mxu0 0.0
  %5245 = vmatprep.subr.mxu0 0.0
  %5246 = vmatpush1.msra.mxu0 0.0
  %5247 = vmatprep.subr.mxu0 0.0
  %5248 = vmatpush1.msra.mxu0 0.0
  %5249 = vmatprep.subr.mxu0 0.0
  %5250 = vmatpush1.msra.mxu0 0.0
  %5251 = vmatprep.subr.mxu0 0.0
  %5252 = vmatpush1.msra.mxu0 0.0
  %5253 = vmatprep.subr.mxu0 0.0
  %5254 = vmatpush1.msra.mxu0 0.0
  %5255 = vmatprep.subr.mxu0 0.0
  %5256 = vmatpush1.msra.mxu0 0.0
  %5257 = vmatprep.subr.mxu0 0.0
  %5258 = vmatpush1.msra.mxu0 0.0
  %5259 = vmatprep.subr.mxu0 0.0
  %5260 = vmatpush1.msra.mxu0 0.0
  %5261 = vmatprep.subr.mxu0 0.0
  %5262 = vmatpush1.msra.mxu0 0.0
  %5263 = vmatprep.subr.mxu0 0.0
  %5264 = vmatpush1.msra.mxu0 0.0
  %5265 = vmatprep.subr.mxu0 0.0
  %5266 = vmatpush1.msra.mxu0 0.0
  %5267 = vmatprep.subr.mxu0 0.0
  %5268 = vmatpush1.msra.mxu0 0.0
  %5269 = vmatprep.subr.mxu0 0.0
  %5270 = vmatpush1.msra.mxu0 0.0
  %5271 = vmatprep.subr.mxu0 0.0
  %5272 = vmatpush1.msra.mxu0 0.0
  %5273 = vmatprep.subr.mxu0 0.0
  %5274 = vmatpush1.msra.mxu0 0.0
  %5275 = vmatprep.subr.mxu0 0.0
  %5276 = vmatpush1.msra.mxu0 0.0
  %5277 = vmatprep.subr.mxu0 0.0
  %5278 = vmatpush1.msra.mxu0 0.0
  %5279 = vmatprep.subr.mxu0 0.0
  %5280 = vmatpush1.msra.mxu0 0.0
  %5281 = vmatprep.subr.mxu0 0.0
  %5282 = vmatpush1.msra.mxu0 0.0
  %5283 = vmatprep.subr.mxu0 0.0
  %5284 = vmatpush1.msra.mxu0 0.0
  %5285 = vmatprep.subr.mxu0 0.0
  %5286 = vmatpush1.msra.mxu0 0.0
  %5287 = vmatprep.subr.mxu0 0.0
  %5288 = vmatpush1.msra.mxu0 0.0
  %5289 = vmatprep.subr.mxu0 0.0
  %5290 = vmatpush1.msra.mxu0 0.0
  %5291 = vmatprep.subr.mxu0 0.0
  %5292 = vmatpush1.msra.mxu0 0.0
  %5293 = vmatprep.subr.mxu0 0.0
  %5294 = vmatpush1.msra.mxu0 0.0
  %5295 = vmatprep.subr.mxu0 0.0
  %5296 = vmatpush1.msra.mxu0 0.0
  %5297 = vmatprep.mubr.f32.mxu0 0.0
  %v5298 = vand.u32 %v1095, 4294901760
  %v5299 = vsub.f32 %v1095, %v5298
  %v5300 = vand.u32 %v5299, 4294901760
  %5301 = vmatmul.mubr.f32.gmra.mrb[0].mxu0 %v5300
  %v5302 = vpop.f32.mrb[0].mxu0
  %v5303 = vadd.f32 %v5229, %v5302
  %v5304 = vpop.f32.mrb[0].mxu0
  %5305 = vdwg.mxu0
  %5306 = vmatprep.subr.mxu0 0.0
  %v5307 = vand.u32 %v5004, 4294901760
  %v5308 = vsub.f32 %v5004, %v5307
  %v5309 = vand.u32 %v5308, 4294901760
  %5310 = vmatpush1.msra.mxu0 %v5309
  %5311 = vmatprep.subr.mxu0 0.0
  %5312 = vmatpush1.msra.mxu0 0.0
  %5313 = vmatprep.subr.mxu0 0.0
  %5314 = vmatpush1.msra.mxu0 0.0
  %5315 = vmatprep.subr.mxu0 0.0
  %5316 = vmatpush1.msra.mxu0 0.0
  %5317 = vmatprep.subr.mxu0 0.0
  %5318 = vmatpush1.msra.mxu0 0.0
  %5319 = vmatprep.subr.mxu0 0.0
  %5320 = vmatpush1.msra.mxu0 0.0
  %5321 = vmatprep.subr.mxu0 0.0
  %5322 = vmatpush1.msra.mxu0 0.0
  %5323 = vmatprep.subr.mxu0 0.0
  %5324 = vmatpush1.msra.mxu0 0.0
  %5325 = vmatprep.subr.mxu0 0.0
  %5326 = vmatpush1.msra.mxu0 0.0
  %5327 = vmatprep.subr.mxu0 0.0
  %5328 = vmatpush1.msra.mxu0 0.0
  %5329 = vmatprep.subr.mxu0 0.0
  %5330 = vmatpush1.msra.mxu0 0.0
  %5331 = vmatprep.subr.mxu0 0.0
  %5332 = vmatpush1.msra.mxu0 0.0
  %5333 = vmatprep.subr.mxu0 0.0
  %5334 = vmatpush1.msra.mxu0 0.0
  %5335 = vmatprep.subr.mxu0 0.0
  %5336 = vmatpush1.msra.mxu0 0.0
  %5337 = vmatprep.subr.mxu0 0.0
  %5338 = vmatpush1.msra.mxu0 0.0
  %5339 = vmatprep.subr.mxu0 0.0
  %5340 = vmatpush1.msra.mxu0 0.0
  %5341 = vmatprep.subr.mxu0 0.0
  %5342 = vmatpush1.msra.mxu0 0.0
  %5343 = vmatprep.subr.mxu0 0.0
  %5344 = vmatpush1.msra.mxu0 0.0
  %5345 = vmatprep.subr.mxu0 0.0
  %5346 = vmatpush1.msra.mxu0 0.0
  %5347 = vmatprep.subr.mxu0 0.0
  %5348 = vmatpush1.msra.mxu0 0.0
  %5349 = vmatprep.subr.mxu0 0.0
  %5350 = vmatpush1.msra.mxu0 0.0
  %5351 = vmatprep.subr.mxu0 0.0
  %5352 = vmatpush1.msra.mxu0 0.0
  %5353 = vmatprep.subr.mxu0 0.0
  %5354 = vmatpush1.msra.mxu0 0.0
  %5355 = vmatprep.subr.mxu0 0.0
  %5356 = vmatpush1.msra.mxu0 0.0
  %5357 = vmatprep.subr.mxu0 0.0
  %5358 = vmatpush1.msra.mxu0 0.0
  %5359 = vmatprep.subr.mxu0 0.0
  %5360 = vmatpush1.msra.mxu0 0.0
  %5361 = vmatprep.subr.mxu0 0.0
  %5362 = vmatpush1.msra.mxu0 0.0
  %5363 = vmatprep.subr.mxu0 0.0
  %5364 = vmatpush1.msra.mxu0 0.0
  %5365 = vmatprep.subr.mxu0 0.0
  %5366 = vmatpush1.msra.mxu0 0.0
  %5367 = vmatprep.subr.mxu0 0.0
  %5368 = vmatpush1.msra.mxu0 0.0
  %5369 = vmatprep.subr.mxu0 0.0
  %5370 = vmatpush1.msra.mxu0 0.0
  %5371 = vmatprep.subr.mxu0 0.0
  %5372 = vmatpush1.msra.mxu0 0.0
  %5373 = vmatprep.mubr.f32.mxu0 0.0
  %v5374 = vand.u32 %v1095, 4294901760
  %5375 = vmatmul.mubr.f32.gmra.mrb[0].mxu0 %v5374
  %v5376 = vpop.f32.mrb[0].mxu0
  %v5377 = vadd.f32 %v5303, %v5376
  %v5378 = vpop.f32.mrb[0].mxu0
  %5379 = vdwg.mxu0
  %5380 = vmatprep.subr.mxu0 0.0
  %v5381 = vand.u32 %v5004, 4294901760
  %5382 = vmatpush1.msra.mxu0 %v5381
  %5383 = vmatprep.subr.mxu0 0.0
  %5384 = vmatpush1.msra.mxu0 0.0
  %5385 = vmatprep.subr.mxu0 0.0
  %5386 = vmatpush1.msra.mxu0 0.0
  %5387 = vmatprep.subr.mxu0 0.0
  %5388 = vmatpush1.msra.mxu0 0.0
  %5389 = vmatprep.subr.mxu0 0.0
  %5390 = vmatpush1.msra.mxu0 0.0
  %5391 = vmatprep.subr.mxu0 0.0
  %5392 = vmatpush1.msra.mxu0 0.0
  %5393 = vmatprep.subr.mxu0 0.0
  %5394 = vmatpush1.msra.mxu0 0.0
  %5395 = vmatprep.subr.mxu0 0.0
  %5396 = vmatpush1.msra.mxu0 0.0
  %5397 = vmatprep.subr.mxu0 0.0
  %5398 = vmatpush1.msra.mxu0 0.0
  %5399 = vmatprep.subr.mxu0 0.0
  %5400 = vmatpush1.msra.mxu0 0.0
  %5401 = vmatprep.subr.mxu0 0.0
  %5402 = vmatpush1.msra.mxu0 0.0
  %5403 = vmatprep.subr.mxu0 0.0
  %5404 = vmatpush1.msra.mxu0 0.0
  %5405 = vmatprep.subr.mxu0 0.0
  %5406 = vmatpush1.msra.mxu0 0.0
  %5407 = vmatprep.subr.mxu0 0.0
  %5408 = vmatpush1.msra.mxu0 0.0
  %5409 = vmatprep.subr.mxu0 0.0
  %5410 = vmatpush1.msra.mxu0 0.0
  %5411 = vmatprep.subr.mxu0 0.0
  %5412 = vmatpush1.msra.mxu0 0.0
  %5413 = vmatprep.subr.mxu0 0.0
  %5414 = vmatpush1.msra.mxu0 0.0
  %5415 = vmatprep.subr.mxu0 0.0
  %5416 = vmatpush1.msra.mxu0 0.0
  %5417 = vmatprep.subr.mxu0 0.0
  %5418 = vmatpush1.msra.mxu0 0.0
  %5419 = vmatprep.subr.mxu0 0.0
  %5420 = vmatpush1.msra.mxu0 0.0
  %5421 = vmatprep.subr.mxu0 0.0
  %5422 = vmatpush1.msra.mxu0 0.0
  %5423 = vmatprep.subr.mxu0 0.0
  %5424 = vmatpush1.msra.mxu0 0.0
  %5425 = vmatprep.subr.mxu0 0.0
  %5426 = vmatpush1.msra.mxu0 0.0
  %5427 = vmatprep.subr.mxu0 0.0
  %5428 = vmatpush1.msra.mxu0 0.0
  %5429 = vmatprep.subr.mxu0 0.0
  %5430 = vmatpush1.msra.mxu0 0.0
  %5431 = vmatprep.subr.mxu0 0.0
  %5432 = vmatpush1.msra.mxu0 0.0
  %5433 = vmatprep.subr.mxu0 0.0
  %5434 = vmatpush1.msra.mxu0 0.0
  %5435 = vmatprep.subr.mxu0 0.0
  %5436 = vmatpush1.msra.mxu0 0.0
  %5437 = vmatprep.subr.mxu0 0.0
  %5438 = vmatpush1.msra.mxu0 0.0
  %5439 = vmatprep.subr.mxu0 0.0
  %5440 = vmatpush1.msra.mxu0 0.0
  %5441 = vmatprep.subr.mxu0 0.0
  %5442 = vmatpush1.msra.mxu0 0.0
  %5443 = vmatprep.subr.mxu0 0.0
  %5444 = vmatpush1.msra.mxu0 0.0
  %5445 = vmatprep.mubr.f32.mxu0 0.0
  %v5446 = vand.u32 %v1095, 4294901760
  %5447 = vmatmul.mubr.f32.gmra.mrb[0].mxu0 %v5446
  %v5448 = vpop.f32.mrb[0].mxu0
  %v5449 = vadd.f32 %v5377, %v5448
  %v5450 = vpop.f32.mrb[0].mxu0
  %5451 = vdwg.mxu0
  %5453 = vrot.lane.b32.xlu0 %v5449, 32
  %v5454 = vpop.permute.xlu0 %5453
  %v5456 = vadd.f32 %v580, %v5454
  %v5457 = vmax.f32 %v5456, 0.0
  %v5458 = vsub.f32 1.0, %v4986
  %v5459 = vmul.f32 %v5458, %v4999
  %v5460 = vmul.f32 %v4986, %v5457
  %v5461 = vadd.f32 %v5459, %v5460
  %5463 = vrot.lane.b32.xlu0 %v5461, 96
  %v5464 = vpop.permute.xlu0 %5463
  %5466 = vmatprep.subr.mxu0 0.0
  %v5467 = vand.u32 %v5464, 4294901760
  %5468 = vmatpush1.msra.mxu0 %v5467
  %5469 = vmatprep.subr.mxu0 0.0
  %5470 = vmatpush1.msra.mxu0 0.0
  %5471 = vmatprep.subr.mxu0 0.0
  %5472 = vmatpush1.msra.mxu0 0.0
  %5473 = vmatprep.subr.mxu0 0.0
  %5474 = vmatpush1.msra.mxu0 0.0
  %5475 = vmatprep.subr.mxu0 0.0
  %5476 = vmatpush1.msra.mxu0 0.0
  %5477 = vmatprep.subr.mxu0 0.0
  %5478 = vmatpush1.msra.mxu0 0.0
  %5479 = vmatprep.subr.mxu0 0.0
  %5480 = vmatpush1.msra.mxu0 0.0
  %5481 = vmatprep.subr.mxu0 0.0
  %5482 = vmatpush1.msra.mxu0 0.0
  %5483 = vmatprep.subr.mxu0 0.0
  %5484 = vmatpush1.msra.mxu0 0.0
  %5485 = vmatprep.subr.mxu0 0.0
  %5486 = vmatpush1.msra.mxu0 0.0
  %5487 = vmatprep.subr.mxu0 0.0
  %5488 = vmatpush1.msra.mxu0 0.0
  %5489 = vmatprep.subr.mxu0 0.0
  %5490 = vmatpush1.msra.mxu0 0.0
  %5491 = vmatprep.subr.mxu0 0.0
  %5492 = vmatpush1.msra.mxu0 0.0
  %5493 = vmatprep.subr.mxu0 0.0
  %5494 = vmatpush1.msra.mxu0 0.0
  %5495 = vmatprep.subr.mxu0 0.0
  %5496 = vmatpush1.msra.mxu0 0.0
  %5497 = vmatprep.subr.mxu0 0.0
  %5498 = vmatpush1.msra.mxu0 0.0
  %5499 = vmatprep.subr.mxu0 0.0
  %5500 = vmatpush1.msra.mxu0 0.0
  %5501 = vmatprep.subr.mxu0 0.0
  %5502 = vmatpush1.msra.mxu0 0.0
  %5503 = vmatprep.subr.mxu0 0.0
  %5504 = vmatpush1.msra.mxu0 0.0
  %5505 = vmatprep.subr.mxu0 0.0
  %5506 = vmatpush1.msra.mxu0 0.0
  %5507 = vmatprep.subr.mxu0 0.0
  %5508 = vmatpush1.msra.mxu0 0.0
  %5509 = vmatprep.subr.mxu0 0.0
  %5510 = vmatpush1.msra.mxu0 0.0
  %5511 = vmatprep.subr.mxu0 0.0
  %5512 = vmatpush1.msra.mxu0 0.0
  %5513 = vmatprep.subr.mxu0 0.0
  %5514 = vmatpush1.msra.mxu0 0.0
  %5515 = vmatprep.subr.mxu0 0.0
  %5516 = vmatpush1.msra.mxu0 0.0
  %5517 = vmatprep.subr.mxu0 0.0
  %5518 = vmatpush1.msra.mxu0 0.0
  %5519 = vmatprep.subr.mxu0 0.0
  %5520 = vmatpush1.msra.mxu0 0.0
  %5521 = vmatprep.subr.mxu0 0.0
  %5522 = vmatpush1.msra.mxu0 0.0
  %5523 = vmatprep.subr.mxu0 0.0
  %5524 = vmatpush1.msra.mxu0 0.0
  %5525 = vmatprep.subr.mxu0 0.0
  %5526 = vmatpush1.msra.mxu0 0.0
  %5527 = vmatprep.subr.mxu0 0.0
  %5528 = vmatpush1.msra.mxu0 0.0
  %5529 = vmatprep.subr.mxu0 0.0
  %5530 = vmatpush1.msra.mxu0 0.0
  %5531 = vmatprep.mubr.f32.mxu0 0.0
  %v5532 = vand.u32 %v585, 4294901760
  %v5533 = vsub.f32 %v585, %v5532
  %v5534 = vand.u32 %v5533, 4294901760
  %v5535 = vsub.f32 %v5533, %v5534
  %v5536 = vand.u32 %v5535, 4294901760
  %5537 = vmatmul.mubr.f32.gmra.mrb[0].mxu0 %v5536
  %v5538 = vpop.f32.mrb[0].mxu0
  %v5539 = vadd.f32 0.0, %v5538
  %v5540 = vpop.f32.mrb[0].mxu0
  %5541 = vmatprep.mubr.f32.mxu0 0.0
  %v5542 = vand.u32 %v588, 4294901760
  %v5543 = vsub.f32 %v588, %v5542
  %v5544 = vand.u32 %v5543, 4294901760
  %v5545 = vsub.f32 %v5543, %v5544
  %v5546 = vand.u32 %v5545, 4294901760
  %5547 = vmatmul.mubr.f32.gmra.mrb[0].mxu0 %v5546
  %v5548 = vpop.f32.mrb[0].mxu0
  %v5549 = vadd.f32 0.0, %v5548
  %v5550 = vpop.f32.mrb[0].mxu0
  %5551 = vdwg.mxu0
  %5552 = vmatprep.subr.mxu0 0.0
  %v5553 = vand.u32 %v5464, 4294901760
  %v5554 = vsub.f32 %v5464, %v5553
  %v5555 = vand.u32 %v5554, 4294901760
  %v5556 = vsub.f32 %v5554, %v5555
  %v5557 = vand.u32 %v5556, 4294901760
  %5558 = vmatpush1.msra.mxu0 %v5557
  %5559 = vmatprep.subr.mxu0 0.0
  %5560 = vmatpush1.msra.mxu0 0.0
  %5561 = vmatprep.subr.mxu0 0.0
  %5562 = vmatpush1.msra.mxu0 0.0
  %5563 = vmatprep.subr.mxu0 0.0
  %5564 = vmatpush1.msra.mxu0 0.0
  %5565 = vmatprep.subr.mxu0 0.0
  %5566 = vmatpush1.msra.mxu0 0.0
  %5567 = vmatprep.subr.mxu0 0.0
  %5568 = vmatpush1.msra.mxu0 0.0
  %5569 = vmatprep.subr.mxu0 0.0
  %5570 = vmatpush1.msra.mxu0 0.0
  %5571 = vmatprep.subr.mxu0 0.0
  %5572 = vmatpush1.msra.mxu0 0.0
  %5573 = vmatprep.subr.mxu0 0.0
  %5574 = vmatpush1.msra.mxu0 0.0
  %5575 = vmatprep.subr.mxu0 0.0
  %5576 = vmatpush1.msra.mxu0 0.0
  %5577 = vmatprep.subr.mxu0 0.0
  %5578 = vmatpush1.msra.mxu0 0.0
  %5579 = vmatprep.subr.mxu0 0.0
  %5580 = vmatpush1.msra.mxu0 0.0
  %5581 = vmatprep.subr.mxu0 0.0
  %5582 = vmatpush1.msra.mxu0 0.0
  %5583 = vmatprep.subr.mxu0 0.0
  %5584 = vmatpush1.msra.mxu0 0.0
  %5585 = vmatprep.subr.mxu0 0.0
  %5586 = vmatpush1.msra.mxu0 0.0
  %5587 = vmatprep.subr.mxu0 0.0
  %5588 = vmatpush1.msra.mxu0 0.0
  %5589 = vmatprep.subr.mxu0 0.0
  %5590 = vmatpush1.msra.mxu0 0.0
  %5591 = vmatprep.subr.mxu0 0.0
  %5592 = vmatpush1.msra.mxu0 0.0
  %5593 = vmatprep.subr.mxu0 0.0
  %5594 = vmatpush1.msra.mxu0 0.0
  %5595 = vmatprep.subr.mxu0 0.0
  %5596 = vmatpush1.msra.mxu0 0.0
  %5597 = vmatprep.subr.mxu0 0.0
  %5598 = vmatpush1.msra.mxu0 0.0
  %5599 = vmatprep.subr.mxu0 0.0
  %5600 = vmatpush1.msra.mxu0 0.0
  %5601 = vmatprep.subr.mxu0 0.0
  %5602 = vmatpush1.msra.mxu0 0.0
  %5603 = vmatprep.subr.mxu0 0.0
  %5604 = vmatpush1.msra.mxu0 0.0
  %5605 = vmatprep.subr.mxu0 0.0
  %5606 = vmatpush1.msra.mxu0 0.0
  %5607 = vmatprep.subr.mxu0 0.0
  %5608 = vmatpush1.msra.mxu0 0.0
  %5609 = vmatprep.subr.mxu0 0.0
  %5610 = vmatpush1.msra.mxu0 0.0
  %5611 = vmatprep.subr.mxu0 0.0
  %5612 = vmatpush1.msra.mxu0 0.0
  %5613 = vmatprep.subr.mxu0 0.0
  %5614 = vmatpush1.msra.mxu0 0.0
  %5615 = vmatprep.subr.mxu0 0.0
  %5616 = vmatpush1.msra.mxu0 0.0
  %5617 = vmatprep.subr.mxu0 0.0
  %5618 = vmatpush1.msra.mxu0 0.0
  %5619 = vmatprep.subr.mxu0 0.0
  %5620 = vmatpush1.msra.mxu0 0.0
  %5621 = vmatprep.mubr.f32.mxu0 0.0
  %v5622 = vand.u32 %v585, 4294901760
  %5623 = vmatmul.mubr.f32.gmra.mrb[0].mxu0 %v5622
  %v5624 = vpop.f32.mrb[0].mxu0
  %v5625 = vadd.f32 %v5539, %v5624
  %v5626 = vpop.f32.mrb[0].mxu0
  %5627 = vmatprep.mubr.f32.mxu0 0.0
  %v5628 = vand.u32 %v588, 4294901760
  %5629 = vmatmul.mubr.f32.gmra.mrb[0].mxu0 %v5628
  %v5630 = vpop.f32.mrb[0].mxu0
  %v5631 = vadd.f32 %v5549, %v5630
  %v5632 = vpop.f32.mrb[0].mxu0
  %5633 = vdwg.mxu0
  %5634 = vmatprep.subr.mxu0 0.0
  %v5635 = vand.u32 %v5464, 4294901760
  %v5636 = vsub.f32 %v5464, %v5635
  %5637 = vmatpush1.msra.mxu0 %v5636
  %5638 = vmatprep.subr.mxu0 0.0
  %5639 = vmatpush1.msra.mxu0 0.0
  %5640 = vmatprep.subr.mxu0 0.0
  %5641 = vmatpush1.msra.mxu0 0.0
  %5642 = vmatprep.subr.mxu0 0.0
  %5643 = vmatpush1.msra.mxu0 0.0
  %5644 = vmatprep.subr.mxu0 0.0
  %5645 = vmatpush1.msra.mxu0 0.0
  %5646 = vmatprep.subr.mxu0 0.0
  %5647 = vmatpush1.msra.mxu0 0.0
  %5648 = vmatprep.subr.mxu0 0.0
  %5649 = vmatpush1.msra.mxu0 0.0
  %5650 = vmatprep.subr.mxu0 0.0
  %5651 = vmatpush1.msra.mxu0 0.0
  %5652 = vmatprep.subr.mxu0 0.0
  %5653 = vmatpush1.msra.mxu0 0.0
  %5654 = vmatprep.subr.mxu0 0.0
  %5655 = vmatpush1.msra.mxu0 0.0
  %5656 = vmatprep.subr.mxu0 0.0
  %5657 = vmatpush1.msra.mxu0 0.0
  %5658 = vmatprep.subr.mxu0 0.0
  %5659 = vmatpush1.msra.mxu0 0.0
  %5660 = vmatprep.subr.mxu0 0.0
  %5661 = vmatpush1.msra.mxu0 0.0
  %5662 = vmatprep.subr.mxu0 0.0
  %5663 = vmatpush1.msra.mxu0 0.0
  %5664 = vmatprep.subr.mxu0 0.0
  %5665 = vmatpush1.msra.mxu0 0.0
  %5666 = vmatprep.subr.mxu0 0.0
  %5667 = vmatpush1.msra.mxu0 0.0
  %5668 = vmatprep.subr.mxu0 0.0
  %5669 = vmatpush1.msra.mxu0 0.0
  %5670 = vmatprep.subr.mxu0 0.0
  %5671 = vmatpush1.msra.mxu0 0.0
  %5672 = vmatprep.subr.mxu0 0.0
  %5673 = vmatpush1.msra.mxu0 0.0
  %5674 = vmatprep.subr.mxu0 0.0
  %5675 = vmatpush1.msra.mxu0 0.0
  %5676 = vmatprep.subr.mxu0 0.0
  %5677 = vmatpush1.msra.mxu0 0.0
  %5678 = vmatprep.subr.mxu0 0.0
  %5679 = vmatpush1.msra.mxu0 0.0
  %5680 = vmatprep.subr.mxu0 0.0
  %5681 = vmatpush1.msra.mxu0 0.0
  %5682 = vmatprep.subr.mxu0 0.0
  %5683 = vmatpush1.msra.mxu0 0.0
  %5684 = vmatprep.subr.mxu0 0.0
  %5685 = vmatpush1.msra.mxu0 0.0
  %5686 = vmatprep.subr.mxu0 0.0
  %5687 = vmatpush1.msra.mxu0 0.0
  %5688 = vmatprep.subr.mxu0 0.0
  %5689 = vmatpush1.msra.mxu0 0.0
  %5690 = vmatprep.subr.mxu0 0.0
  %5691 = vmatpush1.msra.mxu0 0.0
  %5692 = vmatprep.subr.mxu0 0.0
  %5693 = vmatpush1.msra.mxu0 0.0
  %5694 = vmatprep.subr.mxu0 0.0
  %5695 = vmatpush1.msra.mxu0 0.0
  %5696 = vmatprep.subr.mxu0 0.0
  %5697 = vmatpush1.msra.mxu0 0.0
  %5698 = vmatprep.subr.mxu0 0.0
  %5699 = vmatpush1.msra.mxu0 0.0
  %5700 = vmatprep.mubr.f32.mxu0 0.0
  %v5701 = vand.u32 %v585, 4294901760
  %v5702 = vsub.f32 %v585, %v5701
  %5703 = vmatmul.mubr.f32.gmra.mrb[0].mxu0 %v5702
  %v5704 = vpop.f32.mrb[0].mxu0
  %v5705 = vadd.f32 %v5625, %v5704
  %v5706 = vpop.f32.mrb[0].mxu0
  %5707 = vmatprep.mubr.f32.mxu0 0.0
  %v5708 = vand.u32 %v588, 4294901760
  %v5709 = vsub.f32 %v588, %v5708
  %5710 = vmatmul.mubr.f32.gmra.mrb[0].mxu0 %v5709
  %v5711 = vpop.f32.mrb[0].mxu0
  %v5712 = vadd.f32 %v5631, %v5711
  %v5713 = vpop.f32.mrb[0].mxu0
  %5714 = vdwg.mxu0
  %5715 = vmatprep.subr.mxu0 0.0
  %v5716 = vand.u32 %v5464, 4294901760
  %5717 = vmatpush1.msra.mxu0 %v5716
  %5718 = vmatprep.subr.mxu0 0.0
  %5719 = vmatpush1.msra.mxu0 0.0
  %5720 = vmatprep.subr.mxu0 0.0
  %5721 = vmatpush1.msra.mxu0 0.0
  %5722 = vmatprep.subr.mxu0 0.0
  %5723 = vmatpush1.msra.mxu0 0.0
  %5724 = vmatprep.subr.mxu0 0.0
  %5725 = vmatpush1.msra.mxu0 0.0
  %5726 = vmatprep.subr.mxu0 0.0
  %5727 = vmatpush1.msra.mxu0 0.0
  %5728 = vmatprep.subr.mxu0 0.0
  %5729 = vmatpush1.msra.mxu0 0.0
  %5730 = vmatprep.subr.mxu0 0.0
  %5731 = vmatpush1.msra.mxu0 0.0
  %5732 = vmatprep.subr.mxu0 0.0
  %5733 = vmatpush1.msra.mxu0 0.0
  %5734 = vmatprep.subr.mxu0 0.0
  %5735 = vmatpush1.msra.mxu0 0.0
  %5736 = vmatprep.subr.mxu0 0.0
  %5737 = vmatpush1.msra.mxu0 0.0
  %5738 = vmatprep.subr.mxu0 0.0
  %5739 = vmatpush1.msra.mxu0 0.0
  %5740 = vmatprep.subr.mxu0 0.0
  %5741 = vmatpush1.msra.mxu0 0.0
  %5742 = vmatprep.subr.mxu0 0.0
  %5743 = vmatpush1.msra.mxu0 0.0
  %5744 = vmatprep.subr.mxu0 0.0
  %5745 = vmatpush1.msra.mxu0 0.0
  %5746 = vmatprep.subr.mxu0 0.0
  %5747 = vmatpush1.msra.mxu0 0.0
  %5748 = vmatprep.subr.mxu0 0.0
  %5749 = vmatpush1.msra.mxu0 0.0
  %5750 = vmatprep.subr.mxu0 0.0
  %5751 = vmatpush1.msra.mxu0 0.0
  %5752 = vmatprep.subr.mxu0 0.0
  %5753 = vmatpush1.msra.mxu0 0.0
  %5754 = vmatprep.subr.mxu0 0.0
  %5755 = vmatpush1.msra.mxu0 0.0
  %5756 = vmatprep.subr.mxu0 0.0
  %5757 = vmatpush1.msra.mxu0 0.0
  %5758 = vmatprep.subr.mxu0 0.0
  %5759 = vmatpush1.msra.mxu0 0.0
  %5760 = vmatprep.subr.mxu0 0.0
  %5761 = vmatpush1.msra.mxu0 0.0
  %5762 = vmatprep.subr.mxu0 0.0
  %5763 = vmatpush1.msra.mxu0 0.0
  %5764 = vmatprep.subr.mxu0 0.0
  %5765 = vmatpush1.msra.mxu0 0.0
  %5766 = vmatprep.subr.mxu0 0.0
  %5767 = vmatpush1.msra.mxu0 0.0
  %5768 = vmatprep.subr.mxu0 0.0
  %5769 = vmatpush1.msra.mxu0 0.0
  %5770 = vmatprep.subr.mxu0 0.0
  %5771 = vmatpush1.msra.mxu0 0.0
  %5772 = vmatprep.subr.mxu0 0.0
  %5773 = vmatpush1.msra.mxu0 0.0
  %5774 = vmatprep.subr.mxu0 0.0
  %5775 = vmatpush1.msra.mxu0 0.0
  %5776 = vmatprep.subr.mxu0 0.0
  %5777 = vmatpush1.msra.mxu0 0.0
  %5778 = vmatprep.subr.mxu0 0.0
  %5779 = vmatpush1.msra.mxu0 0.0
  %5780 = vmatprep.mubr.f32.mxu0 0.0
  %v5781 = vand.u32 %v585, 4294901760
  %v5782 = vsub.f32 %v585, %v5781
  %v5783 = vand.u32 %v5782, 4294901760
  %5784 = vmatmul.mubr.f32.gmra.mrb[0].mxu0 %v5783
  %v5785 = vpop.f32.mrb[0].mxu0
  %v5786 = vadd.f32 %v5705, %v5785
  %v5787 = vpop.f32.mrb[0].mxu0
  %5788 = vmatprep.mubr.f32.mxu0 0.0
  %v5789 = vand.u32 %v588, 4294901760
  %v5790 = vsub.f32 %v588, %v5789
  %v5791 = vand.u32 %v5790, 4294901760
  %5792 = vmatmul.mubr.f32.gmra.mrb[0].mxu0 %v5791
  %v5793 = vpop.f32.mrb[0].mxu0
  %v5794 = vadd.f32 %v5712, %v5793
  %v5795 = vpop.f32.mrb[0].mxu0
  %5796 = vdwg.mxu0
  %5797 = vmatprep.subr.mxu0 0.0
  %v5798 = vand.u32 %v5464, 4294901760
  %v5799 = vsub.f32 %v5464, %v5798
  %v5800 = vand.u32 %v5799, 4294901760
  %5801 = vmatpush1.msra.mxu0 %v5800
  %5802 = vmatprep.subr.mxu0 0.0
  %5803 = vmatpush1.msra.mxu0 0.0
  %5804 = vmatprep.subr.mxu0 0.0
  %5805 = vmatpush1.msra.mxu0 0.0
  %5806 = vmatprep.subr.mxu0 0.0
  %5807 = vmatpush1.msra.mxu0 0.0
  %5808 = vmatprep.subr.mxu0 0.0
  %5809 = vmatpush1.msra.mxu0 0.0
  %5810 = vmatprep.subr.mxu0 0.0
  %5811 = vmatpush1.msra.mxu0 0.0
  %5812 = vmatprep.subr.mxu0 0.0
  %5813 = vmatpush1.msra.mxu0 0.0
  %5814 = vmatprep.subr.mxu0 0.0
  %5815 = vmatpush1.msra.mxu0 0.0
  %5816 = vmatprep.subr.mxu0 0.0
  %5817 = vmatpush1.msra.mxu0 0.0
  %5818 = vmatprep.subr.mxu0 0.0
  %5819 = vmatpush1.msra.mxu0 0.0
  %5820 = vmatprep.subr.mxu0 0.0
  %5821 = vmatpush1.msra.mxu0 0.0
  %5822 = vmatprep.subr.mxu0 0.0
  %5823 = vmatpush1.msra.mxu0 0.0
  %5824 = vmatprep.subr.mxu0 0.0
  %5825 = vmatpush1.msra.mxu0 0.0
  %5826 = vmatprep.subr.mxu0 0.0
  %5827 = vmatpush1.msra.mxu0 0.0
  %5828 = vmatprep.subr.mxu0 0.0
  %5829 = vmatpush1.msra.mxu0 0.0
  %5830 = vmatprep.subr.mxu0 0.0
  %5831 = vmatpush1.msra.mxu0 0.0
  %5832 = vmatprep.subr.mxu0 0.0
  %5833 = vmatpush1.msra.mxu0 0.0
  %5834 = vmatprep.subr.mxu0 0.0
  %5835 = vmatpush1.msra.mxu0 0.0
  %5836 = vmatprep.subr.mxu0 0.0
  %5837 = vmatpush1.msra.mxu0 0.0
  %5838 = vmatprep.subr.mxu0 0.0
  %5839 = vmatpush1.msra.mxu0 0.0
  %5840 = vmatprep.subr.mxu0 0.0
  %5841 = vmatpush1.msra.mxu0 0.0
  %5842 = vmatprep.subr.mxu0 0.0
  %5843 = vmatpush1.msra.mxu0 0.0
  %5844 = vmatprep.subr.mxu0 0.0
  %5845 = vmatpush1.msra.mxu0 0.0
  %5846 = vmatprep.subr.mxu0 0.0
  %5847 = vmatpush1.msra.mxu0 0.0
  %5848 = vmatprep.subr.mxu0 0.0
  %5849 = vmatpush1.msra.mxu0 0.0
  %5850 = vmatprep.subr.mxu0 0.0
  %5851 = vmatpush1.msra.mxu0 0.0
  %5852 = vmatprep.subr.mxu0 0.0
  %5853 = vmatpush1.msra.mxu0 0.0
  %5854 = vmatprep.subr.mxu0 0.0
  %5855 = vmatpush1.msra.mxu0 0.0
  %5856 = vmatprep.subr.mxu0 0.0
  %5857 = vmatpush1.msra.mxu0 0.0
  %5858 = vmatprep.subr.mxu0 0.0
  %5859 = vmatpush1.msra.mxu0 0.0
  %5860 = vmatprep.subr.mxu0 0.0
  %5861 = vmatpush1.msra.mxu0 0.0
  %5862 = vmatprep.subr.mxu0 0.0
  %5863 = vmatpush1.msra.mxu0 0.0
  %5864 = vmatprep.mubr.f32.mxu0 0.0
  %v5865 = vand.u32 %v585, 4294901760
  %5866 = vmatmul.mubr.f32.gmra.mrb[0].mxu0 %v5865
  %v5867 = vpop.f32.mrb[0].mxu0
  %v5868 = vadd.f32 %v5786, %v5867
  %v5869 = vpop.f32.mrb[0].mxu0
  %5870 = vmatprep.mubr.f32.mxu0 0.0
  %v5871 = vand.u32 %v588, 4294901760
  %5872 = vmatmul.mubr.f32.gmra.mrb[0].mxu0 %v5871
  %v5873 = vpop.f32.mrb[0].mxu0
  %v5874 = vadd.f32 %v5794, %v5873
  %v5875 = vpop.f32.mrb[0].mxu0
  %5876 = vdwg.mxu0
  %5877 = vmatprep.subr.mxu0 0.0
  %v5878 = vand.u32 %v5464, 4294901760
  %5879 = vmatpush1.msra.mxu0 %v5878
  %5880 = vmatprep.subr.mxu0 0.0
  %5881 = vmatpush1.msra.mxu0 0.0
  %5882 = vmatprep.subr.mxu0 0.0
  %5883 = vmatpush1.msra.mxu0 0.0
  %5884 = vmatprep.subr.mxu0 0.0
  %5885 = vmatpush1.msra.mxu0 0.0
  %5886 = vmatprep.subr.mxu0 0.0
  %5887 = vmatpush1.msra.mxu0 0.0
  %5888 = vmatprep.subr.mxu0 0.0
  %5889 = vmatpush1.msra.mxu0 0.0
  %5890 = vmatprep.subr.mxu0 0.0
  %5891 = vmatpush1.msra.mxu0 0.0
  %5892 = vmatprep.subr.mxu0 0.0
  %5893 = vmatpush1.msra.mxu0 0.0
  %5894 = vmatprep.subr.mxu0 0.0
  %5895 = vmatpush1.msra.mxu0 0.0
  %5896 = vmatprep.subr.mxu0 0.0
  %5897 = vmatpush1.msra.mxu0 0.0
  %5898 = vmatprep.subr.mxu0 0.0
  %5899 = vmatpush1.msra.mxu0 0.0
  %5900 = vmatprep.subr.mxu0 0.0
  %5901 = vmatpush1.msra.mxu0 0.0
  %5902 = vmatprep.subr.mxu0 0.0
  %5903 = vmatpush1.msra.mxu0 0.0
  %5904 = vmatprep.subr.mxu0 0.0
  %5905 = vmatpush1.msra.mxu0 0.0
  %5906 = vmatprep.subr.mxu0 0.0
  %5907 = vmatpush1.msra.mxu0 0.0
  %5908 = vmatprep.subr.mxu0 0.0
  %5909 = vmatpush1.msra.mxu0 0.0
  %5910 = vmatprep.subr.mxu0 0.0
  %5911 = vmatpush1.msra.mxu0 0.0
  %5912 = vmatprep.subr.mxu0 0.0
  %5913 = vmatpush1.msra.mxu0 0.0
  %5914 = vmatprep.subr.mxu0 0.0
  %5915 = vmatpush1.msra.mxu0 0.0
  %5916 = vmatprep.subr.mxu0 0.0
  %5917 = vmatpush1.msra.mxu0 0.0
  %5918 = vmatprep.subr.mxu0 0.0
  %5919 = vmatpush1.msra.mxu0 0.0
  %5920 = vmatprep.subr.mxu0 0.0
  %5921 = vmatpush1.msra.mxu0 0.0
  %5922 = vmatprep.subr.mxu0 0.0
  %5923 = vmatpush1.msra.mxu0 0.0
  %5924 = vmatprep.subr.mxu0 0.0
  %5925 = vmatpush1.msra.mxu0 0.0
  %5926 = vmatprep.subr.mxu0 0.0
  %5927 = vmatpush1.msra.mxu0 0.0
  %5928 = vmatprep.subr.mxu0 0.0
  %5929 = vmatpush1.msra.mxu0 0.0
  %5930 = vmatprep.subr.mxu0 0.0
  %5931 = vmatpush1.msra.mxu0 0.0
  %5932 = vmatprep.subr.mxu0 0.0
  %5933 = vmatpush1.msra.mxu0 0.0
  %5934 = vmatprep.subr.mxu0 0.0
  %5935 = vmatpush1.msra.mxu0 0.0
  %5936 = vmatprep.subr.mxu0 0.0
  %5937 = vmatpush1.msra.mxu0 0.0
  %5938 = vmatprep.subr.mxu0 0.0
  %5939 = vmatpush1.msra.mxu0 0.0
  %5940 = vmatprep.subr.mxu0 0.0
  %5941 = vmatpush1.msra.mxu0 0.0
  %5942 = vmatprep.mubr.f32.mxu0 0.0
  %v5943 = vand.u32 %v585, 4294901760
  %5944 = vmatmul.mubr.f32.gmra.mrb[0].mxu0 %v5943
  %v5945 = vpop.f32.mrb[0].mxu0
  %v5946 = vadd.f32 %v5868, %v5945
  %v5947 = vpop.f32.mrb[0].mxu0
  %5948 = vmatprep.mubr.f32.mxu0 0.0
  %v5949 = vand.u32 %v588, 4294901760
  %5950 = vmatmul.mubr.f32.gmra.mrb[0].mxu0 %v5949
  %v5951 = vpop.f32.mrb[0].mxu0
  %v5952 = vadd.f32 %v5874, %v5951
  %v5953 = vpop.f32.mrb[0].mxu0
  %5954 = vdwg.mxu0
  %5956 = vrot.lane.b32.xlu0 %v5946, 40
  %v5957 = vpop.permute.xlu0 %5956
  %v5959 = vadd.f32 %v568, %v5957
  %v5960 = vxor.u32 %v5959, 2147483648
  %v5961 = vmul.f32 %v5960, 1.442695
  %v5962 = vpow.pop %v5961
  %v5963 = vadd.f32 %v5962, 1.0
  %v5964 = vrcp.pop %v5963
  %v5965 = vmul.f32 1.0, %v5964
  %5967 = vrot.lane.b32.xlu0 %v5952, 40
  %v5968 = vpop.permute.xlu0 %5967
  %v5970 = vadd.f32 %v574, %v5968
  %v5971 = vxor.u32 %v5970, 2147483648
  %v5972 = vmul.f32 %v5971, 1.442695
  %v5973 = vpow.pop %v5972
  %v5974 = vadd.f32 %v5973, 1.0
  %v5975 = vrcp.pop %v5974
  %v5976 = vmul.f32 1.0, %v5975
  %5977 = vrot.lane.b32.xlu0 %v5461, 8
  %v5978 = vpop.permute.xlu0 %5977
  %v5980 = vmul.f32 %v5976, %v5978
  %5982 = vrot.lane.b32.xlu0 %v5980, 88
  %v5983 = vpop.permute.xlu0 %5982
  %5985 = vmatprep.subr.mxu0 0.0
  %v5986 = vand.u32 %v5983, 4294901760
  %5987 = vmatpush1.msra.mxu0 %v5986
  %5988 = vmatprep.subr.mxu0 0.0
  %5989 = vmatpush1.msra.mxu0 0.0
  %5990 = vmatprep.subr.mxu0 0.0
  %5991 = vmatpush1.msra.mxu0 0.0
  %5992 = vmatprep.subr.mxu0 0.0
  %5993 = vmatpush1.msra.mxu0 0.0
  %5994 = vmatprep.subr.mxu0 0.0
  %5995 = vmatpush1.msra.mxu0 0.0
  %5996 = vmatprep.subr.mxu0 0.0
  %5997 = vmatpush1.msra.mxu0 0.0
  %5998 = vmatprep.subr.mxu0 0.0
  %5999 = vmatpush1.msra.mxu0 0.0
  %6000 = vmatprep.subr.mxu0 0.0
  %6001 = vmatpush1.msra.mxu0 0.0
  %6002 = vmatprep.subr.mxu0 0.0
  %6003 = vmatpush1.msra.mxu0 0.0
  %6004 = vmatprep.subr.mxu0 0.0
  %6005 = vmatpush1.msra.mxu0 0.0
  %6006 = vmatprep.subr.mxu0 0.0
  %6007 = vmatpush1.msra.mxu0 0.0
  %6008 = vmatprep.subr.mxu0 0.0
  %6009 = vmatpush1.msra.mxu0 0.0
  %6010 = vmatprep.subr.mxu0 0.0
  %6011 = vmatpush1.msra.mxu0 0.0
  %6012 = vmatprep.subr.mxu0 0.0
  %6013 = vmatpush1.msra.mxu0 0.0
  %6014 = vmatprep.subr.mxu0 0.0
  %6015 = vmatpush1.msra.mxu0 0.0
  %6016 = vmatprep.subr.mxu0 0.0
  %6017 = vmatpush1.msra.mxu0 0.0
  %6018 = vmatprep.subr.mxu0 0.0
  %6019 = vmatpush1.msra.mxu0 0.0
  %6020 = vmatprep.subr.mxu0 0.0
  %6021 = vmatpush1.msra.mxu0 0.0
  %6022 = vmatprep.subr.mxu0 0.0
  %6023 = vmatpush1.msra.mxu0 0.0
  %6024 = vmatprep.subr.mxu0 0.0
  %6025 = vmatpush1.msra.mxu0 0.0
  %6026 = vmatprep.subr.mxu0 0.0
  %6027 = vmatpush1.msra.mxu0 0.0
  %6028 = vmatprep.subr.mxu0 0.0
  %6029 = vmatpush1.msra.mxu0 0.0
  %6030 = vmatprep.subr.mxu0 0.0
  %6031 = vmatpush1.msra.mxu0 0.0
  %6032 = vmatprep.subr.mxu0 0.0
  %6033 = vmatpush1.msra.mxu0 0.0
  %6034 = vmatprep.subr.mxu0 0.0
  %6035 = vmatpush1.msra.mxu0 0.0
  %6036 = vmatprep.subr.mxu0 0.0
  %6037 = vmatpush1.msra.mxu0 0.0
  %6038 = vmatprep.subr.mxu0 0.0
  %6039 = vmatpush1.msra.mxu0 0.0
  %6040 = vmatprep.subr.mxu0 0.0
  %6041 = vmatpush1.msra.mxu0 0.0
  %6042 = vmatprep.subr.mxu0 0.0
  %6043 = vmatpush1.msra.mxu0 0.0
  %6044 = vmatprep.subr.mxu0 0.0
  %6045 = vmatpush1.msra.mxu0 0.0
  %6046 = vmatprep.subr.mxu0 0.0
  %6047 = vmatpush1.msra.mxu0 0.0
  %6048 = vmatprep.subr.mxu0 0.0
  %6049 = vmatpush1.msra.mxu0 0.0
  %6050 = vmatprep.mubr.f32.mxu0 0.0
  %v6051 = vand.u32 %v1095, 4294901760
  %v6052 = vsub.f32 %v1095, %v6051
  %v6053 = vand.u32 %v6052, 4294901760
  %v6054 = vsub.f32 %v6052, %v6053
  %v6055 = vand.u32 %v6054, 4294901760
  %6056 = vmatmul.mubr.f32.gmra.mrb[0].mxu0 %v6055
  %v6057 = vpop.f32.mrb[0].mxu0
  %v6058 = vadd.f32 0.0, %v6057
  %v6059 = vpop.f32.mrb[0].mxu0
  %6060 = vdwg.mxu0
  %6061 = vmatprep.subr.mxu0 0.0
  %v6062 = vand.u32 %v5983, 4294901760
  %v6063 = vsub.f32 %v5983, %v6062
  %v6064 = vand.u32 %v6063, 4294901760
  %v6065 = vsub.f32 %v6063, %v6064
  %v6066 = vand.u32 %v6065, 4294901760
  %6067 = vmatpush1.msra.mxu0 %v6066
  %6068 = vmatprep.subr.mxu0 0.0
  %6069 = vmatpush1.msra.mxu0 0.0
  %6070 = vmatprep.subr.mxu0 0.0
  %6071 = vmatpush1.msra.mxu0 0.0
  %6072 = vmatprep.subr.mxu0 0.0
  %6073 = vmatpush1.msra.mxu0 0.0
  %6074 = vmatprep.subr.mxu0 0.0
  %6075 = vmatpush1.msra.mxu0 0.0
  %6076 = vmatprep.subr.mxu0 0.0
  %6077 = vmatpush1.msra.mxu0 0.0
  %6078 = vmatprep.subr.mxu0 0.0
  %6079 = vmatpush1.msra.mxu0 0.0
  %6080 = vmatprep.subr.mxu0 0.0
  %6081 = vmatpush1.msra.mxu0 0.0
  %6082 = vmatprep.subr.mxu0 0.0
  %6083 = vmatpush1.msra.mxu0 0.0
  %6084 = vmatprep.subr.mxu0 0.0
  %6085 = vmatpush1.msra.mxu0 0.0
  %6086 = vmatprep.subr.mxu0 0.0
  %6087 = vmatpush1.msra.mxu0 0.0
  %6088 = vmatprep.subr.mxu0 0.0
  %6089 = vmatpush1.msra.mxu0 0.0
  %6090 = vmatprep.subr.mxu0 0.0
  %6091 = vmatpush1.msra.mxu0 0.0
  %6092 = vmatprep.subr.mxu0 0.0
  %6093 = vmatpush1.msra.mxu0 0.0
  %6094 = vmatprep.subr.mxu0 0.0
  %6095 = vmatpush1.msra.mxu0 0.0
  %6096 = vmatprep.subr.mxu0 0.0
  %6097 = vmatpush1.msra.mxu0 0.0
  %6098 = vmatprep.subr.mxu0 0.0
  %6099 = vmatpush1.msra.mxu0 0.0
  %6100 = vmatprep.subr.mxu0 0.0
  %6101 = vmatpush1.msra.mxu0 0.0
  %6102 = vmatprep.subr.mxu0 0.0
  %6103 = vmatpush1.msra.mxu0 0.0
  %6104 = vmatprep.subr.mxu0 0.0
  %6105 = vmatpush1.msra.mxu0 0.0
  %6106 = vmatprep.subr.mxu0 0.0
  %6107 = vmatpush1.msra.mxu0 0.0
  %6108 = vmatprep.subr.mxu0 0.0
  %6109 = vmatpush1.msra.mxu0 0.0
  %6110 = vmatprep.subr.mxu0 0.0
  %6111 = vmatpush1.msra.mxu0 0.0
  %6112 = vmatprep.subr.mxu0 0.0
  %6113 = vmatpush1.msra.mxu0 0.0
  %6114 = vmatprep.subr.mxu0 0.0
  %6115 = vmatpush1.msra.mxu0 0.0
  %6116 = vmatprep.subr.mxu0 0.0
  %6117 = vmatpush1.msra.mxu0 0.0
  %6118 = vmatprep.subr.mxu0 0.0
  %6119 = vmatpush1.msra.mxu0 0.0
  %6120 = vmatprep.subr.mxu0 0.0
  %6121 = vmatpush1.msra.mxu0 0.0
  %6122 = vmatprep.subr.mxu0 0.0
  %6123 = vmatpush1.msra.mxu0 0.0
  %6124 = vmatprep.subr.mxu0 0.0
  %6125 = vmatpush1.msra.mxu0 0.0
  %6126 = vmatprep.subr.mxu0 0.0
  %6127 = vmatpush1.msra.mxu0 0.0
  %6128 = vmatprep.subr.mxu0 0.0
  %6129 = vmatpush1.msra.mxu0 0.0
  %6130 = vmatprep.mubr.f32.mxu0 0.0
  %v6131 = vand.u32 %v1095, 4294901760
  %6132 = vmatmul.mubr.f32.gmra.mrb[0].mxu0 %v6131
  %v6133 = vpop.f32.mrb[0].mxu0
  %v6134 = vadd.f32 %v6058, %v6133
  %v6135 = vpop.f32.mrb[0].mxu0
  %6136 = vdwg.mxu0
  %6137 = vmatprep.subr.mxu0 0.0
  %v6138 = vand.u32 %v5983, 4294901760
  %v6139 = vsub.f32 %v5983, %v6138
  %6140 = vmatpush1.msra.mxu0 %v6139
  %6141 = vmatprep.subr.mxu0 0.0
  %6142 = vmatpush1.msra.mxu0 0.0
  %6143 = vmatprep.subr.mxu0 0.0
  %6144 = vmatpush1.msra.mxu0 0.0
  %6145 = vmatprep.subr.mxu0 0.0
  %6146 = vmatpush1.msra.mxu0 0.0
  %6147 = vmatprep.subr.mxu0 0.0
  %6148 = vmatpush1.msra.mxu0 0.0
  %6149 = vmatprep.subr.mxu0 0.0
  %6150 = vmatpush1.msra.mxu0 0.0
  %6151 = vmatprep.subr.mxu0 0.0
  %6152 = vmatpush1.msra.mxu0 0.0
  %6153 = vmatprep.subr.mxu0 0.0
  %6154 = vmatpush1.msra.mxu0 0.0
  %6155 = vmatprep.subr.mxu0 0.0
  %6156 = vmatpush1.msra.mxu0 0.0
  %6157 = vmatprep.subr.mxu0 0.0
  %6158 = vmatpush1.msra.mxu0 0.0
  %6159 = vmatprep.subr.mxu0 0.0
  %6160 = vmatpush1.msra.mxu0 0.0
  %6161 = vmatprep.subr.mxu0 0.0
  %6162 = vmatpush1.msra.mxu0 0.0
  %6163 = vmatprep.subr.mxu0 0.0
  %6164 = vmatpush1.msra.mxu0 0.0
  %6165 = vmatprep.subr.mxu0 0.0
  %6166 = vmatpush1.msra.mxu0 0.0
  %6167 = vmatprep.subr.mxu0 0.0
  %6168 = vmatpush1.msra.mxu0 0.0
  %6169 = vmatprep.subr.mxu0 0.0
  %6170 = vmatpush1.msra.mxu0 0.0
  %6171 = vmatprep.subr.mxu0 0.0
  %6172 = vmatpush1.msra.mxu0 0.0
  %6173 = vmatprep.subr.mxu0 0.0
  %6174 = vmatpush1.msra.mxu0 0.0
  %6175 = vmatprep.subr.mxu0 0.0
  %6176 = vmatpush1.msra.mxu0 0.0
  %6177 = vmatprep.subr.mxu0 0.0
  %6178 = vmatpush1.msra.mxu0 0.0
  %6179 = vmatprep.subr.mxu0 0.0
  %6180 = vmatpush1.msra.mxu0 0.0
  %6181 = vmatprep.subr.mxu0 0.0
  %6182 = vmatpush1.msra.mxu0 0.0
  %6183 = vmatprep.subr.mxu0 0.0
  %6184 = vmatpush1.msra.mxu0 0.0
  %6185 = vmatprep.subr.mxu0 0.0
  %6186 = vmatpush1.msra.mxu0 0.0
  %6187 = vmatprep.subr.mxu0 0.0
  %6188 = vmatpush1.msra.mxu0 0.0
  %6189 = vmatprep.subr.mxu0 0.0
  %6190 = vmatpush1.msra.mxu0 0.0
  %6191 = vmatprep.subr.mxu0 0.0
  %6192 = vmatpush1.msra.mxu0 0.0
  %6193 = vmatprep.subr.mxu0 0.0
  %6194 = vmatpush1.msra.mxu0 0.0
  %6195 = vmatprep.subr.mxu0 0.0
  %6196 = vmatpush1.msra.mxu0 0.0
  %6197 = vmatprep.subr.mxu0 0.0
  %6198 = vmatpush1.msra.mxu0 0.0
  %6199 = vmatprep.subr.mxu0 0.0
  %6200 = vmatpush1.msra.mxu0 0.0
  %6201 = vmatprep.subr.mxu0 0.0
  %6202 = vmatpush1.msra.mxu0 0.0
  %6203 = vmatprep.mubr.f32.mxu0 0.0
  %v6204 = vand.u32 %v1095, 4294901760
  %v6205 = vsub.f32 %v1095, %v6204
  %6206 = vmatmul.mubr.f32.gmra.mrb[0].mxu0 %v6205
  %v6207 = vpop.f32.mrb[0].mxu0
  %v6208 = vadd.f32 %v6134, %v6207
  %v6209 = vpop.f32.mrb[0].mxu0
  %6210 = vdwg.mxu0
  %6211 = vmatprep.subr.mxu0 0.0
  %v6212 = vand.u32 %v5983, 4294901760
  %6213 = vmatpush1.msra.mxu0 %v6212
  %6214 = vmatprep.subr.mxu0 0.0
  %6215 = vmatpush1.msra.mxu0 0.0
  %6216 = vmatprep.subr.mxu0 0.0
  %6217 = vmatpush1.msra.mxu0 0.0
  %6218 = vmatprep.subr.mxu0 0.0
  %6219 = vmatpush1.msra.mxu0 0.0
  %6220 = vmatprep.subr.mxu0 0.0
  %6221 = vmatpush1.msra.mxu0 0.0
  %6222 = vmatprep.subr.mxu0 0.0
  %6223 = vmatpush1.msra.mxu0 0.0
  %6224 = vmatprep.subr.mxu0 0.0
  %6225 = vmatpush1.msra.mxu0 0.0
  %6226 = vmatprep.subr.mxu0 0.0
  %6227 = vmatpush1.msra.mxu0 0.0
  %6228 = vmatprep.subr.mxu0 0.0
  %6229 = vmatpush1.msra.mxu0 0.0
  %6230 = vmatprep.subr.mxu0 0.0
  %6231 = vmatpush1.msra.mxu0 0.0
  %6232 = vmatprep.subr.mxu0 0.0
  %6233 = vmatpush1.msra.mxu0 0.0
  %6234 = vmatprep.subr.mxu0 0.0
  %6235 = vmatpush1.msra.mxu0 0.0
  %6236 = vmatprep.subr.mxu0 0.0
  %6237 = vmatpush1.msra.mxu0 0.0
  %6238 = vmatprep.subr.mxu0 0.0
  %6239 = vmatpush1.msra.mxu0 0.0
  %6240 = vmatprep.subr.mxu0 0.0
  %6241 = vmatpush1.msra.mxu0 0.0
  %6242 = vmatprep.subr.mxu0 0.0
  %6243 = vmatpush1.msra.mxu0 0.0
  %6244 = vmatprep.subr.mxu0 0.0
  %6245 = vmatpush1.msra.mxu0 0.0
  %6246 = vmatprep.subr.mxu0 0.0
  %6247 = vmatpush1.msra.mxu0 0.0
  %6248 = vmatprep.subr.mxu0 0.0
  %6249 = vmatpush1.msra.mxu0 0.0
  %6250 = vmatprep.subr.mxu0 0.0
  %6251 = vmatpush1.msra.mxu0 0.0
  %6252 = vmatprep.subr.mxu0 0.0
  %6253 = vmatpush1.msra.mxu0 0.0
  %6254 = vmatprep.subr.mxu0 0.0
  %6255 = vmatpush1.msra.mxu0 0.0
  %6256 = vmatprep.subr.mxu0 0.0
  %6257 = vmatpush1.msra.mxu0 0.0
  %6258 = vmatprep.subr.mxu0 0.0
  %6259 = vmatpush1.msra.mxu0 0.0
  %6260 = vmatprep.subr.mxu0 0.0
  %6261 = vmatpush1.msra.mxu0 0.0
  %6262 = vmatprep.subr.mxu0 0.0
  %6263 = vmatpush1.msra.mxu0 0.0
  %6264 = vmatprep.subr.mxu0 0.0
  %6265 = vmatpush1.msra.mxu0 0.0
  %6266 = vmatprep.subr.mxu0 0.0
  %6267 = vmatpush1.msra.mxu0 0.0
  %6268 = vmatprep.subr.mxu0 0.0
  %6269 = vmatpush1.msra.mxu0 0.0
  %6270 = vmatprep.subr.mxu0 0.0
  %6271 = vmatpush1.msra.mxu0 0.0
  %6272 = vmatprep.subr.mxu0 0.0
  %6273 = vmatpush1.msra.mxu0 0.0
  %6274 = vmatprep.subr.mxu0 0.0
  %6275 = vmatpush1.msra.mxu0 0.0
  %6276 = vmatprep.mubr.f32.mxu0 0.0
  %v6277 = vand.u32 %v1095, 4294901760
  %v6278 = vsub.f32 %v1095, %v6277
  %v6279 = vand.u32 %v6278, 4294901760
  %6280 = vmatmul.mubr.f32.gmra.mrb[0].mxu0 %v6279
  %v6281 = vpop.f32.mrb[0].mxu0
  %v6282 = vadd.f32 %v6208, %v6281
  %v6283 = vpop.f32.mrb[0].mxu0
  %6284 = vdwg.mxu0
  %6285 = vmatprep.subr.mxu0 0.0
  %v6286 = vand.u32 %v5983, 4294901760
  %v6287 = vsub.f32 %v5983, %v6286
  %v6288 = vand.u32 %v6287, 4294901760
  %6289 = vmatpush1.msra.mxu0 %v6288
  %6290 = vmatprep.subr.mxu0 0.0
  %6291 = vmatpush1.msra.mxu0 0.0
  %6292 = vmatprep.subr.mxu0 0.0
  %6293 = vmatpush1.msra.mxu0 0.0
  %6294 = vmatprep.subr.mxu0 0.0
  %6295 = vmatpush1.msra.mxu0 0.0
  %6296 = vmatprep.subr.mxu0 0.0
  %6297 = vmatpush1.msra.mxu0 0.0
  %6298 = vmatprep.subr.mxu0 0.0
  %6299 = vmatpush1.msra.mxu0 0.0
  %6300 = vmatprep.subr.mxu0 0.0
  %6301 = vmatpush1.msra.mxu0 0.0
  %6302 = vmatprep.subr.mxu0 0.0
  %6303 = vmatpush1.msra.mxu0 0.0
  %6304 = vmatprep.subr.mxu0 0.0
  %6305 = vmatpush1.msra.mxu0 0.0
  %6306 = vmatprep.subr.mxu0 0.0
  %6307 = vmatpush1.msra.mxu0 0.0
  %6308 = vmatprep.subr.mxu0 0.0
  %6309 = vmatpush1.msra.mxu0 0.0
  %6310 = vmatprep.subr.mxu0 0.0
  %6311 = vmatpush1.msra.mxu0 0.0
  %6312 = vmatprep.subr.mxu0 0.0
  %6313 = vmatpush1.msra.mxu0 0.0
  %6314 = vmatprep.subr.mxu0 0.0
  %6315 = vmatpush1.msra.mxu0 0.0
  %6316 = vmatprep.subr.mxu0 0.0
  %6317 = vmatpush1.msra.mxu0 0.0
  %6318 = vmatprep.subr.mxu0 0.0
  %6319 = vmatpush1.msra.mxu0 0.0
  %6320 = vmatprep.subr.mxu0 0.0
  %6321 = vmatpush1.msra.mxu0 0.0
  %6322 = vmatprep.subr.mxu0 0.0
  %6323 = vmatpush1.msra.mxu0 0.0
  %6324 = vmatprep.subr.mxu0 0.0
  %6325 = vmatpush1.msra.mxu0 0.0
  %6326 = vmatprep.subr.mxu0 0.0
  %6327 = vmatpush1.msra.mxu0 0.0
  %6328 = vmatprep.subr.mxu0 0.0
  %6329 = vmatpush1.msra.mxu0 0.0
  %6330 = vmatprep.subr.mxu0 0.0
  %6331 = vmatpush1.msra.mxu0 0.0
  %6332 = vmatprep.subr.mxu0 0.0
  %6333 = vmatpush1.msra.mxu0 0.0
  %6334 = vmatprep.subr.mxu0 0.0
  %6335 = vmatpush1.msra.mxu0 0.0
  %6336 = vmatprep.subr.mxu0 0.0
  %6337 = vmatpush1.msra.mxu0 0.0
  %6338 = vmatprep.subr.mxu0 0.0
  %6339 = vmatpush1.msra.mxu0 0.0
  %6340 = vmatprep.subr.mxu0 0.0
  %6341 = vmatpush1.msra.mxu0 0.0
  %6342 = vmatprep.subr.mxu0 0.0
  %6343 = vmatpush1.msra.mxu0 0.0
  %6344 = vmatprep.subr.mxu0 0.0
  %6345 = vmatpush1.msra.mxu0 0.0
  %6346 = vmatprep.subr.mxu0 0.0
  %6347 = vmatpush1.msra.mxu0 0.0
  %6348 = vmatprep.subr.mxu0 0.0
  %6349 = vmatpush1.msra.mxu0 0.0
  %6350 = vmatprep.subr.mxu0 0.0
  %6351 = vmatpush1.msra.mxu0 0.0
  %6352 = vmatprep.mubr.f32.mxu0 0.0
  %v6353 = vand.u32 %v1095, 4294901760
  %6354 = vmatmul.mubr.f32.gmra.mrb[0].mxu0 %v6353
  %v6355 = vpop.f32.mrb[0].mxu0
  %v6356 = vadd.f32 %v6282, %v6355
  %v6357 = vpop.f32.mrb[0].mxu0
  %6358 = vdwg.mxu0
  %6359 = vmatprep.subr.mxu0 0.0
  %v6360 = vand.u32 %v5983, 4294901760
  %6361 = vmatpush1.msra.mxu0 %v6360
  %6362 = vmatprep.subr.mxu0 0.0
  %6363 = vmatpush1.msra.mxu0 0.0
  %6364 = vmatprep.subr.mxu0 0.0
  %6365 = vmatpush1.msra.mxu0 0.0
  %6366 = vmatprep.subr.mxu0 0.0
  %6367 = vmatpush1.msra.mxu0 0.0
  %6368 = vmatprep.subr.mxu0 0.0
  %6369 = vmatpush1.msra.mxu0 0.0
  %6370 = vmatprep.subr.mxu0 0.0
  %6371 = vmatpush1.msra.mxu0 0.0
  %6372 = vmatprep.subr.mxu0 0.0
  %6373 = vmatpush1.msra.mxu0 0.0
  %6374 = vmatprep.subr.mxu0 0.0
  %6375 = vmatpush1.msra.mxu0 0.0
  %6376 = vmatprep.subr.mxu0 0.0
  %6377 = vmatpush1.msra.mxu0 0.0
  %6378 = vmatprep.subr.mxu0 0.0
  %6379 = vmatpush1.msra.mxu0 0.0
  %6380 = vmatprep.subr.mxu0 0.0
  %6381 = vmatpush1.msra.mxu0 0.0
  %6382 = vmatprep.subr.mxu0 0.0
  %6383 = vmatpush1.msra.mxu0 0.0
  %6384 = vmatprep.subr.mxu0 0.0
  %6385 = vmatpush1.msra.mxu0 0.0
  %6386 = vmatprep.subr.mxu0 0.0
  %6387 = vmatpush1.msra.mxu0 0.0
  %6388 = vmatprep.subr.mxu0 0.0
  %6389 = vmatpush1.msra.mxu0 0.0
  %6390 = vmatprep.subr.mxu0 0.0
  %6391 = vmatpush1.msra.mxu0 0.0
  %6392 = vmatprep.subr.mxu0 0.0
  %6393 = vmatpush1.msra.mxu0 0.0
  %6394 = vmatprep.subr.mxu0 0.0
  %6395 = vmatpush1.msra.mxu0 0.0
  %6396 = vmatprep.subr.mxu0 0.0
  %6397 = vmatpush1.msra.mxu0 0.0
  %6398 = vmatprep.subr.mxu0 0.0
  %6399 = vmatpush1.msra.mxu0 0.0
  %6400 = vmatprep.subr.mxu0 0.0
  %6401 = vmatpush1.msra.mxu0 0.0
  %6402 = vmatprep.subr.mxu0 0.0
  %6403 = vmatpush1.msra.mxu0 0.0
  %6404 = vmatprep.subr.mxu0 0.0
  %6405 = vmatpush1.msra.mxu0 0.0
  %6406 = vmatprep.subr.mxu0 0.0
  %6407 = vmatpush1.msra.mxu0 0.0
  %6408 = vmatprep.subr.mxu0 0.0
  %6409 = vmatpush1.msra.mxu0 0.0
  %6410 = vmatprep.subr.mxu0 0.0
  %6411 = vmatpush1.msra.mxu0 0.0
  %6412 = vmatprep.subr.mxu0 0.0
  %6413 = vmatpush1.msra.mxu0 0.0
  %6414 = vmatprep.subr.mxu0 0.0
  %6415 = vmatpush1.msra.mxu0 0.0
  %6416 = vmatprep.subr.mxu0 0.0
  %6417 = vmatpush1.msra.mxu0 0.0
  %6418 = vmatprep.subr.mxu0 0.0
  %6419 = vmatpush1.msra.mxu0 0.0
  %6420 = vmatprep.subr.mxu0 0.0
  %6421 = vmatpush1.msra.mxu0 0.0
  %6422 = vmatprep.subr.mxu0 0.0
  %6423 = vmatpush1.msra.mxu0 0.0
  %6424 = vmatprep.mubr.f32.mxu0 0.0
  %v6425 = vand.u32 %v1095, 4294901760
  %6426 = vmatmul.mubr.f32.gmra.mrb[0].mxu0 %v6425
  %v6427 = vpop.f32.mrb[0].mxu0
  %v6428 = vadd.f32 %v6356, %v6427
  %v6429 = vpop.f32.mrb[0].mxu0
  %6430 = vdwg.mxu0
  %6432 = vrot.lane.b32.xlu0 %v6428, 40
  %v6433 = vpop.permute.xlu0 %6432
  %v6435 = vadd.f32 %v580, %v6433
  %v6436 = vmax.f32 %v6435, 0.0
  %v6437 = vsub.f32 1.0, %v5965
  %v6438 = vmul.f32 %v6437, %v5978
  %v6439 = vmul.f32 %v5965, %v6436
  %v6440 = vadd.f32 %v6438, %v6439
  %v6441 = vsel %vm41, %v1548, %v2524
  %vm6442 = vcmask 130048
  %v6443 = vsel %vm6442, %v6441, %v3503
  %vm6444 = vcmask 195584
  %v6445 = vsel %vm6444, %v6443, %v4482
  %vm6446 = vcmask 261120
  %v6447 = vsel %vm6446, %v6445, %v5461
  %vm6448 = vcmask 326656
  %v6449 = vsel %vm6448, %v6447, %v6440
  %vm6450 = vcmask 392192
  %6451 = vst.msk [vmem:[%s9] sm:$0xff] %vm6450, %v6449
  %v6452 = vld [vmem:[%s2] sm:$0xff]
  %v6453 = vld [vmem:[%s2 + $0x8] sm:$0xff]
  %v6455 = vsel %vm41, %v6452, 0
  %v6458 = vsel %vm41, %v6453, 0
  %6460 = vmatprep.subr.mxu0 0.0
  %v6461 = vand.u32 %v1548, 4294901760
  %6462 = vmatpush1.msra.mxu0 %v6461
  %6463 = vmatprep.subr.mxu0 0.0
  %6464 = vmatpush1.msra.mxu0 0.0
  %6465 = vmatprep.subr.mxu0 0.0
  %6466 = vmatpush1.msra.mxu0 0.0
  %6467 = vmatprep.subr.mxu0 0.0
  %6468 = vmatpush1.msra.mxu0 0.0
  %6469 = vmatprep.subr.mxu0 0.0
  %6470 = vmatpush1.msra.mxu0 0.0
  %6471 = vmatprep.subr.mxu0 0.0
  %6472 = vmatpush1.msra.mxu0 0.0
  %6473 = vmatprep.subr.mxu0 0.0
  %6474 = vmatpush1.msra.mxu0 0.0
  %6475 = vmatprep.subr.mxu0 0.0
  %6476 = vmatpush1.msra.mxu0 0.0
  %6477 = vmatprep.subr.mxu0 0.0
  %6478 = vmatpush1.msra.mxu0 0.0
  %6479 = vmatprep.subr.mxu0 0.0
  %6480 = vmatpush1.msra.mxu0 0.0
  %6481 = vmatprep.subr.mxu0 0.0
  %6482 = vmatpush1.msra.mxu0 0.0
  %6483 = vmatprep.subr.mxu0 0.0
  %6484 = vmatpush1.msra.mxu0 0.0
  %6485 = vmatprep.subr.mxu0 0.0
  %6486 = vmatpush1.msra.mxu0 0.0
  %6487 = vmatprep.subr.mxu0 0.0
  %6488 = vmatpush1.msra.mxu0 0.0
  %6489 = vmatprep.subr.mxu0 0.0
  %6490 = vmatpush1.msra.mxu0 0.0
  %6491 = vmatprep.subr.mxu0 0.0
  %6492 = vmatpush1.msra.mxu0 0.0
  %6493 = vmatprep.subr.mxu0 0.0
  %6494 = vmatpush1.msra.mxu0 0.0
  %6495 = vmatprep.subr.mxu0 0.0
  %6496 = vmatpush1.msra.mxu0 0.0
  %6497 = vmatprep.subr.mxu0 0.0
  %6498 = vmatpush1.msra.mxu0 0.0
  %6499 = vmatprep.subr.mxu0 0.0
  %6500 = vmatpush1.msra.mxu0 0.0
  %6501 = vmatprep.subr.mxu0 0.0
  %6502 = vmatpush1.msra.mxu0 0.0
  %6503 = vmatprep.subr.mxu0 0.0
  %6504 = vmatpush1.msra.mxu0 0.0
  %6505 = vmatprep.subr.mxu0 0.0
  %6506 = vmatpush1.msra.mxu0 0.0
  %6507 = vmatprep.subr.mxu0 0.0
  %6508 = vmatpush1.msra.mxu0 0.0
  %6509 = vmatprep.subr.mxu0 0.0
  %6510 = vmatpush1.msra.mxu0 0.0
  %6511 = vmatprep.subr.mxu0 0.0
  %6512 = vmatpush1.msra.mxu0 0.0
  %6513 = vmatprep.subr.mxu0 0.0
  %6514 = vmatpush1.msra.mxu0 0.0
  %6515 = vmatprep.subr.mxu0 0.0
  %6516 = vmatpush1.msra.mxu0 0.0
  %6517 = vmatprep.subr.mxu0 0.0
  %6518 = vmatpush1.msra.mxu0 0.0
  %6519 = vmatprep.subr.mxu0 0.0
  %6520 = vmatpush1.msra.mxu0 0.0
  %6521 = vmatprep.subr.mxu0 0.0
  %6522 = vmatpush1.msra.mxu0 0.0
  %6523 = vmatprep.subr.mxu0 0.0
  %6524 = vmatpush1.msra.mxu0 0.0
  %6525 = vmatprep.mubr.f32.mxu0 0.0
  %v6526 = vand.u32 %v6455, 4294901760
  %v6527 = vsub.f32 %v6455, %v6526
  %v6528 = vand.u32 %v6527, 4294901760
  %v6529 = vsub.f32 %v6527, %v6528
  %v6530 = vand.u32 %v6529, 4294901760
  %6531 = vmatmul.mubr.f32.gmra.mrb[0].mxu0 %v6530
  %v6532 = vpop.f32.mrb[0].mxu0
  %v6533 = vadd.f32 0.0, %v6532
  %v6534 = vpop.f32.mrb[0].mxu0
  %6535 = vmatprep.mubr.f32.mxu0 0.0
  %v6536 = vand.u32 %v6458, 4294901760
  %v6537 = vsub.f32 %v6458, %v6536
  %v6538 = vand.u32 %v6537, 4294901760
  %v6539 = vsub.f32 %v6537, %v6538
  %v6540 = vand.u32 %v6539, 4294901760
  %6541 = vmatmul.mubr.f32.gmra.mrb[0].mxu0 %v6540
  %v6542 = vpop.f32.mrb[0].mxu0
  %v6543 = vadd.f32 0.0, %v6542
  %v6544 = vpop.f32.mrb[0].mxu0
  %6545 = vdwg.mxu0
  %6546 = vmatprep.subr.mxu0 0.0
  %v6547 = vand.u32 %v1548, 4294901760
  %v6548 = vsub.f32 %v1548, %v6547
  %v6549 = vand.u32 %v6548, 4294901760
  %v6550 = vsub.f32 %v6548, %v6549
  %v6551 = vand.u32 %v6550, 4294901760
  %6552 = vmatpush1.msra.mxu0 %v6551
  %6553 = vmatprep.subr.mxu0 0.0
  %6554 = vmatpush1.msra.mxu0 0.0
  %6555 = vmatprep.subr.mxu0 0.0
  %6556 = vmatpush1.msra.mxu0 0.0
  %6557 = vmatprep.subr.mxu0 0.0
  %6558 = vmatpush1.msra.mxu0 0.0
  %6559 = vmatprep.subr.mxu0 0.0
  %6560 = vmatpush1.msra.mxu0 0.0
  %6561 = vmatprep.subr.mxu0 0.0
  %6562 = vmatpush1.msra.mxu0 0.0
  %6563 = vmatprep.subr.mxu0 0.0
  %6564 = vmatpush1.msra.mxu0 0.0
  %6565 = vmatprep.subr.mxu0 0.0
  %6566 = vmatpush1.msra.mxu0 0.0
  %6567 = vmatprep.subr.mxu0 0.0
  %6568 = vmatpush1.msra.mxu0 0.0
  %6569 = vmatprep.subr.mxu0 0.0
  %6570 = vmatpush1.msra.mxu0 0.0
  %6571 = vmatprep.subr.mxu0 0.0
  %6572 = vmatpush1.msra.mxu0 0.0
  %6573 = vmatprep.subr.mxu0 0.0
  %6574 = vmatpush1.msra.mxu0 0.0
  %6575 = vmatprep.subr.mxu0 0.0
  %6576 = vmatpush1.msra.mxu0 0.0
  %6577 = vmatprep.subr.mxu0 0.0
  %6578 = vmatpush1.msra.mxu0 0.0
  %6579 = vmatprep.subr.mxu0 0.0
  %6580 = vmatpush1.msra.mxu0 0.0
  %6581 = vmatprep.subr.mxu0 0.0
  %6582 = vmatpush1.msra.mxu0 0.0
  %6583 = vmatprep.subr.mxu0 0.0
  %6584 = vmatpush1.msra.mxu0 0.0
  %6585 = vmatprep.subr.mxu0 0.0
  %6586 = vmatpush1.msra.mxu0 0.0
  %6587 = vmatprep.subr.mxu0 0.0
  %6588 = vmatpush1.msra.mxu0 0.0
  %6589 = vmatprep.subr.mxu0 0.0
  %6590 = vmatpush1.msra.mxu0 0.0
  %6591 = vmatprep.subr.mxu0 0.0
  %6592 = vmatpush1.msra.mxu0 0.0
  %6593 = vmatprep.subr.mxu0 0.0
  %6594 = vmatpush1.msra.mxu0 0.0
  %6595 = vmatprep.subr.mxu0 0.0
  %6596 = vmatpush1.msra.mxu0 0.0
  %6597 = vmatprep.subr.mxu0 0.0
  %6598 = vmatpush1.msra.mxu0 0.0
  %6599 = vmatprep.subr.mxu0 0.0
  %6600 = vmatpush1.msra.mxu0 0.0
  %6601 = vmatprep.subr.mxu0 0.0
  %6602 = vmatpush1.msra.mxu0 0.0
  %6603 = vmatprep.subr.mxu0 0.0
  %6604 = vmatpush1.msra.mxu0 0.0
  %6605 = vmatprep.subr.mxu0 0.0
  %6606 = vmatpush1.msra.mxu0 0.0
  %6607 = vmatprep.subr.mxu0 0.0
  %6608 = vmatpush1.msra.mxu0 0.0
  %6609 = vmatprep.subr.mxu0 0.0
  %6610 = vmatpush1.msra.mxu0 0.0
  %6611 = vmatprep.subr.mxu0 0.0
  %6612 = vmatpush1.msra.mxu0 0.0
  %6613 = vmatprep.subr.mxu0 0.0
  %6614 = vmatpush1.msra.mxu0 0.0
  %6615 = vmatprep.mubr.f32.mxu0 0.0
  %v6616 = vand.u32 %v6455, 4294901760
  %6617 = vmatmul.mubr.f32.gmra.mrb[0].mxu0 %v6616
  %v6618 = vpop.f32.mrb[0].mxu0
  %v6619 = vadd.f32 %v6533, %v6618
  %v6620 = vpop.f32.mrb[0].mxu0
  %6621 = vmatprep.mubr.f32.mxu0 0.0
  %v6622 = vand.u32 %v6458, 4294901760
  %6623 = vmatmul.mubr.f32.gmra.mrb[0].mxu0 %v6622
  %v6624 = vpop.f32.mrb[0].mxu0
  %v6625 = vadd.f32 %v6543, %v6624
  %v6626 = vpop.f32.mrb[0].mxu0
  %6627 = vdwg.mxu0
  %6628 = vmatprep.subr.mxu0 0.0
  %v6629 = vand.u32 %v1548, 4294901760
  %v6630 = vsub.f32 %v1548, %v6629
  %6631 = vmatpush1.msra.mxu0 %v6630
  %6632 = vmatprep.subr.mxu0 0.0
  %6633 = vmatpush1.msra.mxu0 0.0
  %6634 = vmatprep.subr.mxu0 0.0
  %6635 = vmatpush1.msra.mxu0 0.0
  %6636 = vmatprep.subr.mxu0 0.0
  %6637 = vmatpush1.msra.mxu0 0.0
  %6638 = vmatprep.subr.mxu0 0.0
  %6639 = vmatpush1.msra.mxu0 0.0
  %6640 = vmatprep.subr.mxu0 0.0
  %6641 = vmatpush1.msra.mxu0 0.0
  %6642 = vmatprep.subr.mxu0 0.0
  %6643 = vmatpush1.msra.mxu0 0.0
  %6644 = vmatprep.subr.mxu0 0.0
  %6645 = vmatpush1.msra.mxu0 0.0
  %6646 = vmatprep.subr.mxu0 0.0
  %6647 = vmatpush1.msra.mxu0 0.0
  %6648 = vmatprep.subr.mxu0 0.0
  %6649 = vmatpush1.msra.mxu0 0.0
  %6650 = vmatprep.subr.mxu0 0.0
  %6651 = vmatpush1.msra.mxu0 0.0
  %6652 = vmatprep.subr.mxu0 0.0
  %6653 = vmatpush1.msra.mxu0 0.0
  %6654 = vmatprep.subr.mxu0 0.0
  %6655 = vmatpush1.msra.mxu0 0.0
  %6656 = vmatprep.subr.mxu0 0.0
  %6657 = vmatpush1.msra.mxu0 0.0
  %6658 = vmatprep.subr.mxu0 0.0
  %6659 = vmatpush1.msra.mxu0 0.0
  %6660 = vmatprep.subr.mxu0 0.0
  %6661 = vmatpush1.msra.mxu0 0.0
  %6662 = vmatprep.subr.mxu0 0.0
  %6663 = vmatpush1.msra.mxu0 0.0
  %6664 = vmatprep.subr.mxu0 0.0
  %6665 = vmatpush1.msra.mxu0 0.0
  %6666 = vmatprep.subr.mxu0 0.0
  %6667 = vmatpush1.msra.mxu0 0.0
  %6668 = vmatprep.subr.mxu0 0.0
  %6669 = vmatpush1.msra.mxu0 0.0
  %6670 = vmatprep.subr.mxu0 0.0
  %6671 = vmatpush1.msra.mxu0 0.0
  %6672 = vmatprep.subr.mxu0 0.0
  %6673 = vmatpush1.msra.mxu0 0.0
  %6674 = vmatprep.subr.mxu0 0.0
  %6675 = vmatpush1.msra.mxu0 0.0
  %6676 = vmatprep.subr.mxu0 0.0
  %6677 = vmatpush1.msra.mxu0 0.0
  %6678 = vmatprep.subr.mxu0 0.0
  %6679 = vmatpush1.msra.mxu0 0.0
  %6680 = vmatprep.subr.mxu0 0.0
  %6681 = vmatpush1.msra.mxu0 0.0
  %6682 = vmatprep.subr.mxu0 0.0
  %6683 = vmatpush1.msra.mxu0 0.0
  %6684 = vmatprep.subr.mxu0 0.0
  %6685 = vmatpush1.msra.mxu0 0.0
  %6686 = vmatprep.subr.mxu0 0.0
  %6687 = vmatpush1.msra.mxu0 0.0
  %6688 = vmatprep.subr.mxu0 0.0
  %6689 = vmatpush1.msra.mxu0 0.0
  %6690 = vmatprep.subr.mxu0 0.0
  %6691 = vmatpush1.msra.mxu0 0.0
  %6692 = vmatprep.subr.mxu0 0.0
  %6693 = vmatpush1.msra.mxu0 0.0
  %6694 = vmatprep.mubr.f32.mxu0 0.0
  %v6695 = vand.u32 %v6455, 4294901760
  %v6696 = vsub.f32 %v6455, %v6695
  %6697 = vmatmul.mubr.f32.gmra.mrb[0].mxu0 %v6696
  %v6698 = vpop.f32.mrb[0].mxu0
  %v6699 = vadd.f32 %v6619, %v6698
  %v6700 = vpop.f32.mrb[0].mxu0
  %6701 = vmatprep.mubr.f32.mxu0 0.0
  %v6702 = vand.u32 %v6458, 4294901760
  %v6703 = vsub.f32 %v6458, %v6702
  %6704 = vmatmul.mubr.f32.gmra.mrb[0].mxu0 %v6703
  %v6705 = vpop.f32.mrb[0].mxu0
  %v6706 = vadd.f32 %v6625, %v6705
  %v6707 = vpop.f32.mrb[0].mxu0
  %6708 = vdwg.mxu0
  %6709 = vmatprep.subr.mxu0 0.0
  %v6710 = vand.u32 %v1548, 4294901760
  %6711 = vmatpush1.msra.mxu0 %v6710
  %6712 = vmatprep.subr.mxu0 0.0
  %6713 = vmatpush1.msra.mxu0 0.0
  %6714 = vmatprep.subr.mxu0 0.0
  %6715 = vmatpush1.msra.mxu0 0.0
  %6716 = vmatprep.subr.mxu0 0.0
  %6717 = vmatpush1.msra.mxu0 0.0
  %6718 = vmatprep.subr.mxu0 0.0
  %6719 = vmatpush1.msra.mxu0 0.0
  %6720 = vmatprep.subr.mxu0 0.0
  %6721 = vmatpush1.msra.mxu0 0.0
  %6722 = vmatprep.subr.mxu0 0.0
  %6723 = vmatpush1.msra.mxu0 0.0
  %6724 = vmatprep.subr.mxu0 0.0
  %6725 = vmatpush1.msra.mxu0 0.0
  %6726 = vmatprep.subr.mxu0 0.0
  %6727 = vmatpush1.msra.mxu0 0.0
  %6728 = vmatprep.subr.mxu0 0.0
  %6729 = vmatpush1.msra.mxu0 0.0
  %6730 = vmatprep.subr.mxu0 0.0
  %6731 = vmatpush1.msra.mxu0 0.0
  %6732 = vmatprep.subr.mxu0 0.0
  %6733 = vmatpush1.msra.mxu0 0.0
  %6734 = vmatprep.subr.mxu0 0.0
  %6735 = vmatpush1.msra.mxu0 0.0
  %6736 = vmatprep.subr.mxu0 0.0
  %6737 = vmatpush1.msra.mxu0 0.0
  %6738 = vmatprep.subr.mxu0 0.0
  %6739 = vmatpush1.msra.mxu0 0.0
  %6740 = vmatprep.subr.mxu0 0.0
  %6741 = vmatpush1.msra.mxu0 0.0
  %6742 = vmatprep.subr.mxu0 0.0
  %6743 = vmatpush1.msra.mxu0 0.0
  %6744 = vmatprep.subr.mxu0 0.0
  %6745 = vmatpush1.msra.mxu0 0.0
  %6746 = vmatprep.subr.mxu0 0.0
  %6747 = vmatpush1.msra.mxu0 0.0
  %6748 = vmatprep.subr.mxu0 0.0
  %6749 = vmatpush1.msra.mxu0 0.0
  %6750 = vmatprep.subr.mxu0 0.0
  %6751 = vmatpush1.msra.mxu0 0.0
  %6752 = vmatprep.subr.mxu0 0.0
  %6753 = vmatpush1.msra.mxu0 0.0
  %6754 = vmatprep.subr.mxu0 0.0
  %6755 = vmatpush1.msra.mxu0 0.0
  %6756 = vmatprep.subr.mxu0 0.0
  %6757 = vmatpush1.msra.mxu0 0.0
  %6758 = vmatprep.subr.mxu0 0.0
  %6759 = vmatpush1.msra.mxu0 0.0
  %6760 = vmatprep.subr.mxu0 0.0
  %6761 = vmatpush1.msra.mxu0 0.0
  %6762 = vmatprep.subr.mxu0 0.0
  %6763 = vmatpush1.msra.mxu0 0.0
  %6764 = vmatprep.subr.mxu0 0.0
  %6765 = vmatpush1.msra.mxu0 0.0
  %6766 = vmatprep.subr.mxu0 0.0
  %6767 = vmatpush1.msra.mxu0 0.0
  %6768 = vmatprep.subr.mxu0 0.0
  %6769 = vmatpush1.msra.mxu0 0.0
  %6770 = vmatprep.subr.mxu0 0.0
  %6771 = vmatpush1.msra.mxu0 0.0
  %6772 = vmatprep.subr.mxu0 0.0
  %6773 = vmatpush1.msra.mxu0 0.0
  %6774 = vmatprep.mubr.f32.mxu0 0.0
  %v6775 = vand.u32 %v6455, 4294901760
  %v6776 = vsub.f32 %v6455, %v6775
  %v6777 = vand.u32 %v6776, 4294901760
  %6778 = vmatmul.mubr.f32.gmra.mrb[0].mxu0 %v6777
  %v6779 = vpop.f32.mrb[0].mxu0
  %v6780 = vadd.f32 %v6699, %v6779
  %v6781 = vpop.f32.mrb[0].mxu0
  %6782 = vmatprep.mubr.f32.mxu0 0.0
  %v6783 = vand.u32 %v6458, 4294901760
  %v6784 = vsub.f32 %v6458, %v6783
  %v6785 = vand.u32 %v6784, 4294901760
  %6786 = vmatmul.mubr.f32.gmra.mrb[0].mxu0 %v6785
  %v6787 = vpop.f32.mrb[0].mxu0
  %v6788 = vadd.f32 %v6706, %v6787
  %v6789 = vpop.f32.mrb[0].mxu0
  %6790 = vdwg.mxu0
  %6791 = vmatprep.subr.mxu0 0.0
  %v6792 = vand.u32 %v1548, 4294901760
  %v6793 = vsub.f32 %v1548, %v6792
  %v6794 = vand.u32 %v6793, 4294901760
  %6795 = vmatpush1.msra.mxu0 %v6794
  %6796 = vmatprep.subr.mxu0 0.0
  %6797 = vmatpush1.msra.mxu0 0.0
  %6798 = vmatprep.subr.mxu0 0.0
  %6799 = vmatpush1.msra.mxu0 0.0
  %6800 = vmatprep.subr.mxu0 0.0
  %6801 = vmatpush1.msra.mxu0 0.0
  %6802 = vmatprep.subr.mxu0 0.0
  %6803 = vmatpush1.msra.mxu0 0.0
  %6804 = vmatprep.subr.mxu0 0.0
  %6805 = vmatpush1.msra.mxu0 0.0
  %6806 = vmatprep.subr.mxu0 0.0
  %6807 = vmatpush1.msra.mxu0 0.0
  %6808 = vmatprep.subr.mxu0 0.0
  %6809 = vmatpush1.msra.mxu0 0.0
  %6810 = vmatprep.subr.mxu0 0.0
  %6811 = vmatpush1.msra.mxu0 0.0
  %6812 = vmatprep.subr.mxu0 0.0
  %6813 = vmatpush1.msra.mxu0 0.0
  %6814 = vmatprep.subr.mxu0 0.0
  %6815 = vmatpush1.msra.mxu0 0.0
  %6816 = vmatprep.subr.mxu0 0.0
  %6817 = vmatpush1.msra.mxu0 0.0
  %6818 = vmatprep.subr.mxu0 0.0
  %6819 = vmatpush1.msra.mxu0 0.0
  %6820 = vmatprep.subr.mxu0 0.0
  %6821 = vmatpush1.msra.mxu0 0.0
  %6822 = vmatprep.subr.mxu0 0.0
  %6823 = vmatpush1.msra.mxu0 0.0
  %6824 = vmatprep.subr.mxu0 0.0
  %6825 = vmatpush1.msra.mxu0 0.0
  %6826 = vmatprep.subr.mxu0 0.0
  %6827 = vmatpush1.msra.mxu0 0.0
  %6828 = vmatprep.subr.mxu0 0.0
  %6829 = vmatpush1.msra.mxu0 0.0
  %6830 = vmatprep.subr.mxu0 0.0
  %6831 = vmatpush1.msra.mxu0 0.0
  %6832 = vmatprep.subr.mxu0 0.0
  %6833 = vmatpush1.msra.mxu0 0.0
  %6834 = vmatprep.subr.mxu0 0.0
  %6835 = vmatpush1.msra.mxu0 0.0
  %6836 = vmatprep.subr.mxu0 0.0
  %6837 = vmatpush1.msra.mxu0 0.0
  %6838 = vmatprep.subr.mxu0 0.0
  %6839 = vmatpush1.msra.mxu0 0.0
  %6840 = vmatprep.subr.mxu0 0.0
  %6841 = vmatpush1.msra.mxu0 0.0
  %6842 = vmatprep.subr.mxu0 0.0
  %6843 = vmatpush1.msra.mxu0 0.0
  %6844 = vmatprep.subr.mxu0 0.0
  %6845 = vmatpush1.msra.mxu0 0.0
  %6846 = vmatprep.subr.mxu0 0.0
  %6847 = vmatpush1.msra.mxu0 0.0
  %6848 = vmatprep.subr.mxu0 0.0
  %6849 = vmatpush1.msra.mxu0 0.0
  %6850 = vmatprep.subr.mxu0 0.0
  %6851 = vmatpush1.msra.mxu0 0.0
  %6852 = vmatprep.subr.mxu0 0.0
  %6853 = vmatpush1.msra.mxu0 0.0
  %6854 = vmatprep.subr.mxu0 0.0
  %6855 = vmatpush1.msra.mxu0 0.0
  %6856 = vmatprep.subr.mxu0 0.0
  %6857 = vmatpush1.msra.mxu0 0.0
  %6858 = vmatprep.mubr.f32.mxu0 0.0
  %v6859 = vand.u32 %v6455, 4294901760
  %6860 = vmatmul.mubr.f32.gmra.mrb[0].mxu0 %v6859
  %v6861 = vpop.f32.mrb[0].mxu0
  %v6862 = vadd.f32 %v6780, %v6861
  %v6863 = vpop.f32.mrb[0].mxu0
  %6864 = vmatprep.mubr.f32.mxu0 0.0
  %v6865 = vand.u32 %v6458, 4294901760
  %6866 = vmatmul.mubr.f32.gmra.mrb[0].mxu0 %v6865
  %v6867 = vpop.f32.mrb[0].mxu0
  %v6868 = vadd.f32 %v6788, %v6867
  %v6869 = vpop.f32.mrb[0].mxu0
  %6870 = vdwg.mxu0
  %6871 = vmatprep.subr.mxu0 0.0
  %v6872 = vand.u32 %v1548, 4294901760
  %6873 = vmatpush1.msra.mxu0 %v6872
  %6874 = vmatprep.subr.mxu0 0.0
  %6875 = vmatpush1.msra.mxu0 0.0
  %6876 = vmatprep.subr.mxu0 0.0
  %6877 = vmatpush1.msra.mxu0 0.0
  %6878 = vmatprep.subr.mxu0 0.0
  %6879 = vmatpush1.msra.mxu0 0.0
  %6880 = vmatprep.subr.mxu0 0.0
  %6881 = vmatpush1.msra.mxu0 0.0
  %6882 = vmatprep.subr.mxu0 0.0
  %6883 = vmatpush1.msra.mxu0 0.0
  %6884 = vmatprep.subr.mxu0 0.0
  %6885 = vmatpush1.msra.mxu0 0.0
  %6886 = vmatprep.subr.mxu0 0.0
  %6887 = vmatpush1.msra.mxu0 0.0
  %6888 = vmatprep.subr.mxu0 0.0
  %6889 = vmatpush1.msra.mxu0 0.0
  %6890 = vmatprep.subr.mxu0 0.0
  %6891 = vmatpush1.msra.mxu0 0.0
  %6892 = vmatprep.subr.mxu0 0.0
  %6893 = vmatpush1.msra.mxu0 0.0
  %6894 = vmatprep.subr.mxu0 0.0
  %6895 = vmatpush1.msra.mxu0 0.0
  %6896 = vmatprep.subr.mxu0 0.0
  %6897 = vmatpush1.msra.mxu0 0.0
  %6898 = vmatprep.subr.mxu0 0.0
  %6899 = vmatpush1.msra.mxu0 0.0
  %6900 = vmatprep.subr.mxu0 0.0
  %6901 = vmatpush1.msra.mxu0 0.0
  %6902 = vmatprep.subr.mxu0 0.0
  %6903 = vmatpush1.msra.mxu0 0.0
  %6904 = vmatprep.subr.mxu0 0.0
  %6905 = vmatpush1.msra.mxu0 0.0
  %6906 = vmatprep.subr.mxu0 0.0
  %6907 = vmatpush1.msra.mxu0 0.0
  %6908 = vmatprep.subr.mxu0 0.0
  %6909 = vmatpush1.msra.mxu0 0.0
  %6910 = vmatprep.subr.mxu0 0.0
  %6911 = vmatpush1.msra.mxu0 0.0
  %6912 = vmatprep.subr.mxu0 0.0
  %6913 = vmatpush1.msra.mxu0 0.0
  %6914 = vmatprep.subr.mxu0 0.0
  %6915 = vmatpush1.msra.mxu0 0.0
  %6916 = vmatprep.subr.mxu0 0.0
  %6917 = vmatpush1.msra.mxu0 0.0
  %6918 = vmatprep.subr.mxu0 0.0
  %6919 = vmatpush1.msra.mxu0 0.0
  %6920 = vmatprep.subr.mxu0 0.0
  %6921 = vmatpush1.msra.mxu0 0.0
  %6922 = vmatprep.subr.mxu0 0.0
  %6923 = vmatpush1.msra.mxu0 0.0
  %6924 = vmatprep.subr.mxu0 0.0
  %6925 = vmatpush1.msra.mxu0 0.0
  %6926 = vmatprep.subr.mxu0 0.0
  %6927 = vmatpush1.msra.mxu0 0.0
  %6928 = vmatprep.subr.mxu0 0.0
  %6929 = vmatpush1.msra.mxu0 0.0
  %6930 = vmatprep.subr.mxu0 0.0
  %6931 = vmatpush1.msra.mxu0 0.0
  %6932 = vmatprep.subr.mxu0 0.0
  %6933 = vmatpush1.msra.mxu0 0.0
  %6934 = vmatprep.subr.mxu0 0.0
  %6935 = vmatpush1.msra.mxu0 0.0
  %6936 = vmatprep.mubr.f32.mxu0 0.0
  %v6937 = vand.u32 %v6455, 4294901760
  %6938 = vmatmul.mubr.f32.gmra.mrb[0].mxu0 %v6937
  %v6939 = vpop.f32.mrb[0].mxu0
  %v6940 = vadd.f32 %v6862, %v6939
  %v6941 = vpop.f32.mrb[0].mxu0
  %6942 = vmatprep.mubr.f32.mxu0 0.0
  %v6943 = vand.u32 %v6458, 4294901760
  %6944 = vmatmul.mubr.f32.gmra.mrb[0].mxu0 %v6943
  %v6945 = vpop.f32.mrb[0].mxu0
  %v6946 = vadd.f32 %v6868, %v6945
  %v6947 = vpop.f32.mrb[0].mxu0
  %6948 = vdwg.mxu0
  %v6949 = vld [vmem:[%s1] sm:$0xff]
  %v6950 = vld [vmem:[%s1 + $0x8] sm:$0xff]
  %v6952 = vsel %vm6442, %v6949, 0
  %v6955 = vsel %vm6442, %v6950, 0
  %6957 = vmatprep.subr.mxu0 0.0
  %v6958 = vand.u32 %v6940, 4294901760
  %6959 = vmatpush1.msra.mxu0 %v6958
  %6960 = vmatprep.subr.mxu0 0.0
  %v6961 = vand.u32 %v6946, 4294901760
  %6962 = vmatpush1.msra.mxu0 %v6961
  %6963 = vmatprep.subr.mxu0 0.0
  %6964 = vmatpush1.msra.mxu0 0.0
  %6965 = vmatprep.subr.mxu0 0.0
  %6966 = vmatpush1.msra.mxu0 0.0
  %6967 = vmatprep.subr.mxu0 0.0
  %6968 = vmatpush1.msra.mxu0 0.0
  %6969 = vmatprep.subr.mxu0 0.0
  %6970 = vmatpush1.msra.mxu0 0.0
  %6971 = vmatprep.subr.mxu0 0.0
  %6972 = vmatpush1.msra.mxu0 0.0
  %6973 = vmatprep.subr.mxu0 0.0
  %6974 = vmatpush1.msra.mxu0 0.0
  %6975 = vmatprep.subr.mxu0 0.0
  %6976 = vmatpush1.msra.mxu0 0.0
  %6977 = vmatprep.subr.mxu0 0.0
  %6978 = vmatpush1.msra.mxu0 0.0
  %6979 = vmatprep.subr.mxu0 0.0
  %6980 = vmatpush1.msra.mxu0 0.0
  %6981 = vmatprep.subr.mxu0 0.0
  %6982 = vmatpush1.msra.mxu0 0.0
  %6983 = vmatprep.subr.mxu0 0.0
  %6984 = vmatpush1.msra.mxu0 0.0
  %6985 = vmatprep.subr.mxu0 0.0
  %6986 = vmatpush1.msra.mxu0 0.0
  %6987 = vmatprep.subr.mxu0 0.0
  %6988 = vmatpush1.msra.mxu0 0.0
  %6989 = vmatprep.subr.mxu0 0.0
  %6990 = vmatpush1.msra.mxu0 0.0
  %6991 = vmatprep.subr.mxu0 0.0
  %6992 = vmatpush1.msra.mxu0 0.0
  %6993 = vmatprep.subr.mxu0 0.0
  %6994 = vmatpush1.msra.mxu0 0.0
  %6995 = vmatprep.subr.mxu0 0.0
  %6996 = vmatpush1.msra.mxu0 0.0
  %6997 = vmatprep.subr.mxu0 0.0
  %6998 = vmatpush1.msra.mxu0 0.0
  %6999 = vmatprep.subr.mxu0 0.0
  %7000 = vmatpush1.msra.mxu0 0.0
  %7001 = vmatprep.subr.mxu0 0.0
  %7002 = vmatpush1.msra.mxu0 0.0
  %7003 = vmatprep.subr.mxu0 0.0
  %7004 = vmatpush1.msra.mxu0 0.0
  %7005 = vmatprep.subr.mxu0 0.0
  %7006 = vmatpush1.msra.mxu0 0.0
  %7007 = vmatprep.subr.mxu0 0.0
  %7008 = vmatpush1.msra.mxu0 0.0
  %7009 = vmatprep.subr.mxu0 0.0
  %7010 = vmatpush1.msra.mxu0 0.0
  %7011 = vmatprep.subr.mxu0 0.0
  %7012 = vmatpush1.msra.mxu0 0.0
  %7013 = vmatprep.subr.mxu0 0.0
  %7014 = vmatpush1.msra.mxu0 0.0
  %7015 = vmatprep.subr.mxu0 0.0
  %7016 = vmatpush1.msra.mxu0 0.0
  %7017 = vmatprep.subr.mxu0 0.0
  %7018 = vmatpush1.msra.mxu0 0.0
  %7019 = vmatprep.subr.mxu0 0.0
  %7020 = vmatpush1.msra.mxu0 0.0
  %7021 = vmatprep.subr.mxu0 0.0
  %7022 = vmatpush1.msra.mxu0 0.0
  %7023 = vmatprep.mubr.f32.mxu0 0.0
  %v7024 = vand.u32 %v6952, 4294901760
  %v7025 = vsub.f32 %v6952, %v7024
  %v7026 = vand.u32 %v7025, 4294901760
  %v7027 = vsub.f32 %v7025, %v7026
  %v7028 = vand.u32 %v7027, 4294901760
  %7029 = vmatmul.mubr.f32.gmra.mrb[0].mxu0 %v7028
  %v7030 = vpop.f32.mrb[0].mxu0
  %v7031 = vadd.f32 0.0, %v7030
  %v7032 = vpop.f32.mrb[0].mxu0
  %7033 = vmatprep.mubr.f32.mxu0 0.0
  %v7034 = vand.u32 %v6955, 4294901760
  %v7035 = vsub.f32 %v6955, %v7034
  %v7036 = vand.u32 %v7035, 4294901760
  %v7037 = vsub.f32 %v7035, %v7036
  %v7038 = vand.u32 %v7037, 4294901760
  %7039 = vmatmul.mubr.f32.gmra.mrb[0].mxu0 %v7038
  %v7040 = vpop.f32.mrb[0].mxu0
  %v7041 = vadd.f32 0.0, %v7040
  %v7042 = vpop.f32.mrb[0].mxu0
  %7043 = vdwg.mxu0
  %7044 = vmatprep.subr.mxu0 0.0
  %v7045 = vand.u32 %v6940, 4294901760
  %v7046 = vsub.f32 %v6940, %v7045
  %v7047 = vand.u32 %v7046, 4294901760
  %v7048 = vsub.f32 %v7046, %v7047
  %v7049 = vand.u32 %v7048, 4294901760
  %7050 = vmatpush1.msra.mxu0 %v7049
  %7051 = vmatprep.subr.mxu0 0.0
  %v7052 = vand.u32 %v6946, 4294901760
  %v7053 = vsub.f32 %v6946, %v7052
  %v7054 = vand.u32 %v7053, 4294901760
  %v7055 = vsub.f32 %v7053, %v7054
  %v7056 = vand.u32 %v7055, 4294901760
  %7057 = vmatpush1.msra.mxu0 %v7056
  %7058 = vmatprep.subr.mxu0 0.0
  %7059 = vmatpush1.msra.mxu0 0.0
  %7060 = vmatprep.subr.mxu0 0.0
  %7061 = vmatpush1.msra.mxu0 0.0
  %7062 = vmatprep.subr.mxu0 0.0
  %7063 = vmatpush1.msra.mxu0 0.0
  %7064 = vmatprep.subr.mxu0 0.0
  %7065 = vmatpush1.msra.mxu0 0.0
  %7066 = vmatprep.subr.mxu0 0.0
  %7067 = vmatpush1.msra.mxu0 0.0
  %7068 = vmatprep.subr.mxu0 0.0
  %7069 = vmatpush1.msra.mxu0 0.0
  %7070 = vmatprep.subr.mxu0 0.0
  %7071 = vmatpush1.msra.mxu0 0.0
  %7072 = vmatprep.subr.mxu0 0.0
  %7073 = vmatpush1.msra.mxu0 0.0
  %7074 = vmatprep.subr.mxu0 0.0
  %7075 = vmatpush1.msra.mxu0 0.0
  %7076 = vmatprep.subr.mxu0 0.0
  %7077 = vmatpush1.msra.mxu0 0.0
  %7078 = vmatprep.subr.mxu0 0.0
  %7079 = vmatpush1.msra.mxu0 0.0
  %7080 = vmatprep.subr.mxu0 0.0
  %7081 = vmatpush1.msra.mxu0 0.0
  %7082 = vmatprep.subr.mxu0 0.0
  %7083 = vmatpush1.msra.mxu0 0.0
  %7084 = vmatprep.subr.mxu0 0.0
  %7085 = vmatpush1.msra.mxu0 0.0
  %7086 = vmatprep.subr.mxu0 0.0
  %7087 = vmatpush1.msra.mxu0 0.0
  %7088 = vmatprep.subr.mxu0 0.0
  %7089 = vmatpush1.msra.mxu0 0.0
  %7090 = vmatprep.subr.mxu0 0.0
  %7091 = vmatpush1.msra.mxu0 0.0
  %7092 = vmatprep.subr.mxu0 0.0
  %7093 = vmatpush1.msra.mxu0 0.0
  %7094 = vmatprep.subr.mxu0 0.0
  %7095 = vmatpush1.msra.mxu0 0.0
  %7096 = vmatprep.subr.mxu0 0.0
  %7097 = vmatpush1.msra.mxu0 0.0
  %7098 = vmatprep.subr.mxu0 0.0
  %7099 = vmatpush1.msra.mxu0 0.0
  %7100 = vmatprep.subr.mxu0 0.0
  %7101 = vmatpush1.msra.mxu0 0.0
  %7102 = vmatprep.subr.mxu0 0.0
  %7103 = vmatpush1.msra.mxu0 0.0
  %7104 = vmatprep.subr.mxu0 0.0
  %7105 = vmatpush1.msra.mxu0 0.0
  %7106 = vmatprep.subr.mxu0 0.0
  %7107 = vmatpush1.msra.mxu0 0.0
  %7108 = vmatprep.subr.mxu0 0.0
  %7109 = vmatpush1.msra.mxu0 0.0
  %7110 = vmatprep.subr.mxu0 0.0
  %7111 = vmatpush1.msra.mxu0 0.0
  %7112 = vmatprep.subr.mxu0 0.0
  %7113 = vmatpush1.msra.mxu0 0.0
  %7114 = vmatprep.subr.mxu0 0.0
  %7115 = vmatpush1.msra.mxu0 0.0
  %7116 = vmatprep.subr.mxu0 0.0
  %7117 = vmatpush1.msra.mxu0 0.0
  %7118 = vmatprep.mubr.f32.mxu0 0.0
  %v7119 = vand.u32 %v6952, 4294901760
  %7120 = vmatmul.mubr.f32.gmra.mrb[0].mxu0 %v7119
  %v7121 = vpop.f32.mrb[0].mxu0
  %v7122 = vadd.f32 %v7031, %v7121
  %v7123 = vpop.f32.mrb[0].mxu0
  %7124 = vmatprep.mubr.f32.mxu0 0.0
  %v7125 = vand.u32 %v6955, 4294901760
  %7126 = vmatmul.mubr.f32.gmra.mrb[0].mxu0 %v7125
  %v7127 = vpop.f32.mrb[0].mxu0
  %v7128 = vadd.f32 %v7041, %v7127
  %v7129 = vpop.f32.mrb[0].mxu0
  %7130 = vdwg.mxu0
  %7131 = vmatprep.subr.mxu0 0.0
  %v7132 = vand.u32 %v6940, 4294901760
  %v7133 = vsub.f32 %v6940, %v7132
  %7134 = vmatpush1.msra.mxu0 %v7133
  %7135 = vmatprep.subr.mxu0 0.0
  %v7136 = vand.u32 %v6946, 4294901760
  %v7137 = vsub.f32 %v6946, %v7136
  %7138 = vmatpush1.msra.mxu0 %v7137
  %7139 = vmatprep.subr.mxu0 0.0
  %7140 = vmatpush1.msra.mxu0 0.0
  %7141 = vmatprep.subr.mxu0 0.0
  %7142 = vmatpush1.msra.mxu0 0.0
  %7143 = vmatprep.subr.mxu0 0.0
  %7144 = vmatpush1.msra.mxu0 0.0
  %7145 = vmatprep.subr.mxu0 0.0
  %7146 = vmatpush1.msra.mxu0 0.0
  %7147 = vmatprep.subr.mxu0 0.0
  %7148 = vmatpush1.msra.mxu0 0.0
  %7149 = vmatprep.subr.mxu0 0.0
  %7150 = vmatpush1.msra.mxu0 0.0
  %7151 = vmatprep.subr.mxu0 0.0
  %7152 = vmatpush1.msra.mxu0 0.0
  %7153 = vmatprep.subr.mxu0 0.0
  %7154 = vmatpush1.msra.mxu0 0.0
  %7155 = vmatprep.subr.mxu0 0.0
  %7156 = vmatpush1.msra.mxu0 0.0
  %7157 = vmatprep.subr.mxu0 0.0
  %7158 = vmatpush1.msra.mxu0 0.0
  %7159 = vmatprep.subr.mxu0 0.0
  %7160 = vmatpush1.msra.mxu0 0.0
  %7161 = vmatprep.subr.mxu0 0.0
  %7162 = vmatpush1.msra.mxu0 0.0
  %7163 = vmatprep.subr.mxu0 0.0
  %7164 = vmatpush1.msra.mxu0 0.0
  %7165 = vmatprep.subr.mxu0 0.0
  %7166 = vmatpush1.msra.mxu0 0.0
  %7167 = vmatprep.subr.mxu0 0.0
  %7168 = vmatpush1.msra.mxu0 0.0
  %7169 = vmatprep.subr.mxu0 0.0
  %7170 = vmatpush1.msra.mxu0 0.0
  %7171 = vmatprep.subr.mxu0 0.0
  %7172 = vmatpush1.msra.mxu0 0.0
  %7173 = vmatprep.subr.mxu0 0.0
  %7174 = vmatpush1.msra.mxu0 0.0
  %7175 = vmatprep.subr.mxu0 0.0
  %7176 = vmatpush1.msra.mxu0 0.0
  %7177 = vmatprep.subr.mxu0 0.0
  %7178 = vmatpush1.msra.mxu0 0.0
  %7179 = vmatprep.subr.mxu0 0.0
  %7180 = vmatpush1.msra.mxu0 0.0
  %7181 = vmatprep.subr.mxu0 0.0
  %7182 = vmatpush1.msra.mxu0 0.0
  %7183 = vmatprep.subr.mxu0 0.0
  %7184 = vmatpush1.msra.mxu0 0.0
  %7185 = vmatprep.subr.mxu0 0.0
  %7186 = vmatpush1.msra.mxu0 0.0
  %7187 = vmatprep.subr.mxu0 0.0
  %7188 = vmatpush1.msra.mxu0 0.0
  %7189 = vmatprep.subr.mxu0 0.0
  %7190 = vmatpush1.msra.mxu0 0.0
  %7191 = vmatprep.subr.mxu0 0.0
  %7192 = vmatpush1.msra.mxu0 0.0
  %7193 = vmatprep.subr.mxu0 0.0
  %7194 = vmatpush1.msra.mxu0 0.0
  %7195 = vmatprep.subr.mxu0 0.0
  %7196 = vmatpush1.msra.mxu0 0.0
  %7197 = vmatprep.subr.mxu0 0.0
  %7198 = vmatpush1.msra.mxu0 0.0
  %7199 = vmatprep.mubr.f32.mxu0 0.0
  %v7200 = vand.u32 %v6952, 4294901760
  %v7201 = vsub.f32 %v6952, %v7200
  %7202 = vmatmul.mubr.f32.gmra.mrb[0].mxu0 %v7201
  %v7203 = vpop.f32.mrb[0].mxu0
  %v7204 = vadd.f32 %v7122, %v7203
  %v7205 = vpop.f32.mrb[0].mxu0
  %7206 = vmatprep.mubr.f32.mxu0 0.0
  %v7207 = vand.u32 %v6955, 4294901760
  %v7208 = vsub.f32 %v6955, %v7207
  %7209 = vmatmul.mubr.f32.gmra.mrb[0].mxu0 %v7208
  %v7210 = vpop.f32.mrb[0].mxu0
  %v7211 = vadd.f32 %v7128, %v7210
  %v7212 = vpop.f32.mrb[0].mxu0
  %7213 = vdwg.mxu0
  %7214 = vmatprep.subr.mxu0 0.0
  %v7215 = vand.u32 %v6940, 4294901760
  %7216 = vmatpush1.msra.mxu0 %v7215
  %7217 = vmatprep.subr.mxu0 0.0
  %v7218 = vand.u32 %v6946, 4294901760
  %7219 = vmatpush1.msra.mxu0 %v7218
  %7220 = vmatprep.subr.mxu0 0.0
  %7221 = vmatpush1.msra.mxu0 0.0
  %7222 = vmatprep.subr.mxu0 0.0
  %7223 = vmatpush1.msra.mxu0 0.0
  %7224 = vmatprep.subr.mxu0 0.0
  %7225 = vmatpush1.msra.mxu0 0.0
  %7226 = vmatprep.subr.mxu0 0.0
  %7227 = vmatpush1.msra.mxu0 0.0
  %7228 = vmatprep.subr.mxu0 0.0
  %7229 = vmatpush1.msra.mxu0 0.0
  %7230 = vmatprep.subr.mxu0 0.0
  %7231 = vmatpush1.msra.mxu0 0.0
  %7232 = vmatprep.subr.mxu0 0.0
  %7233 = vmatpush1.msra.mxu0 0.0
  %7234 = vmatprep.subr.mxu0 0.0
  %7235 = vmatpush1.msra.mxu0 0.0
  %7236 = vmatprep.subr.mxu0 0.0
  %7237 = vmatpush1.msra.mxu0 0.0
  %7238 = vmatprep.subr.mxu0 0.0
  %7239 = vmatpush1.msra.mxu0 0.0
  %7240 = vmatprep.subr.mxu0 0.0
  %7241 = vmatpush1.msra.mxu0 0.0
  %7242 = vmatprep.subr.mxu0 0.0
  %7243 = vmatpush1.msra.mxu0 0.0
  %7244 = vmatprep.subr.mxu0 0.0
  %7245 = vmatpush1.msra.mxu0 0.0
  %7246 = vmatprep.subr.mxu0 0.0
  %7247 = vmatpush1.msra.mxu0 0.0
  %7248 = vmatprep.subr.mxu0 0.0
  %7249 = vmatpush1.msra.mxu0 0.0
  %7250 = vmatprep.subr.mxu0 0.0
  %7251 = vmatpush1.msra.mxu0 0.0
  %7252 = vmatprep.subr.mxu0 0.0
  %7253 = vmatpush1.msra.mxu0 0.0
  %7254 = vmatprep.subr.mxu0 0.0
  %7255 = vmatpush1.msra.mxu0 0.0
  %7256 = vmatprep.subr.mxu0 0.0
  %7257 = vmatpush1.msra.mxu0 0.0
  %7258 = vmatprep.subr.mxu0 0.0
  %7259 = vmatpush1.msra.mxu0 0.0
  %7260 = vmatprep.subr.mxu0 0.0
  %7261 = vmatpush1.msra.mxu0 0.0
  %7262 = vmatprep.subr.mxu0 0.0
  %7263 = vmatpush1.msra.mxu0 0.0
  %7264 = vmatprep.subr.mxu0 0.0
  %7265 = vmatpush1.msra.mxu0 0.0
  %7266 = vmatprep.subr.mxu0 0.0
  %7267 = vmatpush1.msra.mxu0 0.0
  %7268 = vmatprep.subr.mxu0 0.0
  %7269 = vmatpush1.msra.mxu0 0.0
  %7270 = vmatprep.subr.mxu0 0.0
  %7271 = vmatpush1.msra.mxu0 0.0
  %7272 = vmatprep.subr.mxu0 0.0
  %7273 = vmatpush1.msra.mxu0 0.0
  %7274 = vmatprep.subr.mxu0 0.0
  %7275 = vmatpush1.msra.mxu0 0.0
  %7276 = vmatprep.subr.mxu0 0.0
  %7277 = vmatpush1.msra.mxu0 0.0
  %7278 = vmatprep.subr.mxu0 0.0
  %7279 = vmatpush1.msra.mxu0 0.0
  %7280 = vmatprep.mubr.f32.mxu0 0.0
  %v7281 = vand.u32 %v6952, 4294901760
  %v7282 = vsub.f32 %v6952, %v7281
  %v7283 = vand.u32 %v7282, 4294901760
  %7284 = vmatmul.mubr.f32.gmra.mrb[0].mxu0 %v7283
  %v7285 = vpop.f32.mrb[0].mxu0
  %v7286 = vadd.f32 %v7204, %v7285
  %v7287 = vpop.f32.mrb[0].mxu0
  %7288 = vmatprep.mubr.f32.mxu0 0.0
  %v7289 = vand.u32 %v6955, 4294901760
  %v7290 = vsub.f32 %v6955, %v7289
  %v7291 = vand.u32 %v7290, 4294901760
  %7292 = vmatmul.mubr.f32.gmra.mrb[0].mxu0 %v7291
  %v7293 = vpop.f32.mrb[0].mxu0
  %v7294 = vadd.f32 %v7211, %v7293
  %v7295 = vpop.f32.mrb[0].mxu0
  %7296 = vdwg.mxu0
  %7297 = vmatprep.subr.mxu0 0.0
  %v7298 = vand.u32 %v6940, 4294901760
  %v7299 = vsub.f32 %v6940, %v7298
  %v7300 = vand.u32 %v7299, 4294901760
  %7301 = vmatpush1.msra.mxu0 %v7300
  %7302 = vmatprep.subr.mxu0 0.0
  %v7303 = vand.u32 %v6946, 4294901760
  %v7304 = vsub.f32 %v6946, %v7303
  %v7305 = vand.u32 %v7304, 4294901760
  %7306 = vmatpush1.msra.mxu0 %v7305
  %7307 = vmatprep.subr.mxu0 0.0
  %7308 = vmatpush1.msra.mxu0 0.0
  %7309 = vmatprep.subr.mxu0 0.0
  %7310 = vmatpush1.msra.mxu0 0.0
  %7311 = vmatprep.subr.mxu0 0.0
  %7312 = vmatpush1.msra.mxu0 0.0
  %7313 = vmatprep.subr.mxu0 0.0
  %7314 = vmatpush1.msra.mxu0 0.0
  %7315 = vmatprep.subr.mxu0 0.0
  %7316 = vmatpush1.msra.mxu0 0.0
  %7317 = vmatprep.subr.mxu0 0.0
  %7318 = vmatpush1.msra.mxu0 0.0
  %7319 = vmatprep.subr.mxu0 0.0
  %7320 = vmatpush1.msra.mxu0 0.0
  %7321 = vmatprep.subr.mxu0 0.0
  %7322 = vmatpush1.msra.mxu0 0.0
  %7323 = vmatprep.subr.mxu0 0.0
  %7324 = vmatpush1.msra.mxu0 0.0
  %7325 = vmatprep.subr.mxu0 0.0
  %7326 = vmatpush1.msra.mxu0 0.0
  %7327 = vmatprep.subr.mxu0 0.0
  %7328 = vmatpush1.msra.mxu0 0.0
  %7329 = vmatprep.subr.mxu0 0.0
  %7330 = vmatpush1.msra.mxu0 0.0
  %7331 = vmatprep.subr.mxu0 0.0
  %7332 = vmatpush1.msra.mxu0 0.0
  %7333 = vmatprep.subr.mxu0 0.0
  %7334 = vmatpush1.msra.mxu0 0.0
  %7335 = vmatprep.subr.mxu0 0.0
  %7336 = vmatpush1.msra.mxu0 0.0
  %7337 = vmatprep.subr.mxu0 0.0
  %7338 = vmatpush1.msra.mxu0 0.0
  %7339 = vmatprep.subr.mxu0 0.0
  %7340 = vmatpush1.msra.mxu0 0.0
  %7341 = vmatprep.subr.mxu0 0.0
  %7342 = vmatpush1.msra.mxu0 0.0
  %7343 = vmatprep.subr.mxu0 0.0
  %7344 = vmatpush1.msra.mxu0 0.0
  %7345 = vmatprep.subr.mxu0 0.0
  %7346 = vmatpush1.msra.mxu0 0.0
  %7347 = vmatprep.subr.mxu0 0.0
  %7348 = vmatpush1.msra.mxu0 0.0
  %7349 = vmatprep.subr.mxu0 0.0
  %7350 = vmatpush1.msra.mxu0 0.0
  %7351 = vmatprep.subr.mxu0 0.0
  %7352 = vmatpush1.msra.mxu0 0.0
  %7353 = vmatprep.subr.mxu0 0.0
  %7354 = vmatpush1.msra.mxu0 0.0
  %7355 = vmatprep.subr.mxu0 0.0
  %7356 = vmatpush1.msra.mxu0 0.0
  %7357 = vmatprep.subr.mxu0 0.0
  %7358 = vmatpush1.msra.mxu0 0.0
  %7359 = vmatprep.subr.mxu0 0.0
  %7360 = vmatpush1.msra.mxu0 0.0
  %7361 = vmatprep.subr.mxu0 0.0
  %7362 = vmatpush1.msra.mxu0 0.0
  %7363 = vmatprep.subr.mxu0 0.0
  %7364 = vmatpush1.msra.mxu0 0.0
  %7365 = vmatprep.subr.mxu0 0.0
  %7366 = vmatpush1.msra.mxu0 0.0
  %7367 = vmatprep.mubr.f32.mxu0 0.0
  %v7368 = vand.u32 %v6952, 4294901760
  %7369 = vmatmul.mubr.f32.gmra.mrb[0].mxu0 %v7368
  %v7370 = vpop.f32.mrb[0].mxu0
  %v7371 = vadd.f32 %v7286, %v7370
  %v7372 = vpop.f32.mrb[0].mxu0
  %7373 = vmatprep.mubr.f32.mxu0 0.0
  %v7374 = vand.u32 %v6955, 4294901760
  %7375 = vmatmul.mubr.f32.gmra.mrb[0].mxu0 %v7374
  %v7376 = vpop.f32.mrb[0].mxu0
  %v7377 = vadd.f32 %v7294, %v7376
  %v7378 = vpop.f32.mrb[0].mxu0
  %7379 = vdwg.mxu0
  %7380 = vmatprep.subr.mxu0 0.0
  %v7381 = vand.u32 %v6940, 4294901760
  %7382 = vmatpush1.msra.mxu0 %v7381
  %7383 = vmatprep.subr.mxu0 0.0
  %v7384 = vand.u32 %v6946, 4294901760
  %7385 = vmatpush1.msra.mxu0 %v7384
  %7386 = vmatprep.subr.mxu0 0.0
  %7387 = vmatpush1.msra.mxu0 0.0
  %7388 = vmatprep.subr.mxu0 0.0
  %7389 = vmatpush1.msra.mxu0 0.0
  %7390 = vmatprep.subr.mxu0 0.0
  %7391 = vmatpush1.msra.mxu0 0.0
  %7392 = vmatprep.subr.mxu0 0.0
  %7393 = vmatpush1.msra.mxu0 0.0
  %7394 = vmatprep.subr.mxu0 0.0
  %7395 = vmatpush1.msra.mxu0 0.0
  %7396 = vmatprep.subr.mxu0 0.0
  %7397 = vmatpush1.msra.mxu0 0.0
  %7398 = vmatprep.subr.mxu0 0.0
  %7399 = vmatpush1.msra.mxu0 0.0
  %7400 = vmatprep.subr.mxu0 0.0
  %7401 = vmatpush1.msra.mxu0 0.0
  %7402 = vmatprep.subr.mxu0 0.0
  %7403 = vmatpush1.msra.mxu0 0.0
  %7404 = vmatprep.subr.mxu0 0.0
  %7405 = vmatpush1.msra.mxu0 0.0
  %7406 = vmatprep.subr.mxu0 0.0
  %7407 = vmatpush1.msra.mxu0 0.0
  %7408 = vmatprep.subr.mxu0 0.0
  %7409 = vmatpush1.msra.mxu0 0.0
  %7410 = vmatprep.subr.mxu0 0.0
  %7411 = vmatpush1.msra.mxu0 0.0
  %7412 = vmatprep.subr.mxu0 0.0
  %7413 = vmatpush1.msra.mxu0 0.0
  %7414 = vmatprep.subr.mxu0 0.0
  %7415 = vmatpush1.msra.mxu0 0.0
  %7416 = vmatprep.subr.mxu0 0.0
  %7417 = vmatpush1.msra.mxu0 0.0
  %7418 = vmatprep.subr.mxu0 0.0
  %7419 = vmatpush1.msra.mxu0 0.0
  %7420 = vmatprep.subr.mxu0 0.0
  %7421 = vmatpush1.msra.mxu0 0.0
  %7422 = vmatprep.subr.mxu0 0.0
  %7423 = vmatpush1.msra.mxu0 0.0
  %7424 = vmatprep.subr.mxu0 0.0
  %7425 = vmatpush1.msra.mxu0 0.0
  %7426 = vmatprep.subr.mxu0 0.0
  %7427 = vmatpush1.msra.mxu0 0.0
  %7428 = vmatprep.subr.mxu0 0.0
  %7429 = vmatpush1.msra.mxu0 0.0
  %7430 = vmatprep.subr.mxu0 0.0
  %7431 = vmatpush1.msra.mxu0 0.0
  %7432 = vmatprep.subr.mxu0 0.0
  %7433 = vmatpush1.msra.mxu0 0.0
  %7434 = vmatprep.subr.mxu0 0.0
  %7435 = vmatpush1.msra.mxu0 0.0
  %7436 = vmatprep.subr.mxu0 0.0
  %7437 = vmatpush1.msra.mxu0 0.0
  %7438 = vmatprep.subr.mxu0 0.0
  %7439 = vmatpush1.msra.mxu0 0.0
  %7440 = vmatprep.subr.mxu0 0.0
  %7441 = vmatpush1.msra.mxu0 0.0
  %7442 = vmatprep.subr.mxu0 0.0
  %7443 = vmatpush1.msra.mxu0 0.0
  %7444 = vmatprep.subr.mxu0 0.0
  %7445 = vmatpush1.msra.mxu0 0.0
  %7446 = vmatprep.mubr.f32.mxu0 0.0
  %v7447 = vand.u32 %v6952, 4294901760
  %7448 = vmatmul.mubr.f32.gmra.mrb[0].mxu0 %v7447
  %v7449 = vpop.f32.mrb[0].mxu0
  %v7450 = vadd.f32 %v7371, %v7449
  %v7451 = vpop.f32.mrb[0].mxu0
  %7452 = vmatprep.mubr.f32.mxu0 0.0
  %v7453 = vand.u32 %v6955, 4294901760
  %7454 = vmatmul.mubr.f32.gmra.mrb[0].mxu0 %v7453
  %v7455 = vpop.f32.mrb[0].mxu0
  %v7456 = vadd.f32 %v7377, %v7455
  %v7457 = vpop.f32.mrb[0].mxu0
  %7458 = vdwg.mxu0
  %v7459 = vmax.f32 %v7450, 0.0
  %v7460 = vmax.f32 %v7456, 0.0
  %s7461 = scalar_lea.vmem %s2, 16
  %v7462 = vld [vmem:[%s7461] sm:$0xff]
  %v7463 = vld [vmem:[%s7461 + $0x8] sm:$0xff]
  %v7465 = vsel %vm41, %v7462, 0
  %v7468 = vsel %vm41, %v7463, 0
  %7470 = vmatprep.subr.mxu0 0.0
  %v7471 = vand.u32 %v2527, 4294901760
  %7472 = vmatpush1.msra.mxu0 %v7471
  %7473 = vmatprep.subr.mxu0 0.0
  %7474 = vmatpush1.msra.mxu0 0.0
  %7475 = vmatprep.subr.mxu0 0.0
  %7476 = vmatpush1.msra.mxu0 0.0
  %7477 = vmatprep.subr.mxu0 0.0
  %7478 = vmatpush1.msra.mxu0 0.0
  %7479 = vmatprep.subr.mxu0 0.0
  %7480 = vmatpush1.msra.mxu0 0.0
  %7481 = vmatprep.subr.mxu0 0.0
  %7482 = vmatpush1.msra.mxu0 0.0
  %7483 = vmatprep.subr.mxu0 0.0
  %7484 = vmatpush1.msra.mxu0 0.0
  %7485 = vmatprep.subr.mxu0 0.0
  %7486 = vmatpush1.msra.mxu0 0.0
  %7487 = vmatprep.subr.mxu0 0.0
  %7488 = vmatpush1.msra.mxu0 0.0
  %7489 = vmatprep.subr.mxu0 0.0
  %7490 = vmatpush1.msra.mxu0 0.0
  %7491 = vmatprep.subr.mxu0 0.0
  %7492 = vmatpush1.msra.mxu0 0.0
  %7493 = vmatprep.subr.mxu0 0.0
  %7494 = vmatpush1.msra.mxu0 0.0
  %7495 = vmatprep.subr.mxu0 0.0
  %7496 = vmatpush1.msra.mxu0 0.0
  %7497 = vmatprep.subr.mxu0 0.0
  %7498 = vmatpush1.msra.mxu0 0.0
  %7499 = vmatprep.subr.mxu0 0.0
  %7500 = vmatpush1.msra.mxu0 0.0
  %7501 = vmatprep.subr.mxu0 0.0
  %7502 = vmatpush1.msra.mxu0 0.0
  %7503 = vmatprep.subr.mxu0 0.0
  %7504 = vmatpush1.msra.mxu0 0.0
  %7505 = vmatprep.subr.mxu0 0.0
  %7506 = vmatpush1.msra.mxu0 0.0
  %7507 = vmatprep.subr.mxu0 0.0
  %7508 = vmatpush1.msra.mxu0 0.0
  %7509 = vmatprep.subr.mxu0 0.0
  %7510 = vmatpush1.msra.mxu0 0.0
  %7511 = vmatprep.subr.mxu0 0.0
  %7512 = vmatpush1.msra.mxu0 0.0
  %7513 = vmatprep.subr.mxu0 0.0
  %7514 = vmatpush1.msra.mxu0 0.0
  %7515 = vmatprep.subr.mxu0 0.0
  %7516 = vmatpush1.msra.mxu0 0.0
  %7517 = vmatprep.subr.mxu0 0.0
  %7518 = vmatpush1.msra.mxu0 0.0
  %7519 = vmatprep.subr.mxu0 0.0
  %7520 = vmatpush1.msra.mxu0 0.0
  %7521 = vmatprep.subr.mxu0 0.0
  %7522 = vmatpush1.msra.mxu0 0.0
  %7523 = vmatprep.subr.mxu0 0.0
  %7524 = vmatpush1.msra.mxu0 0.0
  %7525 = vmatprep.subr.mxu0 0.0
  %7526 = vmatpush1.msra.mxu0 0.0
  %7527 = vmatprep.subr.mxu0 0.0
  %7528 = vmatpush1.msra.mxu0 0.0
  %7529 = vmatprep.subr.mxu0 0.0
  %7530 = vmatpush1.msra.mxu0 0.0
  %7531 = vmatprep.subr.mxu0 0.0
  %7532 = vmatpush1.msra.mxu0 0.0
  %7533 = vmatprep.subr.mxu0 0.0
  %7534 = vmatpush1.msra.mxu0 0.0
  %7535 = vmatprep.mubr.f32.mxu0 0.0
  %v7536 = vand.u32 %v7465, 4294901760
  %v7537 = vsub.f32 %v7465, %v7536
  %v7538 = vand.u32 %v7537, 4294901760
  %v7539 = vsub.f32 %v7537, %v7538
  %v7540 = vand.u32 %v7539, 4294901760
  %7541 = vmatmul.mubr.f32.gmra.mrb[0].mxu0 %v7540
  %v7542 = vpop.f32.mrb[0].mxu0
  %v7543 = vadd.f32 0.0, %v7542
  %v7544 = vpop.f32.mrb[0].mxu0
  %7545 = vmatprep.mubr.f32.mxu0 0.0
  %v7546 = vand.u32 %v7468, 4294901760
  %v7547 = vsub.f32 %v7468, %v7546
  %v7548 = vand.u32 %v7547, 4294901760
  %v7549 = vsub.f32 %v7547, %v7548
  %v7550 = vand.u32 %v7549, 4294901760
  %7551 = vmatmul.mubr.f32.gmra.mrb[0].mxu0 %v7550
  %v7552 = vpop.f32.mrb[0].mxu0
  %v7553 = vadd.f32 0.0, %v7552
  %v7554 = vpop.f32.mrb[0].mxu0
  %7555 = vdwg.mxu0
  %7556 = vmatprep.subr.mxu0 0.0
  %v7557 = vand.u32 %v2527, 4294901760
  %v7558 = vsub.f32 %v2527, %v7557
  %v7559 = vand.u32 %v7558, 4294901760
  %v7560 = vsub.f32 %v7558, %v7559
  %v7561 = vand.u32 %v7560, 4294901760
  %7562 = vmatpush1.msra.mxu0 %v7561
  %7563 = vmatprep.subr.mxu0 0.0
  %7564 = vmatpush1.msra.mxu0 0.0
  %7565 = vmatprep.subr.mxu0 0.0
  %7566 = vmatpush1.msra.mxu0 0.0
  %7567 = vmatprep.subr.mxu0 0.0
  %7568 = vmatpush1.msra.mxu0 0.0
  %7569 = vmatprep.subr.mxu0 0.0
  %7570 = vmatpush1.msra.mxu0 0.0
  %7571 = vmatprep.subr.mxu0 0.0
  %7572 = vmatpush1.msra.mxu0 0.0
  %7573 = vmatprep.subr.mxu0 0.0
  %7574 = vmatpush1.msra.mxu0 0.0
  %7575 = vmatprep.subr.mxu0 0.0
  %7576 = vmatpush1.msra.mxu0 0.0
  %7577 = vmatprep.subr.mxu0 0.0
  %7578 = vmatpush1.msra.mxu0 0.0
  %7579 = vmatprep.subr.mxu0 0.0
  %7580 = vmatpush1.msra.mxu0 0.0
  %7581 = vmatprep.subr.mxu0 0.0
  %7582 = vmatpush1.msra.mxu0 0.0
  %7583 = vmatprep.subr.mxu0 0.0
  %7584 = vmatpush1.msra.mxu0 0.0
  %7585 = vmatprep.subr.mxu0 0.0
  %7586 = vmatpush1.msra.mxu0 0.0
  %7587 = vmatprep.subr.mxu0 0.0
  %7588 = vmatpush1.msra.mxu0 0.0
  %7589 = vmatprep.subr.mxu0 0.0
  %7590 = vmatpush1.msra.mxu0 0.0
  %7591 = vmatprep.subr.mxu0 0.0
  %7592 = vmatpush1.msra.mxu0 0.0
  %7593 = vmatprep.subr.mxu0 0.0
  %7594 = vmatpush1.msra.mxu0 0.0
  %7595 = vmatprep.subr.mxu0 0.0
  %7596 = vmatpush1.msra.mxu0 0.0
  %7597 = vmatprep.subr.mxu0 0.0
  %7598 = vmatpush1.msra.mxu0 0.0
  %7599 = vmatprep.subr.mxu0 0.0
  %7600 = vmatpush1.msra.mxu0 0.0
  %7601 = vmatprep.subr.mxu0 0.0
  %7602 = vmatpush1.msra.mxu0 0.0
  %7603 = vmatprep.subr.mxu0 0.0
  %7604 = vmatpush1.msra.mxu0 0.0
  %7605 = vmatprep.subr.mxu0 0.0
  %7606 = vmatpush1.msra.mxu0 0.0
  %7607 = vmatprep.subr.mxu0 0.0
  %7608 = vmatpush1.msra.mxu0 0.0
  %7609 = vmatprep.subr.mxu0 0.0
  %7610 = vmatpush1.msra.mxu0 0.0
  %7611 = vmatprep.subr.mxu0 0.0
  %7612 = vmatpush1.msra.mxu0 0.0
  %7613 = vmatprep.subr.mxu0 0.0
  %7614 = vmatpush1.msra.mxu0 0.0
  %7615 = vmatprep.subr.mxu0 0.0
  %7616 = vmatpush1.msra.mxu0 0.0
  %7617 = vmatprep.subr.mxu0 0.0
  %7618 = vmatpush1.msra.mxu0 0.0
  %7619 = vmatprep.subr.mxu0 0.0
  %7620 = vmatpush1.msra.mxu0 0.0
  %7621 = vmatprep.subr.mxu0 0.0
  %7622 = vmatpush1.msra.mxu0 0.0
  %7623 = vmatprep.subr.mxu0 0.0
  %7624 = vmatpush1.msra.mxu0 0.0
  %7625 = vmatprep.mubr.f32.mxu0 0.0
  %v7626 = vand.u32 %v7465, 4294901760
  %7627 = vmatmul.mubr.f32.gmra.mrb[0].mxu0 %v7626
  %v7628 = vpop.f32.mrb[0].mxu0
  %v7629 = vadd.f32 %v7543, %v7628
  %v7630 = vpop.f32.mrb[0].mxu0
  %7631 = vmatprep.mubr.f32.mxu0 0.0
  %v7632 = vand.u32 %v7468, 4294901760
  %7633 = vmatmul.mubr.f32.gmra.mrb[0].mxu0 %v7632
  %v7634 = vpop.f32.mrb[0].mxu0
  %v7635 = vadd.f32 %v7553, %v7634
  %v7636 = vpop.f32.mrb[0].mxu0
  %7637 = vdwg.mxu0
  %7638 = vmatprep.subr.mxu0 0.0
  %v7639 = vand.u32 %v2527, 4294901760
  %v7640 = vsub.f32 %v2527, %v7639
  %7641 = vmatpush1.msra.mxu0 %v7640
  %7642 = vmatprep.subr.mxu0 0.0
  %7643 = vmatpush1.msra.mxu0 0.0
  %7644 = vmatprep.subr.mxu0 0.0
  %7645 = vmatpush1.msra.mxu0 0.0
  %7646 = vmatprep.subr.mxu0 0.0
  %7647 = vmatpush1.msra.mxu0 0.0
  %7648 = vmatprep.subr.mxu0 0.0
  %7649 = vmatpush1.msra.mxu0 0.0
  %7650 = vmatprep.subr.mxu0 0.0
  %7651 = vmatpush1.msra.mxu0 0.0
  %7652 = vmatprep.subr.mxu0 0.0
  %7653 = vmatpush1.msra.mxu0 0.0
  %7654 = vmatprep.subr.mxu0 0.0
  %7655 = vmatpush1.msra.mxu0 0.0
  %7656 = vmatprep.subr.mxu0 0.0
  %7657 = vmatpush1.msra.mxu0 0.0
  %7658 = vmatprep.subr.mxu0 0.0
  %7659 = vmatpush1.msra.mxu0 0.0
  %7660 = vmatprep.subr.mxu0 0.0
  %7661 = vmatpush1.msra.mxu0 0.0
  %7662 = vmatprep.subr.mxu0 0.0
  %7663 = vmatpush1.msra.mxu0 0.0
  %7664 = vmatprep.subr.mxu0 0.0
  %7665 = vmatpush1.msra.mxu0 0.0
  %7666 = vmatprep.subr.mxu0 0.0
  %7667 = vmatpush1.msra.mxu0 0.0
  %7668 = vmatprep.subr.mxu0 0.0
  %7669 = vmatpush1.msra.mxu0 0.0
  %7670 = vmatprep.subr.mxu0 0.0
  %7671 = vmatpush1.msra.mxu0 0.0
  %7672 = vmatprep.subr.mxu0 0.0
  %7673 = vmatpush1.msra.mxu0 0.0
  %7674 = vmatprep.subr.mxu0 0.0
  %7675 = vmatpush1.msra.mxu0 0.0
  %7676 = vmatprep.subr.mxu0 0.0
  %7677 = vmatpush1.msra.mxu0 0.0
  %7678 = vmatprep.subr.mxu0 0.0
  %7679 = vmatpush1.msra.mxu0 0.0
  %7680 = vmatprep.subr.mxu0 0.0
  %7681 = vmatpush1.msra.mxu0 0.0
  %7682 = vmatprep.subr.mxu0 0.0
  %7683 = vmatpush1.msra.mxu0 0.0
  %7684 = vmatprep.subr.mxu0 0.0
  %7685 = vmatpush1.msra.mxu0 0.0
  %7686 = vmatprep.subr.mxu0 0.0
  %7687 = vmatpush1.msra.mxu0 0.0
  %7688 = vmatprep.subr.mxu0 0.0
  %7689 = vmatpush1.msra.mxu0 0.0
  %7690 = vmatprep.subr.mxu0 0.0
  %7691 = vmatpush1.msra.mxu0 0.0
  %7692 = vmatprep.subr.mxu0 0.0
  %7693 = vmatpush1.msra.mxu0 0.0
  %7694 = vmatprep.subr.mxu0 0.0
  %7695 = vmatpush1.msra.mxu0 0.0
  %7696 = vmatprep.subr.mxu0 0.0
  %7697 = vmatpush1.msra.mxu0 0.0
  %7698 = vmatprep.subr.mxu0 0.0
  %7699 = vmatpush1.msra.mxu0 0.0
  %7700 = vmatprep.subr.mxu0 0.0
  %7701 = vmatpush1.msra.mxu0 0.0
  %7702 = vmatprep.subr.mxu0 0.0
  %7703 = vmatpush1.msra.mxu0 0.0
  %7704 = vmatprep.mubr.f32.mxu0 0.0
  %v7705 = vand.u32 %v7465, 4294901760
  %v7706 = vsub.f32 %v7465, %v7705
  %7707 = vmatmul.mubr.f32.gmra.mrb[0].mxu0 %v7706
  %v7708 = vpop.f32.mrb[0].mxu0
  %v7709 = vadd.f32 %v7629, %v7708
  %v7710 = vpop.f32.mrb[0].mxu0
  %7711 = vmatprep.mubr.f32.mxu0 0.0
  %v7712 = vand.u32 %v7468, 4294901760
  %v7713 = vsub.f32 %v7468, %v7712
  %7714 = vmatmul.mubr.f32.gmra.mrb[0].mxu0 %v7713
  %v7715 = vpop.f32.mrb[0].mxu0
  %v7716 = vadd.f32 %v7635, %v7715
  %v7717 = vpop.f32.mrb[0].mxu0
  %7718 = vdwg.mxu0
  %7719 = vmatprep.subr.mxu0 0.0
  %v7720 = vand.u32 %v2527, 4294901760
  %7721 = vmatpush1.msra.mxu0 %v7720
  %7722 = vmatprep.subr.mxu0 0.0
  %7723 = vmatpush1.msra.mxu0 0.0
  %7724 = vmatprep.subr.mxu0 0.0
  %7725 = vmatpush1.msra.mxu0 0.0
  %7726 = vmatprep.subr.mxu0 0.0
  %7727 = vmatpush1.msra.mxu0 0.0
  %7728 = vmatprep.subr.mxu0 0.0
  %7729 = vmatpush1.msra.mxu0 0.0
  %7730 = vmatprep.subr.mxu0 0.0
  %7731 = vmatpush1.msra.mxu0 0.0
  %7732 = vmatprep.subr.mxu0 0.0
  %7733 = vmatpush1.msra.mxu0 0.0
  %7734 = vmatprep.subr.mxu0 0.0
  %7735 = vmatpush1.msra.mxu0 0.0
  %7736 = vmatprep.subr.mxu0 0.0
  %7737 = vmatpush1.msra.mxu0 0.0
  %7738 = vmatprep.subr.mxu0 0.0
  %7739 = vmatpush1.msra.mxu0 0.0
  %7740 = vmatprep.subr.mxu0 0.0
  %7741 = vmatpush1.msra.mxu0 0.0
  %7742 = vmatprep.subr.mxu0 0.0
  %7743 = vmatpush1.msra.mxu0 0.0
  %7744 = vmatprep.subr.mxu0 0.0
  %7745 = vmatpush1.msra.mxu0 0.0
  %7746 = vmatprep.subr.mxu0 0.0
  %7747 = vmatpush1.msra.mxu0 0.0
  %7748 = vmatprep.subr.mxu0 0.0
  %7749 = vmatpush1.msra.mxu0 0.0
  %7750 = vmatprep.subr.mxu0 0.0
  %7751 = vmatpush1.msra.mxu0 0.0
  %7752 = vmatprep.subr.mxu0 0.0
  %7753 = vmatpush1.msra.mxu0 0.0
  %7754 = vmatprep.subr.mxu0 0.0
  %7755 = vmatpush1.msra.mxu0 0.0
  %7756 = vmatprep.subr.mxu0 0.0
  %7757 = vmatpush1.msra.mxu0 0.0
  %7758 = vmatprep.subr.mxu0 0.0
  %7759 = vmatpush1.msra.mxu0 0.0
  %7760 = vmatprep.subr.mxu0 0.0
  %7761 = vmatpush1.msra.mxu0 0.0
  %7762 = vmatprep.subr.mxu0 0.0
  %7763 = vmatpush1.msra.mxu0 0.0
  %7764 = vmatprep.subr.mxu0 0.0
  %7765 = vmatpush1.msra.mxu0 0.0
  %7766 = vmatprep.subr.mxu0 0.0
  %7767 = vmatpush1.msra.mxu0 0.0
  %7768 = vmatprep.subr.mxu0 0.0
  %7769 = vmatpush1.msra.mxu0 0.0
  %7770 = vmatprep.subr.mxu0 0.0
  %7771 = vmatpush1.msra.mxu0 0.0
  %7772 = vmatprep.subr.mxu0 0.0
  %7773 = vmatpush1.msra.mxu0 0.0
  %7774 = vmatprep.subr.mxu0 0.0
  %7775 = vmatpush1.msra.mxu0 0.0
  %7776 = vmatprep.subr.mxu0 0.0
  %7777 = vmatpush1.msra.mxu0 0.0
  %7778 = vmatprep.subr.mxu0 0.0
  %7779 = vmatpush1.msra.mxu0 0.0
  %7780 = vmatprep.subr.mxu0 0.0
  %7781 = vmatpush1.msra.mxu0 0.0
  %7782 = vmatprep.subr.mxu0 0.0
  %7783 = vmatpush1.msra.mxu0 0.0
  %7784 = vmatprep.mubr.f32.mxu0 0.0
  %v7785 = vand.u32 %v7465, 4294901760
  %v7786 = vsub.f32 %v7465, %v7785
  %v7787 = vand.u32 %v7786, 4294901760
  %7788 = vmatmul.mubr.f32.gmra.mrb[0].mxu0 %v7787
  %v7789 = vpop.f32.mrb[0].mxu0
  %v7790 = vadd.f32 %v7709, %v7789
  %v7791 = vpop.f32.mrb[0].mxu0
  %7792 = vmatprep.mubr.f32.mxu0 0.0
  %v7793 = vand.u32 %v7468, 4294901760
  %v7794 = vsub.f32 %v7468, %v7793
  %v7795 = vand.u32 %v7794, 4294901760
  %7796 = vmatmul.mubr.f32.gmra.mrb[0].mxu0 %v7795
  %v7797 = vpop.f32.mrb[0].mxu0
  %v7798 = vadd.f32 %v7716, %v7797
  %v7799 = vpop.f32.mrb[0].mxu0
  %7800 = vdwg.mxu0
  %7801 = vmatprep.subr.mxu0 0.0
  %v7802 = vand.u32 %v2527, 4294901760
  %v7803 = vsub.f32 %v2527, %v7802
  %v7804 = vand.u32 %v7803, 4294901760
  %7805 = vmatpush1.msra.mxu0 %v7804
  %7806 = vmatprep.subr.mxu0 0.0
  %7807 = vmatpush1.msra.mxu0 0.0
  %7808 = vmatprep.subr.mxu0 0.0
  %7809 = vmatpush1.msra.mxu0 0.0
  %7810 = vmatprep.subr.mxu0 0.0
  %7811 = vmatpush1.msra.mxu0 0.0
  %7812 = vmatprep.subr.mxu0 0.0
  %7813 = vmatpush1.msra.mxu0 0.0
  %7814 = vmatprep.subr.mxu0 0.0
  %7815 = vmatpush1.msra.mxu0 0.0
  %7816 = vmatprep.subr.mxu0 0.0
  %7817 = vmatpush1.msra.mxu0 0.0
  %7818 = vmatprep.subr.mxu0 0.0
  %7819 = vmatpush1.msra.mxu0 0.0
  %7820 = vmatprep.subr.mxu0 0.0
  %7821 = vmatpush1.msra.mxu0 0.0
  %7822 = vmatprep.subr.mxu0 0.0
  %7823 = vmatpush1.msra.mxu0 0.0
  %7824 = vmatprep.subr.mxu0 0.0
  %7825 = vmatpush1.msra.mxu0 0.0
  %7826 = vmatprep.subr.mxu0 0.0
  %7827 = vmatpush1.msra.mxu0 0.0
  %7828 = vmatprep.subr.mxu0 0.0
  %7829 = vmatpush1.msra.mxu0 0.0
  %7830 = vmatprep.subr.mxu0 0.0
  %7831 = vmatpush1.msra.mxu0 0.0
  %7832 = vmatprep.subr.mxu0 0.0
  %7833 = vmatpush1.msra.mxu0 0.0
  %7834 = vmatprep.subr.mxu0 0.0
  %7835 = vmatpush1.msra.mxu0 0.0
  %7836 = vmatprep.subr.mxu0 0.0
  %7837 = vmatpush1.msra.mxu0 0.0
  %7838 = vmatprep.subr.mxu0 0.0
  %7839 = vmatpush1.msra.mxu0 0.0
  %7840 = vmatprep.subr.mxu0 0.0
  %7841 = vmatpush1.msra.mxu0 0.0
  %7842 = vmatprep.subr.mxu0 0.0
  %7843 = vmatpush1.msra.mxu0 0.0
  %7844 = vmatprep.subr.mxu0 0.0
  %7845 = vmatpush1.msra.mxu0 0.0
  %7846 = vmatprep.subr.mxu0 0.0
  %7847 = vmatpush1.msra.mxu0 0.0
  %7848 = vmatprep.subr.mxu0 0.0
  %7849 = vmatpush1.msra.mxu0 0.0
  %7850 = vmatprep.subr.mxu0 0.0
  %7851 = vmatpush1.msra.mxu0 0.0
  %7852 = vmatprep.subr.mxu0 0.0
  %7853 = vmatpush1.msra.mxu0 0.0
  %7854 = vmatprep.subr.mxu0 0.0
  %7855 = vmatpush1.msra.mxu0 0.0
  %7856 = vmatprep.subr.mxu0 0.0
  %7857 = vmatpush1.msra.mxu0 0.0
  %7858 = vmatprep.subr.mxu0 0.0
  %7859 = vmatpush1.msra.mxu0 0.0
  %7860 = vmatprep.subr.mxu0 0.0
  %7861 = vmatpush1.msra.mxu0 0.0
  %7862 = vmatprep.subr.mxu0 0.0
  %7863 = vmatpush1.msra.mxu0 0.0
  %7864 = vmatprep.subr.mxu0 0.0
  %7865 = vmatpush1.msra.mxu0 0.0
  %7866 = vmatprep.subr.mxu0 0.0
  %7867 = vmatpush1.msra.mxu0 0.0
  %7868 = vmatprep.mubr.f32.mxu0 0.0
  %v7869 = vand.u32 %v7465, 4294901760
  %7870 = vmatmul.mubr.f32.gmra.mrb[0].mxu0 %v7869
  %v7871 = vpop.f32.mrb[0].mxu0
  %v7872 = vadd.f32 %v7790, %v7871
  %v7873 = vpop.f32.mrb[0].mxu0
  %7874 = vmatprep.mubr.f32.mxu0 0.0
  %v7875 = vand.u32 %v7468, 4294901760
  %7876 = vmatmul.mubr.f32.gmra.mrb[0].mxu0 %v7875
  %v7877 = vpop.f32.mrb[0].mxu0
  %v7878 = vadd.f32 %v7798, %v7877
  %v7879 = vpop.f32.mrb[0].mxu0
  %7880 = vdwg.mxu0
  %7881 = vmatprep.subr.mxu0 0.0
  %v7882 = vand.u32 %v2527, 4294901760
  %7883 = vmatpush1.msra.mxu0 %v7882
  %7884 = vmatprep.subr.mxu0 0.0
  %7885 = vmatpush1.msra.mxu0 0.0
  %7886 = vmatprep.subr.mxu0 0.0
  %7887 = vmatpush1.msra.mxu0 0.0
  %7888 = vmatprep.subr.mxu0 0.0
  %7889 = vmatpush1.msra.mxu0 0.0
  %7890 = vmatprep.subr.mxu0 0.0
  %7891 = vmatpush1.msra.mxu0 0.0
  %7892 = vmatprep.subr.mxu0 0.0
  %7893 = vmatpush1.msra.mxu0 0.0
  %7894 = vmatprep.subr.mxu0 0.0
  %7895 = vmatpush1.msra.mxu0 0.0
  %7896 = vmatprep.subr.mxu0 0.0
  %7897 = vmatpush1.msra.mxu0 0.0
  %7898 = vmatprep.subr.mxu0 0.0
  %7899 = vmatpush1.msra.mxu0 0.0
  %7900 = vmatprep.subr.mxu0 0.0
  %7901 = vmatpush1.msra.mxu0 0.0
  %7902 = vmatprep.subr.mxu0 0.0
  %7903 = vmatpush1.msra.mxu0 0.0
  %7904 = vmatprep.subr.mxu0 0.0
  %7905 = vmatpush1.msra.mxu0 0.0
  %7906 = vmatprep.subr.mxu0 0.0
  %7907 = vmatpush1.msra.mxu0 0.0
  %7908 = vmatprep.subr.mxu0 0.0
  %7909 = vmatpush1.msra.mxu0 0.0
  %7910 = vmatprep.subr.mxu0 0.0
  %7911 = vmatpush1.msra.mxu0 0.0
  %7912 = vmatprep.subr.mxu0 0.0
  %7913 = vmatpush1.msra.mxu0 0.0
  %7914 = vmatprep.subr.mxu0 0.0
  %7915 = vmatpush1.msra.mxu0 0.0
  %7916 = vmatprep.subr.mxu0 0.0
  %7917 = vmatpush1.msra.mxu0 0.0
  %7918 = vmatprep.subr.mxu0 0.0
  %7919 = vmatpush1.msra.mxu0 0.0
  %7920 = vmatprep.subr.mxu0 0.0
  %7921 = vmatpush1.msra.mxu0 0.0
  %7922 = vmatprep.subr.mxu0 0.0
  %7923 = vmatpush1.msra.mxu0 0.0
  %7924 = vmatprep.subr.mxu0 0.0
  %7925 = vmatpush1.msra.mxu0 0.0
  %7926 = vmatprep.subr.mxu0 0.0
  %7927 = vmatpush1.msra.mxu0 0.0
  %7928 = vmatprep.subr.mxu0 0.0
  %7929 = vmatpush1.msra.mxu0 0.0
  %7930 = vmatprep.subr.mxu0 0.0
  %7931 = vmatpush1.msra.mxu0 0.0
  %7932 = vmatprep.subr.mxu0 0.0
  %7933 = vmatpush1.msra.mxu0 0.0
  %7934 = vmatprep.subr.mxu0 0.0
  %7935 = vmatpush1.msra.mxu0 0.0
  %7936 = vmatprep.subr.mxu0 0.0
  %7937 = vmatpush1.msra.mxu0 0.0
  %7938 = vmatprep.subr.mxu0 0.0
  %7939 = vmatpush1.msra.mxu0 0.0
  %7940 = vmatprep.subr.mxu0 0.0
  %7941 = vmatpush1.msra.mxu0 0.0
  %7942 = vmatprep.subr.mxu0 0.0
  %7943 = vmatpush1.msra.mxu0 0.0
  %7944 = vmatprep.subr.mxu0 0.0
  %7945 = vmatpush1.msra.mxu0 0.0
  %7946 = vmatprep.mubr.f32.mxu0 0.0
  %v7947 = vand.u32 %v7465, 4294901760
  %7948 = vmatmul.mubr.f32.gmra.mrb[0].mxu0 %v7947
  %v7949 = vpop.f32.mrb[0].mxu0
  %v7950 = vadd.f32 %v7872, %v7949
  %v7951 = vpop.f32.mrb[0].mxu0
  %7952 = vmatprep.mubr.f32.mxu0 0.0
  %v7953 = vand.u32 %v7468, 4294901760
  %7954 = vmatmul.mubr.f32.gmra.mrb[0].mxu0 %v7953
  %v7955 = vpop.f32.mrb[0].mxu0
  %v7956 = vadd.f32 %v7878, %v7955
  %v7957 = vpop.f32.mrb[0].mxu0
  %7958 = vdwg.mxu0
  %s7959 = scalar_lea.vmem %s1, 16
  %v7960 = vld [vmem:[%s7959] sm:$0xff]
  %v7961 = vld [vmem:[%s7959 + $0x8] sm:$0xff]
  %v7963 = vsel %vm6442, %v7960, 0
  %v7966 = vsel %vm6442, %v7961, 0
  %7968 = vmatprep.subr.mxu0 0.0
  %v7969 = vand.u32 %v7950, 4294901760
  %7970 = vmatpush1.msra.mxu0 %v7969
  %7971 = vmatprep.subr.mxu0 0.0
  %v7972 = vand.u32 %v7956, 4294901760
  %7973 = vmatpush1.msra.mxu0 %v7972
  %7974 = vmatprep.subr.mxu0 0.0
  %7975 = vmatpush1.msra.mxu0 0.0
  %7976 = vmatprep.subr.mxu0 0.0
  %7977 = vmatpush1.msra.mxu0 0.0
  %7978 = vmatprep.subr.mxu0 0.0
  %7979 = vmatpush1.msra.mxu0 0.0
  %7980 = vmatprep.subr.mxu0 0.0
  %7981 = vmatpush1.msra.mxu0 0.0
  %7982 = vmatprep.subr.mxu0 0.0
  %7983 = vmatpush1.msra.mxu0 0.0
  %7984 = vmatprep.subr.mxu0 0.0
  %7985 = vmatpush1.msra.mxu0 0.0
  %7986 = vmatprep.subr.mxu0 0.0
  %7987 = vmatpush1.msra.mxu0 0.0
  %7988 = vmatprep.subr.mxu0 0.0
  %7989 = vmatpush1.msra.mxu0 0.0
  %7990 = vmatprep.subr.mxu0 0.0
  %7991 = vmatpush1.msra.mxu0 0.0
  %7992 = vmatprep.subr.mxu0 0.0
  %7993 = vmatpush1.msra.mxu0 0.0
  %7994 = vmatprep.subr.mxu0 0.0
  %7995 = vmatpush1.msra.mxu0 0.0
  %7996 = vmatprep.subr.mxu0 0.0
  %7997 = vmatpush1.msra.mxu0 0.0
  %7998 = vmatprep.subr.mxu0 0.0
  %7999 = vmatpush1.msra.mxu0 0.0
  %8000 = vmatprep.subr.mxu0 0.0
  %8001 = vmatpush1.msra.mxu0 0.0
  %8002 = vmatprep.subr.mxu0 0.0
  %8003 = vmatpush1.msra.mxu0 0.0
  %8004 = vmatprep.subr.mxu0 0.0
  %8005 = vmatpush1.msra.mxu0 0.0
  %8006 = vmatprep.subr.mxu0 0.0
  %8007 = vmatpush1.msra.mxu0 0.0
  %8008 = vmatprep.subr.mxu0 0.0
  %8009 = vmatpush1.msra.mxu0 0.0
  %8010 = vmatprep.subr.mxu0 0.0
  %8011 = vmatpush1.msra.mxu0 0.0
  %8012 = vmatprep.subr.mxu0 0.0
  %8013 = vmatpush1.msra.mxu0 0.0
  %8014 = vmatprep.subr.mxu0 0.0
  %8015 = vmatpush1.msra.mxu0 0.0
  %8016 = vmatprep.subr.mxu0 0.0
  %8017 = vmatpush1.msra.mxu0 0.0
  %8018 = vmatprep.subr.mxu0 0.0
  %8019 = vmatpush1.msra.mxu0 0.0
  %8020 = vmatprep.subr.mxu0 0.0
  %8021 = vmatpush1.msra.mxu0 0.0
  %8022 = vmatprep.subr.mxu0 0.0
  %8023 = vmatpush1.msra.mxu0 0.0
  %8024 = vmatprep.subr.mxu0 0.0
  %8025 = vmatpush1.msra.mxu0 0.0
  %8026 = vmatprep.subr.mxu0 0.0
  %8027 = vmatpush1.msra.mxu0 0.0
  %8028 = vmatprep.subr.mxu0 0.0
  %8029 = vmatpush1.msra.mxu0 0.0
  %8030 = vmatprep.subr.mxu0 0.0
  %8031 = vmatpush1.msra.mxu0 0.0
  %8032 = vmatprep.subr.mxu0 0.0
  %8033 = vmatpush1.msra.mxu0 0.0
  %8034 = vmatprep.mubr.f32.mxu0 0.0
  %v8035 = vand.u32 %v7963, 4294901760
  %v8036 = vsub.f32 %v7963, %v8035
  %v8037 = vand.u32 %v8036, 4294901760
  %v8038 = vsub.f32 %v8036, %v8037
  %v8039 = vand.u32 %v8038, 4294901760
  %8040 = vmatmul.mubr.f32.gmra.mrb[0].mxu0 %v8039
  %v8041 = vpop.f32.mrb[0].mxu0
  %v8042 = vadd.f32 0.0, %v8041
  %v8043 = vpop.f32.mrb[0].mxu0
  %8044 = vmatprep.mubr.f32.mxu0 0.0
  %v8045 = vand.u32 %v7966, 4294901760
  %v8046 = vsub.f32 %v7966, %v8045
  %v8047 = vand.u32 %v8046, 4294901760
  %v8048 = vsub.f32 %v8046, %v8047
  %v8049 = vand.u32 %v8048, 4294901760
  %8050 = vmatmul.mubr.f32.gmra.mrb[0].mxu0 %v8049
  %v8051 = vpop.f32.mrb[0].mxu0
  %v8052 = vadd.f32 0.0, %v8051
  %v8053 = vpop.f32.mrb[0].mxu0
  %8054 = vdwg.mxu0
  %8055 = vmatprep.subr.mxu0 0.0
  %v8056 = vand.u32 %v7950, 4294901760
  %v8057 = vsub.f32 %v7950, %v8056
  %v8058 = vand.u32 %v8057, 4294901760
  %v8059 = vsub.f32 %v8057, %v8058
  %v8060 = vand.u32 %v8059, 4294901760
  %8061 = vmatpush1.msra.mxu0 %v8060
  %8062 = vmatprep.subr.mxu0 0.0
  %v8063 = vand.u32 %v7956, 4294901760
  %v8064 = vsub.f32 %v7956, %v8063
  %v8065 = vand.u32 %v8064, 4294901760
  %v8066 = vsub.f32 %v8064, %v8065
  %v8067 = vand.u32 %v8066, 4294901760
  %8068 = vmatpush1.msra.mxu0 %v8067
  %8069 = vmatprep.subr.mxu0 0.0
  %8070 = vmatpush1.msra.mxu0 0.0
  %8071 = vmatprep.subr.mxu0 0.0
  %8072 = vmatpush1.msra.mxu0 0.0
  %8073 = vmatprep.subr.mxu0 0.0
  %8074 = vmatpush1.msra.mxu0 0.0
  %8075 = vmatprep.subr.mxu0 0.0
  %8076 = vmatpush1.msra.mxu0 0.0
  %8077 = vmatprep.subr.mxu0 0.0
  %8078 = vmatpush1.msra.mxu0 0.0
  %8079 = vmatprep.subr.mxu0 0.0
  %8080 = vmatpush1.msra.mxu0 0.0
  %8081 = vmatprep.subr.mxu0 0.0
  %8082 = vmatpush1.msra.mxu0 0.0
  %8083 = vmatprep.subr.mxu0 0.0
  %8084 = vmatpush1.msra.mxu0 0.0
  %8085 = vmatprep.subr.mxu0 0.0
  %8086 = vmatpush1.msra.mxu0 0.0
  %8087 = vmatprep.subr.mxu0 0.0
  %8088 = vmatpush1.msra.mxu0 0.0
  %8089 = vmatprep.subr.mxu0 0.0
  %8090 = vmatpush1.msra.mxu0 0.0
  %8091 = vmatprep.subr.mxu0 0.0
  %8092 = vmatpush1.msra.mxu0 0.0
  %8093 = vmatprep.subr.mxu0 0.0
  %8094 = vmatpush1.msra.mxu0 0.0
  %8095 = vmatprep.subr.mxu0 0.0
  %8096 = vmatpush1.msra.mxu0 0.0
  %8097 = vmatprep.subr.mxu0 0.0
  %8098 = vmatpush1.msra.mxu0 0.0
  %8099 = vmatprep.subr.mxu0 0.0
  %8100 = vmatpush1.msra.mxu0 0.0
  %8101 = vmatprep.subr.mxu0 0.0
  %8102 = vmatpush1.msra.mxu0 0.0
  %8103 = vmatprep.subr.mxu0 0.0
  %8104 = vmatpush1.msra.mxu0 0.0
  %8105 = vmatprep.subr.mxu0 0.0
  %8106 = vmatpush1.msra.mxu0 0.0
  %8107 = vmatprep.subr.mxu0 0.0
  %8108 = vmatpush1.msra.mxu0 0.0
  %8109 = vmatprep.subr.mxu0 0.0
  %8110 = vmatpush1.msra.mxu0 0.0
  %8111 = vmatprep.subr.mxu0 0.0
  %8112 = vmatpush1.msra.mxu0 0.0
  %8113 = vmatprep.subr.mxu0 0.0
  %8114 = vmatpush1.msra.mxu0 0.0
  %8115 = vmatprep.subr.mxu0 0.0
  %8116 = vmatpush1.msra.mxu0 0.0
  %8117 = vmatprep.subr.mxu0 0.0
  %8118 = vmatpush1.msra.mxu0 0.0
  %8119 = vmatprep.subr.mxu0 0.0
  %8120 = vmatpush1.msra.mxu0 0.0
  %8121 = vmatprep.subr.mxu0 0.0
  %8122 = vmatpush1.msra.mxu0 0.0
  %8123 = vmatprep.subr.mxu0 0.0
  %8124 = vmatpush1.msra.mxu0 0.0
  %8125 = vmatprep.subr.mxu0 0.0
  %8126 = vmatpush1.msra.mxu0 0.0
  %8127 = vmatprep.subr.mxu0 0.0
  %8128 = vmatpush1.msra.mxu0 0.0
  %8129 = vmatprep.mubr.f32.mxu0 0.0
  %v8130 = vand.u32 %v7963, 4294901760
  %8131 = vmatmul.mubr.f32.gmra.mrb[0].mxu0 %v8130
  %v8132 = vpop.f32.mrb[0].mxu0
  %v8133 = vadd.f32 %v8042, %v8132
  %v8134 = vpop.f32.mrb[0].mxu0
  %8135 = vmatprep.mubr.f32.mxu0 0.0
  %v8136 = vand.u32 %v7966, 4294901760
  %8137 = vmatmul.mubr.f32.gmra.mrb[0].mxu0 %v8136
  %v8138 = vpop.f32.mrb[0].mxu0
  %v8139 = vadd.f32 %v8052, %v8138
  %v8140 = vpop.f32.mrb[0].mxu0
  %8141 = vdwg.mxu0
  %8142 = vmatprep.subr.mxu0 0.0
  %v8143 = vand.u32 %v7950, 4294901760
  %v8144 = vsub.f32 %v7950, %v8143
  %8145 = vmatpush1.msra.mxu0 %v8144
  %8146 = vmatprep.subr.mxu0 0.0
  %v8147 = vand.u32 %v7956, 4294901760
  %v8148 = vsub.f32 %v7956, %v8147
  %8149 = vmatpush1.msra.mxu0 %v8148
  %8150 = vmatprep.subr.mxu0 0.0
  %8151 = vmatpush1.msra.mxu0 0.0
  %8152 = vmatprep.subr.mxu0 0.0
  %8153 = vmatpush1.msra.mxu0 0.0
  %8154 = vmatprep.subr.mxu0 0.0
  %8155 = vmatpush1.msra.mxu0 0.0
  %8156 = vmatprep.subr.mxu0 0.0
  %8157 = vmatpush1.msra.mxu0 0.0
  %8158 = vmatprep.subr.mxu0 0.0
  %8159 = vmatpush1.msra.mxu0 0.0
  %8160 = vmatprep.subr.mxu0 0.0
  %8161 = vmatpush1.msra.mxu0 0.0
  %8162 = vmatprep.subr.mxu0 0.0
  %8163 = vmatpush1.msra.mxu0 0.0
  %8164 = vmatprep.subr.mxu0 0.0
  %8165 = vmatpush1.msra.mxu0 0.0
  %8166 = vmatprep.subr.mxu0 0.0
  %8167 = vmatpush1.msra.mxu0 0.0
  %8168 = vmatprep.subr.mxu0 0.0
  %8169 = vmatpush1.msra.mxu0 0.0
  %8170 = vmatprep.subr.mxu0 0.0
  %8171 = vmatpush1.msra.mxu0 0.0
  %8172 = vmatprep.subr.mxu0 0.0
  %8173 = vmatpush1.msra.mxu0 0.0
  %8174 = vmatprep.subr.mxu0 0.0
  %8175 = vmatpush1.msra.mxu0 0.0
  %8176 = vmatprep.subr.mxu0 0.0
  %8177 = vmatpush1.msra.mxu0 0.0
  %8178 = vmatprep.subr.mxu0 0.0
  %8179 = vmatpush1.msra.mxu0 0.0
  %8180 = vmatprep.subr.mxu0 0.0
  %8181 = vmatpush1.msra.mxu0 0.0
  %8182 = vmatprep.subr.mxu0 0.0
  %8183 = vmatpush1.msra.mxu0 0.0
  %8184 = vmatprep.subr.mxu0 0.0
  %8185 = vmatpush1.msra.mxu0 0.0
  %8186 = vmatprep.subr.mxu0 0.0
  %8187 = vmatpush1.msra.mxu0 0.0
  %8188 = vmatprep.subr.mxu0 0.0
  %8189 = vmatpush1.msra.mxu0 0.0
  %8190 = vmatprep.subr.mxu0 0.0
  %8191 = vmatpush1.msra.mxu0 0.0
  %8192 = vmatprep.subr.mxu0 0.0
  %8193 = vmatpush1.msra.mxu0 0.0
  %8194 = vmatprep.subr.mxu0 0.0
  %8195 = vmatpush1.msra.mxu0 0.0
  %8196 = vmatprep.subr.mxu0 0.0
  %8197 = vmatpush1.msra.mxu0 0.0
  %8198 = vmatprep.subr.mxu0 0.0
  %8199 = vmatpush1.msra.mxu0 0.0
  %8200 = vmatprep.subr.mxu0 0.0
  %8201 = vmatpush1.msra.mxu0 0.0
  %8202 = vmatprep.subr.mxu0 0.0
  %8203 = vmatpush1.msra.mxu0 0.0
  %8204 = vmatprep.subr.mxu0 0.0
  %8205 = vmatpush1.msra.mxu0 0.0
  %8206 = vmatprep.subr.mxu0 0.0
  %8207 = vmatpush1.msra.mxu0 0.0
  %8208 = vmatprep.subr.mxu0 0.0
  %8209 = vmatpush1.msra.mxu0 0.0
  %8210 = vmatprep.mubr.f32.mxu0 0.0
  %v8211 = vand.u32 %v7963, 4294901760
  %v8212 = vsub.f32 %v7963, %v8211
  %8213 = vmatmul.mubr.f32.gmra.mrb[0].mxu0 %v8212
  %v8214 = vpop.f32.mrb[0].mxu0
  %v8215 = vadd.f32 %v8133, %v8214
  %v8216 = vpop.f32.mrb[0].mxu0
  %8217 = vmatprep.mubr.f32.mxu0 0.0
  %v8218 = vand.u32 %v7966, 4294901760
  %v8219 = vsub.f32 %v7966, %v8218
  %8220 = vmatmul.mubr.f32.gmra.mrb[0].mxu0 %v8219
  %v8221 = vpop.f32.mrb[0].mxu0
  %v8222 = vadd.f32 %v8139, %v8221
  %v8223 = vpop.f32.mrb[0].mxu0
  %8224 = vdwg.mxu0
  %8225 = vmatprep.subr.mxu0 0.0
  %v8226 = vand.u32 %v7950, 4294901760
  %8227 = vmatpush1.msra.mxu0 %v8226
  %8228 = vmatprep.subr.mxu0 0.0
  %v8229 = vand.u32 %v7956, 4294901760
  %8230 = vmatpush1.msra.mxu0 %v8229
  %8231 = vmatprep.subr.mxu0 0.0
  %8232 = vmatpush1.msra.mxu0 0.0
  %8233 = vmatprep.subr.mxu0 0.0
  %8234 = vmatpush1.msra.mxu0 0.0
  %8235 = vmatprep.subr.mxu0 0.0
  %8236 = vmatpush1.msra.mxu0 0.0
  %8237 = vmatprep.subr.mxu0 0.0
  %8238 = vmatpush1.msra.mxu0 0.0
  %8239 = vmatprep.subr.mxu0 0.0
  %8240 = vmatpush1.msra.mxu0 0.0
  %8241 = vmatprep.subr.mxu0 0.0
  %8242 = vmatpush1.msra.mxu0 0.0
  %8243 = vmatprep.subr.mxu0 0.0
  %8244 = vmatpush1.msra.mxu0 0.0
  %8245 = vmatprep.subr.mxu0 0.0
  %8246 = vmatpush1.msra.mxu0 0.0
  %8247 = vmatprep.subr.mxu0 0.0
  %8248 = vmatpush1.msra.mxu0 0.0
  %8249 = vmatprep.subr.mxu0 0.0
  %8250 = vmatpush1.msra.mxu0 0.0
  %8251 = vmatprep.subr.mxu0 0.0
  %8252 = vmatpush1.msra.mxu0 0.0
  %8253 = vmatprep.subr.mxu0 0.0
  %8254 = vmatpush1.msra.mxu0 0.0
  %8255 = vmatprep.subr.mxu0 0.0
  %8256 = vmatpush1.msra.mxu0 0.0
  %8257 = vmatprep.subr.mxu0 0.0
  %8258 = vmatpush1.msra.mxu0 0.0
  %8259 = vmatprep.subr.mxu0 0.0
  %8260 = vmatpush1.msra.mxu0 0.0
  %8261 = vmatprep.subr.mxu0 0.0
  %8262 = vmatpush1.msra.mxu0 0.0
  %8263 = vmatprep.subr.mxu0 0.0
  %8264 = vmatpush1.msra.mxu0 0.0
  %8265 = vmatprep.subr.mxu0 0.0
  %8266 = vmatpush1.msra.mxu0 0.0
  %8267 = vmatprep.subr.mxu0 0.0
  %8268 = vmatpush1.msra.mxu0 0.0
  %8269 = vmatprep.subr.mxu0 0.0
  %8270 = vmatpush1.msra.mxu0 0.0
  %8271 = vmatprep.subr.mxu0 0.0
  %8272 = vmatpush1.msra.mxu0 0.0
  %8273 = vmatprep.subr.mxu0 0.0
  %8274 = vmatpush1.msra.mxu0 0.0
  %8275 = vmatprep.subr.mxu0 0.0
  %8276 = vmatpush1.msra.mxu0 0.0
  %8277 = vmatprep.subr.mxu0 0.0
  %8278 = vmatpush1.msra.mxu0 0.0
  %8279 = vmatprep.subr.mxu0 0.0
  %8280 = vmatpush1.msra.mxu0 0.0
  %8281 = vmatprep.subr.mxu0 0.0
  %8282 = vmatpush1.msra.mxu0 0.0
  %8283 = vmatprep.subr.mxu0 0.0
  %8284 = vmatpush1.msra.mxu0 0.0
  %8285 = vmatprep.subr.mxu0 0.0
  %8286 = vmatpush1.msra.mxu0 0.0
  %8287 = vmatprep.subr.mxu0 0.0
  %8288 = vmatpush1.msra.mxu0 0.0
  %8289 = vmatprep.subr.mxu0 0.0
  %8290 = vmatpush1.msra.mxu0 0.0
  %8291 = vmatprep.mubr.f32.mxu0 0.0
  %v8292 = vand.u32 %v7963, 4294901760
  %v8293 = vsub.f32 %v7963, %v8292
  %v8294 = vand.u32 %v8293, 4294901760
  %8295 = vmatmul.mubr.f32.gmra.mrb[0].mxu0 %v8294
  %v8296 = vpop.f32.mrb[0].mxu0
  %v8297 = vadd.f32 %v8215, %v8296
  %v8298 = vpop.f32.mrb[0].mxu0
  %8299 = vmatprep.mubr.f32.mxu0 0.0
  %v8300 = vand.u32 %v7966, 4294901760
  %v8301 = vsub.f32 %v7966, %v8300
  %v8302 = vand.u32 %v8301, 4294901760
  %8303 = vmatmul.mubr.f32.gmra.mrb[0].mxu0 %v8302
  %v8304 = vpop.f32.mrb[0].mxu0
  %v8305 = vadd.f32 %v8222, %v8304
  %v8306 = vpop.f32.mrb[0].mxu0
  %8307 = vdwg.mxu0
  %8308 = vmatprep.subr.mxu0 0.0
  %v8309 = vand.u32 %v7950, 4294901760
  %v8310 = vsub.f32 %v7950, %v8309
  %v8311 = vand.u32 %v8310, 4294901760
  %8312 = vmatpush1.msra.mxu0 %v8311
  %8313 = vmatprep.subr.mxu0 0.0
  %v8314 = vand.u32 %v7956, 4294901760
  %v8315 = vsub.f32 %v7956, %v8314
  %v8316 = vand.u32 %v8315, 4294901760
  %8317 = vmatpush1.msra.mxu0 %v8316
  %8318 = vmatprep.subr.mxu0 0.0
  %8319 = vmatpush1.msra.mxu0 0.0
  %8320 = vmatprep.subr.mxu0 0.0
  %8321 = vmatpush1.msra.mxu0 0.0
  %8322 = vmatprep.subr.mxu0 0.0
  %8323 = vmatpush1.msra.mxu0 0.0
  %8324 = vmatprep.subr.mxu0 0.0
  %8325 = vmatpush1.msra.mxu0 0.0
  %8326 = vmatprep.subr.mxu0 0.0
  %8327 = vmatpush1.msra.mxu0 0.0
  %8328 = vmatprep.subr.mxu0 0.0
  %8329 = vmatpush1.msra.mxu0 0.0
  %8330 = vmatprep.subr.mxu0 0.0
  %8331 = vmatpush1.msra.mxu0 0.0
  %8332 = vmatprep.subr.mxu0 0.0
  %8333 = vmatpush1.msra.mxu0 0.0
  %8334 = vmatprep.subr.mxu0 0.0
  %8335 = vmatpush1.msra.mxu0 0.0
  %8336 = vmatprep.subr.mxu0 0.0
  %8337 = vmatpush1.msra.mxu0 0.0
  %8338 = vmatprep.subr.mxu0 0.0
  %8339 = vmatpush1.msra.mxu0 0.0
  %8340 = vmatprep.subr.mxu0 0.0
  %8341 = vmatpush1.msra.mxu0 0.0
  %8342 = vmatprep.subr.mxu0 0.0
  %8343 = vmatpush1.msra.mxu0 0.0
  %8344 = vmatprep.subr.mxu0 0.0
  %8345 = vmatpush1.msra.mxu0 0.0
  %8346 = vmatprep.subr.mxu0 0.0
  %8347 = vmatpush1.msra.mxu0 0.0
  %8348 = vmatprep.subr.mxu0 0.0
  %8349 = vmatpush1.msra.mxu0 0.0
  %8350 = vmatprep.subr.mxu0 0.0
  %8351 = vmatpush1.msra.mxu0 0.0
  %8352 = vmatprep.subr.mxu0 0.0
  %8353 = vmatpush1.msra.mxu0 0.0
  %8354 = vmatprep.subr.mxu0 0.0
  %8355 = vmatpush1.msra.mxu0 0.0
  %8356 = vmatprep.subr.mxu0 0.0
  %8357 = vmatpush1.msra.mxu0 0.0
  %8358 = vmatprep.subr.mxu0 0.0
  %8359 = vmatpush1.msra.mxu0 0.0
  %8360 = vmatprep.subr.mxu0 0.0
  %8361 = vmatpush1.msra.mxu0 0.0
  %8362 = vmatprep.subr.mxu0 0.0
  %8363 = vmatpush1.msra.mxu0 0.0
  %8364 = vmatprep.subr.mxu0 0.0
  %8365 = vmatpush1.msra.mxu0 0.0
  %8366 = vmatprep.subr.mxu0 0.0
  %8367 = vmatpush1.msra.mxu0 0.0
  %8368 = vmatprep.subr.mxu0 0.0
  %8369 = vmatpush1.msra.mxu0 0.0
  %8370 = vmatprep.subr.mxu0 0.0
  %8371 = vmatpush1.msra.mxu0 0.0
  %8372 = vmatprep.subr.mxu0 0.0
  %8373 = vmatpush1.msra.mxu0 0.0
  %8374 = vmatprep.subr.mxu0 0.0
  %8375 = vmatpush1.msra.mxu0 0.0
  %8376 = vmatprep.subr.mxu0 0.0
  %8377 = vmatpush1.msra.mxu0 0.0
  %8378 = vmatprep.mubr.f32.mxu0 0.0
  %v8379 = vand.u32 %v7963, 4294901760
  %8380 = vmatmul.mubr.f32.gmra.mrb[0].mxu0 %v8379
  %v8381 = vpop.f32.mrb[0].mxu0
  %v8382 = vadd.f32 %v8297, %v8381
  %v8383 = vpop.f32.mrb[0].mxu0
  %8384 = vmatprep.mubr.f32.mxu0 0.0
  %v8385 = vand.u32 %v7966, 4294901760
  %8386 = vmatmul.mubr.f32.gmra.mrb[0].mxu0 %v8385
  %v8387 = vpop.f32.mrb[0].mxu0
  %v8388 = vadd.f32 %v8305, %v8387
  %v8389 = vpop.f32.mrb[0].mxu0
  %8390 = vdwg.mxu0
  %8391 = vmatprep.subr.mxu0 0.0
  %v8392 = vand.u32 %v7950, 4294901760
  %8393 = vmatpush1.msra.mxu0 %v8392
  %8394 = vmatprep.subr.mxu0 0.0
  %v8395 = vand.u32 %v7956, 4294901760
  %8396 = vmatpush1.msra.mxu0 %v8395
  %8397 = vmatprep.subr.mxu0 0.0
  %8398 = vmatpush1.msra.mxu0 0.0
  %8399 = vmatprep.subr.mxu0 0.0
  %8400 = vmatpush1.msra.mxu0 0.0
  %8401 = vmatprep.subr.mxu0 0.0
  %8402 = vmatpush1.msra.mxu0 0.0
  %8403 = vmatprep.subr.mxu0 0.0
  %8404 = vmatpush1.msra.mxu0 0.0
  %8405 = vmatprep.subr.mxu0 0.0
  %8406 = vmatpush1.msra.mxu0 0.0
  %8407 = vmatprep.subr.mxu0 0.0
  %8408 = vmatpush1.msra.mxu0 0.0
  %8409 = vmatprep.subr.mxu0 0.0
  %8410 = vmatpush1.msra.mxu0 0.0
  %8411 = vmatprep.subr.mxu0 0.0
  %8412 = vmatpush1.msra.mxu0 0.0
  %8413 = vmatprep.subr.mxu0 0.0
  %8414 = vmatpush1.msra.mxu0 0.0
  %8415 = vmatprep.subr.mxu0 0.0
  %8416 = vmatpush1.msra.mxu0 0.0
  %8417 = vmatprep.subr.mxu0 0.0
  %8418 = vmatpush1.msra.mxu0 0.0
  %8419 = vmatprep.subr.mxu0 0.0
  %8420 = vmatpush1.msra.mxu0 0.0
  %8421 = vmatprep.subr.mxu0 0.0
  %8422 = vmatpush1.msra.mxu0 0.0
  %8423 = vmatprep.subr.mxu0 0.0
  %8424 = vmatpush1.msra.mxu0 0.0
  %8425 = vmatprep.subr.mxu0 0.0
  %8426 = vmatpush1.msra.mxu0 0.0
  %8427 = vmatprep.subr.mxu0 0.0
  %8428 = vmatpush1.msra.mxu0 0.0
  %8429 = vmatprep.subr.mxu0 0.0
  %8430 = vmatpush1.msra.mxu0 0.0
  %8431 = vmatprep.subr.mxu0 0.0
  %8432 = vmatpush1.msra.mxu0 0.0
  %8433 = vmatprep.subr.mxu0 0.0
  %8434 = vmatpush1.msra.mxu0 0.0
  %8435 = vmatprep.subr.mxu0 0.0
  %8436 = vmatpush1.msra.mxu0 0.0
  %8437 = vmatprep.subr.mxu0 0.0
  %8438 = vmatpush1.msra.mxu0 0.0
  %8439 = vmatprep.subr.mxu0 0.0
  %8440 = vmatpush1.msra.mxu0 0.0
  %8441 = vmatprep.subr.mxu0 0.0
  %8442 = vmatpush1.msra.mxu0 0.0
  %8443 = vmatprep.subr.mxu0 0.0
  %8444 = vmatpush1.msra.mxu0 0.0
  %8445 = vmatprep.subr.mxu0 0.0
  %8446 = vmatpush1.msra.mxu0 0.0
  %8447 = vmatprep.subr.mxu0 0.0
  %8448 = vmatpush1.msra.mxu0 0.0
  %8449 = vmatprep.subr.mxu0 0.0
  %8450 = vmatpush1.msra.mxu0 0.0
  %8451 = vmatprep.subr.mxu0 0.0
  %8452 = vmatpush1.msra.mxu0 0.0
  %8453 = vmatprep.subr.mxu0 0.0
  %8454 = vmatpush1.msra.mxu0 0.0
  %8455 = vmatprep.subr.mxu0 0.0
  %8456 = vmatpush1.msra.mxu0 0.0
  %8457 = vmatprep.mubr.f32.mxu0 0.0
  %v8458 = vand.u32 %v7963, 4294901760
  %8459 = vmatmul.mubr.f32.gmra.mrb[0].mxu0 %v8458
  %v8460 = vpop.f32.mrb[0].mxu0
  %v8461 = vadd.f32 %v8382, %v8460
  %v8462 = vpop.f32.mrb[0].mxu0
  %8463 = vmatprep.mubr.f32.mxu0 0.0
  %v8464 = vand.u32 %v7966, 4294901760
  %8465 = vmatmul.mubr.f32.gmra.mrb[0].mxu0 %v8464
  %v8466 = vpop.f32.mrb[0].mxu0
  %v8467 = vadd.f32 %v8388, %v8466
  %v8468 = vpop.f32.mrb[0].mxu0
  %8469 = vdwg.mxu0
  %v8470 = vmax.f32 %v8461, 0.0
  %v8471 = vmax.f32 %v8467, 0.0
  %s8472 = scalar_lea.vmem %s2, 32
  %v8473 = vld [vmem:[%s8472] sm:$0xff]
  %v8474 = vld [vmem:[%s8472 + $0x8] sm:$0xff]
  %v8476 = vsel %vm41, %v8473, 0
  %v8479 = vsel %vm41, %v8474, 0
  %8481 = vmatprep.subr.mxu0 0.0
  %v8482 = vand.u32 %v3506, 4294901760
  %8483 = vmatpush1.msra.mxu0 %v8482
  %8484 = vmatprep.subr.mxu0 0.0
  %8485 = vmatpush1.msra.mxu0 0.0
  %8486 = vmatprep.subr.mxu0 0.0
  %8487 = vmatpush1.msra.mxu0 0.0
  %8488 = vmatprep.subr.mxu0 0.0
  %8489 = vmatpush1.msra.mxu0 0.0
  %8490 = vmatprep.subr.mxu0 0.0
  %8491 = vmatpush1.msra.mxu0 0.0
  %8492 = vmatprep.subr.mxu0 0.0
  %8493 = vmatpush1.msra.mxu0 0.0
  %8494 = vmatprep.subr.mxu0 0.0
  %8495 = vmatpush1.msra.mxu0 0.0
  %8496 = vmatprep.subr.mxu0 0.0
  %8497 = vmatpush1.msra.mxu0 0.0
  %8498 = vmatprep.subr.mxu0 0.0
  %8499 = vmatpush1.msra.mxu0 0.0
  %8500 = vmatprep.subr.mxu0 0.0
  %8501 = vmatpush1.msra.mxu0 0.0
  %8502 = vmatprep.subr.mxu0 0.0
  %8503 = vmatpush1.msra.mxu0 0.0
  %8504 = vmatprep.subr.mxu0 0.0
  %8505 = vmatpush1.msra.mxu0 0.0
  %8506 = vmatprep.subr.mxu0 0.0
  %8507 = vmatpush1.msra.mxu0 0.0
  %8508 = vmatprep.subr.mxu0 0.0
  %8509 = vmatpush1.msra.mxu0 0.0
  %8510 = vmatprep.subr.mxu0 0.0
  %8511 = vmatpush1.msra.mxu0 0.0
  %8512 = vmatprep.subr.mxu0 0.0
  %8513 = vmatpush1.msra.mxu0 0.0
  %8514 = vmatprep.subr.mxu0 0.0
  %8515 = vmatpush1.msra.mxu0 0.0
  %8516 = vmatprep.subr.mxu0 0.0
  %8517 = vmatpush1.msra.mxu0 0.0
  %8518 = vmatprep.subr.mxu0 0.0
  %8519 = vmatpush1.msra.mxu0 0.0
  %8520 = vmatprep.subr.mxu0 0.0
  %8521 = vmatpush1.msra.mxu0 0.0
  %8522 = vmatprep.subr.mxu0 0.0
  %8523 = vmatpush1.msra.mxu0 0.0
  %8524 = vmatprep.subr.mxu0 0.0
  %8525 = vmatpush1.msra.mxu0 0.0
  %8526 = vmatprep.subr.mxu0 0.0
  %8527 = vmatpush1.msra.mxu0 0.0
  %8528 = vmatprep.subr.mxu0 0.0
  %8529 = vmatpush1.msra.mxu0 0.0
  %8530 = vmatprep.subr.mxu0 0.0
  %8531 = vmatpush1.msra.mxu0 0.0
  %8532 = vmatprep.subr.mxu0 0.0
  %8533 = vmatpush1.msra.mxu0 0.0
  %8534 = vmatprep.subr.mxu0 0.0
  %8535 = vmatpush1.msra.mxu0 0.0
  %8536 = vmatprep.subr.mxu0 0.0
  %8537 = vmatpush1.msra.mxu0 0.0
  %8538 = vmatprep.subr.mxu0 0.0
  %8539 = vmatpush1.msra.mxu0 0.0
  %8540 = vmatprep.subr.mxu0 0.0
  %8541 = vmatpush1.msra.mxu0 0.0
  %8542 = vmatprep.subr.mxu0 0.0
  %8543 = vmatpush1.msra.mxu0 0.0
  %8544 = vmatprep.subr.mxu0 0.0
  %8545 = vmatpush1.msra.mxu0 0.0
  %8546 = vmatprep.mubr.f32.mxu0 0.0
  %v8547 = vand.u32 %v8476, 4294901760
  %v8548 = vsub.f32 %v8476, %v8547
  %v8549 = vand.u32 %v8548, 4294901760
  %v8550 = vsub.f32 %v8548, %v8549
  %v8551 = vand.u32 %v8550, 4294901760
  %8552 = vmatmul.mubr.f32.gmra.mrb[0].mxu0 %v8551
  %v8553 = vpop.f32.mrb[0].mxu0
  %v8554 = vadd.f32 0.0, %v8553
  %v8555 = vpop.f32.mrb[0].mxu0
  %8556 = vmatprep.mubr.f32.mxu0 0.0
  %v8557 = vand.u32 %v8479, 4294901760
  %v8558 = vsub.f32 %v8479, %v8557
  %v8559 = vand.u32 %v8558, 4294901760
  %v8560 = vsub.f32 %v8558, %v8559
  %v8561 = vand.u32 %v8560, 4294901760
  %8562 = vmatmul.mubr.f32.gmra.mrb[0].mxu0 %v8561
  %v8563 = vpop.f32.mrb[0].mxu0
  %v8564 = vadd.f32 0.0, %v8563
  %v8565 = vpop.f32.mrb[0].mxu0
  %8566 = vdwg.mxu0
  %8567 = vmatprep.subr.mxu0 0.0
  %v8568 = vand.u32 %v3506, 4294901760
  %v8569 = vsub.f32 %v3506, %v8568
  %v8570 = vand.u32 %v8569, 4294901760
  %v8571 = vsub.f32 %v8569, %v8570
  %v8572 = vand.u32 %v8571, 4294901760
  %8573 = vmatpush1.msra.mxu0 %v8572
  %8574 = vmatprep.subr.mxu0 0.0
  %8575 = vmatpush1.msra.mxu0 0.0
  %8576 = vmatprep.subr.mxu0 0.0
  %8577 = vmatpush1.msra.mxu0 0.0
  %8578 = vmatprep.subr.mxu0 0.0
  %8579 = vmatpush1.msra.mxu0 0.0
  %8580 = vmatprep.subr.mxu0 0.0
  %8581 = vmatpush1.msra.mxu0 0.0
  %8582 = vmatprep.subr.mxu0 0.0
  %8583 = vmatpush1.msra.mxu0 0.0
  %8584 = vmatprep.subr.mxu0 0.0
  %8585 = vmatpush1.msra.mxu0 0.0
  %8586 = vmatprep.subr.mxu0 0.0
  %8587 = vmatpush1.msra.mxu0 0.0
  %8588 = vmatprep.subr.mxu0 0.0
  %8589 = vmatpush1.msra.mxu0 0.0
  %8590 = vmatprep.subr.mxu0 0.0
  %8591 = vmatpush1.msra.mxu0 0.0
  %8592 = vmatprep.subr.mxu0 0.0
  %8593 = vmatpush1.msra.mxu0 0.0
  %8594 = vmatprep.subr.mxu0 0.0
  %8595 = vmatpush1.msra.mxu0 0.0
  %8596 = vmatprep.subr.mxu0 0.0
  %8597 = vmatpush1.msra.mxu0 0.0
  %8598 = vmatprep.subr.mxu0 0.0
  %8599 = vmatpush1.msra.mxu0 0.0
  %8600 = vmatprep.subr.mxu0 0.0
  %8601 = vmatpush1.msra.mxu0 0.0
  %8602 = vmatprep.subr.mxu0 0.0
  %8603 = vmatpush1.msra.mxu0 0.0
  %8604 = vmatprep.subr.mxu0 0.0
  %8605 = vmatpush1.msra.mxu0 0.0
  %8606 = vmatprep.subr.mxu0 0.0
  %8607 = vmatpush1.msra.mxu0 0.0
  %8608 = vmatprep.subr.mxu0 0.0
  %8609 = vmatpush1.msra.mxu0 0.0
  %8610 = vmatprep.subr.mxu0 0.0
  %8611 = vmatpush1.msra.mxu0 0.0
  %8612 = vmatprep.subr.mxu0 0.0
  %8613 = vmatpush1.msra.mxu0 0.0
  %8614 = vmatprep.subr.mxu0 0.0
  %8615 = vmatpush1.msra.mxu0 0.0
  %8616 = vmatprep.subr.mxu0 0.0
  %8617 = vmatpush1.msra.mxu0 0.0
  %8618 = vmatprep.subr.mxu0 0.0
  %8619 = vmatpush1.msra.mxu0 0.0
  %8620 = vmatprep.subr.mxu0 0.0
  %8621 = vmatpush1.msra.mxu0 0.0
  %8622 = vmatprep.subr.mxu0 0.0
  %8623 = vmatpush1.msra.mxu0 0.0
  %8624 = vmatprep.subr.mxu0 0.0
  %8625 = vmatpush1.msra.mxu0 0.0
  %8626 = vmatprep.subr.mxu0 0.0
  %8627 = vmatpush1.msra.mxu0 0.0
  %8628 = vmatprep.subr.mxu0 0.0
  %8629 = vmatpush1.msra.mxu0 0.0
  %8630 = vmatprep.subr.mxu0 0.0
  %8631 = vmatpush1.msra.mxu0 0.0
  %8632 = vmatprep.subr.mxu0 0.0
  %8633 = vmatpush1.msra.mxu0 0.0
  %8634 = vmatprep.subr.mxu0 0.0
  %8635 = vmatpush1.msra.mxu0 0.0
  %8636 = vmatprep.mubr.f32.mxu0 0.0
  %v8637 = vand.u32 %v8476, 4294901760
  %8638 = vmatmul.mubr.f32.gmra.mrb[0].mxu0 %v8637
  %v8639 = vpop.f32.mrb[0].mxu0
  %v8640 = vadd.f32 %v8554, %v8639
  %v8641 = vpop.f32.mrb[0].mxu0
  %8642 = vmatprep.mubr.f32.mxu0 0.0
  %v8643 = vand.u32 %v8479, 4294901760
  %8644 = vmatmul.mubr.f32.gmra.mrb[0].mxu0 %v8643
  %v8645 = vpop.f32.mrb[0].mxu0
  %v8646 = vadd.f32 %v8564, %v8645
  %v8647 = vpop.f32.mrb[0].mxu0
  %8648 = vdwg.mxu0
  %8649 = vmatprep.subr.mxu0 0.0
  %v8650 = vand.u32 %v3506, 4294901760
  %v8651 = vsub.f32 %v3506, %v8650
  %8652 = vmatpush1.msra.mxu0 %v8651
  %8653 = vmatprep.subr.mxu0 0.0
  %8654 = vmatpush1.msra.mxu0 0.0
  %8655 = vmatprep.subr.mxu0 0.0
  %8656 = vmatpush1.msra.mxu0 0.0
  %8657 = vmatprep.subr.mxu0 0.0
  %8658 = vmatpush1.msra.mxu0 0.0
  %8659 = vmatprep.subr.mxu0 0.0
  %8660 = vmatpush1.msra.mxu0 0.0
  %8661 = vmatprep.subr.mxu0 0.0
  %8662 = vmatpush1.msra.mxu0 0.0
  %8663 = vmatprep.subr.mxu0 0.0
  %8664 = vmatpush1.msra.mxu0 0.0
  %8665 = vmatprep.subr.mxu0 0.0
  %8666 = vmatpush1.msra.mxu0 0.0
  %8667 = vmatprep.subr.mxu0 0.0
  %8668 = vmatpush1.msra.mxu0 0.0
  %8669 = vmatprep.subr.mxu0 0.0
  %8670 = vmatpush1.msra.mxu0 0.0
  %8671 = vmatprep.subr.mxu0 0.0
  %8672 = vmatpush1.msra.mxu0 0.0
  %8673 = vmatprep.subr.mxu0 0.0
  %8674 = vmatpush1.msra.mxu0 0.0
  %8675 = vmatprep.subr.mxu0 0.0
  %8676 = vmatpush1.msra.mxu0 0.0
  %8677 = vmatprep.subr.mxu0 0.0
  %8678 = vmatpush1.msra.mxu0 0.0
  %8679 = vmatprep.subr.mxu0 0.0
  %8680 = vmatpush1.msra.mxu0 0.0
  %8681 = vmatprep.subr.mxu0 0.0
  %8682 = vmatpush1.msra.mxu0 0.0
  %8683 = vmatprep.subr.mxu0 0.0
  %8684 = vmatpush1.msra.mxu0 0.0
  %8685 = vmatprep.subr.mxu0 0.0
  %8686 = vmatpush1.msra.mxu0 0.0
  %8687 = vmatprep.subr.mxu0 0.0
  %8688 = vmatpush1.msra.mxu0 0.0
  %8689 = vmatprep.subr.mxu0 0.0
  %8690 = vmatpush1.msra.mxu0 0.0
  %8691 = vmatprep.subr.mxu0 0.0
  %8692 = vmatpush1.msra.mxu0 0.0
  %8693 = vmatprep.subr.mxu0 0.0
  %8694 = vmatpush1.msra.mxu0 0.0
  %8695 = vmatprep.subr.mxu0 0.0
  %8696 = vmatpush1.msra.mxu0 0.0
  %8697 = vmatprep.subr.mxu0 0.0
  %8698 = vmatpush1.msra.mxu0 0.0
  %8699 = vmatprep.subr.mxu0 0.0
  %8700 = vmatpush1.msra.mxu0 0.0
  %8701 = vmatprep.subr.mxu0 0.0
  %8702 = vmatpush1.msra.mxu0 0.0
  %8703 = vmatprep.subr.mxu0 0.0
  %8704 = vmatpush1.msra.mxu0 0.0
  %8705 = vmatprep.subr.mxu0 0.0
  %8706 = vmatpush1.msra.mxu0 0.0
  %8707 = vmatprep.subr.mxu0 0.0
  %8708 = vmatpush1.msra.mxu0 0.0
  %8709 = vmatprep.subr.mxu0 0.0
  %8710 = vmatpush1.msra.mxu0 0.0
  %8711 = vmatprep.subr.mxu0 0.0
  %8712 = vmatpush1.msra.mxu0 0.0
  %8713 = vmatprep.subr.mxu0 0.0
  %8714 = vmatpush1.msra.mxu0 0.0
  %8715 = vmatprep.mubr.f32.mxu0 0.0
  %v8716 = vand.u32 %v8476, 4294901760
  %v8717 = vsub.f32 %v8476, %v8716
  %8718 = vmatmul.mubr.f32.gmra.mrb[0].mxu0 %v8717
  %v8719 = vpop.f32.mrb[0].mxu0
  %v8720 = vadd.f32 %v8640, %v8719
  %v8721 = vpop.f32.mrb[0].mxu0
  %8722 = vmatprep.mubr.f32.mxu0 0.0
  %v8723 = vand.u32 %v8479, 4294901760
  %v8724 = vsub.f32 %v8479, %v8723
  %8725 = vmatmul.mubr.f32.gmra.mrb[0].mxu0 %v8724
  %v8726 = vpop.f32.mrb[0].mxu0
  %v8727 = vadd.f32 %v8646, %v8726
  %v8728 = vpop.f32.mrb[0].mxu0
  %8729 = vdwg.mxu0
  %8730 = vmatprep.subr.mxu0 0.0
  %v8731 = vand.u32 %v3506, 4294901760
  %8732 = vmatpush1.msra.mxu0 %v8731
  %8733 = vmatprep.subr.mxu0 0.0
  %8734 = vmatpush1.msra.mxu0 0.0
  %8735 = vmatprep.subr.mxu0 0.0
  %8736 = vmatpush1.msra.mxu0 0.0
  %8737 = vmatprep.subr.mxu0 0.0
  %8738 = vmatpush1.msra.mxu0 0.0
  %8739 = vmatprep.subr.mxu0 0.0
  %8740 = vmatpush1.msra.mxu0 0.0
  %8741 = vmatprep.subr.mxu0 0.0
  %8742 = vmatpush1.msra.mxu0 0.0
  %8743 = vmatprep.subr.mxu0 0.0
  %8744 = vmatpush1.msra.mxu0 0.0
  %8745 = vmatprep.subr.mxu0 0.0
  %8746 = vmatpush1.msra.mxu0 0.0
  %8747 = vmatprep.subr.mxu0 0.0
  %8748 = vmatpush1.msra.mxu0 0.0
  %8749 = vmatprep.subr.mxu0 0.0
  %8750 = vmatpush1.msra.mxu0 0.0
  %8751 = vmatprep.subr.mxu0 0.0
  %8752 = vmatpush1.msra.mxu0 0.0
  %8753 = vmatprep.subr.mxu0 0.0
  %8754 = vmatpush1.msra.mxu0 0.0
  %8755 = vmatprep.subr.mxu0 0.0
  %8756 = vmatpush1.msra.mxu0 0.0
  %8757 = vmatprep.subr.mxu0 0.0
  %8758 = vmatpush1.msra.mxu0 0.0
  %8759 = vmatprep.subr.mxu0 0.0
  %8760 = vmatpush1.msra.mxu0 0.0
  %8761 = vmatprep.subr.mxu0 0.0
  %8762 = vmatpush1.msra.mxu0 0.0
  %8763 = vmatprep.subr.mxu0 0.0
  %8764 = vmatpush1.msra.mxu0 0.0
  %8765 = vmatprep.subr.mxu0 0.0
  %8766 = vmatpush1.msra.mxu0 0.0
  %8767 = vmatprep.subr.mxu0 0.0
  %8768 = vmatpush1.msra.mxu0 0.0
  %8769 = vmatprep.subr.mxu0 0.0
  %8770 = vmatpush1.msra.mxu0 0.0
  %8771 = vmatprep.subr.mxu0 0.0
  %8772 = vmatpush1.msra.mxu0 0.0
  %8773 = vmatprep.subr.mxu0 0.0
  %8774 = vmatpush1.msra.mxu0 0.0
  %8775 = vmatprep.subr.mxu0 0.0
  %8776 = vmatpush1.msra.mxu0 0.0
  %8777 = vmatprep.subr.mxu0 0.0
  %8778 = vmatpush1.msra.mxu0 0.0
  %8779 = vmatprep.subr.mxu0 0.0
  %8780 = vmatpush1.msra.mxu0 0.0
  %8781 = vmatprep.subr.mxu0 0.0
  %8782 = vmatpush1.msra.mxu0 0.0
  %8783 = vmatprep.subr.mxu0 0.0
  %8784 = vmatpush1.msra.mxu0 0.0
  %8785 = vmatprep.subr.mxu0 0.0
  %8786 = vmatpush1.msra.mxu0 0.0
  %8787 = vmatprep.subr.mxu0 0.0
  %8788 = vmatpush1.msra.mxu0 0.0
  %8789 = vmatprep.subr.mxu0 0.0
  %8790 = vmatpush1.msra.mxu0 0.0
  %8791 = vmatprep.subr.mxu0 0.0
  %8792 = vmatpush1.msra.mxu0 0.0
  %8793 = vmatprep.subr.mxu0 0.0
  %8794 = vmatpush1.msra.mxu0 0.0
  %8795 = vmatprep.mubr.f32.mxu0 0.0
  %v8796 = vand.u32 %v8476, 4294901760
  %v8797 = vsub.f32 %v8476, %v8796
  %v8798 = vand.u32 %v8797, 4294901760
  %8799 = vmatmul.mubr.f32.gmra.mrb[0].mxu0 %v8798
  %v8800 = vpop.f32.mrb[0].mxu0
  %v8801 = vadd.f32 %v8720, %v8800
  %v8802 = vpop.f32.mrb[0].mxu0
  %8803 = vmatprep.mubr.f32.mxu0 0.0
  %v8804 = vand.u32 %v8479, 4294901760
  %v8805 = vsub.f32 %v8479, %v8804
  %v8806 = vand.u32 %v8805, 4294901760
  %8807 = vmatmul.mubr.f32.gmra.mrb[0].mxu0 %v8806
  %v8808 = vpop.f32.mrb[0].mxu0
  %v8809 = vadd.f32 %v8727, %v8808
  %v8810 = vpop.f32.mrb[0].mxu0
  %8811 = vdwg.mxu0
  %8812 = vmatprep.subr.mxu0 0.0
  %v8813 = vand.u32 %v3506, 4294901760
  %v8814 = vsub.f32 %v3506, %v8813
  %v8815 = vand.u32 %v8814, 4294901760
  %8816 = vmatpush1.msra.mxu0 %v8815
  %8817 = vmatprep.subr.mxu0 0.0
  %8818 = vmatpush1.msra.mxu0 0.0
  %8819 = vmatprep.subr.mxu0 0.0
  %8820 = vmatpush1.msra.mxu0 0.0
  %8821 = vmatprep.subr.mxu0 0.0
  %8822 = vmatpush1.msra.mxu0 0.0
  %8823 = vmatprep.subr.mxu0 0.0
  %8824 = vmatpush1.msra.mxu0 0.0
  %8825 = vmatprep.subr.mxu0 0.0
  %8826 = vmatpush1.msra.mxu0 0.0
  %8827 = vmatprep.subr.mxu0 0.0
  %8828 = vmatpush1.msra.mxu0 0.0
  %8829 = vmatprep.subr.mxu0 0.0
  %8830 = vmatpush1.msra.mxu0 0.0
  %8831 = vmatprep.subr.mxu0 0.0
  %8832 = vmatpush1.msra.mxu0 0.0
  %8833 = vmatprep.subr.mxu0 0.0
  %8834 = vmatpush1.msra.mxu0 0.0
  %8835 = vmatprep.subr.mxu0 0.0
  %8836 = vmatpush1.msra.mxu0 0.0
  %8837 = vmatprep.subr.mxu0 0.0
  %8838 = vmatpush1.msra.mxu0 0.0
  %8839 = vmatprep.subr.mxu0 0.0
  %8840 = vmatpush1.msra.mxu0 0.0
  %8841 = vmatprep.subr.mxu0 0.0
  %8842 = vmatpush1.msra.mxu0 0.0
  %8843 = vmatprep.subr.mxu0 0.0
  %8844 = vmatpush1.msra.mxu0 0.0
  %8845 = vmatprep.subr.mxu0 0.0
  %8846 = vmatpush1.msra.mxu0 0.0
  %8847 = vmatprep.subr.mxu0 0.0
  %8848 = vmatpush1.msra.mxu0 0.0
  %8849 = vmatprep.subr.mxu0 0.0
  %8850 = vmatpush1.msra.mxu0 0.0
  %8851 = vmatprep.subr.mxu0 0.0
  %8852 = vmatpush1.msra.mxu0 0.0
  %8853 = vmatprep.subr.mxu0 0.0
  %8854 = vmatpush1.msra.mxu0 0.0
  %8855 = vmatprep.subr.mxu0 0.0
  %8856 = vmatpush1.msra.mxu0 0.0
  %8857 = vmatprep.subr.mxu0 0.0
  %8858 = vmatpush1.msra.mxu0 0.0
  %8859 = vmatprep.subr.mxu0 0.0
  %8860 = vmatpush1.msra.mxu0 0.0
  %8861 = vmatprep.subr.mxu0 0.0
  %8862 = vmatpush1.msra.mxu0 0.0
  %8863 = vmatprep.subr.mxu0 0.0
  %8864 = vmatpush1.msra.mxu0 0.0
  %8865 = vmatprep.subr.mxu0 0.0
  %8866 = vmatpush1.msra.mxu0 0.0
  %8867 = vmatprep.subr.mxu0 0.0
  %8868 = vmatpush1.msra.mxu0 0.0
  %8869 = vmatprep.subr.mxu0 0.0
  %8870 = vmatpush1.msra.mxu0 0.0
  %8871 = vmatprep.subr.mxu0 0.0
  %8872 = vmatpush1.msra.mxu0 0.0
  %8873 = vmatprep.subr.mxu0 0.0
  %8874 = vmatpush1.msra.mxu0 0.0
  %8875 = vmatprep.subr.mxu0 0.0
  %8876 = vmatpush1.msra.mxu0 0.0
  %8877 = vmatprep.subr.mxu0 0.0
  %8878 = vmatpush1.msra.mxu0 0.0
  %8879 = vmatprep.mubr.f32.mxu0 0.0
  %v8880 = vand.u32 %v8476, 4294901760
  %8881 = vmatmul.mubr.f32.gmra.mrb[0].mxu0 %v8880
  %v8882 = vpop.f32.mrb[0].mxu0
  %v8883 = vadd.f32 %v8801, %v8882
  %v8884 = vpop.f32.mrb[0].mxu0
  %8885 = vmatprep.mubr.f32.mxu0 0.0
  %v8886 = vand.u32 %v8479, 4294901760
  %8887 = vmatmul.mubr.f32.gmra.mrb[0].mxu0 %v8886
  %v8888 = vpop.f32.mrb[0].mxu0
  %v8889 = vadd.f32 %v8809, %v8888
  %v8890 = vpop.f32.mrb[0].mxu0
  %8891 = vdwg.mxu0
  %8892 = vmatprep.subr.mxu0 0.0
  %v8893 = vand.u32 %v3506, 4294901760
  %8894 = vmatpush1.msra.mxu0 %v8893
  %8895 = vmatprep.subr.mxu0 0.0
  %8896 = vmatpush1.msra.mxu0 0.0
  %8897 = vmatprep.subr.mxu0 0.0
  %8898 = vmatpush1.msra.mxu0 0.0
  %8899 = vmatprep.subr.mxu0 0.0
  %8900 = vmatpush1.msra.mxu0 0.0
  %8901 = vmatprep.subr.mxu0 0.0
  %8902 = vmatpush1.msra.mxu0 0.0
  %8903 = vmatprep.subr.mxu0 0.0
  %8904 = vmatpush1.msra.mxu0 0.0
  %8905 = vmatprep.subr.mxu0 0.0
  %8906 = vmatpush1.msra.mxu0 0.0
  %8907 = vmatprep.subr.mxu0 0.0
  %8908 = vmatpush1.msra.mxu0 0.0
  %8909 = vmatprep.subr.mxu0 0.0
  %8910 = vmatpush1.msra.mxu0 0.0
  %8911 = vmatprep.subr.mxu0 0.0
  %8912 = vmatpush1.msra.mxu0 0.0
  %8913 = vmatprep.subr.mxu0 0.0
  %8914 = vmatpush1.msra.mxu0 0.0
  %8915 = vmatprep.subr.mxu0 0.0
  %8916 = vmatpush1.msra.mxu0 0.0
  %8917 = vmatprep.subr.mxu0 0.0
  %8918 = vmatpush1.msra.mxu0 0.0
  %8919 = vmatprep.subr.mxu0 0.0
  %8920 = vmatpush1.msra.mxu0 0.0
  %8921 = vmatprep.subr.mxu0 0.0
  %8922 = vmatpush1.msra.mxu0 0.0
  %8923 = vmatprep.subr.mxu0 0.0
  %8924 = vmatpush1.msra.mxu0 0.0
  %8925 = vmatprep.subr.mxu0 0.0
  %8926 = vmatpush1.msra.mxu0 0.0
  %8927 = vmatprep.subr.mxu0 0.0
  %8928 = vmatpush1.msra.mxu0 0.0
  %8929 = vmatprep.subr.mxu0 0.0
  %8930 = vmatpush1.msra.mxu0 0.0
  %8931 = vmatprep.subr.mxu0 0.0
  %8932 = vmatpush1.msra.mxu0 0.0
  %8933 = vmatprep.subr.mxu0 0.0
  %8934 = vmatpush1.msra.mxu0 0.0
  %8935 = vmatprep.subr.mxu0 0.0
  %8936 = vmatpush1.msra.mxu0 0.0
  %8937 = vmatprep.subr.mxu0 0.0
  %8938 = vmatpush1.msra.mxu0 0.0
  %8939 = vmatprep.subr.mxu0 0.0
  %8940 = vmatpush1.msra.mxu0 0.0
  %8941 = vmatprep.subr.mxu0 0.0
  %8942 = vmatpush1.msra.mxu0 0.0
  %8943 = vmatprep.subr.mxu0 0.0
  %8944 = vmatpush1.msra.mxu0 0.0
  %8945 = vmatprep.subr.mxu0 0.0
  %8946 = vmatpush1.msra.mxu0 0.0
  %8947 = vmatprep.subr.mxu0 0.0
  %8948 = vmatpush1.msra.mxu0 0.0
  %8949 = vmatprep.subr.mxu0 0.0
  %8950 = vmatpush1.msra.mxu0 0.0
  %8951 = vmatprep.subr.mxu0 0.0
  %8952 = vmatpush1.msra.mxu0 0.0
  %8953 = vmatprep.subr.mxu0 0.0
  %8954 = vmatpush1.msra.mxu0 0.0
  %8955 = vmatprep.subr.mxu0 0.0
  %8956 = vmatpush1.msra.mxu0 0.0
  %8957 = vmatprep.mubr.f32.mxu0 0.0
  %v8958 = vand.u32 %v8476, 4294901760
  %8959 = vmatmul.mubr.f32.gmra.mrb[0].mxu0 %v8958
  %v8960 = vpop.f32.mrb[0].mxu0
  %v8961 = vadd.f32 %v8883, %v8960
  %v8962 = vpop.f32.mrb[0].mxu0
  %8963 = vmatprep.mubr.f32.mxu0 0.0
  %v8964 = vand.u32 %v8479, 4294901760
  %8965 = vmatmul.mubr.f32.gmra.mrb[0].mxu0 %v8964
  %v8966 = vpop.f32.mrb[0].mxu0
  %v8967 = vadd.f32 %v8889, %v8966
  %v8968 = vpop.f32.mrb[0].mxu0
  %8969 = vdwg.mxu0
  %s8970 = scalar_lea.vmem %s1, 32
  %v8971 = vld [vmem:[%s8970] sm:$0xff]
  %v8972 = vld [vmem:[%s8970 + $0x8] sm:$0xff]
  %v8974 = vsel %vm6442, %v8971, 0
  %v8977 = vsel %vm6442, %v8972, 0
  %8979 = vmatprep.subr.mxu0 0.0
  %v8980 = vand.u32 %v8961, 4294901760
  %8981 = vmatpush1.msra.mxu0 %v8980
  %8982 = vmatprep.subr.mxu0 0.0
  %v8983 = vand.u32 %v8967, 4294901760
  %8984 = vmatpush1.msra.mxu0 %v8983
  %8985 = vmatprep.subr.mxu0 0.0
  %8986 = vmatpush1.msra.mxu0 0.0
  %8987 = vmatprep.subr.mxu0 0.0
  %8988 = vmatpush1.msra.mxu0 0.0
  %8989 = vmatprep.subr.mxu0 0.0
  %8990 = vmatpush1.msra.mxu0 0.0
  %8991 = vmatprep.subr.mxu0 0.0
  %8992 = vmatpush1.msra.mxu0 0.0
  %8993 = vmatprep.subr.mxu0 0.0
  %8994 = vmatpush1.msra.mxu0 0.0
  %8995 = vmatprep.subr.mxu0 0.0
  %8996 = vmatpush1.msra.mxu0 0.0
  %8997 = vmatprep.subr.mxu0 0.0
  %8998 = vmatpush1.msra.mxu0 0.0
  %8999 = vmatprep.subr.mxu0 0.0
  %9000 = vmatpush1.msra.mxu0 0.0
  %9001 = vmatprep.subr.mxu0 0.0
  %9002 = vmatpush1.msra.mxu0 0.0
  %9003 = vmatprep.subr.mxu0 0.0
  %9004 = vmatpush1.msra.mxu0 0.0
  %9005 = vmatprep.subr.mxu0 0.0
  %9006 = vmatpush1.msra.mxu0 0.0
  %9007 = vmatprep.subr.mxu0 0.0
  %9008 = vmatpush1.msra.mxu0 0.0
  %9009 = vmatprep.subr.mxu0 0.0
  %9010 = vmatpush1.msra.mxu0 0.0
  %9011 = vmatprep.subr.mxu0 0.0
  %9012 = vmatpush1.msra.mxu0 0.0
  %9013 = vmatprep.subr.mxu0 0.0
  %9014 = vmatpush1.msra.mxu0 0.0
  %9015 = vmatprep.subr.mxu0 0.0
  %9016 = vmatpush1.msra.mxu0 0.0
  %9017 = vmatprep.subr.mxu0 0.0
  %9018 = vmatpush1.msra.mxu0 0.0
  %9019 = vmatprep.subr.mxu0 0.0
  %9020 = vmatpush1.msra.mxu0 0.0
  %9021 = vmatprep.subr.mxu0 0.0
  %9022 = vmatpush1.msra.mxu0 0.0
  %9023 = vmatprep.subr.mxu0 0.0
  %9024 = vmatpush1.msra.mxu0 0.0
  %9025 = vmatprep.subr.mxu0 0.0
  %9026 = vmatpush1.msra.mxu0 0.0
  %9027 = vmatprep.subr.mxu0 0.0
  %9028 = vmatpush1.msra.mxu0 0.0
  %9029 = vmatprep.subr.mxu0 0.0
  %9030 = vmatpush1.msra.mxu0 0.0
  %9031 = vmatprep.subr.mxu0 0.0
  %9032 = vmatpush1.msra.mxu0 0.0
  %9033 = vmatprep.subr.mxu0 0.0
  %9034 = vmatpush1.msra.mxu0 0.0
  %9035 = vmatprep.subr.mxu0 0.0
  %9036 = vmatpush1.msra.mxu0 0.0
  %9037 = vmatprep.subr.mxu0 0.0
  %9038 = vmatpush1.msra.mxu0 0.0
  %9039 = vmatprep.subr.mxu0 0.0
  %9040 = vmatpush1.msra.mxu0 0.0
  %9041 = vmatprep.subr.mxu0 0.0
  %9042 = vmatpush1.msra.mxu0 0.0
  %9043 = vmatprep.subr.mxu0 0.0
  %9044 = vmatpush1.msra.mxu0 0.0
  %9045 = vmatprep.mubr.f32.mxu0 0.0
  %v9046 = vand.u32 %v8974, 4294901760
  %v9047 = vsub.f32 %v8974, %v9046
  %v9048 = vand.u32 %v9047, 4294901760
  %v9049 = vsub.f32 %v9047, %v9048
  %v9050 = vand.u32 %v9049, 4294901760
  %9051 = vmatmul.mubr.f32.gmra.mrb[0].mxu0 %v9050
  %v9052 = vpop.f32.mrb[0].mxu0
  %v9053 = vadd.f32 0.0, %v9052
  %v9054 = vpop.f32.mrb[0].mxu0
  %9055 = vmatprep.mubr.f32.mxu0 0.0
  %v9056 = vand.u32 %v8977, 4294901760
  %v9057 = vsub.f32 %v8977, %v9056
  %v9058 = vand.u32 %v9057, 4294901760
  %v9059 = vsub.f32 %v9057, %v9058
  %v9060 = vand.u32 %v9059, 4294901760
  %9061 = vmatmul.mubr.f32.gmra.mrb[0].mxu0 %v9060
  %v9062 = vpop.f32.mrb[0].mxu0
  %v9063 = vadd.f32 0.0, %v9062
  %v9064 = vpop.f32.mrb[0].mxu0
  %9065 = vdwg.mxu0
  %9066 = vmatprep.subr.mxu0 0.0
  %v9067 = vand.u32 %v8961, 4294901760
  %v9068 = vsub.f32 %v8961, %v9067
  %v9069 = vand.u32 %v9068, 4294901760
  %v9070 = vsub.f32 %v9068, %v9069
  %v9071 = vand.u32 %v9070, 4294901760
  %9072 = vmatpush1.msra.mxu0 %v9071
  %9073 = vmatprep.subr.mxu0 0.0
  %v9074 = vand.u32 %v8967, 4294901760
  %v9075 = vsub.f32 %v8967, %v9074
  %v9076 = vand.u32 %v9075, 4294901760
  %v9077 = vsub.f32 %v9075, %v9076
  %v9078 = vand.u32 %v9077, 4294901760
  %9079 = vmatpush1.msra.mxu0 %v9078
  %9080 = vmatprep.subr.mxu0 0.0
  %9081 = vmatpush1.msra.mxu0 0.0
  %9082 = vmatprep.subr.mxu0 0.0
  %9083 = vmatpush1.msra.mxu0 0.0
  %9084 = vmatprep.subr.mxu0 0.0
  %9085 = vmatpush1.msra.mxu0 0.0
  %9086 = vmatprep.subr.mxu0 0.0
  %9087 = vmatpush1.msra.mxu0 0.0
  %9088 = vmatprep.subr.mxu0 0.0
  %9089 = vmatpush1.msra.mxu0 0.0
  %9090 = vmatprep.subr.mxu0 0.0
  %9091 = vmatpush1.msra.mxu0 0.0
  %9092 = vmatprep.subr.mxu0 0.0
  %9093 = vmatpush1.msra.mxu0 0.0
  %9094 = vmatprep.subr.mxu0 0.0
  %9095 = vmatpush1.msra.mxu0 0.0
  %9096 = vmatprep.subr.mxu0 0.0
  %9097 = vmatpush1.msra.mxu0 0.0
  %9098 = vmatprep.subr.mxu0 0.0
  %9099 = vmatpush1.msra.mxu0 0.0
  %9100 = vmatprep.subr.mxu0 0.0
  %9101 = vmatpush1.msra.mxu0 0.0
  %9102 = vmatprep.subr.mxu0 0.0
  %9103 = vmatpush1.msra.mxu0 0.0
  %9104 = vmatprep.subr.mxu0 0.0
  %9105 = vmatpush1.msra.mxu0 0.0
  %9106 = vmatprep.subr.mxu0 0.0
  %9107 = vmatpush1.msra.mxu0 0.0
  %9108 = vmatprep.subr.mxu0 0.0
  %9109 = vmatpush1.msra.mxu0 0.0
  %9110 = vmatprep.subr.mxu0 0.0
  %9111 = vmatpush1.msra.mxu0 0.0
  %9112 = vmatprep.subr.mxu0 0.0
  %9113 = vmatpush1.msra.mxu0 0.0
  %9114 = vmatprep.subr.mxu0 0.0
  %9115 = vmatpush1.msra.mxu0 0.0
  %9116 = vmatprep.subr.mxu0 0.0
  %9117 = vmatpush1.msra.mxu0 0.0
  %9118 = vmatprep.subr.mxu0 0.0
  %9119 = vmatpush1.msra.mxu0 0.0
  %9120 = vmatprep.subr.mxu0 0.0
  %9121 = vmatpush1.msra.mxu0 0.0
  %9122 = vmatprep.subr.mxu0 0.0
  %9123 = vmatpush1.msra.mxu0 0.0
  %9124 = vmatprep.subr.mxu0 0.0
  %9125 = vmatpush1.msra.mxu0 0.0
  %9126 = vmatprep.subr.mxu0 0.0
  %9127 = vmatpush1.msra.mxu0 0.0
  %9128 = vmatprep.subr.mxu0 0.0
  %9129 = vmatpush1.msra.mxu0 0.0
  %9130 = vmatprep.subr.mxu0 0.0
  %9131 = vmatpush1.msra.mxu0 0.0
  %9132 = vmatprep.subr.mxu0 0.0
  %9133 = vmatpush1.msra.mxu0 0.0
  %9134 = vmatprep.subr.mxu0 0.0
  %9135 = vmatpush1.msra.mxu0 0.0
  %9136 = vmatprep.subr.mxu0 0.0
  %9137 = vmatpush1.msra.mxu0 0.0
  %9138 = vmatprep.subr.mxu0 0.0
  %9139 = vmatpush1.msra.mxu0 0.0
  %9140 = vmatprep.mubr.f32.mxu0 0.0
  %v9141 = vand.u32 %v8974, 4294901760
  %9142 = vmatmul.mubr.f32.gmra.mrb[0].mxu0 %v9141
  %v9143 = vpop.f32.mrb[0].mxu0
  %v9144 = vadd.f32 %v9053, %v9143
  %v9145 = vpop.f32.mrb[0].mxu0
  %9146 = vmatprep.mubr.f32.mxu0 0.0
  %v9147 = vand.u32 %v8977, 4294901760
  %9148 = vmatmul.mubr.f32.gmra.mrb[0].mxu0 %v9147
  %v9149 = vpop.f32.mrb[0].mxu0
  %v9150 = vadd.f32 %v9063, %v9149
  %v9151 = vpop.f32.mrb[0].mxu0
  %9152 = vdwg.mxu0
  %9153 = vmatprep.subr.mxu0 0.0
  %v9154 = vand.u32 %v8961, 4294901760
  %v9155 = vsub.f32 %v8961, %v9154
  %9156 = vmatpush1.msra.mxu0 %v9155
  %9157 = vmatprep.subr.mxu0 0.0
  %v9158 = vand.u32 %v8967, 4294901760
  %v9159 = vsub.f32 %v8967, %v9158
  %9160 = vmatpush1.msra.mxu0 %v9159
  %9161 = vmatprep.subr.mxu0 0.0
  %9162 = vmatpush1.msra.mxu0 0.0
  %9163 = vmatprep.subr.mxu0 0.0
  %9164 = vmatpush1.msra.mxu0 0.0
  %9165 = vmatprep.subr.mxu0 0.0
  %9166 = vmatpush1.msra.mxu0 0.0
  %9167 = vmatprep.subr.mxu0 0.0
  %9168 = vmatpush1.msra.mxu0 0.0
  %9169 = vmatprep.subr.mxu0 0.0
  %9170 = vmatpush1.msra.mxu0 0.0
  %9171 = vmatprep.subr.mxu0 0.0
  %9172 = vmatpush1.msra.mxu0 0.0
  %9173 = vmatprep.subr.mxu0 0.0
  %9174 = vmatpush1.msra.mxu0 0.0
  %9175 = vmatprep.subr.mxu0 0.0
  %9176 = vmatpush1.msra.mxu0 0.0
  %9177 = vmatprep.subr.mxu0 0.0
  %9178 = vmatpush1.msra.mxu0 0.0
  %9179 = vmatprep.subr.mxu0 0.0
  %9180 = vmatpush1.msra.mxu0 0.0
  %9181 = vmatprep.subr.mxu0 0.0
  %9182 = vmatpush1.msra.mxu0 0.0
  %9183 = vmatprep.subr.mxu0 0.0
  %9184 = vmatpush1.msra.mxu0 0.0
  %9185 = vmatprep.subr.mxu0 0.0
  %9186 = vmatpush1.msra.mxu0 0.0
  %9187 = vmatprep.subr.mxu0 0.0
  %9188 = vmatpush1.msra.mxu0 0.0
  %9189 = vmatprep.subr.mxu0 0.0
  %9190 = vmatpush1.msra.mxu0 0.0
  %9191 = vmatprep.subr.mxu0 0.0
  %9192 = vmatpush1.msra.mxu0 0.0
  %9193 = vmatprep.subr.mxu0 0.0
  %9194 = vmatpush1.msra.mxu0 0.0
  %9195 = vmatprep.subr.mxu0 0.0
  %9196 = vmatpush1.msra.mxu0 0.0
  %9197 = vmatprep.subr.mxu0 0.0
  %9198 = vmatpush1.msra.mxu0 0.0
  %9199 = vmatprep.subr.mxu0 0.0
  %9200 = vmatpush1.msra.mxu0 0.0
  %9201 = vmatprep.subr.mxu0 0.0
  %9202 = vmatpush1.msra.mxu0 0.0
  %9203 = vmatprep.subr.mxu0 0.0
  %9204 = vmatpush1.msra.mxu0 0.0
  %9205 = vmatprep.subr.mxu0 0.0
  %9206 = vmatpush1.msra.mxu0 0.0
  %9207 = vmatprep.subr.mxu0 0.0
  %9208 = vmatpush1.msra.mxu0 0.0
  %9209 = vmatprep.subr.mxu0 0.0
  %9210 = vmatpush1.msra.mxu0 0.0
  %9211 = vmatprep.subr.mxu0 0.0
  %9212 = vmatpush1.msra.mxu0 0.0
  %9213 = vmatprep.subr.mxu0 0.0
  %9214 = vmatpush1.msra.mxu0 0.0
  %9215 = vmatprep.subr.mxu0 0.0
  %9216 = vmatpush1.msra.mxu0 0.0
  %9217 = vmatprep.subr.mxu0 0.0
  %9218 = vmatpush1.msra.mxu0 0.0
  %9219 = vmatprep.subr.mxu0 0.0
  %9220 = vmatpush1.msra.mxu0 0.0
  %9221 = vmatprep.mubr.f32.mxu0 0.0
  %v9222 = vand.u32 %v8974, 4294901760
  %v9223 = vsub.f32 %v8974, %v9222
  %9224 = vmatmul.mubr.f32.gmra.mrb[0].mxu0 %v9223
  %v9225 = vpop.f32.mrb[0].mxu0
  %v9226 = vadd.f32 %v9144, %v9225
  %v9227 = vpop.f32.mrb[0].mxu0
  %9228 = vmatprep.mubr.f32.mxu0 0.0
  %v9229 = vand.u32 %v8977, 4294901760
  %v9230 = vsub.f32 %v8977, %v9229
  %9231 = vmatmul.mubr.f32.gmra.mrb[0].mxu0 %v9230
  %v9232 = vpop.f32.mrb[0].mxu0
  %v9233 = vadd.f32 %v9150, %v9232
  %v9234 = vpop.f32.mrb[0].mxu0
  %9235 = vdwg.mxu0
  %9236 = vmatprep.subr.mxu0 0.0
  %v9237 = vand.u32 %v8961, 4294901760
  %9238 = vmatpush1.msra.mxu0 %v9237
  %9239 = vmatprep.subr.mxu0 0.0
  %v9240 = vand.u32 %v8967, 4294901760
  %9241 = vmatpush1.msra.mxu0 %v9240
  %9242 = vmatprep.subr.mxu0 0.0
  %9243 = vmatpush1.msra.mxu0 0.0
  %9244 = vmatprep.subr.mxu0 0.0
  %9245 = vmatpush1.msra.mxu0 0.0
  %9246 = vmatprep.subr.mxu0 0.0
  %9247 = vmatpush1.msra.mxu0 0.0
  %9248 = vmatprep.subr.mxu0 0.0
  %9249 = vmatpush1.msra.mxu0 0.0
  %9250 = vmatprep.subr.mxu0 0.0
  %9251 = vmatpush1.msra.mxu0 0.0
  %9252 = vmatprep.subr.mxu0 0.0
  %9253 = vmatpush1.msra.mxu0 0.0
  %9254 = vmatprep.subr.mxu0 0.0
  %9255 = vmatpush1.msra.mxu0 0.0
  %9256 = vmatprep.subr.mxu0 0.0
  %9257 = vmatpush1.msra.mxu0 0.0
  %9258 = vmatprep.subr.mxu0 0.0
  %9259 = vmatpush1.msra.mxu0 0.0
  %9260 = vmatprep.subr.mxu0 0.0
  %9261 = vmatpush1.msra.mxu0 0.0
  %9262 = vmatprep.subr.mxu0 0.0
  %9263 = vmatpush1.msra.mxu0 0.0
  %9264 = vmatprep.subr.mxu0 0.0
  %9265 = vmatpush1.msra.mxu0 0.0
  %9266 = vmatprep.subr.mxu0 0.0
  %9267 = vmatpush1.msra.mxu0 0.0
  %9268 = vmatprep.subr.mxu0 0.0
  %9269 = vmatpush1.msra.mxu0 0.0
  %9270 = vmatprep.subr.mxu0 0.0
  %9271 = vmatpush1.msra.mxu0 0.0
  %9272 = vmatprep.subr.mxu0 0.0
  %9273 = vmatpush1.msra.mxu0 0.0
  %9274 = vmatprep.subr.mxu0 0.0
  %9275 = vmatpush1.msra.mxu0 0.0
  %9276 = vmatprep.subr.mxu0 0.0
  %9277 = vmatpush1.msra.mxu0 0.0
  %9278 = vmatprep.subr.mxu0 0.0
  %9279 = vmatpush1.msra.mxu0 0.0
  %9280 = vmatprep.subr.mxu0 0.0
  %9281 = vmatpush1.msra.mxu0 0.0
  %9282 = vmatprep.subr.mxu0 0.0
  %9283 = vmatpush1.msra.mxu0 0.0
  %9284 = vmatprep.subr.mxu0 0.0
  %9285 = vmatpush1.msra.mxu0 0.0
  %9286 = vmatprep.subr.mxu0 0.0
  %9287 = vmatpush1.msra.mxu0 0.0
  %9288 = vmatprep.subr.mxu0 0.0
  %9289 = vmatpush1.msra.mxu0 0.0
  %9290 = vmatprep.subr.mxu0 0.0
  %9291 = vmatpush1.msra.mxu0 0.0
  %9292 = vmatprep.subr.mxu0 0.0
  %9293 = vmatpush1.msra.mxu0 0.0
  %9294 = vmatprep.subr.mxu0 0.0
  %9295 = vmatpush1.msra.mxu0 0.0
  %9296 = vmatprep.subr.mxu0 0.0
  %9297 = vmatpush1.msra.mxu0 0.0
  %9298 = vmatprep.subr.mxu0 0.0
  %9299 = vmatpush1.msra.mxu0 0.0
  %9300 = vmatprep.subr.mxu0 0.0
  %9301 = vmatpush1.msra.mxu0 0.0
  %9302 = vmatprep.mubr.f32.mxu0 0.0
  %v9303 = vand.u32 %v8974, 4294901760
  %v9304 = vsub.f32 %v8974, %v9303
  %v9305 = vand.u32 %v9304, 4294901760
  %9306 = vmatmul.mubr.f32.gmra.mrb[0].mxu0 %v9305
  %v9307 = vpop.f32.mrb[0].mxu0
  %v9308 = vadd.f32 %v9226, %v9307
  %v9309 = vpop.f32.mrb[0].mxu0
  %9310 = vmatprep.mubr.f32.mxu0 0.0
  %v9311 = vand.u32 %v8977, 4294901760
  %v9312 = vsub.f32 %v8977, %v9311
  %v9313 = vand.u32 %v9312, 4294901760
  %9314 = vmatmul.mubr.f32.gmra.mrb[0].mxu0 %v9313
  %v9315 = vpop.f32.mrb[0].mxu0
  %v9316 = vadd.f32 %v9233, %v9315
  %v9317 = vpop.f32.mrb[0].mxu0
  %9318 = vdwg.mxu0
  %9319 = vmatprep.subr.mxu0 0.0
  %v9320 = vand.u32 %v8961, 4294901760
  %v9321 = vsub.f32 %v8961, %v9320
  %v9322 = vand.u32 %v9321, 4294901760
  %9323 = vmatpush1.msra.mxu0 %v9322
  %9324 = vmatprep.subr.mxu0 0.0
  %v9325 = vand.u32 %v8967, 4294901760
  %v9326 = vsub.f32 %v8967, %v9325
  %v9327 = vand.u32 %v9326, 4294901760
  %9328 = vmatpush1.msra.mxu0 %v9327
  %9329 = vmatprep.subr.mxu0 0.0
  %9330 = vmatpush1.msra.mxu0 0.0
  %9331 = vmatprep.subr.mxu0 0.0
  %9332 = vmatpush1.msra.mxu0 0.0
  %9333 = vmatprep.subr.mxu0 0.0
  %9334 = vmatpush1.msra.mxu0 0.0
  %9335 = vmatprep.subr.mxu0 0.0
  %9336 = vmatpush1.msra.mxu0 0.0
  %9337 = vmatprep.subr.mxu0 0.0
  %9338 = vmatpush1.msra.mxu0 0.0
  %9339 = vmatprep.subr.mxu0 0.0
  %9340 = vmatpush1.msra.mxu0 0.0
  %9341 = vmatprep.subr.mxu0 0.0
  %9342 = vmatpush1.msra.mxu0 0.0
  %9343 = vmatprep.subr.mxu0 0.0
  %9344 = vmatpush1.msra.mxu0 0.0
  %9345 = vmatprep.subr.mxu0 0.0
  %9346 = vmatpush1.msra.mxu0 0.0
  %9347 = vmatprep.subr.mxu0 0.0
  %9348 = vmatpush1.msra.mxu0 0.0
  %9349 = vmatprep.subr.mxu0 0.0
  %9350 = vmatpush1.msra.mxu0 0.0
  %9351 = vmatprep.subr.mxu0 0.0
  %9352 = vmatpush1.msra.mxu0 0.0
  %9353 = vmatprep.subr.mxu0 0.0
  %9354 = vmatpush1.msra.mxu0 0.0
  %9355 = vmatprep.subr.mxu0 0.0
  %9356 = vmatpush1.msra.mxu0 0.0
  %9357 = vmatprep.subr.mxu0 0.0
  %9358 = vmatpush1.msra.mxu0 0.0
  %9359 = vmatprep.subr.mxu0 0.0
  %9360 = vmatpush1.msra.mxu0 0.0
  %9361 = vmatprep.subr.mxu0 0.0
  %9362 = vmatpush1.msra.mxu0 0.0
  %9363 = vmatprep.subr.mxu0 0.0
  %9364 = vmatpush1.msra.mxu0 0.0
  %9365 = vmatprep.subr.mxu0 0.0
  %9366 = vmatpush1.msra.mxu0 0.0
  %9367 = vmatprep.subr.mxu0 0.0
  %9368 = vmatpush1.msra.mxu0 0.0
  %9369 = vmatprep.subr.mxu0 0.0
  %9370 = vmatpush1.msra.mxu0 0.0
  %9371 = vmatprep.subr.mxu0 0.0
  %9372 = vmatpush1.msra.mxu0 0.0
  %9373 = vmatprep.subr.mxu0 0.0
  %9374 = vmatpush1.msra.mxu0 0.0
  %9375 = vmatprep.subr.mxu0 0.0
  %9376 = vmatpush1.msra.mxu0 0.0
  %9377 = vmatprep.subr.mxu0 0.0
  %9378 = vmatpush1.msra.mxu0 0.0
  %9379 = vmatprep.subr.mxu0 0.0
  %9380 = vmatpush1.msra.mxu0 0.0
  %9381 = vmatprep.subr.mxu0 0.0
  %9382 = vmatpush1.msra.mxu0 0.0
  %9383 = vmatprep.subr.mxu0 0.0
  %9384 = vmatpush1.msra.mxu0 0.0
  %9385 = vmatprep.subr.mxu0 0.0
  %9386 = vmatpush1.msra.mxu0 0.0
  %9387 = vmatprep.subr.mxu0 0.0
  %9388 = vmatpush1.msra.mxu0 0.0
  %9389 = vmatprep.mubr.f32.mxu0 0.0
  %v9390 = vand.u32 %v8974, 4294901760
  %9391 = vmatmul.mubr.f32.gmra.mrb[0].mxu0 %v9390
  %v9392 = vpop.f32.mrb[0].mxu0
  %v9393 = vadd.f32 %v9308, %v9392
  %v9394 = vpop.f32.mrb[0].mxu0
  %9395 = vmatprep.mubr.f32.mxu0 0.0
  %v9396 = vand.u32 %v8977, 4294901760
  %9397 = vmatmul.mubr.f32.gmra.mrb[0].mxu0 %v9396
  %v9398 = vpop.f32.mrb[0].mxu0
  %v9399 = vadd.f32 %v9316, %v9398
  %v9400 = vpop.f32.mrb[0].mxu0
  %9401 = vdwg.mxu0
  %9402 = vmatprep.subr.mxu0 0.0
  %v9403 = vand.u32 %v8961, 4294901760
  %9404 = vmatpush1.msra.mxu0 %v9403
  %9405 = vmatprep.subr.mxu0 0.0
  %v9406 = vand.u32 %v8967, 4294901760
  %9407 = vmatpush1.msra.mxu0 %v9406
  %9408 = vmatprep.subr.mxu0 0.0
  %9409 = vmatpush1.msra.mxu0 0.0
  %9410 = vmatprep.subr.mxu0 0.0
  %9411 = vmatpush1.msra.mxu0 0.0
  %9412 = vmatprep.subr.mxu0 0.0
  %9413 = vmatpush1.msra.mxu0 0.0
  %9414 = vmatprep.subr.mxu0 0.0
  %9415 = vmatpush1.msra.mxu0 0.0
  %9416 = vmatprep.subr.mxu0 0.0
  %9417 = vmatpush1.msra.mxu0 0.0
  %9418 = vmatprep.subr.mxu0 0.0
  %9419 = vmatpush1.msra.mxu0 0.0
  %9420 = vmatprep.subr.mxu0 0.0
  %9421 = vmatpush1.msra.mxu0 0.0
  %9422 = vmatprep.subr.mxu0 0.0
  %9423 = vmatpush1.msra.mxu0 0.0
  %9424 = vmatprep.subr.mxu0 0.0
  %9425 = vmatpush1.msra.mxu0 0.0
  %9426 = vmatprep.subr.mxu0 0.0
  %9427 = vmatpush1.msra.mxu0 0.0
  %9428 = vmatprep.subr.mxu0 0.0
  %9429 = vmatpush1.msra.mxu0 0.0
  %9430 = vmatprep.subr.mxu0 0.0
  %9431 = vmatpush1.msra.mxu0 0.0
  %9432 = vmatprep.subr.mxu0 0.0
  %9433 = vmatpush1.msra.mxu0 0.0
  %9434 = vmatprep.subr.mxu0 0.0
  %9435 = vmatpush1.msra.mxu0 0.0
  %9436 = vmatprep.subr.mxu0 0.0
  %9437 = vmatpush1.msra.mxu0 0.0
  %9438 = vmatprep.subr.mxu0 0.0
  %9439 = vmatpush1.msra.mxu0 0.0
  %9440 = vmatprep.subr.mxu0 0.0
  %9441 = vmatpush1.msra.mxu0 0.0
  %9442 = vmatprep.subr.mxu0 0.0
  %9443 = vmatpush1.msra.mxu0 0.0
  %9444 = vmatprep.subr.mxu0 0.0
  %9445 = vmatpush1.msra.mxu0 0.0
  %9446 = vmatprep.subr.mxu0 0.0
  %9447 = vmatpush1.msra.mxu0 0.0
  %9448 = vmatprep.subr.mxu0 0.0
  %9449 = vmatpush1.msra.mxu0 0.0
  %9450 = vmatprep.subr.mxu0 0.0
  %9451 = vmatpush1.msra.mxu0 0.0
  %9452 = vmatprep.subr.mxu0 0.0
  %9453 = vmatpush1.msra.mxu0 0.0
  %9454 = vmatprep.subr.mxu0 0.0
  %9455 = vmatpush1.msra.mxu0 0.0
  %9456 = vmatprep.subr.mxu0 0.0
  %9457 = vmatpush1.msra.mxu0 0.0
  %9458 = vmatprep.subr.mxu0 0.0
  %9459 = vmatpush1.msra.mxu0 0.0
  %9460 = vmatprep.subr.mxu0 0.0
  %9461 = vmatpush1.msra.mxu0 0.0
  %9462 = vmatprep.subr.mxu0 0.0
  %9463 = vmatpush1.msra.mxu0 0.0
  %9464 = vmatprep.subr.mxu0 0.0
  %9465 = vmatpush1.msra.mxu0 0.0
  %9466 = vmatprep.subr.mxu0 0.0
  %9467 = vmatpush1.msra.mxu0 0.0
  %9468 = vmatprep.mubr.f32.mxu0 0.0
  %v9469 = vand.u32 %v8974, 4294901760
  %9470 = vmatmul.mubr.f32.gmra.mrb[0].mxu0 %v9469
  %v9471 = vpop.f32.mrb[0].mxu0
  %v9472 = vadd.f32 %v9393, %v9471
  %v9473 = vpop.f32.mrb[0].mxu0
  %9474 = vmatprep.mubr.f32.mxu0 0.0
  %v9475 = vand.u32 %v8977, 4294901760
  %9476 = vmatmul.mubr.f32.gmra.mrb[0].mxu0 %v9475
  %v9477 = vpop.f32.mrb[0].mxu0
  %v9478 = vadd.f32 %v9399, %v9477
  %v9479 = vpop.f32.mrb[0].mxu0
  %9480 = vdwg.mxu0
  %v9481 = vmax.f32 %v9472, 0.0
  %v9482 = vmax.f32 %v9478, 0.0
  %s9483 = scalar_lea.vmem %s2, 48
  %v9484 = vld [vmem:[%s9483] sm:$0xff]
  %v9485 = vld [vmem:[%s9483 + $0x8] sm:$0xff]
  %v9487 = vsel %vm41, %v9484, 0
  %v9490 = vsel %vm41, %v9485, 0
  %9492 = vmatprep.subr.mxu0 0.0
  %v9493 = vand.u32 %v4485, 4294901760
  %9494 = vmatpush1.msra.mxu0 %v9493
  %9495 = vmatprep.subr.mxu0 0.0
  %9496 = vmatpush1.msra.mxu0 0.0
  %9497 = vmatprep.subr.mxu0 0.0
  %9498 = vmatpush1.msra.mxu0 0.0
  %9499 = vmatprep.subr.mxu0 0.0
  %9500 = vmatpush1.msra.mxu0 0.0
  %9501 = vmatprep.subr.mxu0 0.0
  %9502 = vmatpush1.msra.mxu0 0.0
  %9503 = vmatprep.subr.mxu0 0.0
  %9504 = vmatpush1.msra.mxu0 0.0
  %9505 = vmatprep.subr.mxu0 0.0
  %9506 = vmatpush1.msra.mxu0 0.0
  %9507 = vmatprep.subr.mxu0 0.0
  %9508 = vmatpush1.msra.mxu0 0.0
  %9509 = vmatprep.subr.mxu0 0.0
  %9510 = vmatpush1.msra.mxu0 0.0
  %9511 = vmatprep.subr.mxu0 0.0
  %9512 = vmatpush1.msra.mxu0 0.0
  %9513 = vmatprep.subr.mxu0 0.0
  %9514 = vmatpush1.msra.mxu0 0.0
  %9515 = vmatprep.subr.mxu0 0.0
  %9516 = vmatpush1.msra.mxu0 0.0
  %9517 = vmatprep.subr.mxu0 0.0
  %9518 = vmatpush1.msra.mxu0 0.0
  %9519 = vmatprep.subr.mxu0 0.0
  %9520 = vmatpush1.msra.mxu0 0.0
  %9521 = vmatprep.subr.mxu0 0.0
  %9522 = vmatpush1.msra.mxu0 0.0
  %9523 = vmatprep.subr.mxu0 0.0
  %9524 = vmatpush1.msra.mxu0 0.0
  %9525 = vmatprep.subr.mxu0 0.0
  %9526 = vmatpush1.msra.mxu0 0.0
  %9527 = vmatprep.subr.mxu0 0.0
  %9528 = vmatpush1.msra.mxu0 0.0
  %9529 = vmatprep.subr.mxu0 0.0
  %9530 = vmatpush1.msra.mxu0 0.0
  %9531 = vmatprep.subr.mxu0 0.0
  %9532 = vmatpush1.msra.mxu0 0.0
  %9533 = vmatprep.subr.mxu0 0.0
  %9534 = vmatpush1.msra.mxu0 0.0
  %9535 = vmatprep.subr.mxu0 0.0
  %9536 = vmatpush1.msra.mxu0 0.0
  %9537 = vmatprep.subr.mxu0 0.0
  %9538 = vmatpush1.msra.mxu0 0.0
  %9539 = vmatprep.subr.mxu0 0.0
  %9540 = vmatpush1.msra.mxu0 0.0
  %9541 = vmatprep.subr.mxu0 0.0
  %9542 = vmatpush1.msra.mxu0 0.0
  %9543 = vmatprep.subr.mxu0 0.0
  %9544 = vmatpush1.msra.mxu0 0.0
  %9545 = vmatprep.subr.mxu0 0.0
  %9546 = vmatpush1.msra.mxu0 0.0
  %9547 = vmatprep.subr.mxu0 0.0
  %9548 = vmatpush1.msra.mxu0 0.0
  %9549 = vmatprep.subr.mxu0 0.0
  %9550 = vmatpush1.msra.mxu0 0.0
  %9551 = vmatprep.subr.mxu0 0.0
  %9552 = vmatpush1.msra.mxu0 0.0
  %9553 = vmatprep.subr.mxu0 0.0
  %9554 = vmatpush1.msra.mxu0 0.0
  %9555 = vmatprep.subr.mxu0 0.0
  %9556 = vmatpush1.msra.mxu0 0.0
  %9557 = vmatprep.mubr.f32.mxu0 0.0
  %v9558 = vand.u32 %v9487, 4294901760
  %v9559 = vsub.f32 %v9487, %v9558
  %v9560 = vand.u32 %v9559, 4294901760
  %v9561 = vsub.f32 %v9559, %v9560
  %v9562 = vand.u32 %v9561, 4294901760
  %9563 = vmatmul.mubr.f32.gmra.mrb[0].mxu0 %v9562
  %v9564 = vpop.f32.mrb[0].mxu0
  %v9565 = vadd.f32 0.0, %v9564
  %v9566 = vpop.f32.mrb[0].mxu0
  %9567 = vmatprep.mubr.f32.mxu0 0.0
  %v9568 = vand.u32 %v9490, 4294901760
  %v9569 = vsub.f32 %v9490, %v9568
  %v9570 = vand.u32 %v9569, 4294901760
  %v9571 = vsub.f32 %v9569, %v9570
  %v9572 = vand.u32 %v9571, 4294901760
  %9573 = vmatmul.mubr.f32.gmra.mrb[0].mxu0 %v9572
  %v9574 = vpop.f32.mrb[0].mxu0
  %v9575 = vadd.f32 0.0, %v9574
  %v9576 = vpop.f32.mrb[0].mxu0
  %9577 = vdwg.mxu0
  %9578 = vmatprep.subr.mxu0 0.0
  %v9579 = vand.u32 %v4485, 4294901760
  %v9580 = vsub.f32 %v4485, %v9579
  %v9581 = vand.u32 %v9580, 4294901760
  %v9582 = vsub.f32 %v9580, %v9581
  %v9583 = vand.u32 %v9582, 4294901760
  %9584 = vmatpush1.msra.mxu0 %v9583
  %9585 = vmatprep.subr.mxu0 0.0
  %9586 = vmatpush1.msra.mxu0 0.0
  %9587 = vmatprep.subr.mxu0 0.0
  %9588 = vmatpush1.msra.mxu0 0.0
  %9589 = vmatprep.subr.mxu0 0.0
  %9590 = vmatpush1.msra.mxu0 0.0
  %9591 = vmatprep.subr.mxu0 0.0
  %9592 = vmatpush1.msra.mxu0 0.0
  %9593 = vmatprep.subr.mxu0 0.0
  %9594 = vmatpush1.msra.mxu0 0.0
  %9595 = vmatprep.subr.mxu0 0.0
  %9596 = vmatpush1.msra.mxu0 0.0
  %9597 = vmatprep.subr.mxu0 0.0
  %9598 = vmatpush1.msra.mxu0 0.0
  %9599 = vmatprep.subr.mxu0 0.0
  %9600 = vmatpush1.msra.mxu0 0.0
  %9601 = vmatprep.subr.mxu0 0.0
  %9602 = vmatpush1.msra.mxu0 0.0
  %9603 = vmatprep.subr.mxu0 0.0
  %9604 = vmatpush1.msra.mxu0 0.0
  %9605 = vmatprep.subr.mxu0 0.0
  %9606 = vmatpush1.msra.mxu0 0.0
  %9607 = vmatprep.subr.mxu0 0.0
  %9608 = vmatpush1.msra.mxu0 0.0
  %9609 = vmatprep.subr.mxu0 0.0
  %9610 = vmatpush1.msra.mxu0 0.0
  %9611 = vmatprep.subr.mxu0 0.0
  %9612 = vmatpush1.msra.mxu0 0.0
  %9613 = vmatprep.subr.mxu0 0.0
  %9614 = vmatpush1.msra.mxu0 0.0
  %9615 = vmatprep.subr.mxu0 0.0
  %9616 = vmatpush1.msra.mxu0 0.0
  %9617 = vmatprep.subr.mxu0 0.0
  %9618 = vmatpush1.msra.mxu0 0.0
  %9619 = vmatprep.subr.mxu0 0.0
  %9620 = vmatpush1.msra.mxu0 0.0
  %9621 = vmatprep.subr.mxu0 0.0
  %9622 = vmatpush1.msra.mxu0 0.0
  %9623 = vmatprep.subr.mxu0 0.0
  %9624 = vmatpush1.msra.mxu0 0.0
  %9625 = vmatprep.subr.mxu0 0.0
  %9626 = vmatpush1.msra.mxu0 0.0
  %9627 = vmatprep.subr.mxu0 0.0
  %9628 = vmatpush1.msra.mxu0 0.0
  %9629 = vmatprep.subr.mxu0 0.0
  %9630 = vmatpush1.msra.mxu0 0.0
  %9631 = vmatprep.subr.mxu0 0.0
  %9632 = vmatpush1.msra.mxu0 0.0
  %9633 = vmatprep.subr.mxu0 0.0
  %9634 = vmatpush1.msra.mxu0 0.0
  %9635 = vmatprep.subr.mxu0 0.0
  %9636 = vmatpush1.msra.mxu0 0.0
  %9637 = vmatprep.subr.mxu0 0.0
  %9638 = vmatpush1.msra.mxu0 0.0
  %9639 = vmatprep.subr.mxu0 0.0
  %9640 = vmatpush1.msra.mxu0 0.0
  %9641 = vmatprep.subr.mxu0 0.0
  %9642 = vmatpush1.msra.mxu0 0.0
  %9643 = vmatprep.subr.mxu0 0.0
  %9644 = vmatpush1.msra.mxu0 0.0
  %9645 = vmatprep.subr.mxu0 0.0
  %9646 = vmatpush1.msra.mxu0 0.0
  %9647 = vmatprep.mubr.f32.mxu0 0.0
  %v9648 = vand.u32 %v9487, 4294901760
  %9649 = vmatmul.mubr.f32.gmra.mrb[0].mxu0 %v9648
  %v9650 = vpop.f32.mrb[0].mxu0
  %v9651 = vadd.f32 %v9565, %v9650
  %v9652 = vpop.f32.mrb[0].mxu0
  %9653 = vmatprep.mubr.f32.mxu0 0.0
  %v9654 = vand.u32 %v9490, 4294901760
  %9655 = vmatmul.mubr.f32.gmra.mrb[0].mxu0 %v9654
  %v9656 = vpop.f32.mrb[0].mxu0
  %v9657 = vadd.f32 %v9575, %v9656
  %v9658 = vpop.f32.mrb[0].mxu0
  %9659 = vdwg.mxu0
  %9660 = vmatprep.subr.mxu0 0.0
  %v9661 = vand.u32 %v4485, 4294901760
  %v9662 = vsub.f32 %v4485, %v9661
  %9663 = vmatpush1.msra.mxu0 %v9662
  %9664 = vmatprep.subr.mxu0 0.0
  %9665 = vmatpush1.msra.mxu0 0.0
  %9666 = vmatprep.subr.mxu0 0.0
  %9667 = vmatpush1.msra.mxu0 0.0
  %9668 = vmatprep.subr.mxu0 0.0
  %9669 = vmatpush1.msra.mxu0 0.0
  %9670 = vmatprep.subr.mxu0 0.0
  %9671 = vmatpush1.msra.mxu0 0.0
  %9672 = vmatprep.subr.mxu0 0.0
  %9673 = vmatpush1.msra.mxu0 0.0
  %9674 = vmatprep.subr.mxu0 0.0
  %9675 = vmatpush1.msra.mxu0 0.0
  %9676 = vmatprep.subr.mxu0 0.0
  %9677 = vmatpush1.msra.mxu0 0.0
  %9678 = vmatprep.subr.mxu0 0.0
  %9679 = vmatpush1.msra.mxu0 0.0
  %9680 = vmatprep.subr.mxu0 0.0
  %9681 = vmatpush1.msra.mxu0 0.0
  %9682 = vmatprep.subr.mxu0 0.0
  %9683 = vmatpush1.msra.mxu0 0.0
  %9684 = vmatprep.subr.mxu0 0.0
  %9685 = vmatpush1.msra.mxu0 0.0
  %9686 = vmatprep.subr.mxu0 0.0
  %9687 = vmatpush1.msra.mxu0 0.0
  %9688 = vmatprep.subr.mxu0 0.0
  %9689 = vmatpush1.msra.mxu0 0.0
  %9690 = vmatprep.subr.mxu0 0.0
  %9691 = vmatpush1.msra.mxu0 0.0
  %9692 = vmatprep.subr.mxu0 0.0
  %9693 = vmatpush1.msra.mxu0 0.0
  %9694 = vmatprep.subr.mxu0 0.0
  %9695 = vmatpush1.msra.mxu0 0.0
  %9696 = vmatprep.subr.mxu0 0.0
  %9697 = vmatpush1.msra.mxu0 0.0
  %9698 = vmatprep.subr.mxu0 0.0
  %9699 = vmatpush1.msra.mxu0 0.0
  %9700 = vmatprep.subr.mxu0 0.0
  %9701 = vmatpush1.msra.mxu0 0.0
  %9702 = vmatprep.subr.mxu0 0.0
  %9703 = vmatpush1.msra.mxu0 0.0
  %9704 = vmatprep.subr.mxu0 0.0
  %9705 = vmatpush1.msra.mxu0 0.0
  %9706 = vmatprep.subr.mxu0 0.0
  %9707 = vmatpush1.msra.mxu0 0.0
  %9708 = vmatprep.subr.mxu0 0.0
  %9709 = vmatpush1.msra.mxu0 0.0
  %9710 = vmatprep.subr.mxu0 0.0
  %9711 = vmatpush1.msra.mxu0 0.0
  %9712 = vmatprep.subr.mxu0 0.0
  %9713 = vmatpush1.msra.mxu0 0.0
  %9714 = vmatprep.subr.mxu0 0.0
  %9715 = vmatpush1.msra.mxu0 0.0
  %9716 = vmatprep.subr.mxu0 0.0
  %9717 = vmatpush1.msra.mxu0 0.0
  %9718 = vmatprep.subr.mxu0 0.0
  %9719 = vmatpush1.msra.mxu0 0.0
  %9720 = vmatprep.subr.mxu0 0.0
  %9721 = vmatpush1.msra.mxu0 0.0
  %9722 = vmatprep.subr.mxu0 0.0
  %9723 = vmatpush1.msra.mxu0 0.0
  %9724 = vmatprep.subr.mxu0 0.0
  %9725 = vmatpush1.msra.mxu0 0.0
  %9726 = vmatprep.mubr.f32.mxu0 0.0
  %v9727 = vand.u32 %v9487, 4294901760
  %v9728 = vsub.f32 %v9487, %v9727
  %9729 = vmatmul.mubr.f32.gmra.mrb[0].mxu0 %v9728
  %v9730 = vpop.f32.mrb[0].mxu0
  %v9731 = vadd.f32 %v9651, %v9730
  %v9732 = vpop.f32.mrb[0].mxu0
  %9733 = vmatprep.mubr.f32.mxu0 0.0
  %v9734 = vand.u32 %v9490, 4294901760
  %v9735 = vsub.f32 %v9490, %v9734
  %9736 = vmatmul.mubr.f32.gmra.mrb[0].mxu0 %v9735
  %v9737 = vpop.f32.mrb[0].mxu0
  %v9738 = vadd.f32 %v9657, %v9737
  %v9739 = vpop.f32.mrb[0].mxu0
  %9740 = vdwg.mxu0
  %9741 = vmatprep.subr.mxu0 0.0
  %v9742 = vand.u32 %v4485, 4294901760
  %9743 = vmatpush1.msra.mxu0 %v9742
  %9744 = vmatprep.subr.mxu0 0.0
  %9745 = vmatpush1.msra.mxu0 0.0
  %9746 = vmatprep.subr.mxu0 0.0
  %9747 = vmatpush1.msra.mxu0 0.0
  %9748 = vmatprep.subr.mxu0 0.0
  %9749 = vmatpush1.msra.mxu0 0.0
  %9750 = vmatprep.subr.mxu0 0.0
  %9751 = vmatpush1.msra.mxu0 0.0
  %9752 = vmatprep.subr.mxu0 0.0
  %9753 = vmatpush1.msra.mxu0 0.0
  %9754 = vmatprep.subr.mxu0 0.0
  %9755 = vmatpush1.msra.mxu0 0.0
  %9756 = vmatprep.subr.mxu0 0.0
  %9757 = vmatpush1.msra.mxu0 0.0
  %9758 = vmatprep.subr.mxu0 0.0
  %9759 = vmatpush1.msra.mxu0 0.0
  %9760 = vmatprep.subr.mxu0 0.0
  %9761 = vmatpush1.msra.mxu0 0.0
  %9762 = vmatprep.subr.mxu0 0.0
  %9763 = vmatpush1.msra.mxu0 0.0
  %9764 = vmatprep.subr.mxu0 0.0
  %9765 = vmatpush1.msra.mxu0 0.0
  %9766 = vmatprep.subr.mxu0 0.0
  %9767 = vmatpush1.msra.mxu0 0.0
  %9768 = vmatprep.subr.mxu0 0.0
  %9769 = vmatpush1.msra.mxu0 0.0
  %9770 = vmatprep.subr.mxu0 0.0
  %9771 = vmatpush1.msra.mxu0 0.0
  %9772 = vmatprep.subr.mxu0 0.0
  %9773 = vmatpush1.msra.mxu0 0.0
  %9774 = vmatprep.subr.mxu0 0.0
  %9775 = vmatpush1.msra.mxu0 0.0
  %9776 = vmatprep.subr.mxu0 0.0
  %9777 = vmatpush1.msra.mxu0 0.0
  %9778 = vmatprep.subr.mxu0 0.0
  %9779 = vmatpush1.msra.mxu0 0.0
  %9780 = vmatprep.subr.mxu0 0.0
  %9781 = vmatpush1.msra.mxu0 0.0
  %9782 = vmatprep.subr.mxu0 0.0
  %9783 = vmatpush1.msra.mxu0 0.0
  %9784 = vmatprep.subr.mxu0 0.0
  %9785 = vmatpush1.msra.mxu0 0.0
  %9786 = vmatprep.subr.mxu0 0.0
  %9787 = vmatpush1.msra.mxu0 0.0
  %9788 = vmatprep.subr.mxu0 0.0
  %9789 = vmatpush1.msra.mxu0 0.0
  %9790 = vmatprep.subr.mxu0 0.0
  %9791 = vmatpush1.msra.mxu0 0.0
  %9792 = vmatprep.subr.mxu0 0.0
  %9793 = vmatpush1.msra.mxu0 0.0
  %9794 = vmatprep.subr.mxu0 0.0
  %9795 = vmatpush1.msra.mxu0 0.0
  %9796 = vmatprep.subr.mxu0 0.0
  %9797 = vmatpush1.msra.mxu0 0.0
  %9798 = vmatprep.subr.mxu0 0.0
  %9799 = vmatpush1.msra.mxu0 0.0
  %9800 = vmatprep.subr.mxu0 0.0
  %9801 = vmatpush1.msra.mxu0 0.0
  %9802 = vmatprep.subr.mxu0 0.0
  %9803 = vmatpush1.msra.mxu0 0.0
  %9804 = vmatprep.subr.mxu0 0.0
  %9805 = vmatpush1.msra.mxu0 0.0
  %9806 = vmatprep.mubr.f32.mxu0 0.0
  %v9807 = vand.u32 %v9487, 4294901760
  %v9808 = vsub.f32 %v9487, %v9807
  %v9809 = vand.u32 %v9808, 4294901760
  %9810 = vmatmul.mubr.f32.gmra.mrb[0].mxu0 %v9809
  %v9811 = vpop.f32.mrb[0].mxu0
  %v9812 = vadd.f32 %v9731, %v9811
  %v9813 = vpop.f32.mrb[0].mxu0
  %9814 = vmatprep.mubr.f32.mxu0 0.0
  %v9815 = vand.u32 %v9490, 4294901760
  %v9816 = vsub.f32 %v9490, %v9815
  %v9817 = vand.u32 %v9816, 4294901760
  %9818 = vmatmul.mubr.f32.gmra.mrb[0].mxu0 %v9817
  %v9819 = vpop.f32.mrb[0].mxu0
  %v9820 = vadd.f32 %v9738, %v9819
  %v9821 = vpop.f32.mrb[0].mxu0
  %9822 = vdwg.mxu0
  %9823 = vmatprep.subr.mxu0 0.0
  %v9824 = vand.u32 %v4485, 4294901760
  %v9825 = vsub.f32 %v4485, %v9824
  %v9826 = vand.u32 %v9825, 4294901760
  %9827 = vmatpush1.msra.mxu0 %v9826
  %9828 = vmatprep.subr.mxu0 0.0
  %9829 = vmatpush1.msra.mxu0 0.0
  %9830 = vmatprep.subr.mxu0 0.0
  %9831 = vmatpush1.msra.mxu0 0.0
  %9832 = vmatprep.subr.mxu0 0.0
  %9833 = vmatpush1.msra.mxu0 0.0
  %9834 = vmatprep.subr.mxu0 0.0
  %9835 = vmatpush1.msra.mxu0 0.0
  %9836 = vmatprep.subr.mxu0 0.0
  %9837 = vmatpush1.msra.mxu0 0.0
  %9838 = vmatprep.subr.mxu0 0.0
  %9839 = vmatpush1.msra.mxu0 0.0
  %9840 = vmatprep.subr.mxu0 0.0
  %9841 = vmatpush1.msra.mxu0 0.0
  %9842 = vmatprep.subr.mxu0 0.0
  %9843 = vmatpush1.msra.mxu0 0.0
  %9844 = vmatprep.subr.mxu0 0.0
  %9845 = vmatpush1.msra.mxu0 0.0
  %9846 = vmatprep.subr.mxu0 0.0
  %9847 = vmatpush1.msra.mxu0 0.0
  %9848 = vmatprep.subr.mxu0 0.0
  %9849 = vmatpush1.msra.mxu0 0.0
  %9850 = vmatprep.subr.mxu0 0.0
  %9851 = vmatpush1.msra.mxu0 0.0
  %9852 = vmatprep.subr.mxu0 0.0
  %9853 = vmatpush1.msra.mxu0 0.0
  %9854 = vmatprep.subr.mxu0 0.0
  %9855 = vmatpush1.msra.mxu0 0.0
  %9856 = vmatprep.subr.mxu0 0.0
  %9857 = vmatpush1.msra.mxu0 0.0
  %9858 = vmatprep.subr.mxu0 0.0
  %9859 = vmatpush1.msra.mxu0 0.0
  %9860 = vmatprep.subr.mxu0 0.0
  %9861 = vmatpush1.msra.mxu0 0.0
  %9862 = vmatprep.subr.mxu0 0.0
  %9863 = vmatpush1.msra.mxu0 0.0
  %9864 = vmatprep.subr.mxu0 0.0
  %9865 = vmatpush1.msra.mxu0 0.0
  %9866 = vmatprep.subr.mxu0 0.0
  %9867 = vmatpush1.msra.mxu0 0.0
  %9868 = vmatprep.subr.mxu0 0.0
  %9869 = vmatpush1.msra.mxu0 0.0
  %9870 = vmatprep.subr.mxu0 0.0
  %9871 = vmatpush1.msra.mxu0 0.0
  %9872 = vmatprep.subr.mxu0 0.0
  %9873 = vmatpush1.msra.mxu0 0.0
  %9874 = vmatprep.subr.mxu0 0.0
  %9875 = vmatpush1.msra.mxu0 0.0
  %9876 = vmatprep.subr.mxu0 0.0
  %9877 = vmatpush1.msra.mxu0 0.0
  %9878 = vmatprep.subr.mxu0 0.0
  %9879 = vmatpush1.msra.mxu0 0.0
  %9880 = vmatprep.subr.mxu0 0.0
  %9881 = vmatpush1.msra.mxu0 0.0
  %9882 = vmatprep.subr.mxu0 0.0
  %9883 = vmatpush1.msra.mxu0 0.0
  %9884 = vmatprep.subr.mxu0 0.0
  %9885 = vmatpush1.msra.mxu0 0.0
  %9886 = vmatprep.subr.mxu0 0.0
  %9887 = vmatpush1.msra.mxu0 0.0
  %9888 = vmatprep.subr.mxu0 0.0
  %9889 = vmatpush1.msra.mxu0 0.0
  %9890 = vmatprep.mubr.f32.mxu0 0.0
  %v9891 = vand.u32 %v9487, 4294901760
  %9892 = vmatmul.mubr.f32.gmra.mrb[0].mxu0 %v9891
  %v9893 = vpop.f32.mrb[0].mxu0
  %v9894 = vadd.f32 %v9812, %v9893
  %v9895 = vpop.f32.mrb[0].mxu0
  %9896 = vmatprep.mubr.f32.mxu0 0.0
  %v9897 = vand.u32 %v9490, 4294901760
  %9898 = vmatmul.mubr.f32.gmra.mrb[0].mxu0 %v9897
  %v9899 = vpop.f32.mrb[0].mxu0
  %v9900 = vadd.f32 %v9820, %v9899
  %v9901 = vpop.f32.mrb[0].mxu0
  %9902 = vdwg.mxu0
  %9903 = vmatprep.subr.mxu0 0.0
  %v9904 = vand.u32 %v4485, 4294901760
  %9905 = vmatpush1.msra.mxu0 %v9904
  %9906 = vmatprep.subr.mxu0 0.0
  %9907 = vmatpush1.msra.mxu0 0.0
  %9908 = vmatprep.subr.mxu0 0.0
  %9909 = vmatpush1.msra.mxu0 0.0
  %9910 = vmatprep.subr.mxu0 0.0
  %9911 = vmatpush1.msra.mxu0 0.0
  %9912 = vmatprep.subr.mxu0 0.0
  %9913 = vmatpush1.msra.mxu0 0.0
  %9914 = vmatprep.subr.mxu0 0.0
  %9915 = vmatpush1.msra.mxu0 0.0
  %9916 = vmatprep.subr.mxu0 0.0
  %9917 = vmatpush1.msra.mxu0 0.0
  %9918 = vmatprep.subr.mxu0 0.0
  %9919 = vmatpush1.msra.mxu0 0.0
  %9920 = vmatprep.subr.mxu0 0.0
  %9921 = vmatpush1.msra.mxu0 0.0
  %9922 = vmatprep.subr.mxu0 0.0
  %9923 = vmatpush1.msra.mxu0 0.0
  %9924 = vmatprep.subr.mxu0 0.0
  %9925 = vmatpush1.msra.mxu0 0.0
  %9926 = vmatprep.subr.mxu0 0.0
  %9927 = vmatpush1.msra.mxu0 0.0
  %9928 = vmatprep.subr.mxu0 0.0
  %9929 = vmatpush1.msra.mxu0 0.0
  %9930 = vmatprep.subr.mxu0 0.0
  %9931 = vmatpush1.msra.mxu0 0.0
  %9932 = vmatprep.subr.mxu0 0.0
  %9933 = vmatpush1.msra.mxu0 0.0
  %9934 = vmatprep.subr.mxu0 0.0
  %9935 = vmatpush1.msra.mxu0 0.0
  %9936 = vmatprep.subr.mxu0 0.0
  %9937 = vmatpush1.msra.mxu0 0.0
  %9938 = vmatprep.subr.mxu0 0.0
  %9939 = vmatpush1.msra.mxu0 0.0
  %9940 = vmatprep.subr.mxu0 0.0
  %9941 = vmatpush1.msra.mxu0 0.0
  %9942 = vmatprep.subr.mxu0 0.0
  %9943 = vmatpush1.msra.mxu0 0.0
  %9944 = vmatprep.subr.mxu0 0.0
  %9945 = vmatpush1.msra.mxu0 0.0
  %9946 = vmatprep.subr.mxu0 0.0
  %9947 = vmatpush1.msra.mxu0 0.0
  %9948 = vmatprep.subr.mxu0 0.0
  %9949 = vmatpush1.msra.mxu0 0.0
  %9950 = vmatprep.subr.mxu0 0.0
  %9951 = vmatpush1.msra.mxu0 0.0
  %9952 = vmatprep.subr.mxu0 0.0
  %9953 = vmatpush1.msra.mxu0 0.0
  %9954 = vmatprep.subr.mxu0 0.0
  %9955 = vmatpush1.msra.mxu0 0.0
  %9956 = vmatprep.subr.mxu0 0.0
  %9957 = vmatpush1.msra.mxu0 0.0
  %9958 = vmatprep.subr.mxu0 0.0
  %9959 = vmatpush1.msra.mxu0 0.0
  %9960 = vmatprep.subr.mxu0 0.0
  %9961 = vmatpush1.msra.mxu0 0.0
  %9962 = vmatprep.subr.mxu0 0.0
  %9963 = vmatpush1.msra.mxu0 0.0
  %9964 = vmatprep.subr.mxu0 0.0
  %9965 = vmatpush1.msra.mxu0 0.0
  %9966 = vmatprep.subr.mxu0 0.0
  %9967 = vmatpush1.msra.mxu0 0.0
  %9968 = vmatprep.mubr.f32.mxu0 0.0
  %v9969 = vand.u32 %v9487, 4294901760
  %9970 = vmatmul.mubr.f32.gmra.mrb[0].mxu0 %v9969
  %v9971 = vpop.f32.mrb[0].mxu0
  %v9972 = vadd.f32 %v9894, %v9971
  %v9973 = vpop.f32.mrb[0].mxu0
  %9974 = vmatprep.mubr.f32.mxu0 0.0
  %v9975 = vand.u32 %v9490, 4294901760
  %9976 = vmatmul.mubr.f32.gmra.mrb[0].mxu0 %v9975
  %v9977 = vpop.f32.mrb[0].mxu0
  %v9978 = vadd.f32 %v9900, %v9977
  %v9979 = vpop.f32.mrb[0].mxu0
  %9980 = vdwg.mxu0
  %s9981 = scalar_lea.vmem %s1, 48
  %v9982 = vld [vmem:[%s9981] sm:$0xff]
  %v9983 = vld [vmem:[%s9981 + $0x8] sm:$0xff]
  %v9985 = vsel %vm6442, %v9982, 0
  %v9988 = vsel %vm6442, %v9983, 0
  %9990 = vmatprep.subr.mxu0 0.0
  %v9991 = vand.u32 %v9972, 4294901760
  %9992 = vmatpush1.msra.mxu0 %v9991
  %9993 = vmatprep.subr.mxu0 0.0
  %v9994 = vand.u32 %v9978, 4294901760
  %9995 = vmatpush1.msra.mxu0 %v9994
  %9996 = vmatprep.subr.mxu0 0.0
  %9997 = vmatpush1.msra.mxu0 0.0
  %9998 = vmatprep.subr.mxu0 0.0
  %9999 = vmatpush1.msra.mxu0 0.0
  %10000 = vmatprep.subr.mxu0 0.0
  %10001 = vmatpush1.msra.mxu0 0.0
  %10002 = vmatprep.subr.mxu0 0.0
  %10003 = vmatpush1.msra.mxu0 0.0
  %10004 = vmatprep.subr.mxu0 0.0
  %10005 = vmatpush1.msra.mxu0 0.0
  %10006 = vmatprep.subr.mxu0 0.0
  %10007 = vmatpush1.msra.mxu0 0.0
  %10008 = vmatprep.subr.mxu0 0.0
  %10009 = vmatpush1.msra.mxu0 0.0
  %10010 = vmatprep.subr.mxu0 0.0
  %10011 = vmatpush1.msra.mxu0 0.0
  %10012 = vmatprep.subr.mxu0 0.0
  %10013 = vmatpush1.msra.mxu0 0.0
  %10014 = vmatprep.subr.mxu0 0.0
  %10015 = vmatpush1.msra.mxu0 0.0
  %10016 = vmatprep.subr.mxu0 0.0
  %10017 = vmatpush1.msra.mxu0 0.0
  %10018 = vmatprep.subr.mxu0 0.0
  %10019 = vmatpush1.msra.mxu0 0.0
  %10020 = vmatprep.subr.mxu0 0.0
  %10021 = vmatpush1.msra.mxu0 0.0
  %10022 = vmatprep.subr.mxu0 0.0
  %10023 = vmatpush1.msra.mxu0 0.0
  %10024 = vmatprep.subr.mxu0 0.0
  %10025 = vmatpush1.msra.mxu0 0.0
  %10026 = vmatprep.subr.mxu0 0.0
  %10027 = vmatpush1.msra.mxu0 0.0
  %10028 = vmatprep.subr.mxu0 0.0
  %10029 = vmatpush1.msra.mxu0 0.0
  %10030 = vmatprep.subr.mxu0 0.0
  %10031 = vmatpush1.msra.mxu0 0.0
  %10032 = vmatprep.subr.mxu0 0.0
  %10033 = vmatpush1.msra.mxu0 0.0
  %10034 = vmatprep.subr.mxu0 0.0
  %10035 = vmatpush1.msra.mxu0 0.0
  %10036 = vmatprep.subr.mxu0 0.0
  %10037 = vmatpush1.msra.mxu0 0.0
  %10038 = vmatprep.subr.mxu0 0.0
  %10039 = vmatpush1.msra.mxu0 0.0
  %10040 = vmatprep.subr.mxu0 0.0
  %10041 = vmatpush1.msra.mxu0 0.0
  %10042 = vmatprep.subr.mxu0 0.0
  %10043 = vmatpush1.msra.mxu0 0.0
  %10044 = vmatprep.subr.mxu0 0.0
  %10045 = vmatpush1.msra.mxu0 0.0
  %10046 = vmatprep.subr.mxu0 0.0
  %10047 = vmatpush1.msra.mxu0 0.0
  %10048 = vmatprep.subr.mxu0 0.0
  %10049 = vmatpush1.msra.mxu0 0.0
  %10050 = vmatprep.subr.mxu0 0.0
  %10051 = vmatpush1.msra.mxu0 0.0
  %10052 = vmatprep.subr.mxu0 0.0
  %10053 = vmatpush1.msra.mxu0 0.0
  %10054 = vmatprep.subr.mxu0 0.0
  %10055 = vmatpush1.msra.mxu0 0.0
  %10056 = vmatprep.mubr.f32.mxu0 0.0
  %v10057 = vand.u32 %v9985, 4294901760
  %v10058 = vsub.f32 %v9985, %v10057
  %v10059 = vand.u32 %v10058, 4294901760
  %v10060 = vsub.f32 %v10058, %v10059
  %v10061 = vand.u32 %v10060, 4294901760
  %10062 = vmatmul.mubr.f32.gmra.mrb[0].mxu0 %v10061
  %v10063 = vpop.f32.mrb[0].mxu0
  %v10064 = vadd.f32 0.0, %v10063
  %v10065 = vpop.f32.mrb[0].mxu0
  %10066 = vmatprep.mubr.f32.mxu0 0.0
  %v10067 = vand.u32 %v9988, 4294901760
  %v10068 = vsub.f32 %v9988, %v10067
  %v10069 = vand.u32 %v10068, 4294901760
  %v10070 = vsub.f32 %v10068, %v10069
  %v10071 = vand.u32 %v10070, 4294901760
  %10072 = vmatmul.mubr.f32.gmra.mrb[0].mxu0 %v10071
  %v10073 = vpop.f32.mrb[0].mxu0
  %v10074 = vadd.f32 0.0, %v10073
  %v10075 = vpop.f32.mrb[0].mxu0
  %10076 = vdwg.mxu0
  %10077 = vmatprep.subr.mxu0 0.0
  %v10078 = vand.u32 %v9972, 4294901760
  %v10079 = vsub.f32 %v9972, %v10078
  %v10080 = vand.u32 %v10079, 4294901760
  %v10081 = vsub.f32 %v10079, %v10080
  %v10082 = vand.u32 %v10081, 4294901760
  %10083 = vmatpush1.msra.mxu0 %v10082
  %10084 = vmatprep.subr.mxu0 0.0
  %v10085 = vand.u32 %v9978, 4294901760
  %v10086 = vsub.f32 %v9978, %v10085
  %v10087 = vand.u32 %v10086, 4294901760
  %v10088 = vsub.f32 %v10086, %v10087
  %v10089 = vand.u32 %v10088, 4294901760
  %10090 = vmatpush1.msra.mxu0 %v10089
  %10091 = vmatprep.subr.mxu0 0.0
  %10092 = vmatpush1.msra.mxu0 0.0
  %10093 = vmatprep.subr.mxu0 0.0
  %10094 = vmatpush1.msra.mxu0 0.0
  %10095 = vmatprep.subr.mxu0 0.0
  %10096 = vmatpush1.msra.mxu0 0.0
  %10097 = vmatprep.subr.mxu0 0.0
  %10098 = vmatpush1.msra.mxu0 0.0
  %10099 = vmatprep.subr.mxu0 0.0
  %10100 = vmatpush1.msra.mxu0 0.0
  %10101 = vmatprep.subr.mxu0 0.0
  %10102 = vmatpush1.msra.mxu0 0.0
  %10103 = vmatprep.subr.mxu0 0.0
  %10104 = vmatpush1.msra.mxu0 0.0
  %10105 = vmatprep.subr.mxu0 0.0
  %10106 = vmatpush1.msra.mxu0 0.0
  %10107 = vmatprep.subr.mxu0 0.0
  %10108 = vmatpush1.msra.mxu0 0.0
  %10109 = vmatprep.subr.mxu0 0.0
  %10110 = vmatpush1.msra.mxu0 0.0
  %10111 = vmatprep.subr.mxu0 0.0
  %10112 = vmatpush1.msra.mxu0 0.0
  %10113 = vmatprep.subr.mxu0 0.0
  %10114 = vmatpush1.msra.mxu0 0.0
  %10115 = vmatprep.subr.mxu0 0.0
  %10116 = vmatpush1.msra.mxu0 0.0
  %10117 = vmatprep.subr.mxu0 0.0
  %10118 = vmatpush1.msra.mxu0 0.0
  %10119 = vmatprep.subr.mxu0 0.0
  %10120 = vmatpush1.msra.mxu0 0.0
  %10121 = vmatprep.subr.mxu0 0.0
  %10122 = vmatpush1.msra.mxu0 0.0
  %10123 = vmatprep.subr.mxu0 0.0
  %10124 = vmatpush1.msra.mxu0 0.0
  %10125 = vmatprep.subr.mxu0 0.0
  %10126 = vmatpush1.msra.mxu0 0.0
  %10127 = vmatprep.subr.mxu0 0.0
  %10128 = vmatpush1.msra.mxu0 0.0
  %10129 = vmatprep.subr.mxu0 0.0
  %10130 = vmatpush1.msra.mxu0 0.0
  %10131 = vmatprep.subr.mxu0 0.0
  %10132 = vmatpush1.msra.mxu0 0.0
  %10133 = vmatprep.subr.mxu0 0.0
  %10134 = vmatpush1.msra.mxu0 0.0
  %10135 = vmatprep.subr.mxu0 0.0
  %10136 = vmatpush1.msra.mxu0 0.0
  %10137 = vmatprep.subr.mxu0 0.0
  %10138 = vmatpush1.msra.mxu0 0.0
  %10139 = vmatprep.subr.mxu0 0.0
  %10140 = vmatpush1.msra.mxu0 0.0
  %10141 = vmatprep.subr.mxu0 0.0
  %10142 = vmatpush1.msra.mxu0 0.0
  %10143 = vmatprep.subr.mxu0 0.0
  %10144 = vmatpush1.msra.mxu0 0.0
  %10145 = vmatprep.subr.mxu0 0.0
  %10146 = vmatpush1.msra.mxu0 0.0
  %10147 = vmatprep.subr.mxu0 0.0
  %10148 = vmatpush1.msra.mxu0 0.0
  %10149 = vmatprep.subr.mxu0 0.0
  %10150 = vmatpush1.msra.mxu0 0.0
  %10151 = vmatprep.mubr.f32.mxu0 0.0
  %v10152 = vand.u32 %v9985, 4294901760
  %10153 = vmatmul.mubr.f32.gmra.mrb[0].mxu0 %v10152
  %v10154 = vpop.f32.mrb[0].mxu0
  %v10155 = vadd.f32 %v10064, %v10154
  %v10156 = vpop.f32.mrb[0].mxu0
  %10157 = vmatprep.mubr.f32.mxu0 0.0
  %v10158 = vand.u32 %v9988, 4294901760
  %10159 = vmatmul.mubr.f32.gmra.mrb[0].mxu0 %v10158
  %v10160 = vpop.f32.mrb[0].mxu0
  %v10161 = vadd.f32 %v10074, %v10160
  %v10162 = vpop.f32.mrb[0].mxu0
  %10163 = vdwg.mxu0
  %10164 = vmatprep.subr.mxu0 0.0
  %v10165 = vand.u32 %v9972, 4294901760
  %v10166 = vsub.f32 %v9972, %v10165
  %10167 = vmatpush1.msra.mxu0 %v10166
  %10168 = vmatprep.subr.mxu0 0.0
  %v10169 = vand.u32 %v9978, 4294901760
  %v10170 = vsub.f32 %v9978, %v10169
  %10171 = vmatpush1.msra.mxu0 %v10170
  %10172 = vmatprep.subr.mxu0 0.0
  %10173 = vmatpush1.msra.mxu0 0.0
  %10174 = vmatprep.subr.mxu0 0.0
  %10175 = vmatpush1.msra.mxu0 0.0
  %10176 = vmatprep.subr.mxu0 0.0
  %10177 = vmatpush1.msra.mxu0 0.0
  %10178 = vmatprep.subr.mxu0 0.0
  %10179 = vmatpush1.msra.mxu0 0.0
  %10180 = vmatprep.subr.mxu0 0.0
  %10181 = vmatpush1.msra.mxu0 0.0
  %10182 = vmatprep.subr.mxu0 0.0
  %10183 = vmatpush1.msra.mxu0 0.0
  %10184 = vmatprep.subr.mxu0 0.0
  %10185 = vmatpush1.msra.mxu0 0.0
  %10186 = vmatprep.subr.mxu0 0.0
  %10187 = vmatpush1.msra.mxu0 0.0
  %10188 = vmatprep.subr.mxu0 0.0
  %10189 = vmatpush1.msra.mxu0 0.0
  %10190 = vmatprep.subr.mxu0 0.0
  %10191 = vmatpush1.msra.mxu0 0.0
  %10192 = vmatprep.subr.mxu0 0.0
  %10193 = vmatpush1.msra.mxu0 0.0
  %10194 = vmatprep.subr.mxu0 0.0
  %10195 = vmatpush1.msra.mxu0 0.0
  %10196 = vmatprep.subr.mxu0 0.0
  %10197 = vmatpush1.msra.mxu0 0.0
  %10198 = vmatprep.subr.mxu0 0.0
  %10199 = vmatpush1.msra.mxu0 0.0
  %10200 = vmatprep.subr.mxu0 0.0
  %10201 = vmatpush1.msra.mxu0 0.0
  %10202 = vmatprep.subr.mxu0 0.0
  %10203 = vmatpush1.msra.mxu0 0.0
  %10204 = vmatprep.subr.mxu0 0.0
  %10205 = vmatpush1.msra.mxu0 0.0
  %10206 = vmatprep.subr.mxu0 0.0
  %10207 = vmatpush1.msra.mxu0 0.0
  %10208 = vmatprep.subr.mxu0 0.0
  %10209 = vmatpush1.msra.mxu0 0.0
  %10210 = vmatprep.subr.mxu0 0.0
  %10211 = vmatpush1.msra.mxu0 0.0
  %10212 = vmatprep.subr.mxu0 0.0
  %10213 = vmatpush1.msra.mxu0 0.0
  %10214 = vmatprep.subr.mxu0 0.0
  %10215 = vmatpush1.msra.mxu0 0.0
  %10216 = vmatprep.subr.mxu0 0.0
  %10217 = vmatpush1.msra.mxu0 0.0
  %10218 = vmatprep.subr.mxu0 0.0
  %10219 = vmatpush1.msra.mxu0 0.0
  %10220 = vmatprep.subr.mxu0 0.0
  %10221 = vmatpush1.msra.mxu0 0.0
  %10222 = vmatprep.subr.mxu0 0.0
  %10223 = vmatpush1.msra.mxu0 0.0
  %10224 = vmatprep.subr.mxu0 0.0
  %10225 = vmatpush1.msra.mxu0 0.0
  %10226 = vmatprep.subr.mxu0 0.0
  %10227 = vmatpush1.msra.mxu0 0.0
  %10228 = vmatprep.subr.mxu0 0.0
  %10229 = vmatpush1.msra.mxu0 0.0
  %10230 = vmatprep.subr.mxu0 0.0
  %10231 = vmatpush1.msra.mxu0 0.0
  %10232 = vmatprep.mubr.f32.mxu0 0.0
  %v10233 = vand.u32 %v9985, 4294901760
  %v10234 = vsub.f32 %v9985, %v10233
  %10235 = vmatmul.mubr.f32.gmra.mrb[0].mxu0 %v10234
  %v10236 = vpop.f32.mrb[0].mxu0
  %v10237 = vadd.f32 %v10155, %v10236
  %v10238 = vpop.f32.mrb[0].mxu0
  %10239 = vmatprep.mubr.f32.mxu0 0.0
  %v10240 = vand.u32 %v9988, 4294901760
  %v10241 = vsub.f32 %v9988, %v10240
  %10242 = vmatmul.mubr.f32.gmra.mrb[0].mxu0 %v10241
  %v10243 = vpop.f32.mrb[0].mxu0
  %v10244 = vadd.f32 %v10161, %v10243
  %v10245 = vpop.f32.mrb[0].mxu0
  %10246 = vdwg.mxu0
  %10247 = vmatprep.subr.mxu0 0.0
  %v10248 = vand.u32 %v9972, 4294901760
  %10249 = vmatpush1.msra.mxu0 %v10248
  %10250 = vmatprep.subr.mxu0 0.0
  %v10251 = vand.u32 %v9978, 4294901760
  %10252 = vmatpush1.msra.mxu0 %v10251
  %10253 = vmatprep.subr.mxu0 0.0
  %10254 = vmatpush1.msra.mxu0 0.0
  %10255 = vmatprep.subr.mxu0 0.0
  %10256 = vmatpush1.msra.mxu0 0.0
  %10257 = vmatprep.subr.mxu0 0.0
  %10258 = vmatpush1.msra.mxu0 0.0
  %10259 = vmatprep.subr.mxu0 0.0
  %10260 = vmatpush1.msra.mxu0 0.0
  %10261 = vmatprep.subr.mxu0 0.0
  %10262 = vmatpush1.msra.mxu0 0.0
  %10263 = vmatprep.subr.mxu0 0.0
  %10264 = vmatpush1.msra.mxu0 0.0
  %10265 = vmatprep.subr.mxu0 0.0
  %10266 = vmatpush1.msra.mxu0 0.0
  %10267 = vmatprep.subr.mxu0 0.0
  %10268 = vmatpush1.msra.mxu0 0.0
  %10269 = vmatprep.subr.mxu0 0.0
  %10270 = vmatpush1.msra.mxu0 0.0
  %10271 = vmatprep.subr.mxu0 0.0
  %10272 = vmatpush1.msra.mxu0 0.0
  %10273 = vmatprep.subr.mxu0 0.0
  %10274 = vmatpush1.msra.mxu0 0.0
  %10275 = vmatprep.subr.mxu0 0.0
  %10276 = vmatpush1.msra.mxu0 0.0
  %10277 = vmatprep.subr.mxu0 0.0
  %10278 = vmatpush1.msra.mxu0 0.0
  %10279 = vmatprep.subr.mxu0 0.0
  %10280 = vmatpush1.msra.mxu0 0.0
  %10281 = vmatprep.subr.mxu0 0.0
  %10282 = vmatpush1.msra.mxu0 0.0
  %10283 = vmatprep.subr.mxu0 0.0
  %10284 = vmatpush1.msra.mxu0 0.0
  %10285 = vmatprep.subr.mxu0 0.0
  %10286 = vmatpush1.msra.mxu0 0.0
  %10287 = vmatprep.subr.mxu0 0.0
  %10288 = vmatpush1.msra.mxu0 0.0
  %10289 = vmatprep.subr.mxu0 0.0
  %10290 = vmatpush1.msra.mxu0 0.0
  %10291 = vmatprep.subr.mxu0 0.0
  %10292 = vmatpush1.msra.mxu0 0.0
  %10293 = vmatprep.subr.mxu0 0.0
  %10294 = vmatpush1.msra.mxu0 0.0
  %10295 = vmatprep.subr.mxu0 0.0
  %10296 = vmatpush1.msra.mxu0 0.0
  %10297 = vmatprep.subr.mxu0 0.0
  %10298 = vmatpush1.msra.mxu0 0.0
  %10299 = vmatprep.subr.mxu0 0.0
  %10300 = vmatpush1.msra.mxu0 0.0
  %10301 = vmatprep.subr.mxu0 0.0
  %10302 = vmatpush1.msra.mxu0 0.0
  %10303 = vmatprep.subr.mxu0 0.0
  %10304 = vmatpush1.msra.mxu0 0.0
  %10305 = vmatprep.subr.mxu0 0.0
  %10306 = vmatpush1.msra.mxu0 0.0
  %10307 = vmatprep.subr.mxu0 0.0
  %10308 = vmatpush1.msra.mxu0 0.0
  %10309 = vmatprep.subr.mxu0 0.0
  %10310 = vmatpush1.msra.mxu0 0.0
  %10311 = vmatprep.subr.mxu0 0.0
  %10312 = vmatpush1.msra.mxu0 0.0
  %10313 = vmatprep.mubr.f32.mxu0 0.0
  %v10314 = vand.u32 %v9985, 4294901760
  %v10315 = vsub.f32 %v9985, %v10314
  %v10316 = vand.u32 %v10315, 4294901760
  %10317 = vmatmul.mubr.f32.gmra.mrb[0].mxu0 %v10316
  %v10318 = vpop.f32.mrb[0].mxu0
  %v10319 = vadd.f32 %v10237, %v10318
  %v10320 = vpop.f32.mrb[0].mxu0
  %10321 = vmatprep.mubr.f32.mxu0 0.0
  %v10322 = vand.u32 %v9988, 4294901760
  %v10323 = vsub.f32 %v9988, %v10322
  %v10324 = vand.u32 %v10323, 4294901760
  %10325 = vmatmul.mubr.f32.gmra.mrb[0].mxu0 %v10324
  %v10326 = vpop.f32.mrb[0].mxu0
  %v10327 = vadd.f32 %v10244, %v10326
  %v10328 = vpop.f32.mrb[0].mxu0
  %10329 = vdwg.mxu0
  %10330 = vmatprep.subr.mxu0 0.0
  %v10331 = vand.u32 %v9972, 4294901760
  %v10332 = vsub.f32 %v9972, %v10331
  %v10333 = vand.u32 %v10332, 4294901760
  %10334 = vmatpush1.msra.mxu0 %v10333
  %10335 = vmatprep.subr.mxu0 0.0
  %v10336 = vand.u32 %v9978, 4294901760
  %v10337 = vsub.f32 %v9978, %v10336
  %v10338 = vand.u32 %v10337, 4294901760
  %10339 = vmatpush1.msra.mxu0 %v10338
  %10340 = vmatprep.subr.mxu0 0.0
  %10341 = vmatpush1.msra.mxu0 0.0
  %10342 = vmatprep.subr.mxu0 0.0
  %10343 = vmatpush1.msra.mxu0 0.0
  %10344 = vmatprep.subr.mxu0 0.0
  %10345 = vmatpush1.msra.mxu0 0.0
  %10346 = vmatprep.subr.mxu0 0.0
  %10347 = vmatpush1.msra.mxu0 0.0
  %10348 = vmatprep.subr.mxu0 0.0
  %10349 = vmatpush1.msra.mxu0 0.0
  %10350 = vmatprep.subr.mxu0 0.0
  %10351 = vmatpush1.msra.mxu0 0.0
  %10352 = vmatprep.subr.mxu0 0.0
  %10353 = vmatpush1.msra.mxu0 0.0
  %10354 = vmatprep.subr.mxu0 0.0
  %10355 = vmatpush1.msra.mxu0 0.0
  %10356 = vmatprep.subr.mxu0 0.0
  %10357 = vmatpush1.msra.mxu0 0.0
  %10358 = vmatprep.subr.mxu0 0.0
  %10359 = vmatpush1.msra.mxu0 0.0
  %10360 = vmatprep.subr.mxu0 0.0
  %10361 = vmatpush1.msra.mxu0 0.0
  %10362 = vmatprep.subr.mxu0 0.0
  %10363 = vmatpush1.msra.mxu0 0.0
  %10364 = vmatprep.subr.mxu0 0.0
  %10365 = vmatpush1.msra.mxu0 0.0
  %10366 = vmatprep.subr.mxu0 0.0
  %10367 = vmatpush1.msra.mxu0 0.0
  %10368 = vmatprep.subr.mxu0 0.0
  %10369 = vmatpush1.msra.mxu0 0.0
  %10370 = vmatprep.subr.mxu0 0.0
  %10371 = vmatpush1.msra.mxu0 0.0
  %10372 = vmatprep.subr.mxu0 0.0
  %10373 = vmatpush1.msra.mxu0 0.0
  %10374 = vmatprep.subr.mxu0 0.0
  %10375 = vmatpush1.msra.mxu0 0.0
  %10376 = vmatprep.subr.mxu0 0.0
  %10377 = vmatpush1.msra.mxu0 0.0
  %10378 = vmatprep.subr.mxu0 0.0
  %10379 = vmatpush1.msra.mxu0 0.0
  %10380 = vmatprep.subr.mxu0 0.0
  %10381 = vmatpush1.msra.mxu0 0.0
  %10382 = vmatprep.subr.mxu0 0.0
  %10383 = vmatpush1.msra.mxu0 0.0
  %10384 = vmatprep.subr.mxu0 0.0
  %10385 = vmatpush1.msra.mxu0 0.0
  %10386 = vmatprep.subr.mxu0 0.0
  %10387 = vmatpush1.msra.mxu0 0.0
  %10388 = vmatprep.subr.mxu0 0.0
  %10389 = vmatpush1.msra.mxu0 0.0
  %10390 = vmatprep.subr.mxu0 0.0
  %10391 = vmatpush1.msra.mxu0 0.0
  %10392 = vmatprep.subr.mxu0 0.0
  %10393 = vmatpush1.msra.mxu0 0.0
  %10394 = vmatprep.subr.mxu0 0.0
  %10395 = vmatpush1.msra.mxu0 0.0
  %10396 = vmatprep.subr.mxu0 0.0
  %10397 = vmatpush1.msra.mxu0 0.0
  %10398 = vmatprep.subr.mxu0 0.0
  %10399 = vmatpush1.msra.mxu0 0.0
  %10400 = vmatprep.mubr.f32.mxu0 0.0
  %v10401 = vand.u32 %v9985, 4294901760
  %10402 = vmatmul.mubr.f32.gmra.mrb[0].mxu0 %v10401
  %v10403 = vpop.f32.mrb[0].mxu0
  %v10404 = vadd.f32 %v10319, %v10403
  %v10405 = vpop.f32.mrb[0].mxu0
  %10406 = vmatprep.mubr.f32.mxu0 0.0
  %v10407 = vand.u32 %v9988, 4294901760
  %10408 = vmatmul.mubr.f32.gmra.mrb[0].mxu0 %v10407
  %v10409 = vpop.f32.mrb[0].mxu0
  %v10410 = vadd.f32 %v10327, %v10409
  %v10411 = vpop.f32.mrb[0].mxu0
  %10412 = vdwg.mxu0
  %10413 = vmatprep.subr.mxu0 0.0
  %v10414 = vand.u32 %v9972, 4294901760
  %10415 = vmatpush1.msra.mxu0 %v10414
  %10416 = vmatprep.subr.mxu0 0.0
  %v10417 = vand.u32 %v9978, 4294901760
  %10418 = vmatpush1.msra.mxu0 %v10417
  %10419 = vmatprep.subr.mxu0 0.0
  %10420 = vmatpush1.msra.mxu0 0.0
  %10421 = vmatprep.subr.mxu0 0.0
  %10422 = vmatpush1.msra.mxu0 0.0
  %10423 = vmatprep.subr.mxu0 0.0
  %10424 = vmatpush1.msra.mxu0 0.0
  %10425 = vmatprep.subr.mxu0 0.0
  %10426 = vmatpush1.msra.mxu0 0.0
  %10427 = vmatprep.subr.mxu0 0.0
  %10428 = vmatpush1.msra.mxu0 0.0
  %10429 = vmatprep.subr.mxu0 0.0
  %10430 = vmatpush1.msra.mxu0 0.0
  %10431 = vmatprep.subr.mxu0 0.0
  %10432 = vmatpush1.msra.mxu0 0.0
  %10433 = vmatprep.subr.mxu0 0.0
  %10434 = vmatpush1.msra.mxu0 0.0
  %10435 = vmatprep.subr.mxu0 0.0
  %10436 = vmatpush1.msra.mxu0 0.0
  %10437 = vmatprep.subr.mxu0 0.0
  %10438 = vmatpush1.msra.mxu0 0.0
  %10439 = vmatprep.subr.mxu0 0.0
  %10440 = vmatpush1.msra.mxu0 0.0
  %10441 = vmatprep.subr.mxu0 0.0
  %10442 = vmatpush1.msra.mxu0 0.0
  %10443 = vmatprep.subr.mxu0 0.0
  %10444 = vmatpush1.msra.mxu0 0.0
  %10445 = vmatprep.subr.mxu0 0.0
  %10446 = vmatpush1.msra.mxu0 0.0
  %10447 = vmatprep.subr.mxu0 0.0
  %10448 = vmatpush1.msra.mxu0 0.0
  %10449 = vmatprep.subr.mxu0 0.0
  %10450 = vmatpush1.msra.mxu0 0.0
  %10451 = vmatprep.subr.mxu0 0.0
  %10452 = vmatpush1.msra.mxu0 0.0
  %10453 = vmatprep.subr.mxu0 0.0
  %10454 = vmatpush1.msra.mxu0 0.0
  %10455 = vmatprep.subr.mxu0 0.0
  %10456 = vmatpush1.msra.mxu0 0.0
  %10457 = vmatprep.subr.mxu0 0.0
  %10458 = vmatpush1.msra.mxu0 0.0
  %10459 = vmatprep.subr.mxu0 0.0
  %10460 = vmatpush1.msra.mxu0 0.0
  %10461 = vmatprep.subr.mxu0 0.0
  %10462 = vmatpush1.msra.mxu0 0.0
  %10463 = vmatprep.subr.mxu0 0.0
  %10464 = vmatpush1.msra.mxu0 0.0
  %10465 = vmatprep.subr.mxu0 0.0
  %10466 = vmatpush1.msra.mxu0 0.0
  %10467 = vmatprep.subr.mxu0 0.0
  %10468 = vmatpush1.msra.mxu0 0.0
  %10469 = vmatprep.subr.mxu0 0.0
  %10470 = vmatpush1.msra.mxu0 0.0
  %10471 = vmatprep.subr.mxu0 0.0
  %10472 = vmatpush1.msra.mxu0 0.0
  %10473 = vmatprep.subr.mxu0 0.0
  %10474 = vmatpush1.msra.mxu0 0.0
  %10475 = vmatprep.subr.mxu0 0.0
  %10476 = vmatpush1.msra.mxu0 0.0
  %10477 = vmatprep.subr.mxu0 0.0
  %10478 = vmatpush1.msra.mxu0 0.0
  %10479 = vmatprep.mubr.f32.mxu0 0.0
  %v10480 = vand.u32 %v9985, 4294901760
  %10481 = vmatmul.mubr.f32.gmra.mrb[0].mxu0 %v10480
  %v10482 = vpop.f32.mrb[0].mxu0
  %v10483 = vadd.f32 %v10404, %v10482
  %v10484 = vpop.f32.mrb[0].mxu0
  %10485 = vmatprep.mubr.f32.mxu0 0.0
  %v10486 = vand.u32 %v9988, 4294901760
  %10487 = vmatmul.mubr.f32.gmra.mrb[0].mxu0 %v10486
  %v10488 = vpop.f32.mrb[0].mxu0
  %v10489 = vadd.f32 %v10410, %v10488
  %v10490 = vpop.f32.mrb[0].mxu0
  %10491 = vdwg.mxu0
  %v10492 = vmax.f32 %v10483, 0.0
  %v10493 = vmax.f32 %v10489, 0.0
  %s10494 = scalar_lea.vmem %s2, 64
  %v10495 = vld [vmem:[%s10494] sm:$0xff]
  %v10496 = vld [vmem:[%s10494 + $0x8] sm:$0xff]
  %v10498 = vsel %vm41, %v10495, 0
  %v10501 = vsel %vm41, %v10496, 0
  %10503 = vmatprep.subr.mxu0 0.0
  %v10504 = vand.u32 %v5464, 4294901760
  %10505 = vmatpush1.msra.mxu0 %v10504
  %10506 = vmatprep.subr.mxu0 0.0
  %10507 = vmatpush1.msra.mxu0 0.0
  %10508 = vmatprep.subr.mxu0 0.0
  %10509 = vmatpush1.msra.mxu0 0.0
  %10510 = vmatprep.subr.mxu0 0.0
  %10511 = vmatpush1.msra.mxu0 0.0
  %10512 = vmatprep.subr.mxu0 0.0
  %10513 = vmatpush1.msra.mxu0 0.0
  %10514 = vmatprep.subr.mxu0 0.0
  %10515 = vmatpush1.msra.mxu0 0.0
  %10516 = vmatprep.subr.mxu0 0.0
  %10517 = vmatpush1.msra.mxu0 0.0
  %10518 = vmatprep.subr.mxu0 0.0
  %10519 = vmatpush1.msra.mxu0 0.0
  %10520 = vmatprep.subr.mxu0 0.0
  %10521 = vmatpush1.msra.mxu0 0.0
  %10522 = vmatprep.subr.mxu0 0.0
  %10523 = vmatpush1.msra.mxu0 0.0
  %10524 = vmatprep.subr.mxu0 0.0
  %10525 = vmatpush1.msra.mxu0 0.0
  %10526 = vmatprep.subr.mxu0 0.0
  %10527 = vmatpush1.msra.mxu0 0.0
  %10528 = vmatprep.subr.mxu0 0.0
  %10529 = vmatpush1.msra.mxu0 0.0
  %10530 = vmatprep.subr.mxu0 0.0
  %10531 = vmatpush1.msra.mxu0 0.0
  %10532 = vmatprep.subr.mxu0 0.0
  %10533 = vmatpush1.msra.mxu0 0.0
  %10534 = vmatprep.subr.mxu0 0.0
  %10535 = vmatpush1.msra.mxu0 0.0
  %10536 = vmatprep.subr.mxu0 0.0
  %10537 = vmatpush1.msra.mxu0 0.0
  %10538 = vmatprep.subr.mxu0 0.0
  %10539 = vmatpush1.msra.mxu0 0.0
  %10540 = vmatprep.subr.mxu0 0.0
  %10541 = vmatpush1.msra.mxu0 0.0
  %10542 = vmatprep.subr.mxu0 0.0
  %10543 = vmatpush1.msra.mxu0 0.0
  %10544 = vmatprep.subr.mxu0 0.0
  %10545 = vmatpush1.msra.mxu0 0.0
  %10546 = vmatprep.subr.mxu0 0.0
  %10547 = vmatpush1.msra.mxu0 0.0
  %10548 = vmatprep.subr.mxu0 0.0
  %10549 = vmatpush1.msra.mxu0 0.0
  %10550 = vmatprep.subr.mxu0 0.0
  %10551 = vmatpush1.msra.mxu0 0.0
  %10552 = vmatprep.subr.mxu0 0.0
  %10553 = vmatpush1.msra.mxu0 0.0
  %10554 = vmatprep.subr.mxu0 0.0
  %10555 = vmatpush1.msra.mxu0 0.0
  %10556 = vmatprep.subr.mxu0 0.0
  %10557 = vmatpush1.msra.mxu0 0.0
  %10558 = vmatprep.subr.mxu0 0.0
  %10559 = vmatpush1.msra.mxu0 0.0
  %10560 = vmatprep.subr.mxu0 0.0
  %10561 = vmatpush1.msra.mxu0 0.0
  %10562 = vmatprep.subr.mxu0 0.0
  %10563 = vmatpush1.msra.mxu0 0.0
  %10564 = vmatprep.subr.mxu0 0.0
  %10565 = vmatpush1.msra.mxu0 0.0
  %10566 = vmatprep.subr.mxu0 0.0
  %10567 = vmatpush1.msra.mxu0 0.0
  %10568 = vmatprep.mubr.f32.mxu0 0.0
  %v10569 = vand.u32 %v10498, 4294901760
  %v10570 = vsub.f32 %v10498, %v10569
  %v10571 = vand.u32 %v10570, 4294901760
  %v10572 = vsub.f32 %v10570, %v10571
  %v10573 = vand.u32 %v10572, 4294901760
  %10574 = vmatmul.mubr.f32.gmra.mrb[0].mxu0 %v10573
  %v10575 = vpop.f32.mrb[0].mxu0
  %v10576 = vadd.f32 0.0, %v10575
  %v10577 = vpop.f32.mrb[0].mxu0
  %10578 = vmatprep.mubr.f32.mxu0 0.0
  %v10579 = vand.u32 %v10501, 4294901760
  %v10580 = vsub.f32 %v10501, %v10579
  %v10581 = vand.u32 %v10580, 4294901760
  %v10582 = vsub.f32 %v10580, %v10581
  %v10583 = vand.u32 %v10582, 4294901760
  %10584 = vmatmul.mubr.f32.gmra.mrb[0].mxu0 %v10583
  %v10585 = vpop.f32.mrb[0].mxu0
  %v10586 = vadd.f32 0.0, %v10585
  %v10587 = vpop.f32.mrb[0].mxu0
  %10588 = vdwg.mxu0
  %10589 = vmatprep.subr.mxu0 0.0
  %v10590 = vand.u32 %v5464, 4294901760
  %v10591 = vsub.f32 %v5464, %v10590
  %v10592 = vand.u32 %v10591, 4294901760
  %v10593 = vsub.f32 %v10591, %v10592
  %v10594 = vand.u32 %v10593, 4294901760
  %10595 = vmatpush1.msra.mxu0 %v10594
  %10596 = vmatprep.subr.mxu0 0.0
  %10597 = vmatpush1.msra.mxu0 0.0
  %10598 = vmatprep.subr.mxu0 0.0
  %10599 = vmatpush1.msra.mxu0 0.0
  %10600 = vmatprep.subr.mxu0 0.0
  %10601 = vmatpush1.msra.mxu0 0.0
  %10602 = vmatprep.subr.mxu0 0.0
  %10603 = vmatpush1.msra.mxu0 0.0
  %10604 = vmatprep.subr.mxu0 0.0
  %10605 = vmatpush1.msra.mxu0 0.0
  %10606 = vmatprep.subr.mxu0 0.0
  %10607 = vmatpush1.msra.mxu0 0.0
  %10608 = vmatprep.subr.mxu0 0.0
  %10609 = vmatpush1.msra.mxu0 0.0
  %10610 = vmatprep.subr.mxu0 0.0
  %10611 = vmatpush1.msra.mxu0 0.0
  %10612 = vmatprep.subr.mxu0 0.0
  %10613 = vmatpush1.msra.mxu0 0.0
  %10614 = vmatprep.subr.mxu0 0.0
  %10615 = vmatpush1.msra.mxu0 0.0
  %10616 = vmatprep.subr.mxu0 0.0
  %10617 = vmatpush1.msra.mxu0 0.0
  %10618 = vmatprep.subr.mxu0 0.0
  %10619 = vmatpush1.msra.mxu0 0.0
  %10620 = vmatprep.subr.mxu0 0.0
  %10621 = vmatpush1.msra.mxu0 0.0
  %10622 = vmatprep.subr.mxu0 0.0
  %10623 = vmatpush1.msra.mxu0 0.0
  %10624 = vmatprep.subr.mxu0 0.0
  %10625 = vmatpush1.msra.mxu0 0.0
  %10626 = vmatprep.subr.mxu0 0.0
  %10627 = vmatpush1.msra.mxu0 0.0
  %10628 = vmatprep.subr.mxu0 0.0
  %10629 = vmatpush1.msra.mxu0 0.0
  %10630 = vmatprep.subr.mxu0 0.0
  %10631 = vmatpush1.msra.mxu0 0.0
  %10632 = vmatprep.subr.mxu0 0.0
  %10633 = vmatpush1.msra.mxu0 0.0
  %10634 = vmatprep.subr.mxu0 0.0
  %10635 = vmatpush1.msra.mxu0 0.0
  %10636 = vmatprep.subr.mxu0 0.0
  %10637 = vmatpush1.msra.mxu0 0.0
  %10638 = vmatprep.subr.mxu0 0.0
  %10639 = vmatpush1.msra.mxu0 0.0
  %10640 = vmatprep.subr.mxu0 0.0
  %10641 = vmatpush1.msra.mxu0 0.0
  %10642 = vmatprep.subr.mxu0 0.0
  %10643 = vmatpush1.msra.mxu0 0.0
  %10644 = vmatprep.subr.mxu0 0.0
  %10645 = vmatpush1.msra.mxu0 0.0
  %10646 = vmatprep.subr.mxu0 0.0
  %10647 = vmatpush1.msra.mxu0 0.0
  %10648 = vmatprep.subr.mxu0 0.0
  %10649 = vmatpush1.msra.mxu0 0.0
  %10650 = vmatprep.subr.mxu0 0.0
  %10651 = vmatpush1.msra.mxu0 0.0
  %10652 = vmatprep.subr.mxu0 0.0
  %10653 = vmatpush1.msra.mxu0 0.0
  %10654 = vmatprep.subr.mxu0 0.0
  %10655 = vmatpush1.msra.mxu0 0.0
  %10656 = vmatprep.subr.mxu0 0.0
  %10657 = vmatpush1.msra.mxu0 0.0
  %10658 = vmatprep.mubr.f32.mxu0 0.0
  %v10659 = vand.u32 %v10498, 4294901760
  %10660 = vmatmul.mubr.f32.gmra.mrb[0].mxu0 %v10659
  %v10661 = vpop.f32.mrb[0].mxu0
  %v10662 = vadd.f32 %v10576, %v10661
  %v10663 = vpop.f32.mrb[0].mxu0
  %10664 = vmatprep.mubr.f32.mxu0 0.0
  %v10665 = vand.u32 %v10501, 4294901760
  %10666 = vmatmul.mubr.f32.gmra.mrb[0].mxu0 %v10665
  %v10667 = vpop.f32.mrb[0].mxu0
  %v10668 = vadd.f32 %v10586, %v10667
  %v10669 = vpop.f32.mrb[0].mxu0
  %10670 = vdwg.mxu0
  %10671 = vmatprep.subr.mxu0 0.0
  %v10672 = vand.u32 %v5464, 4294901760
  %v10673 = vsub.f32 %v5464, %v10672
  %10674 = vmatpush1.msra.mxu0 %v10673
  %10675 = vmatprep.subr.mxu0 0.0
  %10676 = vmatpush1.msra.mxu0 0.0
  %10677 = vmatprep.subr.mxu0 0.0
  %10678 = vmatpush1.msra.mxu0 0.0
  %10679 = vmatprep.subr.mxu0 0.0
  %10680 = vmatpush1.msra.mxu0 0.0
  %10681 = vmatprep.subr.mxu0 0.0
  %10682 = vmatpush1.msra.mxu0 0.0
  %10683 = vmatprep.subr.mxu0 0.0
  %10684 = vmatpush1.msra.mxu0 0.0
  %10685 = vmatprep.subr.mxu0 0.0
  %10686 = vmatpush1.msra.mxu0 0.0
  %10687 = vmatprep.subr.mxu0 0.0
  %10688 = vmatpush1.msra.mxu0 0.0
  %10689 = vmatprep.subr.mxu0 0.0
  %10690 = vmatpush1.msra.mxu0 0.0
  %10691 = vmatprep.subr.mxu0 0.0
  %10692 = vmatpush1.msra.mxu0 0.0
  %10693 = vmatprep.subr.mxu0 0.0
  %10694 = vmatpush1.msra.mxu0 0.0
  %10695 = vmatprep.subr.mxu0 0.0
  %10696 = vmatpush1.msra.mxu0 0.0
  %10697 = vmatprep.subr.mxu0 0.0
  %10698 = vmatpush1.msra.mxu0 0.0
  %10699 = vmatprep.subr.mxu0 0.0
  %10700 = vmatpush1.msra.mxu0 0.0
  %10701 = vmatprep.subr.mxu0 0.0
  %10702 = vmatpush1.msra.mxu0 0.0
  %10703 = vmatprep.subr.mxu0 0.0
  %10704 = vmatpush1.msra.mxu0 0.0
  %10705 = vmatprep.subr.mxu0 0.0
  %10706 = vmatpush1.msra.mxu0 0.0
  %10707 = vmatprep.subr.mxu0 0.0
  %10708 = vmatpush1.msra.mxu0 0.0
  %10709 = vmatprep.subr.mxu0 0.0
  %10710 = vmatpush1.msra.mxu0 0.0
  %10711 = vmatprep.subr.mxu0 0.0
  %10712 = vmatpush1.msra.mxu0 0.0
  %10713 = vmatprep.subr.mxu0 0.0
  %10714 = vmatpush1.msra.mxu0 0.0
  %10715 = vmatprep.subr.mxu0 0.0
  %10716 = vmatpush1.msra.mxu0 0.0
  %10717 = vmatprep.subr.mxu0 0.0
  %10718 = vmatpush1.msra.mxu0 0.0
  %10719 = vmatprep.subr.mxu0 0.0
  %10720 = vmatpush1.msra.mxu0 0.0
  %10721 = vmatprep.subr.mxu0 0.0
  %10722 = vmatpush1.msra.mxu0 0.0
  %10723 = vmatprep.subr.mxu0 0.0
  %10724 = vmatpush1.msra.mxu0 0.0
  %10725 = vmatprep.subr.mxu0 0.0
  %10726 = vmatpush1.msra.mxu0 0.0
  %10727 = vmatprep.subr.mxu0 0.0
  %10728 = vmatpush1.msra.mxu0 0.0
  %10729 = vmatprep.subr.mxu0 0.0
  %10730 = vmatpush1.msra.mxu0 0.0
  %10731 = vmatprep.subr.mxu0 0.0
  %10732 = vmatpush1.msra.mxu0 0.0
  %10733 = vmatprep.subr.mxu0 0.0
  %10734 = vmatpush1.msra.mxu0 0.0
  %10735 = vmatprep.subr.mxu0 0.0
  %10736 = vmatpush1.msra.mxu0 0.0
  %10737 = vmatprep.mubr.f32.mxu0 0.0
  %v10738 = vand.u32 %v10498, 4294901760
  %v10739 = vsub.f32 %v10498, %v10738
  %10740 = vmatmul.mubr.f32.gmra.mrb[0].mxu0 %v10739
  %v10741 = vpop.f32.mrb[0].mxu0
  %v10742 = vadd.f32 %v10662, %v10741
  %v10743 = vpop.f32.mrb[0].mxu0
  %10744 = vmatprep.mubr.f32.mxu0 0.0
  %v10745 = vand.u32 %v10501, 4294901760
  %v10746 = vsub.f32 %v10501, %v10745
  %10747 = vmatmul.mubr.f32.gmra.mrb[0].mxu0 %v10746
  %v10748 = vpop.f32.mrb[0].mxu0
  %v10749 = vadd.f32 %v10668, %v10748
  %v10750 = vpop.f32.mrb[0].mxu0
  %10751 = vdwg.mxu0
  %10752 = vmatprep.subr.mxu0 0.0
  %v10753 = vand.u32 %v5464, 4294901760
  %10754 = vmatpush1.msra.mxu0 %v10753
  %10755 = vmatprep.subr.mxu0 0.0
  %10756 = vmatpush1.msra.mxu0 0.0
  %10757 = vmatprep.subr.mxu0 0.0
  %10758 = vmatpush1.msra.mxu0 0.0
  %10759 = vmatprep.subr.mxu0 0.0
  %10760 = vmatpush1.msra.mxu0 0.0
  %10761 = vmatprep.subr.mxu0 0.0
  %10762 = vmatpush1.msra.mxu0 0.0
  %10763 = vmatprep.subr.mxu0 0.0
  %10764 = vmatpush1.msra.mxu0 0.0
  %10765 = vmatprep.subr.mxu0 0.0
  %10766 = vmatpush1.msra.mxu0 0.0
  %10767 = vmatprep.subr.mxu0 0.0
  %10768 = vmatpush1.msra.mxu0 0.0
  %10769 = vmatprep.subr.mxu0 0.0
  %10770 = vmatpush1.msra.mxu0 0.0
  %10771 = vmatprep.subr.mxu0 0.0
  %10772 = vmatpush1.msra.mxu0 0.0
  %10773 = vmatprep.subr.mxu0 0.0
  %10774 = vmatpush1.msra.mxu0 0.0
  %10775 = vmatprep.subr.mxu0 0.0
  %10776 = vmatpush1.msra.mxu0 0.0
  %10777 = vmatprep.subr.mxu0 0.0
  %10778 = vmatpush1.msra.mxu0 0.0
  %10779 = vmatprep.subr.mxu0 0.0
  %10780 = vmatpush1.msra.mxu0 0.0
  %10781 = vmatprep.subr.mxu0 0.0
  %10782 = vmatpush1.msra.mxu0 0.0
  %10783 = vmatprep.subr.mxu0 0.0
  %10784 = vmatpush1.msra.mxu0 0.0
  %10785 = vmatprep.subr.mxu0 0.0
  %10786 = vmatpush1.msra.mxu0 0.0
  %10787 = vmatprep.subr.mxu0 0.0
  %10788 = vmatpush1.msra.mxu0 0.0
  %10789 = vmatprep.subr.mxu0 0.0
  %10790 = vmatpush1.msra.mxu0 0.0
  %10791 = vmatprep.subr.mxu0 0.0
  %10792 = vmatpush1.msra.mxu0 0.0
  %10793 = vmatprep.subr.mxu0 0.0
  %10794 = vmatpush1.msra.mxu0 0.0
  %10795 = vmatprep.subr.mxu0 0.0
  %10796 = vmatpush1.msra.mxu0 0.0
  %10797 = vmatprep.subr.mxu0 0.0
  %10798 = vmatpush1.msra.mxu0 0.0
  %10799 = vmatprep.subr.mxu0 0.0
  %10800 = vmatpush1.msra.mxu0 0.0
  %10801 = vmatprep.subr.mxu0 0.0
  %10802 = vmatpush1.msra.mxu0 0.0
  %10803 = vmatprep.subr.mxu0 0.0
  %10804 = vmatpush1.msra.mxu0 0.0
  %10805 = vmatprep.subr.mxu0 0.0
  %10806 = vmatpush1.msra.mxu0 0.0
  %10807 = vmatprep.subr.mxu0 0.0
  %10808 = vmatpush1.msra.mxu0 0.0
  %10809 = vmatprep.subr.mxu0 0.0
  %10810 = vmatpush1.msra.mxu0 0.0
  %10811 = vmatprep.subr.mxu0 0.0
  %10812 = vmatpush1.msra.mxu0 0.0
  %10813 = vmatprep.subr.mxu0 0.0
  %10814 = vmatpush1.msra.mxu0 0.0
  %10815 = vmatprep.subr.mxu0 0.0
  %10816 = vmatpush1.msra.mxu0 0.0
  %10817 = vmatprep.mubr.f32.mxu0 0.0
  %v10818 = vand.u32 %v10498, 4294901760
  %v10819 = vsub.f32 %v10498, %v10818
  %v10820 = vand.u32 %v10819, 4294901760
  %10821 = vmatmul.mubr.f32.gmra.mrb[0].mxu0 %v10820
  %v10822 = vpop.f32.mrb[0].mxu0
  %v10823 = vadd.f32 %v10742, %v10822
  %v10824 = vpop.f32.mrb[0].mxu0
  %10825 = vmatprep.mubr.f32.mxu0 0.0
  %v10826 = vand.u32 %v10501, 4294901760
  %v10827 = vsub.f32 %v10501, %v10826
  %v10828 = vand.u32 %v10827, 4294901760
  %10829 = vmatmul.mubr.f32.gmra.mrb[0].mxu0 %v10828
  %v10830 = vpop.f32.mrb[0].mxu0
  %v10831 = vadd.f32 %v10749, %v10830
  %v10832 = vpop.f32.mrb[0].mxu0
  %10833 = vdwg.mxu0
  %10834 = vmatprep.subr.mxu0 0.0
  %v10835 = vand.u32 %v5464, 4294901760
  %v10836 = vsub.f32 %v5464, %v10835
  %v10837 = vand.u32 %v10836, 4294901760
  %10838 = vmatpush1.msra.mxu0 %v10837
  %10839 = vmatprep.subr.mxu0 0.0
  %10840 = vmatpush1.msra.mxu0 0.0
  %10841 = vmatprep.subr.mxu0 0.0
  %10842 = vmatpush1.msra.mxu0 0.0
  %10843 = vmatprep.subr.mxu0 0.0
  %10844 = vmatpush1.msra.mxu0 0.0
  %10845 = vmatprep.subr.mxu0 0.0
  %10846 = vmatpush1.msra.mxu0 0.0
  %10847 = vmatprep.subr.mxu0 0.0
  %10848 = vmatpush1.msra.mxu0 0.0
  %10849 = vmatprep.subr.mxu0 0.0
  %10850 = vmatpush1.msra.mxu0 0.0
  %10851 = vmatprep.subr.mxu0 0.0
  %10852 = vmatpush1.msra.mxu0 0.0
  %10853 = vmatprep.subr.mxu0 0.0
  %10854 = vmatpush1.msra.mxu0 0.0
  %10855 = vmatprep.subr.mxu0 0.0
  %10856 = vmatpush1.msra.mxu0 0.0
  %10857 = vmatprep.subr.mxu0 0.0
  %10858 = vmatpush1.msra.mxu0 0.0
  %10859 = vmatprep.subr.mxu0 0.0
  %10860 = vmatpush1.msra.mxu0 0.0
  %10861 = vmatprep.subr.mxu0 0.0
  %10862 = vmatpush1.msra.mxu0 0.0
  %10863 = vmatprep.subr.mxu0 0.0
  %10864 = vmatpush1.msra.mxu0 0.0
  %10865 = vmatprep.subr.mxu0 0.0
  %10866 = vmatpush1.msra.mxu0 0.0
  %10867 = vmatprep.subr.mxu0 0.0
  %10868 = vmatpush1.msra.mxu0 0.0
  %10869 = vmatprep.subr.mxu0 0.0
  %10870 = vmatpush1.msra.mxu0 0.0
  %10871 = vmatprep.subr.mxu0 0.0
  %10872 = vmatpush1.msra.mxu0 0.0
  %10873 = vmatprep.subr.mxu0 0.0
  %10874 = vmatpush1.msra.mxu0 0.0
  %10875 = vmatprep.subr.mxu0 0.0
  %10876 = vmatpush1.msra.mxu0 0.0
  %10877 = vmatprep.subr.mxu0 0.0
  %10878 = vmatpush1.msra.mxu0 0.0
  %10879 = vmatprep.subr.mxu0 0.0
  %10880 = vmatpush1.msra.mxu0 0.0
  %10881 = vmatprep.subr.mxu0 0.0
  %10882 = vmatpush1.msra.mxu0 0.0
  %10883 = vmatprep.subr.mxu0 0.0
  %10884 = vmatpush1.msra.mxu0 0.0
  %10885 = vmatprep.subr.mxu0 0.0
  %10886 = vmatpush1.msra.mxu0 0.0
  %10887 = vmatprep.subr.mxu0 0.0
  %10888 = vmatpush1.msra.mxu0 0.0
  %10889 = vmatprep.subr.mxu0 0.0
  %10890 = vmatpush1.msra.mxu0 0.0
  %10891 = vmatprep.subr.mxu0 0.0
  %10892 = vmatpush1.msra.mxu0 0.0
  %10893 = vmatprep.subr.mxu0 0.0
  %10894 = vmatpush1.msra.mxu0 0.0
  %10895 = vmatprep.subr.mxu0 0.0
  %10896 = vmatpush1.msra.mxu0 0.0
  %10897 = vmatprep.subr.mxu0 0.0
  %10898 = vmatpush1.msra.mxu0 0.0
  %10899 = vmatprep.subr.mxu0 0.0
  %10900 = vmatpush1.msra.mxu0 0.0
  %10901 = vmatprep.mubr.f32.mxu0 0.0
  %v10902 = vand.u32 %v10498, 4294901760
  %10903 = vmatmul.mubr.f32.gmra.mrb[0].mxu0 %v10902
  %v10904 = vpop.f32.mrb[0].mxu0
  %v10905 = vadd.f32 %v10823, %v10904
  %v10906 = vpop.f32.mrb[0].mxu0
  %10907 = vmatprep.mubr.f32.mxu0 0.0
  %v10908 = vand.u32 %v10501, 4294901760
  %10909 = vmatmul.mubr.f32.gmra.mrb[0].mxu0 %v10908
  %v10910 = vpop.f32.mrb[0].mxu0
  %v10911 = vadd.f32 %v10831, %v10910
  %v10912 = vpop.f32.mrb[0].mxu0
  %10913 = vdwg.mxu0
  %10914 = vmatprep.subr.mxu0 0.0
  %v10915 = vand.u32 %v5464, 4294901760
  %10916 = vmatpush1.msra.mxu0 %v10915
  %10917 = vmatprep.subr.mxu0 0.0
  %10918 = vmatpush1.msra.mxu0 0.0
  %10919 = vmatprep.subr.mxu0 0.0
  %10920 = vmatpush1.msra.mxu0 0.0
  %10921 = vmatprep.subr.mxu0 0.0
  %10922 = vmatpush1.msra.mxu0 0.0
  %10923 = vmatprep.subr.mxu0 0.0
  %10924 = vmatpush1.msra.mxu0 0.0
  %10925 = vmatprep.subr.mxu0 0.0
  %10926 = vmatpush1.msra.mxu0 0.0
  %10927 = vmatprep.subr.mxu0 0.0
  %10928 = vmatpush1.msra.mxu0 0.0
  %10929 = vmatprep.subr.mxu0 0.0
  %10930 = vmatpush1.msra.mxu0 0.0
  %10931 = vmatprep.subr.mxu0 0.0
  %10932 = vmatpush1.msra.mxu0 0.0
  %10933 = vmatprep.subr.mxu0 0.0
  %10934 = vmatpush1.msra.mxu0 0.0
  %10935 = vmatprep.subr.mxu0 0.0
  %10936 = vmatpush1.msra.mxu0 0.0
  %10937 = vmatprep.subr.mxu0 0.0
  %10938 = vmatpush1.msra.mxu0 0.0
  %10939 = vmatprep.subr.mxu0 0.0
  %10940 = vmatpush1.msra.mxu0 0.0
  %10941 = vmatprep.subr.mxu0 0.0
  %10942 = vmatpush1.msra.mxu0 0.0
  %10943 = vmatprep.subr.mxu0 0.0
  %10944 = vmatpush1.msra.mxu0 0.0
  %10945 = vmatprep.subr.mxu0 0.0
  %10946 = vmatpush1.msra.mxu0 0.0
  %10947 = vmatprep.subr.mxu0 0.0
  %10948 = vmatpush1.msra.mxu0 0.0
  %10949 = vmatprep.subr.mxu0 0.0
  %10950 = vmatpush1.msra.mxu0 0.0
  %10951 = vmatprep.subr.mxu0 0.0
  %10952 = vmatpush1.msra.mxu0 0.0
  %10953 = vmatprep.subr.mxu0 0.0
  %10954 = vmatpush1.msra.mxu0 0.0
  %10955 = vmatprep.subr.mxu0 0.0
  %10956 = vmatpush1.msra.mxu0 0.0
  %10957 = vmatprep.subr.mxu0 0.0
  %10958 = vmatpush1.msra.mxu0 0.0
  %10959 = vmatprep.subr.mxu0 0.0
  %10960 = vmatpush1.msra.mxu0 0.0
  %10961 = vmatprep.subr.mxu0 0.0
  %10962 = vmatpush1.msra.mxu0 0.0
  %10963 = vmatprep.subr.mxu0 0.0
  %10964 = vmatpush1.msra.mxu0 0.0
  %10965 = vmatprep.subr.mxu0 0.0
  %10966 = vmatpush1.msra.mxu0 0.0
  %10967 = vmatprep.subr.mxu0 0.0
  %10968 = vmatpush1.msra.mxu0 0.0
  %10969 = vmatprep.subr.mxu0 0.0
  %10970 = vmatpush1.msra.mxu0 0.0
  %10971 = vmatprep.subr.mxu0 0.0
  %10972 = vmatpush1.msra.mxu0 0.0
  %10973 = vmatprep.subr.mxu0 0.0
  %10974 = vmatpush1.msra.mxu0 0.0
  %10975 = vmatprep.subr.mxu0 0.0
  %10976 = vmatpush1.msra.mxu0 0.0
  %10977 = vmatprep.subr.mxu0 0.0
  %10978 = vmatpush1.msra.mxu0 0.0
  %10979 = vmatprep.mubr.f32.mxu0 0.0
  %v10980 = vand.u32 %v10498, 4294901760
  %10981 = vmatmul.mubr.f32.gmra.mrb[0].mxu0 %v10980
  %v10982 = vpop.f32.mrb[0].mxu0
  %v10983 = vadd.f32 %v10905, %v10982
  %v10984 = vpop.f32.mrb[0].mxu0
  %10985 = vmatprep.mubr.f32.mxu0 0.0
  %v10986 = vand.u32 %v10501, 4294901760
  %10987 = vmatmul.mubr.f32.gmra.mrb[0].mxu0 %v10986
  %v10988 = vpop.f32.mrb[0].mxu0
  %v10989 = vadd.f32 %v10911, %v10988
  %v10990 = vpop.f32.mrb[0].mxu0
  %10991 = vdwg.mxu0
  %s10992 = scalar_lea.vmem %s1, 64
  %v10993 = vld [vmem:[%s10992] sm:$0xff]
  %v10994 = vld [vmem:[%s10992 + $0x8] sm:$0xff]
  %v10996 = vsel %vm6442, %v10993, 0
  %v10999 = vsel %vm6442, %v10994, 0
  %11001 = vmatprep.subr.mxu0 0.0
  %v11002 = vand.u32 %v10983, 4294901760
  %11003 = vmatpush1.msra.mxu0 %v11002
  %11004 = vmatprep.subr.mxu0 0.0
  %v11005 = vand.u32 %v10989, 4294901760
  %11006 = vmatpush1.msra.mxu0 %v11005
  %11007 = vmatprep.subr.mxu0 0.0
  %11008 = vmatpush1.msra.mxu0 0.0
  %11009 = vmatprep.subr.mxu0 0.0
  %11010 = vmatpush1.msra.mxu0 0.0
  %11011 = vmatprep.subr.mxu0 0.0
  %11012 = vmatpush1.msra.mxu0 0.0
  %11013 = vmatprep.subr.mxu0 0.0
  %11014 = vmatpush1.msra.mxu0 0.0
  %11015 = vmatprep.subr.mxu0 0.0
  %11016 = vmatpush1.msra.mxu0 0.0
  %11017 = vmatprep.subr.mxu0 0.0
  %11018 = vmatpush1.msra.mxu0 0.0
  %11019 = vmatprep.subr.mxu0 0.0
  %11020 = vmatpush1.msra.mxu0 0.0
  %11021 = vmatprep.subr.mxu0 0.0
  %11022 = vmatpush1.msra.mxu0 0.0
  %11023 = vmatprep.subr.mxu0 0.0
  %11024 = vmatpush1.msra.mxu0 0.0
  %11025 = vmatprep.subr.mxu0 0.0
  %11026 = vmatpush1.msra.mxu0 0.0
  %11027 = vmatprep.subr.mxu0 0.0
  %11028 = vmatpush1.msra.mxu0 0.0
  %11029 = vmatprep.subr.mxu0 0.0
  %11030 = vmatpush1.msra.mxu0 0.0
  %11031 = vmatprep.subr.mxu0 0.0
  %11032 = vmatpush1.msra.mxu0 0.0
  %11033 = vmatprep.subr.mxu0 0.0
  %11034 = vmatpush1.msra.mxu0 0.0
  %11035 = vmatprep.subr.mxu0 0.0
  %11036 = vmatpush1.msra.mxu0 0.0
  %11037 = vmatprep.subr.mxu0 0.0
  %11038 = vmatpush1.msra.mxu0 0.0
  %11039 = vmatprep.subr.mxu0 0.0
  %11040 = vmatpush1.msra.mxu0 0.0
  %11041 = vmatprep.subr.mxu0 0.0
  %11042 = vmatpush1.msra.mxu0 0.0
  %11043 = vmatprep.subr.mxu0 0.0
  %11044 = vmatpush1.msra.mxu0 0.0
  %11045 = vmatprep.subr.mxu0 0.0
  %11046 = vmatpush1.msra.mxu0 0.0
  %11047 = vmatprep.subr.mxu0 0.0
  %11048 = vmatpush1.msra.mxu0 0.0
  %11049 = vmatprep.subr.mxu0 0.0
  %11050 = vmatpush1.msra.mxu0 0.0
  %11051 = vmatprep.subr.mxu0 0.0
  %11052 = vmatpush1.msra.mxu0 0.0
  %11053 = vmatprep.subr.mxu0 0.0
  %11054 = vmatpush1.msra.mxu0 0.0
  %11055 = vmatprep.subr.mxu0 0.0
  %11056 = vmatpush1.msra.mxu0 0.0
  %11057 = vmatprep.subr.mxu0 0.0
  %11058 = vmatpush1.msra.mxu0 0.0
  %11059 = vmatprep.subr.mxu0 0.0
  %11060 = vmatpush1.msra.mxu0 0.0
  %11061 = vmatprep.subr.mxu0 0.0
  %11062 = vmatpush1.msra.mxu0 0.0
  %11063 = vmatprep.subr.mxu0 0.0
  %11064 = vmatpush1.msra.mxu0 0.0
  %11065 = vmatprep.subr.mxu0 0.0
  %11066 = vmatpush1.msra.mxu0 0.0
  %11067 = vmatprep.mubr.f32.mxu0 0.0
  %v11068 = vand.u32 %v10996, 4294901760
  %v11069 = vsub.f32 %v10996, %v11068
  %v11070 = vand.u32 %v11069, 4294901760
  %v11071 = vsub.f32 %v11069, %v11070
  %v11072 = vand.u32 %v11071, 4294901760
  %11073 = vmatmul.mubr.f32.gmra.mrb[0].mxu0 %v11072
  %v11074 = vpop.f32.mrb[0].mxu0
  %v11075 = vadd.f32 0.0, %v11074
  %v11076 = vpop.f32.mrb[0].mxu0
  %11077 = vmatprep.mubr.f32.mxu0 0.0
  %v11078 = vand.u32 %v10999, 4294901760
  %v11079 = vsub.f32 %v10999, %v11078
  %v11080 = vand.u32 %v11079, 4294901760
  %v11081 = vsub.f32 %v11079, %v11080
  %v11082 = vand.u32 %v11081, 4294901760
  %11083 = vmatmul.mubr.f32.gmra.mrb[0].mxu0 %v11082
  %v11084 = vpop.f32.mrb[0].mxu0
  %v11085 = vadd.f32 0.0, %v11084
  %v11086 = vpop.f32.mrb[0].mxu0
  %11087 = vdwg.mxu0
  %11088 = vmatprep.subr.mxu0 0.0
  %v11089 = vand.u32 %v10983, 4294901760
  %v11090 = vsub.f32 %v10983, %v11089
  %v11091 = vand.u32 %v11090, 4294901760
  %v11092 = vsub.f32 %v11090, %v11091
  %v11093 = vand.u32 %v11092, 4294901760
  %11094 = vmatpush1.msra.mxu0 %v11093
  %11095 = vmatprep.subr.mxu0 0.0
  %v11096 = vand.u32 %v10989, 4294901760
  %v11097 = vsub.f32 %v10989, %v11096
  %v11098 = vand.u32 %v11097, 4294901760
  %v11099 = vsub.f32 %v11097, %v11098
  %v11100 = vand.u32 %v11099, 4294901760
  %11101 = vmatpush1.msra.mxu0 %v11100
  %11102 = vmatprep.subr.mxu0 0.0
  %11103 = vmatpush1.msra.mxu0 0.0
  %11104 = vmatprep.subr.mxu0 0.0
  %11105 = vmatpush1.msra.mxu0 0.0
  %11106 = vmatprep.subr.mxu0 0.0
  %11107 = vmatpush1.msra.mxu0 0.0
  %11108 = vmatprep.subr.mxu0 0.0
  %11109 = vmatpush1.msra.mxu0 0.0
  %11110 = vmatprep.subr.mxu0 0.0
  %11111 = vmatpush1.msra.mxu0 0.0
  %11112 = vmatprep.subr.mxu0 0.0
  %11113 = vmatpush1.msra.mxu0 0.0
  %11114 = vmatprep.subr.mxu0 0.0
  %11115 = vmatpush1.msra.mxu0 0.0
  %11116 = vmatprep.subr.mxu0 0.0
  %11117 = vmatpush1.msra.mxu0 0.0
  %11118 = vmatprep.subr.mxu0 0.0
  %11119 = vmatpush1.msra.mxu0 0.0
  %11120 = vmatprep.subr.mxu0 0.0
  %11121 = vmatpush1.msra.mxu0 0.0
  %11122 = vmatprep.subr.mxu0 0.0
  %11123 = vmatpush1.msra.mxu0 0.0
  %11124 = vmatprep.subr.mxu0 0.0
  %11125 = vmatpush1.msra.mxu0 0.0
  %11126 = vmatprep.subr.mxu0 0.0
  %11127 = vmatpush1.msra.mxu0 0.0
  %11128 = vmatprep.subr.mxu0 0.0
  %11129 = vmatpush1.msra.mxu0 0.0
  %11130 = vmatprep.subr.mxu0 0.0
  %11131 = vmatpush1.msra.mxu0 0.0
  %11132 = vmatprep.subr.mxu0 0.0
  %11133 = vmatpush1.msra.mxu0 0.0
  %11134 = vmatprep.subr.mxu0 0.0
  %11135 = vmatpush1.msra.mxu0 0.0
  %11136 = vmatprep.subr.mxu0 0.0
  %11137 = vmatpush1.msra.mxu0 0.0
  %11138 = vmatprep.subr.mxu0 0.0
  %11139 = vmatpush1.msra.mxu0 0.0
  %11140 = vmatprep.subr.mxu0 0.0
  %11141 = vmatpush1.msra.mxu0 0.0
  %11142 = vmatprep.subr.mxu0 0.0
  %11143 = vmatpush1.msra.mxu0 0.0
  %11144 = vmatprep.subr.mxu0 0.0
  %11145 = vmatpush1.msra.mxu0 0.0
  %11146 = vmatprep.subr.mxu0 0.0
  %11147 = vmatpush1.msra.mxu0 0.0
  %11148 = vmatprep.subr.mxu0 0.0
  %11149 = vmatpush1.msra.mxu0 0.0
  %11150 = vmatprep.subr.mxu0 0.0
  %11151 = vmatpush1.msra.mxu0 0.0
  %11152 = vmatprep.subr.mxu0 0.0
  %11153 = vmatpush1.msra.mxu0 0.0
  %11154 = vmatprep.subr.mxu0 0.0
  %11155 = vmatpush1.msra.mxu0 0.0
  %11156 = vmatprep.subr.mxu0 0.0
  %11157 = vmatpush1.msra.mxu0 0.0
  %11158 = vmatprep.subr.mxu0 0.0
  %11159 = vmatpush1.msra.mxu0 0.0
  %11160 = vmatprep.subr.mxu0 0.0
  %11161 = vmatpush1.msra.mxu0 0.0
  %11162 = vmatprep.mubr.f32.mxu0 0.0
  %v11163 = vand.u32 %v10996, 4294901760
  %11164 = vmatmul.mubr.f32.gmra.mrb[0].mxu0 %v11163
  %v11165 = vpop.f32.mrb[0].mxu0
  %v11166 = vadd.f32 %v11075, %v11165
  %v11167 = vpop.f32.mrb[0].mxu0
  %11168 = vmatprep.mubr.f32.mxu0 0.0
  %v11169 = vand.u32 %v10999, 4294901760
  %11170 = vmatmul.mubr.f32.gmra.mrb[0].mxu0 %v11169
  %v11171 = vpop.f32.mrb[0].mxu0
  %v11172 = vadd.f32 %v11085, %v11171
  %v11173 = vpop.f32.mrb[0].mxu0
  %11174 = vdwg.mxu0
  %11175 = vmatprep.subr.mxu0 0.0
  %v11176 = vand.u32 %v10983, 4294901760
  %v11177 = vsub.f32 %v10983, %v11176
  %11178 = vmatpush1.msra.mxu0 %v11177
  %11179 = vmatprep.subr.mxu0 0.0
  %v11180 = vand.u32 %v10989, 4294901760
  %v11181 = vsub.f32 %v10989, %v11180
  %11182 = vmatpush1.msra.mxu0 %v11181
  %11183 = vmatprep.subr.mxu0 0.0
  %11184 = vmatpush1.msra.mxu0 0.0
  %11185 = vmatprep.subr.mxu0 0.0
  %11186 = vmatpush1.msra.mxu0 0.0
  %11187 = vmatprep.subr.mxu0 0.0
  %11188 = vmatpush1.msra.mxu0 0.0
  %11189 = vmatprep.subr.mxu0 0.0
  %11190 = vmatpush1.msra.mxu0 0.0
  %11191 = vmatprep.subr.mxu0 0.0
  %11192 = vmatpush1.msra.mxu0 0.0
  %11193 = vmatprep.subr.mxu0 0.0
  %11194 = vmatpush1.msra.mxu0 0.0
  %11195 = vmatprep.subr.mxu0 0.0
  %11196 = vmatpush1.msra.mxu0 0.0
  %11197 = vmatprep.subr.mxu0 0.0
  %11198 = vmatpush1.msra.mxu0 0.0
  %11199 = vmatprep.subr.mxu0 0.0
  %11200 = vmatpush1.msra.mxu0 0.0
  %11201 = vmatprep.subr.mxu0 0.0
  %11202 = vmatpush1.msra.mxu0 0.0
  %11203 = vmatprep.subr.mxu0 0.0
  %11204 = vmatpush1.msra.mxu0 0.0
  %11205 = vmatprep.subr.mxu0 0.0
  %11206 = vmatpush1.msra.mxu0 0.0
  %11207 = vmatprep.subr.mxu0 0.0
  %11208 = vmatpush1.msra.mxu0 0.0
  %11209 = vmatprep.subr.mxu0 0.0
  %11210 = vmatpush1.msra.mxu0 0.0
  %11211 = vmatprep.subr.mxu0 0.0
  %11212 = vmatpush1.msra.mxu0 0.0
  %11213 = vmatprep.subr.mxu0 0.0
  %11214 = vmatpush1.msra.mxu0 0.0
  %11215 = vmatprep.subr.mxu0 0.0
  %11216 = vmatpush1.msra.mxu0 0.0
  %11217 = vmatprep.subr.mxu0 0.0
  %11218 = vmatpush1.msra.mxu0 0.0
  %11219 = vmatprep.subr.mxu0 0.0
  %11220 = vmatpush1.msra.mxu0 0.0
  %11221 = vmatprep.subr.mxu0 0.0
  %11222 = vmatpush1.msra.mxu0 0.0
  %11223 = vmatprep.subr.mxu0 0.0
  %11224 = vmatpush1.msra.mxu0 0.0
  %11225 = vmatprep.subr.mxu0 0.0
  %11226 = vmatpush1.msra.mxu0 0.0
  %11227 = vmatprep.subr.mxu0 0.0
  %11228 = vmatpush1.msra.mxu0 0.0
  %11229 = vmatprep.subr.mxu0 0.0
  %11230 = vmatpush1.msra.mxu0 0.0
  %11231 = vmatprep.subr.mxu0 0.0
  %11232 = vmatpush1.msra.mxu0 0.0
  %11233 = vmatprep.subr.mxu0 0.0
  %11234 = vmatpush1.msra.mxu0 0.0
  %11235 = vmatprep.subr.mxu0 0.0
  %11236 = vmatpush1.msra.mxu0 0.0
  %11237 = vmatprep.subr.mxu0 0.0
  %11238 = vmatpush1.msra.mxu0 0.0
  %11239 = vmatprep.subr.mxu0 0.0
  %11240 = vmatpush1.msra.mxu0 0.0
  %11241 = vmatprep.subr.mxu0 0.0
  %11242 = vmatpush1.msra.mxu0 0.0
  %11243 = vmatprep.mubr.f32.mxu0 0.0
  %v11244 = vand.u32 %v10996, 4294901760
  %v11245 = vsub.f32 %v10996, %v11244
  %11246 = vmatmul.mubr.f32.gmra.mrb[0].mxu0 %v11245
  %v11247 = vpop.f32.mrb[0].mxu0
  %v11248 = vadd.f32 %v11166, %v11247
  %v11249 = vpop.f32.mrb[0].mxu0
  %11250 = vmatprep.mubr.f32.mxu0 0.0
  %v11251 = vand.u32 %v10999, 4294901760
  %v11252 = vsub.f32 %v10999, %v11251
  %11253 = vmatmul.mubr.f32.gmra.mrb[0].mxu0 %v11252
  %v11254 = vpop.f32.mrb[0].mxu0
  %v11255 = vadd.f32 %v11172, %v11254
  %v11256 = vpop.f32.mrb[0].mxu0
  %11257 = vdwg.mxu0
  %11258 = vmatprep.subr.mxu0 0.0
  %v11259 = vand.u32 %v10983, 4294901760
  %11260 = vmatpush1.msra.mxu0 %v11259
  %11261 = vmatprep.subr.mxu0 0.0
  %v11262 = vand.u32 %v10989, 4294901760
  %11263 = vmatpush1.msra.mxu0 %v11262
  %11264 = vmatprep.subr.mxu0 0.0
  %11265 = vmatpush1.msra.mxu0 0.0
  %11266 = vmatprep.subr.mxu0 0.0
  %11267 = vmatpush1.msra.mxu0 0.0
  %11268 = vmatprep.subr.mxu0 0.0
  %11269 = vmatpush1.msra.mxu0 0.0
  %11270 = vmatprep.subr.mxu0 0.0
  %11271 = vmatpush1.msra.mxu0 0.0
  %11272 = vmatprep.subr.mxu0 0.0
  %11273 = vmatpush1.msra.mxu0 0.0
  %11274 = vmatprep.subr.mxu0 0.0
  %11275 = vmatpush1.msra.mxu0 0.0
  %11276 = vmatprep.subr.mxu0 0.0
  %11277 = vmatpush1.msra.mxu0 0.0
  %11278 = vmatprep.subr.mxu0 0.0
  %11279 = vmatpush1.msra.mxu0 0.0
  %11280 = vmatprep.subr.mxu0 0.0
  %11281 = vmatpush1.msra.mxu0 0.0
  %11282 = vmatprep.subr.mxu0 0.0
  %11283 = vmatpush1.msra.mxu0 0.0
  %11284 = vmatprep.subr.mxu0 0.0
  %11285 = vmatpush1.msra.mxu0 0.0
  %11286 = vmatprep.subr.mxu0 0.0
  %11287 = vmatpush1.msra.mxu0 0.0
  %11288 = vmatprep.subr.mxu0 0.0
  %11289 = vmatpush1.msra.mxu0 0.0
  %11290 = vmatprep.subr.mxu0 0.0
  %11291 = vmatpush1.msra.mxu0 0.0
  %11292 = vmatprep.subr.mxu0 0.0
  %11293 = vmatpush1.msra.mxu0 0.0
  %11294 = vmatprep.subr.mxu0 0.0
  %11295 = vmatpush1.msra.mxu0 0.0
  %11296 = vmatprep.subr.mxu0 0.0
  %11297 = vmatpush1.msra.mxu0 0.0
  %11298 = vmatprep.subr.mxu0 0.0
  %11299 = vmatpush1.msra.mxu0 0.0
  %11300 = vmatprep.subr.mxu0 0.0
  %11301 = vmatpush1.msra.mxu0 0.0
  %11302 = vmatprep.subr.mxu0 0.0
  %11303 = vmatpush1.msra.mxu0 0.0
  %11304 = vmatprep.subr.mxu0 0.0
  %11305 = vmatpush1.msra.mxu0 0.0
  %11306 = vmatprep.subr.mxu0 0.0
  %11307 = vmatpush1.msra.mxu0 0.0
  %11308 = vmatprep.subr.mxu0 0.0
  %11309 = vmatpush1.msra.mxu0 0.0
  %11310 = vmatprep.subr.mxu0 0.0
  %11311 = vmatpush1.msra.mxu0 0.0
  %11312 = vmatprep.subr.mxu0 0.0
  %11313 = vmatpush1.msra.mxu0 0.0
  %11314 = vmatprep.subr.mxu0 0.0
  %11315 = vmatpush1.msra.mxu0 0.0
  %11316 = vmatprep.subr.mxu0 0.0
  %11317 = vmatpush1.msra.mxu0 0.0
  %11318 = vmatprep.subr.mxu0 0.0
  %11319 = vmatpush1.msra.mxu0 0.0
  %11320 = vmatprep.subr.mxu0 0.0
  %11321 = vmatpush1.msra.mxu0 0.0
  %11322 = vmatprep.subr.mxu0 0.0
  %11323 = vmatpush1.msra.mxu0 0.0
  %11324 = vmatprep.mubr.f32.mxu0 0.0
  %v11325 = vand.u32 %v10996, 4294901760
  %v11326 = vsub.f32 %v10996, %v11325
  %v11327 = vand.u32 %v11326, 4294901760
  %11328 = vmatmul.mubr.f32.gmra.mrb[0].mxu0 %v11327
  %v11329 = vpop.f32.mrb[0].mxu0
  %v11330 = vadd.f32 %v11248, %v11329
  %v11331 = vpop.f32.mrb[0].mxu0
  %11332 = vmatprep.mubr.f32.mxu0 0.0
  %v11333 = vand.u32 %v10999, 4294901760
  %v11334 = vsub.f32 %v10999, %v11333
  %v11335 = vand.u32 %v11334, 4294901760
  %11336 = vmatmul.mubr.f32.gmra.mrb[0].mxu0 %v11335
  %v11337 = vpop.f32.mrb[0].mxu0
  %v11338 = vadd.f32 %v11255, %v11337
  %v11339 = vpop.f32.mrb[0].mxu0
  %11340 = vdwg.mxu0
  %11341 = vmatprep.subr.mxu0 0.0
  %v11342 = vand.u32 %v10983, 4294901760
  %v11343 = vsub.f32 %v10983, %v11342
  %v11344 = vand.u32 %v11343, 4294901760
  %11345 = vmatpush1.msra.mxu0 %v11344
  %11346 = vmatprep.subr.mxu0 0.0
  %v11347 = vand.u32 %v10989, 4294901760
  %v11348 = vsub.f32 %v10989, %v11347
  %v11349 = vand.u32 %v11348, 4294901760
  %11350 = vmatpush1.msra.mxu0 %v11349
  %11351 = vmatprep.subr.mxu0 0.0
  %11352 = vmatpush1.msra.mxu0 0.0
  %11353 = vmatprep.subr.mxu0 0.0
  %11354 = vmatpush1.msra.mxu0 0.0
  %11355 = vmatprep.subr.mxu0 0.0
  %11356 = vmatpush1.msra.mxu0 0.0
  %11357 = vmatprep.subr.mxu0 0.0
  %11358 = vmatpush1.msra.mxu0 0.0
  %11359 = vmatprep.subr.mxu0 0.0
  %11360 = vmatpush1.msra.mxu0 0.0
  %11361 = vmatprep.subr.mxu0 0.0
  %11362 = vmatpush1.msra.mxu0 0.0
  %11363 = vmatprep.subr.mxu0 0.0
  %11364 = vmatpush1.msra.mxu0 0.0
  %11365 = vmatprep.subr.mxu0 0.0
  %11366 = vmatpush1.msra.mxu0 0.0
  %11367 = vmatprep.subr.mxu0 0.0
  %11368 = vmatpush1.msra.mxu0 0.0
  %11369 = vmatprep.subr.mxu0 0.0
  %11370 = vmatpush1.msra.mxu0 0.0
  %11371 = vmatprep.subr.mxu0 0.0
  %11372 = vmatpush1.msra.mxu0 0.0
  %11373 = vmatprep.subr.mxu0 0.0
  %11374 = vmatpush1.msra.mxu0 0.0
  %11375 = vmatprep.subr.mxu0 0.0
  %11376 = vmatpush1.msra.mxu0 0.0
  %11377 = vmatprep.subr.mxu0 0.0
  %11378 = vmatpush1.msra.mxu0 0.0
  %11379 = vmatprep.subr.mxu0 0.0
  %11380 = vmatpush1.msra.mxu0 0.0
  %11381 = vmatprep.subr.mxu0 0.0
  %11382 = vmatpush1.msra.mxu0 0.0
  %11383 = vmatprep.subr.mxu0 0.0
  %11384 = vmatpush1.msra.mxu0 0.0
  %11385 = vmatprep.subr.mxu0 0.0
  %11386 = vmatpush1.msra.mxu0 0.0
  %11387 = vmatprep.subr.mxu0 0.0
  %11388 = vmatpush1.msra.mxu0 0.0
  %11389 = vmatprep.subr.mxu0 0.0
  %11390 = vmatpush1.msra.mxu0 0.0
  %11391 = vmatprep.subr.mxu0 0.0
  %11392 = vmatpush1.msra.mxu0 0.0
  %11393 = vmatprep.subr.mxu0 0.0
  %11394 = vmatpush1.msra.mxu0 0.0
  %11395 = vmatprep.subr.mxu0 0.0
  %11396 = vmatpush1.msra.mxu0 0.0
  %11397 = vmatprep.subr.mxu0 0.0
  %11398 = vmatpush1.msra.mxu0 0.0
  %11399 = vmatprep.subr.mxu0 0.0
  %11400 = vmatpush1.msra.mxu0 0.0
  %11401 = vmatprep.subr.mxu0 0.0
  %11402 = vmatpush1.msra.mxu0 0.0
  %11403 = vmatprep.subr.mxu0 0.0
  %11404 = vmatpush1.msra.mxu0 0.0
  %11405 = vmatprep.subr.mxu0 0.0
  %11406 = vmatpush1.msra.mxu0 0.0
  %11407 = vmatprep.subr.mxu0 0.0
  %11408 = vmatpush1.msra.mxu0 0.0
  %11409 = vmatprep.subr.mxu0 0.0
  %11410 = vmatpush1.msra.mxu0 0.0
  %11411 = vmatprep.mubr.f32.mxu0 0.0
  %v11412 = vand.u32 %v10996, 4294901760
  %11413 = vmatmul.mubr.f32.gmra.mrb[0].mxu0 %v11412
  %v11414 = vpop.f32.mrb[0].mxu0
  %v11415 = vadd.f32 %v11330, %v11414
  %v11416 = vpop.f32.mrb[0].mxu0
  %11417 = vmatprep.mubr.f32.mxu0 0.0
  %v11418 = vand.u32 %v10999, 4294901760
  %11419 = vmatmul.mubr.f32.gmra.mrb[0].mxu0 %v11418
  %v11420 = vpop.f32.mrb[0].mxu0
  %v11421 = vadd.f32 %v11338, %v11420
  %v11422 = vpop.f32.mrb[0].mxu0
  %11423 = vdwg.mxu0
  %11424 = vmatprep.subr.mxu0 0.0
  %v11425 = vand.u32 %v10983, 4294901760
  %11426 = vmatpush1.msra.mxu0 %v11425
  %11427 = vmatprep.subr.mxu0 0.0
  %v11428 = vand.u32 %v10989, 4294901760
  %11429 = vmatpush1.msra.mxu0 %v11428
  %11430 = vmatprep.subr.mxu0 0.0
  %11431 = vmatpush1.msra.mxu0 0.0
  %11432 = vmatprep.subr.mxu0 0.0
  %11433 = vmatpush1.msra.mxu0 0.0
  %11434 = vmatprep.subr.mxu0 0.0
  %11435 = vmatpush1.msra.mxu0 0.0
  %11436 = vmatprep.subr.mxu0 0.0
  %11437 = vmatpush1.msra.mxu0 0.0
  %11438 = vmatprep.subr.mxu0 0.0
  %11439 = vmatpush1.msra.mxu0 0.0
  %11440 = vmatprep.subr.mxu0 0.0
  %11441 = vmatpush1.msra.mxu0 0.0
  %11442 = vmatprep.subr.mxu0 0.0
  %11443 = vmatpush1.msra.mxu0 0.0
  %11444 = vmatprep.subr.mxu0 0.0
  %11445 = vmatpush1.msra.mxu0 0.0
  %11446 = vmatprep.subr.mxu0 0.0
  %11447 = vmatpush1.msra.mxu0 0.0
  %11448 = vmatprep.subr.mxu0 0.0
  %11449 = vmatpush1.msra.mxu0 0.0
  %11450 = vmatprep.subr.mxu0 0.0
  %11451 = vmatpush1.msra.mxu0 0.0
  %11452 = vmatprep.subr.mxu0 0.0
  %11453 = vmatpush1.msra.mxu0 0.0
  %11454 = vmatprep.subr.mxu0 0.0
  %11455 = vmatpush1.msra.mxu0 0.0
  %11456 = vmatprep.subr.mxu0 0.0
  %11457 = vmatpush1.msra.mxu0 0.0
  %11458 = vmatprep.subr.mxu0 0.0
  %11459 = vmatpush1.msra.mxu0 0.0
  %11460 = vmatprep.subr.mxu0 0.0
  %11461 = vmatpush1.msra.mxu0 0.0
  %11462 = vmatprep.subr.mxu0 0.0
  %11463 = vmatpush1.msra.mxu0 0.0
  %11464 = vmatprep.subr.mxu0 0.0
  %11465 = vmatpush1.msra.mxu0 0.0
  %11466 = vmatprep.subr.mxu0 0.0
  %11467 = vmatpush1.msra.mxu0 0.0
  %11468 = vmatprep.subr.mxu0 0.0
  %11469 = vmatpush1.msra.mxu0 0.0
  %11470 = vmatprep.subr.mxu0 0.0
  %11471 = vmatpush1.msra.mxu0 0.0
  %11472 = vmatprep.subr.mxu0 0.0
  %11473 = vmatpush1.msra.mxu0 0.0
  %11474 = vmatprep.subr.mxu0 0.0
  %11475 = vmatpush1.msra.mxu0 0.0
  %11476 = vmatprep.subr.mxu0 0.0
  %11477 = vmatpush1.msra.mxu0 0.0
  %11478 = vmatprep.subr.mxu0 0.0
  %11479 = vmatpush1.msra.mxu0 0.0
  %11480 = vmatprep.subr.mxu0 0.0
  %11481 = vmatpush1.msra.mxu0 0.0
  %11482 = vmatprep.subr.mxu0 0.0
  %11483 = vmatpush1.msra.mxu0 0.0
  %11484 = vmatprep.subr.mxu0 0.0
  %11485 = vmatpush1.msra.mxu0 0.0
  %11486 = vmatprep.subr.mxu0 0.0
  %11487 = vmatpush1.msra.mxu0 0.0
  %11488 = vmatprep.subr.mxu0 0.0
  %11489 = vmatpush1.msra.mxu0 0.0
  %11490 = vmatprep.mubr.f32.mxu0 0.0
  %v11491 = vand.u32 %v10996, 4294901760
  %11492 = vmatmul.mubr.f32.gmra.mrb[0].mxu0 %v11491
  %v11493 = vpop.f32.mrb[0].mxu0
  %v11494 = vadd.f32 %v11415, %v11493
  %v11495 = vpop.f32.mrb[0].mxu0
  %11496 = vmatprep.mubr.f32.mxu0 0.0
  %v11497 = vand.u32 %v10999, 4294901760
  %11498 = vmatmul.mubr.f32.gmra.mrb[0].mxu0 %v11497
  %v11499 = vpop.f32.mrb[0].mxu0
  %v11500 = vadd.f32 %v11421, %v11499
  %v11501 = vpop.f32.mrb[0].mxu0
  %11502 = vdwg.mxu0
  %v11503 = vmax.f32 %v11494, 0.0
  %v11504 = vmax.f32 %v11500, 0.0
  %s11505 = scalar_lea.vmem %s2, 80
  %v11506 = vld [vmem:[%s11505] sm:$0xff]
  %v11507 = vld [vmem:[%s11505 + $0x8] sm:$0xff]
  %11509 = vrot.lane.b32.xlu0 %v6440, 88
  %v11510 = vpop.permute.xlu0 %11509
  %v11513 = vsel %vm41, %v11506, 0
  %v11516 = vsel %vm41, %v11507, 0
  %11518 = vmatprep.subr.mxu0 0.0
  %v11519 = vand.u32 %v11510, 4294901760
  %11520 = vmatpush1.msra.mxu0 %v11519
  %11521 = vmatprep.subr.mxu0 0.0
  %11522 = vmatpush1.msra.mxu0 0.0
  %11523 = vmatprep.subr.mxu0 0.0
  %11524 = vmatpush1.msra.mxu0 0.0
  %11525 = vmatprep.subr.mxu0 0.0
  %11526 = vmatpush1.msra.mxu0 0.0
  %11527 = vmatprep.subr.mxu0 0.0
  %11528 = vmatpush1.msra.mxu0 0.0
  %11529 = vmatprep.subr.mxu0 0.0
  %11530 = vmatpush1.msra.mxu0 0.0
  %11531 = vmatprep.subr.mxu0 0.0
  %11532 = vmatpush1.msra.mxu0 0.0
  %11533 = vmatprep.subr.mxu0 0.0
  %11534 = vmatpush1.msra.mxu0 0.0
  %11535 = vmatprep.subr.mxu0 0.0
  %11536 = vmatpush1.msra.mxu0 0.0
  %11537 = vmatprep.subr.mxu0 0.0
  %11538 = vmatpush1.msra.mxu0 0.0
  %11539 = vmatprep.subr.mxu0 0.0
  %11540 = vmatpush1.msra.mxu0 0.0
  %11541 = vmatprep.subr.mxu0 0.0
  %11542 = vmatpush1.msra.mxu0 0.0
  %11543 = vmatprep.subr.mxu0 0.0
  %11544 = vmatpush1.msra.mxu0 0.0
  %11545 = vmatprep.subr.mxu0 0.0
  %11546 = vmatpush1.msra.mxu0 0.0
  %11547 = vmatprep.subr.mxu0 0.0
  %11548 = vmatpush1.msra.mxu0 0.0
  %11549 = vmatprep.subr.mxu0 0.0
  %11550 = vmatpush1.msra.mxu0 0.0
  %11551 = vmatprep.subr.mxu0 0.0
  %11552 = vmatpush1.msra.mxu0 0.0
  %11553 = vmatprep.subr.mxu0 0.0
  %11554 = vmatpush1.msra.mxu0 0.0
  %11555 = vmatprep.subr.mxu0 0.0
  %11556 = vmatpush1.msra.mxu0 0.0
  %11557 = vmatprep.subr.mxu0 0.0
  %11558 = vmatpush1.msra.mxu0 0.0
  %11559 = vmatprep.subr.mxu0 0.0
  %11560 = vmatpush1.msra.mxu0 0.0
  %11561 = vmatprep.subr.mxu0 0.0
  %11562 = vmatpush1.msra.mxu0 0.0
  %11563 = vmatprep.subr.mxu0 0.0
  %11564 = vmatpush1.msra.mxu0 0.0
  %11565 = vmatprep.subr.mxu0 0.0
  %11566 = vmatpush1.msra.mxu0 0.0
  %11567 = vmatprep.subr.mxu0 0.0
  %11568 = vmatpush1.msra.mxu0 0.0
  %11569 = vmatprep.subr.mxu0 0.0
  %11570 = vmatpush1.msra.mxu0 0.0
  %11571 = vmatprep.subr.mxu0 0.0
  %11572 = vmatpush1.msra.mxu0 0.0
  %11573 = vmatprep.subr.mxu0 0.0
  %11574 = vmatpush1.msra.mxu0 0.0
  %11575 = vmatprep.subr.mxu0 0.0
  %11576 = vmatpush1.msra.mxu0 0.0
  %11577 = vmatprep.subr.mxu0 0.0
  %11578 = vmatpush1.msra.mxu0 0.0
  %11579 = vmatprep.subr.mxu0 0.0
  %11580 = vmatpush1.msra.mxu0 0.0
  %11581 = vmatprep.subr.mxu0 0.0
  %11582 = vmatpush1.msra.mxu0 0.0
  %11583 = vmatprep.mubr.f32.mxu0 0.0
  %v11584 = vand.u32 %v11513, 4294901760
  %v11585 = vsub.f32 %v11513, %v11584
  %v11586 = vand.u32 %v11585, 4294901760
  %v11587 = vsub.f32 %v11585, %v11586
  %v11588 = vand.u32 %v11587, 4294901760
  %11589 = vmatmul.mubr.f32.gmra.mrb[0].mxu0 %v11588
  %v11590 = vpop.f32.mrb[0].mxu0
  %v11591 = vadd.f32 0.0, %v11590
  %v11592 = vpop.f32.mrb[0].mxu0
  %11593 = vmatprep.mubr.f32.mxu0 0.0
  %v11594 = vand.u32 %v11516, 4294901760
  %v11595 = vsub.f32 %v11516, %v11594
  %v11596 = vand.u32 %v11595, 4294901760
  %v11597 = vsub.f32 %v11595, %v11596
  %v11598 = vand.u32 %v11597, 4294901760
  %11599 = vmatmul.mubr.f32.gmra.mrb[0].mxu0 %v11598
  %v11600 = vpop.f32.mrb[0].mxu0
  %v11601 = vadd.f32 0.0, %v11600
  %v11602 = vpop.f32.mrb[0].mxu0
  %11603 = vdwg.mxu0
  %11604 = vmatprep.subr.mxu0 0.0
  %v11605 = vand.u32 %v11510, 4294901760
  %v11606 = vsub.f32 %v11510, %v11605
  %v11607 = vand.u32 %v11606, 4294901760
  %v11608 = vsub.f32 %v11606, %v11607
  %v11609 = vand.u32 %v11608, 4294901760
  %11610 = vmatpush1.msra.mxu0 %v11609
  %11611 = vmatprep.subr.mxu0 0.0
  %11612 = vmatpush1.msra.mxu0 0.0
  %11613 = vmatprep.subr.mxu0 0.0
  %11614 = vmatpush1.msra.mxu0 0.0
  %11615 = vmatprep.subr.mxu0 0.0
  %11616 = vmatpush1.msra.mxu0 0.0
  %11617 = vmatprep.subr.mxu0 0.0
  %11618 = vmatpush1.msra.mxu0 0.0
  %11619 = vmatprep.subr.mxu0 0.0
  %11620 = vmatpush1.msra.mxu0 0.0
  %11621 = vmatprep.subr.mxu0 0.0
  %11622 = vmatpush1.msra.mxu0 0.0
  %11623 = vmatprep.subr.mxu0 0.0
  %11624 = vmatpush1.msra.mxu0 0.0
  %11625 = vmatprep.subr.mxu0 0.0
  %11626 = vmatpush1.msra.mxu0 0.0
  %11627 = vmatprep.subr.mxu0 0.0
  %11628 = vmatpush1.msra.mxu0 0.0
  %11629 = vmatprep.subr.mxu0 0.0
  %11630 = vmatpush1.msra.mxu0 0.0
  %11631 = vmatprep.subr.mxu0 0.0
  %11632 = vmatpush1.msra.mxu0 0.0
  %11633 = vmatprep.subr.mxu0 0.0
  %11634 = vmatpush1.msra.mxu0 0.0
  %11635 = vmatprep.subr.mxu0 0.0
  %11636 = vmatpush1.msra.mxu0 0.0
  %11637 = vmatprep.subr.mxu0 0.0
  %11638 = vmatpush1.msra.mxu0 0.0
  %11639 = vmatprep.subr.mxu0 0.0
  %11640 = vmatpush1.msra.mxu0 0.0
  %11641 = vmatprep.subr.mxu0 0.0
  %11642 = vmatpush1.msra.mxu0 0.0
  %11643 = vmatprep.subr.mxu0 0.0
  %11644 = vmatpush1.msra.mxu0 0.0
  %11645 = vmatprep.subr.mxu0 0.0
  %11646 = vmatpush1.msra.mxu0 0.0
  %11647 = vmatprep.subr.mxu0 0.0
  %11648 = vmatpush1.msra.mxu0 0.0
  %11649 = vmatprep.subr.mxu0 0.0
  %11650 = vmatpush1.msra.mxu0 0.0
  %11651 = vmatprep.subr.mxu0 0.0
  %11652 = vmatpush1.msra.mxu0 0.0
  %11653 = vmatprep.subr.mxu0 0.0
  %11654 = vmatpush1.msra.mxu0 0.0
  %11655 = vmatprep.subr.mxu0 0.0
  %11656 = vmatpush1.msra.mxu0 0.0
  %11657 = vmatprep.subr.mxu0 0.0
  %11658 = vmatpush1.msra.mxu0 0.0
  %11659 = vmatprep.subr.mxu0 0.0
  %11660 = vmatpush1.msra.mxu0 0.0
  %11661 = vmatprep.subr.mxu0 0.0
  %11662 = vmatpush1.msra.mxu0 0.0
  %11663 = vmatprep.subr.mxu0 0.0
  %11664 = vmatpush1.msra.mxu0 0.0
  %11665 = vmatprep.subr.mxu0 0.0
  %11666 = vmatpush1.msra.mxu0 0.0
  %11667 = vmatprep.subr.mxu0 0.0
  %11668 = vmatpush1.msra.mxu0 0.0
  %11669 = vmatprep.subr.mxu0 0.0
  %11670 = vmatpush1.msra.mxu0 0.0
  %11671 = vmatprep.subr.mxu0 0.0
  %11672 = vmatpush1.msra.mxu0 0.0
  %11673 = vmatprep.mubr.f32.mxu0 0.0
  %v11674 = vand.u32 %v11513, 4294901760
  %11675 = vmatmul.mubr.f32.gmra.mrb[0].mxu0 %v11674
  %v11676 = vpop.f32.mrb[0].mxu0
  %v11677 = vadd.f32 %v11591, %v11676
  %v11678 = vpop.f32.mrb[0].mxu0
  %11679 = vmatprep.mubr.f32.mxu0 0.0
  %v11680 = vand.u32 %v11516, 4294901760
  %11681 = vmatmul.mubr.f32.gmra.mrb[0].mxu0 %v11680
  %v11682 = vpop.f32.mrb[0].mxu0
  %v11683 = vadd.f32 %v11601, %v11682
  %v11684 = vpop.f32.mrb[0].mxu0
  %11685 = vdwg.mxu0
  %11686 = vmatprep.subr.mxu0 0.0
  %v11687 = vand.u32 %v11510, 4294901760
  %v11688 = vsub.f32 %v11510, %v11687
  %11689 = vmatpush1.msra.mxu0 %v11688
  %11690 = vmatprep.subr.mxu0 0.0
  %11691 = vmatpush1.msra.mxu0 0.0
  %11692 = vmatprep.subr.mxu0 0.0
  %11693 = vmatpush1.msra.mxu0 0.0
  %11694 = vmatprep.subr.mxu0 0.0
  %11695 = vmatpush1.msra.mxu0 0.0
  %11696 = vmatprep.subr.mxu0 0.0
  %11697 = vmatpush1.msra.mxu0 0.0
  %11698 = vmatprep.subr.mxu0 0.0
  %11699 = vmatpush1.msra.mxu0 0.0
  %11700 = vmatprep.subr.mxu0 0.0
  %11701 = vmatpush1.msra.mxu0 0.0
  %11702 = vmatprep.subr.mxu0 0.0
  %11703 = vmatpush1.msra.mxu0 0.0
  %11704 = vmatprep.subr.mxu0 0.0
  %11705 = vmatpush1.msra.mxu0 0.0
  %11706 = vmatprep.subr.mxu0 0.0
  %11707 = vmatpush1.msra.mxu0 0.0
  %11708 = vmatprep.subr.mxu0 0.0
  %11709 = vmatpush1.msra.mxu0 0.0
  %11710 = vmatprep.subr.mxu0 0.0
  %11711 = vmatpush1.msra.mxu0 0.0
  %11712 = vmatprep.subr.mxu0 0.0
  %11713 = vmatpush1.msra.mxu0 0.0
  %11714 = vmatprep.subr.mxu0 0.0
  %11715 = vmatpush1.msra.mxu0 0.0
  %11716 = vmatprep.subr.mxu0 0.0
  %11717 = vmatpush1.msra.mxu0 0.0
  %11718 = vmatprep.subr.mxu0 0.0
  %11719 = vmatpush1.msra.mxu0 0.0
  %11720 = vmatprep.subr.mxu0 0.0
  %11721 = vmatpush1.msra.mxu0 0.0
  %11722 = vmatprep.subr.mxu0 0.0
  %11723 = vmatpush1.msra.mxu0 0.0
  %11724 = vmatprep.subr.mxu0 0.0
  %11725 = vmatpush1.msra.mxu0 0.0
  %11726 = vmatprep.subr.mxu0 0.0
  %11727 = vmatpush1.msra.mxu0 0.0
  %11728 = vmatprep.subr.mxu0 0.0
  %11729 = vmatpush1.msra.mxu0 0.0
  %11730 = vmatprep.subr.mxu0 0.0
  %11731 = vmatpush1.msra.mxu0 0.0
  %11732 = vmatprep.subr.mxu0 0.0
  %11733 = vmatpush1.msra.mxu0 0.0
  %11734 = vmatprep.subr.mxu0 0.0
  %11735 = vmatpush1.msra.mxu0 0.0
  %11736 = vmatprep.subr.mxu0 0.0
  %11737 = vmatpush1.msra.mxu0 0.0
  %11738 = vmatprep.subr.mxu0 0.0
  %11739 = vmatpush1.msra.mxu0 0.0
  %11740 = vmatprep.subr.mxu0 0.0
  %11741 = vmatpush1.msra.mxu0 0.0
  %11742 = vmatprep.subr.mxu0 0.0
  %11743 = vmatpush1.msra.mxu0 0.0
  %11744 = vmatprep.subr.mxu0 0.0
  %11745 = vmatpush1.msra.mxu0 0.0
  %11746 = vmatprep.subr.mxu0 0.0
  %11747 = vmatpush1.msra.mxu0 0.0
  %11748 = vmatprep.subr.mxu0 0.0
  %11749 = vmatpush1.msra.mxu0 0.0
  %11750 = vmatprep.subr.mxu0 0.0
  %11751 = vmatpush1.msra.mxu0 0.0
  %11752 = vmatprep.mubr.f32.mxu0 0.0
  %v11753 = vand.u32 %v11513, 4294901760
  %v11754 = vsub.f32 %v11513, %v11753
  %11755 = vmatmul.mubr.f32.gmra.mrb[0].mxu0 %v11754
  %v11756 = vpop.f32.mrb[0].mxu0
  %v11757 = vadd.f32 %v11677, %v11756
  %v11758 = vpop.f32.mrb[0].mxu0
  %11759 = vmatprep.mubr.f32.mxu0 0.0
  %v11760 = vand.u32 %v11516, 4294901760
  %v11761 = vsub.f32 %v11516, %v11760
  %11762 = vmatmul.mubr.f32.gmra.mrb[0].mxu0 %v11761
  %v11763 = vpop.f32.mrb[0].mxu0
  %v11764 = vadd.f32 %v11683, %v11763
  %v11765 = vpop.f32.mrb[0].mxu0
  %11766 = vdwg.mxu0
  %11767 = vmatprep.subr.mxu0 0.0
  %v11768 = vand.u32 %v11510, 4294901760
  %11769 = vmatpush1.msra.mxu0 %v11768
  %11770 = vmatprep.subr.mxu0 0.0
  %11771 = vmatpush1.msra.mxu0 0.0
  %11772 = vmatprep.subr.mxu0 0.0
  %11773 = vmatpush1.msra.mxu0 0.0
  %11774 = vmatprep.subr.mxu0 0.0
  %11775 = vmatpush1.msra.mxu0 0.0
  %11776 = vmatprep.subr.mxu0 0.0
  %11777 = vmatpush1.msra.mxu0 0.0
  %11778 = vmatprep.subr.mxu0 0.0
  %11779 = vmatpush1.msra.mxu0 0.0
  %11780 = vmatprep.subr.mxu0 0.0
  %11781 = vmatpush1.msra.mxu0 0.0
  %11782 = vmatprep.subr.mxu0 0.0
  %11783 = vmatpush1.msra.mxu0 0.0
  %11784 = vmatprep.subr.mxu0 0.0
  %11785 = vmatpush1.msra.mxu0 0.0
  %11786 = vmatprep.subr.mxu0 0.0
  %11787 = vmatpush1.msra.mxu0 0.0
  %11788 = vmatprep.subr.mxu0 0.0
  %11789 = vmatpush1.msra.mxu0 0.0
  %11790 = vmatprep.subr.mxu0 0.0
  %11791 = vmatpush1.msra.mxu0 0.0
  %11792 = vmatprep.subr.mxu0 0.0
  %11793 = vmatpush1.msra.mxu0 0.0
  %11794 = vmatprep.subr.mxu0 0.0
  %11795 = vmatpush1.msra.mxu0 0.0
  %11796 = vmatprep.subr.mxu0 0.0
  %11797 = vmatpush1.msra.mxu0 0.0
  %11798 = vmatprep.subr.mxu0 0.0
  %11799 = vmatpush1.msra.mxu0 0.0
  %11800 = vmatprep.subr.mxu0 0.0
  %11801 = vmatpush1.msra.mxu0 0.0
  %11802 = vmatprep.subr.mxu0 0.0
  %11803 = vmatpush1.msra.mxu0 0.0
  %11804 = vmatprep.subr.mxu0 0.0
  %11805 = vmatpush1.msra.mxu0 0.0
  %11806 = vmatprep.subr.mxu0 0.0
  %11807 = vmatpush1.msra.mxu0 0.0
  %11808 = vmatprep.subr.mxu0 0.0
  %11809 = vmatpush1.msra.mxu0 0.0
  %11810 = vmatprep.subr.mxu0 0.0
  %11811 = vmatpush1.msra.mxu0 0.0
  %11812 = vmatprep.subr.mxu0 0.0
  %11813 = vmatpush1.msra.mxu0 0.0
  %11814 = vmatprep.subr.mxu0 0.0
  %11815 = vmatpush1.msra.mxu0 0.0
  %11816 = vmatprep.subr.mxu0 0.0
  %11817 = vmatpush1.msra.mxu0 0.0
  %11818 = vmatprep.subr.mxu0 0.0
  %11819 = vmatpush1.msra.mxu0 0.0
  %11820 = vmatprep.subr.mxu0 0.0
  %11821 = vmatpush1.msra.mxu0 0.0
  %11822 = vmatprep.subr.mxu0 0.0
  %11823 = vmatpush1.msra.mxu0 0.0
  %11824 = vmatprep.subr.mxu0 0.0
  %11825 = vmatpush1.msra.mxu0 0.0
  %11826 = vmatprep.subr.mxu0 0.0
  %11827 = vmatpush1.msra.mxu0 0.0
  %11828 = vmatprep.subr.mxu0 0.0
  %11829 = vmatpush1.msra.mxu0 0.0
  %11830 = vmatprep.subr.mxu0 0.0
  %11831 = vmatpush1.msra.mxu0 0.0
  %11832 = vmatprep.mubr.f32.mxu0 0.0
  %v11833 = vand.u32 %v11513, 4294901760
  %v11834 = vsub.f32 %v11513, %v11833
  %v11835 = vand.u32 %v11834, 4294901760
  %11836 = vmatmul.mubr.f32.gmra.mrb[0].mxu0 %v11835
  %v11837 = vpop.f32.mrb[0].mxu0
  %v11838 = vadd.f32 %v11757, %v11837
  %v11839 = vpop.f32.mrb[0].mxu0
  %11840 = vmatprep.mubr.f32.mxu0 0.0
  %v11841 = vand.u32 %v11516, 4294901760
  %v11842 = vsub.f32 %v11516, %v11841
  %v11843 = vand.u32 %v11842, 4294901760
  %11844 = vmatmul.mubr.f32.gmra.mrb[0].mxu0 %v11843
  %v11845 = vpop.f32.mrb[0].mxu0
  %v11846 = vadd.f32 %v11764, %v11845
  %v11847 = vpop.f32.mrb[0].mxu0
  %11848 = vdwg.mxu0
  %11849 = vmatprep.subr.mxu0 0.0
  %v11850 = vand.u32 %v11510, 4294901760
  %v11851 = vsub.f32 %v11510, %v11850
  %v11852 = vand.u32 %v11851, 4294901760
  %11853 = vmatpush1.msra.mxu0 %v11852
  %11854 = vmatprep.subr.mxu0 0.0
  %11855 = vmatpush1.msra.mxu0 0.0
  %11856 = vmatprep.subr.mxu0 0.0
  %11857 = vmatpush1.msra.mxu0 0.0
  %11858 = vmatprep.subr.mxu0 0.0
  %11859 = vmatpush1.msra.mxu0 0.0
  %11860 = vmatprep.subr.mxu0 0.0
  %11861 = vmatpush1.msra.mxu0 0.0
  %11862 = vmatprep.subr.mxu0 0.0
  %11863 = vmatpush1.msra.mxu0 0.0
  %11864 = vmatprep.subr.mxu0 0.0
  %11865 = vmatpush1.msra.mxu0 0.0
  %11866 = vmatprep.subr.mxu0 0.0
  %11867 = vmatpush1.msra.mxu0 0.0
  %11868 = vmatprep.subr.mxu0 0.0
  %11869 = vmatpush1.msra.mxu0 0.0
  %11870 = vmatprep.subr.mxu0 0.0
  %11871 = vmatpush1.msra.mxu0 0.0
  %11872 = vmatprep.subr.mxu0 0.0
  %11873 = vmatpush1.msra.mxu0 0.0
  %11874 = vmatprep.subr.mxu0 0.0
  %11875 = vmatpush1.msra.mxu0 0.0
  %11876 = vmatprep.subr.mxu0 0.0
  %11877 = vmatpush1.msra.mxu0 0.0
  %11878 = vmatprep.subr.mxu0 0.0
  %11879 = vmatpush1.msra.mxu0 0.0
  %11880 = vmatprep.subr.mxu0 0.0
  %11881 = vmatpush1.msra.mxu0 0.0
  %11882 = vmatprep.subr.mxu0 0.0
  %11883 = vmatpush1.msra.mxu0 0.0
  %11884 = vmatprep.subr.mxu0 0.0
  %11885 = vmatpush1.msra.mxu0 0.0
  %11886 = vmatprep.subr.mxu0 0.0
  %11887 = vmatpush1.msra.mxu0 0.0
  %11888 = vmatprep.subr.mxu0 0.0
  %11889 = vmatpush1.msra.mxu0 0.0
  %11890 = vmatprep.subr.mxu0 0.0
  %11891 = vmatpush1.msra.mxu0 0.0
  %11892 = vmatprep.subr.mxu0 0.0
  %11893 = vmatpush1.msra.mxu0 0.0
  %11894 = vmatprep.subr.mxu0 0.0
  %11895 = vmatpush1.msra.mxu0 0.0
  %11896 = vmatprep.subr.mxu0 0.0
  %11897 = vmatpush1.msra.mxu0 0.0
  %11898 = vmatprep.subr.mxu0 0.0
  %11899 = vmatpush1.msra.mxu0 0.0
  %11900 = vmatprep.subr.mxu0 0.0
  %11901 = vmatpush1.msra.mxu0 0.0
  %11902 = vmatprep.subr.mxu0 0.0
  %11903 = vmatpush1.msra.mxu0 0.0
  %11904 = vmatprep.subr.mxu0 0.0
  %11905 = vmatpush1.msra.mxu0 0.0
  %11906 = vmatprep.subr.mxu0 0.0
  %11907 = vmatpush1.msra.mxu0 0.0
  %11908 = vmatprep.subr.mxu0 0.0
  %11909 = vmatpush1.msra.mxu0 0.0
  %11910 = vmatprep.subr.mxu0 0.0
  %11911 = vmatpush1.msra.mxu0 0.0
  %11912 = vmatprep.subr.mxu0 0.0
  %11913 = vmatpush1.msra.mxu0 0.0
  %11914 = vmatprep.subr.mxu0 0.0
  %11915 = vmatpush1.msra.mxu0 0.0
  %11916 = vmatprep.mubr.f32.mxu0 0.0
  %v11917 = vand.u32 %v11513, 4294901760
  %11918 = vmatmul.mubr.f32.gmra.mrb[0].mxu0 %v11917
  %v11919 = vpop.f32.mrb[0].mxu0
  %v11920 = vadd.f32 %v11838, %v11919
  %v11921 = vpop.f32.mrb[0].mxu0
  %11922 = vmatprep.mubr.f32.mxu0 0.0
  %v11923 = vand.u32 %v11516, 4294901760
  %11924 = vmatmul.mubr.f32.gmra.mrb[0].mxu0 %v11923
  %v11925 = vpop.f32.mrb[0].mxu0
  %v11926 = vadd.f32 %v11846, %v11925
  %v11927 = vpop.f32.mrb[0].mxu0
  %11928 = vdwg.mxu0
  %11929 = vmatprep.subr.mxu0 0.0
  %v11930 = vand.u32 %v11510, 4294901760
  %11931 = vmatpush1.msra.mxu0 %v11930
  %11932 = vmatprep.subr.mxu0 0.0
  %11933 = vmatpush1.msra.mxu0 0.0
  %11934 = vmatprep.subr.mxu0 0.0
  %11935 = vmatpush1.msra.mxu0 0.0
  %11936 = vmatprep.subr.mxu0 0.0
  %11937 = vmatpush1.msra.mxu0 0.0
  %11938 = vmatprep.subr.mxu0 0.0
  %11939 = vmatpush1.msra.mxu0 0.0
  %11940 = vmatprep.subr.mxu0 0.0
  %11941 = vmatpush1.msra.mxu0 0.0
  %11942 = vmatprep.subr.mxu0 0.0
  %11943 = vmatpush1.msra.mxu0 0.0
  %11944 = vmatprep.subr.mxu0 0.0
  %11945 = vmatpush1.msra.mxu0 0.0
  %11946 = vmatprep.subr.mxu0 0.0
  %11947 = vmatpush1.msra.mxu0 0.0
  %11948 = vmatprep.subr.mxu0 0.0
  %11949 = vmatpush1.msra.mxu0 0.0
  %11950 = vmatprep.subr.mxu0 0.0
  %11951 = vmatpush1.msra.mxu0 0.0
  %11952 = vmatprep.subr.mxu0 0.0
  %11953 = vmatpush1.msra.mxu0 0.0
  %11954 = vmatprep.subr.mxu0 0.0
  %11955 = vmatpush1.msra.mxu0 0.0
  %11956 = vmatprep.subr.mxu0 0.0
  %11957 = vmatpush1.msra.mxu0 0.0
  %11958 = vmatprep.subr.mxu0 0.0
  %11959 = vmatpush1.msra.mxu0 0.0
  %11960 = vmatprep.subr.mxu0 0.0
  %11961 = vmatpush1.msra.mxu0 0.0
  %11962 = vmatprep.subr.mxu0 0.0
  %11963 = vmatpush1.msra.mxu0 0.0
  %11964 = vmatprep.subr.mxu0 0.0
  %11965 = vmatpush1.msra.mxu0 0.0
  %11966 = vmatprep.subr.mxu0 0.0
  %11967 = vmatpush1.msra.mxu0 0.0
  %11968 = vmatprep.subr.mxu0 0.0
  %11969 = vmatpush1.msra.mxu0 0.0
  %11970 = vmatprep.subr.mxu0 0.0
  %11971 = vmatpush1.msra.mxu0 0.0
  %11972 = vmatprep.subr.mxu0 0.0
  %11973 = vmatpush1.msra.mxu0 0.0
  %11974 = vmatprep.subr.mxu0 0.0
  %11975 = vmatpush1.msra.mxu0 0.0
  %11976 = vmatprep.subr.mxu0 0.0
  %11977 = vmatpush1.msra.mxu0 0.0
  %11978 = vmatprep.subr.mxu0 0.0
  %11979 = vmatpush1.msra.mxu0 0.0
  %11980 = vmatprep.subr.mxu0 0.0
  %11981 = vmatpush1.msra.mxu0 0.0
  %11982 = vmatprep.subr.mxu0 0.0
  %11983 = vmatpush1.msra.mxu0 0.0
  %11984 = vmatprep.subr.mxu0 0.0
  %11985 = vmatpush1.msra.mxu0 0.0
  %11986 = vmatprep.subr.mxu0 0.0
  %11987 = vmatpush1.msra.mxu0 0.0
  %11988 = vmatprep.subr.mxu0 0.0
  %11989 = vmatpush1.msra.mxu0 0.0
  %11990 = vmatprep.subr.mxu0 0.0
  %11991 = vmatpush1.msra.mxu0 0.0
  %11992 = vmatprep.subr.mxu0 0.0
  %11993 = vmatpush1.msra.mxu0 0.0
  %11994 = vmatprep.mubr.f32.mxu0 0.0
  %v11995 = vand.u32 %v11513, 4294901760
  %11996 = vmatmul.mubr.f32.gmra.mrb[0].mxu0 %v11995
  %v11997 = vpop.f32.mrb[0].mxu0
  %v11998 = vadd.f32 %v11920, %v11997
  %v11999 = vpop.f32.mrb[0].mxu0
  %12000 = vmatprep.mubr.f32.mxu0 0.0
  %v12001 = vand.u32 %v11516, 4294901760
  %12002 = vmatmul.mubr.f32.gmra.mrb[0].mxu0 %v12001
  %v12003 = vpop.f32.mrb[0].mxu0
  %v12004 = vadd.f32 %v11926, %v12003
  %v12005 = vpop.f32.mrb[0].mxu0
  %12006 = vdwg.mxu0
  %s12007 = scalar_lea.vmem %s1, 80
  %v12008 = vld [vmem:[%s12007] sm:$0xff]
  %v12009 = vld [vmem:[%s12007 + $0x8] sm:$0xff]
  %v12011 = vsel %vm6442, %v12008, 0
  %v12014 = vsel %vm6442, %v12009, 0
  %12016 = vmatprep.subr.mxu0 0.0
  %v12017 = vand.u32 %v11998, 4294901760
  %12018 = vmatpush1.msra.mxu0 %v12017
  %12019 = vmatprep.subr.mxu0 0.0
  %v12020 = vand.u32 %v12004, 4294901760
  %12021 = vmatpush1.msra.mxu0 %v12020
  %12022 = vmatprep.subr.mxu0 0.0
  %12023 = vmatpush1.msra.mxu0 0.0
  %12024 = vmatprep.subr.mxu0 0.0
  %12025 = vmatpush1.msra.mxu0 0.0
  %12026 = vmatprep.subr.mxu0 0.0
  %12027 = vmatpush1.msra.mxu0 0.0
  %12028 = vmatprep.subr.mxu0 0.0
  %12029 = vmatpush1.msra.mxu0 0.0
  %12030 = vmatprep.subr.mxu0 0.0
  %12031 = vmatpush1.msra.mxu0 0.0
  %12032 = vmatprep.subr.mxu0 0.0
  %12033 = vmatpush1.msra.mxu0 0.0
  %12034 = vmatprep.subr.mxu0 0.0
  %12035 = vmatpush1.msra.mxu0 0.0
  %12036 = vmatprep.subr.mxu0 0.0
  %12037 = vmatpush1.msra.mxu0 0.0
  %12038 = vmatprep.subr.mxu0 0.0
  %12039 = vmatpush1.msra.mxu0 0.0
  %12040 = vmatprep.subr.mxu0 0.0
  %12041 = vmatpush1.msra.mxu0 0.0
  %12042 = vmatprep.subr.mxu0 0.0
  %12043 = vmatpush1.msra.mxu0 0.0
  %12044 = vmatprep.subr.mxu0 0.0
  %12045 = vmatpush1.msra.mxu0 0.0
  %12046 = vmatprep.subr.mxu0 0.0
  %12047 = vmatpush1.msra.mxu0 0.0
  %12048 = vmatprep.subr.mxu0 0.0
  %12049 = vmatpush1.msra.mxu0 0.0
  %12050 = vmatprep.subr.mxu0 0.0
  %12051 = vmatpush1.msra.mxu0 0.0
  %12052 = vmatprep.subr.mxu0 0.0
  %12053 = vmatpush1.msra.mxu0 0.0
  %12054 = vmatprep.subr.mxu0 0.0
  %12055 = vmatpush1.msra.mxu0 0.0
  %12056 = vmatprep.subr.mxu0 0.0
  %12057 = vmatpush1.msra.mxu0 0.0
  %12058 = vmatprep.subr.mxu0 0.0
  %12059 = vmatpush1.msra.mxu0 0.0
  %12060 = vmatprep.subr.mxu0 0.0
  %12061 = vmatpush1.msra.mxu0 0.0
  %12062 = vmatprep.subr.mxu0 0.0
  %12063 = vmatpush1.msra.mxu0 0.0
  %12064 = vmatprep.subr.mxu0 0.0
  %12065 = vmatpush1.msra.mxu0 0.0
  %12066 = vmatprep.subr.mxu0 0.0
  %12067 = vmatpush1.msra.mxu0 0.0
  %12068 = vmatprep.subr.mxu0 0.0
  %12069 = vmatpush1.msra.mxu0 0.0
  %12070 = vmatprep.subr.mxu0 0.0
  %12071 = vmatpush1.msra.mxu0 0.0
  %12072 = vmatprep.subr.mxu0 0.0
  %12073 = vmatpush1.msra.mxu0 0.0
  %12074 = vmatprep.subr.mxu0 0.0
  %12075 = vmatpush1.msra.mxu0 0.0
  %12076 = vmatprep.subr.mxu0 0.0
  %12077 = vmatpush1.msra.mxu0 0.0
  %12078 = vmatprep.subr.mxu0 0.0
  %12079 = vmatpush1.msra.mxu0 0.0
  %12080 = vmatprep.subr.mxu0 0.0
  %12081 = vmatpush1.msra.mxu0 0.0
  %12082 = vmatprep.mubr.f32.mxu0 0.0
  %v12083 = vand.u32 %v12011, 4294901760
  %v12084 = vsub.f32 %v12011, %v12083
  %v12085 = vand.u32 %v12084, 4294901760
  %v12086 = vsub.f32 %v12084, %v12085
  %v12087 = vand.u32 %v12086, 4294901760
  %12088 = vmatmul.mubr.f32.gmra.mrb[0].mxu0 %v12087
  %v12089 = vpop.f32.mrb[0].mxu0
  %v12090 = vadd.f32 0.0, %v12089
  %v12091 = vpop.f32.mrb[0].mxu0
  %12092 = vmatprep.mubr.f32.mxu0 0.0
  %v12093 = vand.u32 %v12014, 4294901760
  %v12094 = vsub.f32 %v12014, %v12093
  %v12095 = vand.u32 %v12094, 4294901760
  %v12096 = vsub.f32 %v12094, %v12095
  %v12097 = vand.u32 %v12096, 4294901760
  %12098 = vmatmul.mubr.f32.gmra.mrb[0].mxu0 %v12097
  %v12099 = vpop.f32.mrb[0].mxu0
  %v12100 = vadd.f32 0.0, %v12099
  %v12101 = vpop.f32.mrb[0].mxu0
  %12102 = vdwg.mxu0
  %12103 = vmatprep.subr.mxu0 0.0
  %v12104 = vand.u32 %v11998, 4294901760
  %v12105 = vsub.f32 %v11998, %v12104
  %v12106 = vand.u32 %v12105, 4294901760
  %v12107 = vsub.f32 %v12105, %v12106
  %v12108 = vand.u32 %v12107, 4294901760
  %12109 = vmatpush1.msra.mxu0 %v12108
  %12110 = vmatprep.subr.mxu0 0.0
  %v12111 = vand.u32 %v12004, 4294901760
  %v12112 = vsub.f32 %v12004, %v12111
  %v12113 = vand.u32 %v12112, 4294901760
  %v12114 = vsub.f32 %v12112, %v12113
  %v12115 = vand.u32 %v12114, 4294901760
  %12116 = vmatpush1.msra.mxu0 %v12115
  %12117 = vmatprep.subr.mxu0 0.0
  %12118 = vmatpush1.msra.mxu0 0.0
  %12119 = vmatprep.subr.mxu0 0.0
  %12120 = vmatpush1.msra.mxu0 0.0
  %12121 = vmatprep.subr.mxu0 0.0
  %12122 = vmatpush1.msra.mxu0 0.0
  %12123 = vmatprep.subr.mxu0 0.0
  %12124 = vmatpush1.msra.mxu0 0.0
  %12125 = vmatprep.subr.mxu0 0.0
  %12126 = vmatpush1.msra.mxu0 0.0
  %12127 = vmatprep.subr.mxu0 0.0
  %12128 = vmatpush1.msra.mxu0 0.0
  %12129 = vmatprep.subr.mxu0 0.0
  %12130 = vmatpush1.msra.mxu0 0.0
  %12131 = vmatprep.subr.mxu0 0.0
  %12132 = vmatpush1.msra.mxu0 0.0
  %12133 = vmatprep.subr.mxu0 0.0
  %12134 = vmatpush1.msra.mxu0 0.0
  %12135 = vmatprep.subr.mxu0 0.0
  %12136 = vmatpush1.msra.mxu0 0.0
  %12137 = vmatprep.subr.mxu0 0.0
  %12138 = vmatpush1.msra.mxu0 0.0
  %12139 = vmatprep.subr.mxu0 0.0
  %12140 = vmatpush1.msra.mxu0 0.0
  %12141 = vmatprep.subr.mxu0 0.0
  %12142 = vmatpush1.msra.mxu0 0.0
  %12143 = vmatprep.subr.mxu0 0.0
  %12144 = vmatpush1.msra.mxu0 0.0
  %12145 = vmatprep.subr.mxu0 0.0
  %12146 = vmatpush1.msra.mxu0 0.0
  %12147 = vmatprep.subr.mxu0 0.0
  %12148 = vmatpush1.msra.mxu0 0.0
  %12149 = vmatprep.subr.mxu0 0.0
  %12150 = vmatpush1.msra.mxu0 0.0
  %12151 = vmatprep.subr.mxu0 0.0
  %12152 = vmatpush1.msra.mxu0 0.0
  %12153 = vmatprep.subr.mxu0 0.0
  %12154 = vmatpush1.msra.mxu0 0.0
  %12155 = vmatprep.subr.mxu0 0.0
  %12156 = vmatpush1.msra.mxu0 0.0
  %12157 = vmatprep.subr.mxu0 0.0
  %12158 = vmatpush1.msra.mxu0 0.0
  %12159 = vmatprep.subr.mxu0 0.0
  %12160 = vmatpush1.msra.mxu0 0.0
  %12161 = vmatprep.subr.mxu0 0.0
  %12162 = vmatpush1.msra.mxu0 0.0
  %12163 = vmatprep.subr.mxu0 0.0
  %12164 = vmatpush1.msra.mxu0 0.0
  %12165 = vmatprep.subr.mxu0 0.0
  %12166 = vmatpush1.msra.mxu0 0.0
  %12167 = vmatprep.subr.mxu0 0.0
  %12168 = vmatpush1.msra.mxu0 0.0
  %12169 = vmatprep.subr.mxu0 0.0
  %12170 = vmatpush1.msra.mxu0 0.0
  %12171 = vmatprep.subr.mxu0 0.0
  %12172 = vmatpush1.msra.mxu0 0.0
  %12173 = vmatprep.subr.mxu0 0.0
  %12174 = vmatpush1.msra.mxu0 0.0
  %12175 = vmatprep.subr.mxu0 0.0
  %12176 = vmatpush1.msra.mxu0 0.0
  %12177 = vmatprep.mubr.f32.mxu0 0.0
  %v12178 = vand.u32 %v12011, 4294901760
  %12179 = vmatmul.mubr.f32.gmra.mrb[0].mxu0 %v12178
  %v12180 = vpop.f32.mrb[0].mxu0
  %v12181 = vadd.f32 %v12090, %v12180
  %v12182 = vpop.f32.mrb[0].mxu0
  %12183 = vmatprep.mubr.f32.mxu0 0.0
  %v12184 = vand.u32 %v12014, 4294901760
  %12185 = vmatmul.mubr.f32.gmra.mrb[0].mxu0 %v12184
  %v12186 = vpop.f32.mrb[0].mxu0
  %v12187 = vadd.f32 %v12100, %v12186
  %v12188 = vpop.f32.mrb[0].mxu0
  %12189 = vdwg.mxu0
  %12190 = vmatprep.subr.mxu0 0.0
  %v12191 = vand.u32 %v11998, 4294901760
  %v12192 = vsub.f32 %v11998, %v12191
  %12193 = vmatpush1.msra.mxu0 %v12192
  %12194 = vmatprep.subr.mxu0 0.0
  %v12195 = vand.u32 %v12004, 4294901760
  %v12196 = vsub.f32 %v12004, %v12195
  %12197 = vmatpush1.msra.mxu0 %v12196
  %12198 = vmatprep.subr.mxu0 0.0
  %12199 = vmatpush1.msra.mxu0 0.0
  %12200 = vmatprep.subr.mxu0 0.0
  %12201 = vmatpush1.msra.mxu0 0.0
  %12202 = vmatprep.subr.mxu0 0.0
  %12203 = vmatpush1.msra.mxu0 0.0
  %12204 = vmatprep.subr.mxu0 0.0
  %12205 = vmatpush1.msra.mxu0 0.0
  %12206 = vmatprep.subr.mxu0 0.0
  %12207 = vmatpush1.msra.mxu0 0.0
  %12208 = vmatprep.subr.mxu0 0.0
  %12209 = vmatpush1.msra.mxu0 0.0
  %12210 = vmatprep.subr.mxu0 0.0
  %12211 = vmatpush1.msra.mxu0 0.0
  %12212 = vmatprep.subr.mxu0 0.0
  %12213 = vmatpush1.msra.mxu0 0.0
  %12214 = vmatprep.subr.mxu0 0.0
  %12215 = vmatpush1.msra.mxu0 0.0
  %12216 = vmatprep.subr.mxu0 0.0
  %12217 = vmatpush1.msra.mxu0 0.0
  %12218 = vmatprep.subr.mxu0 0.0
  %12219 = vmatpush1.msra.mxu0 0.0
  %12220 = vmatprep.subr.mxu0 0.0
  %12221 = vmatpush1.msra.mxu0 0.0
  %12222 = vmatprep.subr.mxu0 0.0
  %12223 = vmatpush1.msra.mxu0 0.0
  %12224 = vmatprep.subr.mxu0 0.0
  %12225 = vmatpush1.msra.mxu0 0.0
  %12226 = vmatprep.subr.mxu0 0.0
  %12227 = vmatpush1.msra.mxu0 0.0
  %12228 = vmatprep.subr.mxu0 0.0
  %12229 = vmatpush1.msra.mxu0 0.0
  %12230 = vmatprep.subr.mxu0 0.0
  %12231 = vmatpush1.msra.mxu0 0.0
  %12232 = vmatprep.subr.mxu0 0.0
  %12233 = vmatpush1.msra.mxu0 0.0
  %12234 = vmatprep.subr.mxu0 0.0
  %12235 = vmatpush1.msra.mxu0 0.0
  %12236 = vmatprep.subr.mxu0 0.0
  %12237 = vmatpush1.msra.mxu0 0.0
  %12238 = vmatprep.subr.mxu0 0.0
  %12239 = vmatpush1.msra.mxu0 0.0
  %12240 = vmatprep.subr.mxu0 0.0
  %12241 = vmatpush1.msra.mxu0 0.0
  %12242 = vmatprep.subr.mxu0 0.0
  %12243 = vmatpush1.msra.mxu0 0.0
  %12244 = vmatprep.subr.mxu0 0.0
  %12245 = vmatpush1.msra.mxu0 0.0
  %12246 = vmatprep.subr.mxu0 0.0
  %12247 = vmatpush1.msra.mxu0 0.0
  %12248 = vmatprep.subr.mxu0 0.0
  %12249 = vmatpush1.msra.mxu0 0.0
  %12250 = vmatprep.subr.mxu0 0.0
  %12251 = vmatpush1.msra.mxu0 0.0
  %12252 = vmatprep.subr.mxu0 0.0
  %12253 = vmatpush1.msra.mxu0 0.0
  %12254 = vmatprep.subr.mxu0 0.0
  %12255 = vmatpush1.msra.mxu0 0.0
  %12256 = vmatprep.subr.mxu0 0.0
  %12257 = vmatpush1.msra.mxu0 0.0
  %12258 = vmatprep.mubr.f32.mxu0 0.0
  %v12259 = vand.u32 %v12011, 4294901760
  %v12260 = vsub.f32 %v12011, %v12259
  %12261 = vmatmul.mubr.f32.gmra.mrb[0].mxu0 %v12260
  %v12262 = vpop.f32.mrb[0].mxu0
  %v12263 = vadd.f32 %v12181, %v12262
  %v12264 = vpop.f32.mrb[0].mxu0
  %12265 = vmatprep.mubr.f32.mxu0 0.0
  %v12266 = vand.u32 %v12014, 4294901760
  %v12267 = vsub.f32 %v12014, %v12266
  %12268 = vmatmul.mubr.f32.gmra.mrb[0].mxu0 %v12267
  %v12269 = vpop.f32.mrb[0].mxu0
  %v12270 = vadd.f32 %v12187, %v12269
  %v12271 = vpop.f32.mrb[0].mxu0
  %12272 = vdwg.mxu0
  %12273 = vmatprep.subr.mxu0 0.0
  %v12274 = vand.u32 %v11998, 4294901760
  %12275 = vmatpush1.msra.mxu0 %v12274
  %12276 = vmatprep.subr.mxu0 0.0
  %v12277 = vand.u32 %v12004, 4294901760
  %12278 = vmatpush1.msra.mxu0 %v12277
  %12279 = vmatprep.subr.mxu0 0.0
  %12280 = vmatpush1.msra.mxu0 0.0
  %12281 = vmatprep.subr.mxu0 0.0
  %12282 = vmatpush1.msra.mxu0 0.0
  %12283 = vmatprep.subr.mxu0 0.0
  %12284 = vmatpush1.msra.mxu0 0.0
  %12285 = vmatprep.subr.mxu0 0.0
  %12286 = vmatpush1.msra.mxu0 0.0
  %12287 = vmatprep.subr.mxu0 0.0
  %12288 = vmatpush1.msra.mxu0 0.0
  %12289 = vmatprep.subr.mxu0 0.0
  %12290 = vmatpush1.msra.mxu0 0.0
  %12291 = vmatprep.subr.mxu0 0.0
  %12292 = vmatpush1.msra.mxu0 0.0
  %12293 = vmatprep.subr.mxu0 0.0
  %12294 = vmatpush1.msra.mxu0 0.0
  %12295 = vmatprep.subr.mxu0 0.0
  %12296 = vmatpush1.msra.mxu0 0.0
  %12297 = vmatprep.subr.mxu0 0.0
  %12298 = vmatpush1.msra.mxu0 0.0
  %12299 = vmatprep.subr.mxu0 0.0
  %12300 = vmatpush1.msra.mxu0 0.0
  %12301 = vmatprep.subr.mxu0 0.0
  %12302 = vmatpush1.msra.mxu0 0.0
  %12303 = vmatprep.subr.mxu0 0.0
  %12304 = vmatpush1.msra.mxu0 0.0
  %12305 = vmatprep.subr.mxu0 0.0
  %12306 = vmatpush1.msra.mxu0 0.0
  %12307 = vmatprep.subr.mxu0 0.0
  %12308 = vmatpush1.msra.mxu0 0.0
  %12309 = vmatprep.subr.mxu0 0.0
  %12310 = vmatpush1.msra.mxu0 0.0
  %12311 = vmatprep.subr.mxu0 0.0
  %12312 = vmatpush1.msra.mxu0 0.0
  %12313 = vmatprep.subr.mxu0 0.0
  %12314 = vmatpush1.msra.mxu0 0.0
  %12315 = vmatprep.subr.mxu0 0.0
  %12316 = vmatpush1.msra.mxu0 0.0
  %12317 = vmatprep.subr.mxu0 0.0
  %12318 = vmatpush1.msra.mxu0 0.0
  %12319 = vmatprep.subr.mxu0 0.0
  %12320 = vmatpush1.msra.mxu0 0.0
  %12321 = vmatprep.subr.mxu0 0.0
  %12322 = vmatpush1.msra.mxu0 0.0
  %12323 = vmatprep.subr.mxu0 0.0
  %12324 = vmatpush1.msra.mxu0 0.0
  %12325 = vmatprep.subr.mxu0 0.0
  %12326 = vmatpush1.msra.mxu0 0.0
  %12327 = vmatprep.subr.mxu0 0.0
  %12328 = vmatpush1.msra.mxu0 0.0
  %12329 = vmatprep.subr.mxu0 0.0
  %12330 = vmatpush1.msra.mxu0 0.0
  %12331 = vmatprep.subr.mxu0 0.0
  %12332 = vmatpush1.msra.mxu0 0.0
  %12333 = vmatprep.subr.mxu0 0.0
  %12334 = vmatpush1.msra.mxu0 0.0
  %12335 = vmatprep.subr.mxu0 0.0
  %12336 = vmatpush1.msra.mxu0 0.0
  %12337 = vmatprep.subr.mxu0 0.0
  %12338 = vmatpush1.msra.mxu0 0.0
  %12339 = vmatprep.mubr.f32.mxu0 0.0
  %v12340 = vand.u32 %v12011, 4294901760
  %v12341 = vsub.f32 %v12011, %v12340
  %v12342 = vand.u32 %v12341, 4294901760
  %12343 = vmatmul.mubr.f32.gmra.mrb[0].mxu0 %v12342
  %v12344 = vpop.f32.mrb[0].mxu0
  %v12345 = vadd.f32 %v12263, %v12344
  %v12346 = vpop.f32.mrb[0].mxu0
  %12347 = vmatprep.mubr.f32.mxu0 0.0
  %v12348 = vand.u32 %v12014, 4294901760
  %v12349 = vsub.f32 %v12014, %v12348
  %v12350 = vand.u32 %v12349, 4294901760
  %12351 = vmatmul.mubr.f32.gmra.mrb[0].mxu0 %v12350
  %v12352 = vpop.f32.mrb[0].mxu0
  %v12353 = vadd.f32 %v12270, %v12352
  %v12354 = vpop.f32.mrb[0].mxu0
  %12355 = vdwg.mxu0
  %12356 = vmatprep.subr.mxu0 0.0
  %v12357 = vand.u32 %v11998, 4294901760
  %v12358 = vsub.f32 %v11998, %v12357
  %v12359 = vand.u32 %v12358, 4294901760
  %12360 = vmatpush1.msra.mxu0 %v12359
  %12361 = vmatprep.subr.mxu0 0.0
  %v12362 = vand.u32 %v12004, 4294901760
  %v12363 = vsub.f32 %v12004, %v12362
  %v12364 = vand.u32 %v12363, 4294901760
  %12365 = vmatpush1.msra.mxu0 %v12364
  %12366 = vmatprep.subr.mxu0 0.0
  %12367 = vmatpush1.msra.mxu0 0.0
  %12368 = vmatprep.subr.mxu0 0.0
  %12369 = vmatpush1.msra.mxu0 0.0
  %12370 = vmatprep.subr.mxu0 0.0
  %12371 = vmatpush1.msra.mxu0 0.0
  %12372 = vmatprep.subr.mxu0 0.0
  %12373 = vmatpush1.msra.mxu0 0.0
  %12374 = vmatprep.subr.mxu0 0.0
  %12375 = vmatpush1.msra.mxu0 0.0
  %12376 = vmatprep.subr.mxu0 0.0
  %12377 = vmatpush1.msra.mxu0 0.0
  %12378 = vmatprep.subr.mxu0 0.0
  %12379 = vmatpush1.msra.mxu0 0.0
  %12380 = vmatprep.subr.mxu0 0.0
  %12381 = vmatpush1.msra.mxu0 0.0
  %12382 = vmatprep.subr.mxu0 0.0
  %12383 = vmatpush1.msra.mxu0 0.0
  %12384 = vmatprep.subr.mxu0 0.0
  %12385 = vmatpush1.msra.mxu0 0.0
  %12386 = vmatprep.subr.mxu0 0.0
  %12387 = vmatpush1.msra.mxu0 0.0
  %12388 = vmatprep.subr.mxu0 0.0
  %12389 = vmatpush1.msra.mxu0 0.0
  %12390 = vmatprep.subr.mxu0 0.0
  %12391 = vmatpush1.msra.mxu0 0.0
  %12392 = vmatprep.subr.mxu0 0.0
  %12393 = vmatpush1.msra.mxu0 0.0
  %12394 = vmatprep.subr.mxu0 0.0
  %12395 = vmatpush1.msra.mxu0 0.0
  %12396 = vmatprep.subr.mxu0 0.0
  %12397 = vmatpush1.msra.mxu0 0.0
  %12398 = vmatprep.subr.mxu0 0.0
  %12399 = vmatpush1.msra.mxu0 0.0
  %12400 = vmatprep.subr.mxu0 0.0
  %12401 = vmatpush1.msra.mxu0 0.0
  %12402 = vmatprep.subr.mxu0 0.0
  %12403 = vmatpush1.msra.mxu0 0.0
  %12404 = vmatprep.subr.mxu0 0.0
  %12405 = vmatpush1.msra.mxu0 0.0
  %12406 = vmatprep.subr.mxu0 0.0
  %12407 = vmatpush1.msra.mxu0 0.0
  %12408 = vmatprep.subr.mxu0 0.0
  %12409 = vmatpush1.msra.mxu0 0.0
  %12410 = vmatprep.subr.mxu0 0.0
  %12411 = vmatpush1.msra.mxu0 0.0
  %12412 = vmatprep.subr.mxu0 0.0
  %12413 = vmatpush1.msra.mxu0 0.0
  %12414 = vmatprep.subr.mxu0 0.0
  %12415 = vmatpush1.msra.mxu0 0.0
  %12416 = vmatprep.subr.mxu0 0.0
  %12417 = vmatpush1.msra.mxu0 0.0
  %12418 = vmatprep.subr.mxu0 0.0
  %12419 = vmatpush1.msra.mxu0 0.0
  %12420 = vmatprep.subr.mxu0 0.0
  %12421 = vmatpush1.msra.mxu0 0.0
  %12422 = vmatprep.subr.mxu0 0.0
  %12423 = vmatpush1.msra.mxu0 0.0
  %12424 = vmatprep.subr.mxu0 0.0
  %12425 = vmatpush1.msra.mxu0 0.0
  %12426 = vmatprep.mubr.f32.mxu0 0.0
  %v12427 = vand.u32 %v12011, 4294901760
  %12428 = vmatmul.mubr.f32.gmra.mrb[0].mxu0 %v12427
  %v12429 = vpop.f32.mrb[0].mxu0
  %v12430 = vadd.f32 %v12345, %v12429
  %v12431 = vpop.f32.mrb[0].mxu0
  %12432 = vmatprep.mubr.f32.mxu0 0.0
  %v12433 = vand.u32 %v12014, 4294901760
  %12434 = vmatmul.mubr.f32.gmra.mrb[0].mxu0 %v12433
  %v12435 = vpop.f32.mrb[0].mxu0
  %v12436 = vadd.f32 %v12353, %v12435
  %v12437 = vpop.f32.mrb[0].mxu0
  %12438 = vdwg.mxu0
  %12439 = vmatprep.subr.mxu0 0.0
  %v12440 = vand.u32 %v11998, 4294901760
  %12441 = vmatpush1.msra.mxu0 %v12440
  %12442 = vmatprep.subr.mxu0 0.0
  %v12443 = vand.u32 %v12004, 4294901760
  %12444 = vmatpush1.msra.mxu0 %v12443
  %12445 = vmatprep.subr.mxu0 0.0
  %12446 = vmatpush1.msra.mxu0 0.0
  %12447 = vmatprep.subr.mxu0 0.0
  %12448 = vmatpush1.msra.mxu0 0.0
  %12449 = vmatprep.subr.mxu0 0.0
  %12450 = vmatpush1.msra.mxu0 0.0
  %12451 = vmatprep.subr.mxu0 0.0
  %12452 = vmatpush1.msra.mxu0 0.0
  %12453 = vmatprep.subr.mxu0 0.0
  %12454 = vmatpush1.msra.mxu0 0.0
  %12455 = vmatprep.subr.mxu0 0.0
  %12456 = vmatpush1.msra.mxu0 0.0
  %12457 = vmatprep.subr.mxu0 0.0
  %12458 = vmatpush1.msra.mxu0 0.0
  %12459 = vmatprep.subr.mxu0 0.0
  %12460 = vmatpush1.msra.mxu0 0.0
  %12461 = vmatprep.subr.mxu0 0.0
  %12462 = vmatpush1.msra.mxu0 0.0
  %12463 = vmatprep.subr.mxu0 0.0
  %12464 = vmatpush1.msra.mxu0 0.0
  %12465 = vmatprep.subr.mxu0 0.0
  %12466 = vmatpush1.msra.mxu0 0.0
  %12467 = vmatprep.subr.mxu0 0.0
  %12468 = vmatpush1.msra.mxu0 0.0
  %12469 = vmatprep.subr.mxu0 0.0
  %12470 = vmatpush1.msra.mxu0 0.0
  %12471 = vmatprep.subr.mxu0 0.0
  %12472 = vmatpush1.msra.mxu0 0.0
  %12473 = vmatprep.subr.mxu0 0.0
  %12474 = vmatpush1.msra.mxu0 0.0
  %12475 = vmatprep.subr.mxu0 0.0
  %12476 = vmatpush1.msra.mxu0 0.0
  %12477 = vmatprep.subr.mxu0 0.0
  %12478 = vmatpush1.msra.mxu0 0.0
  %12479 = vmatprep.subr.mxu0 0.0
  %12480 = vmatpush1.msra.mxu0 0.0
  %12481 = vmatprep.subr.mxu0 0.0
  %12482 = vmatpush1.msra.mxu0 0.0
  %12483 = vmatprep.subr.mxu0 0.0
  %12484 = vmatpush1.msra.mxu0 0.0
  %12485 = vmatprep.subr.mxu0 0.0
  %12486 = vmatpush1.msra.mxu0 0.0
  %12487 = vmatprep.subr.mxu0 0.0
  %12488 = vmatpush1.msra.mxu0 0.0
  %12489 = vmatprep.subr.mxu0 0.0
  %12490 = vmatpush1.msra.mxu0 0.0
  %12491 = vmatprep.subr.mxu0 0.0
  %12492 = vmatpush1.msra.mxu0 0.0
  %12493 = vmatprep.subr.mxu0 0.0
  %12494 = vmatpush1.msra.mxu0 0.0
  %12495 = vmatprep.subr.mxu0 0.0
  %12496 = vmatpush1.msra.mxu0 0.0
  %12497 = vmatprep.subr.mxu0 0.0
  %12498 = vmatpush1.msra.mxu0 0.0
  %12499 = vmatprep.subr.mxu0 0.0
  %12500 = vmatpush1.msra.mxu0 0.0
  %12501 = vmatprep.subr.mxu0 0.0
  %12502 = vmatpush1.msra.mxu0 0.0
  %12503 = vmatprep.subr.mxu0 0.0
  %12504 = vmatpush1.msra.mxu0 0.0
  %12505 = vmatprep.mubr.f32.mxu0 0.0
  %v12506 = vand.u32 %v12011, 4294901760
  %12507 = vmatmul.mubr.f32.gmra.mrb[0].mxu0 %v12506
  %v12508 = vpop.f32.mrb[0].mxu0
  %v12509 = vadd.f32 %v12430, %v12508
  %v12510 = vpop.f32.mrb[0].mxu0
  %12511 = vmatprep.mubr.f32.mxu0 0.0
  %v12512 = vand.u32 %v12014, 4294901760
  %12513 = vmatmul.mubr.f32.gmra.mrb[0].mxu0 %v12512
  %v12514 = vpop.f32.mrb[0].mxu0
  %v12515 = vadd.f32 %v12436, %v12514
  %v12516 = vpop.f32.mrb[0].mxu0
  %12517 = vdwg.mxu0
  %v12518 = vmax.f32 %v12509, 0.0
  %v12519 = vmax.f32 %v12515, 0.0
  %12522 = vrot.lane.b32.xlu0 %v8470, 8
  %v12523 = vpop.permute.xlu0 %12522
  %12524 = vrot.lane.b32.xlu0 %v8471, 8
  %v12525 = vpop.permute.xlu0 %12524
  %12530 = vrot.lane.b32.xlu0 %v9481, 16
  %v12531 = vpop.permute.xlu0 %12530
  %12532 = vrot.lane.b32.xlu0 %v9482, 16
  %v12533 = vpop.permute.xlu0 %12532
  %12538 = vrot.lane.b32.xlu0 %v10492, 24
  %v12539 = vpop.permute.xlu0 %12538
  %12540 = vrot.lane.b32.xlu0 %v10493, 24
  %v12541 = vpop.permute.xlu0 %12540
  %12546 = vrot.lane.b32.xlu0 %v11503, 32
  %v12547 = vpop.permute.xlu0 %12546
  %12548 = vrot.lane.b32.xlu0 %v11504, 32
  %v12549 = vpop.permute.xlu0 %12548
  %12554 = vrot.lane.b32.xlu0 %v12518, 40
  %v12555 = vpop.permute.xlu0 %12554
  %12556 = vrot.lane.b32.xlu0 %v12519, 40
  %v12557 = vpop.permute.xlu0 %12556
  %v12560 = vsel %vm41, %v7459, %v12523
  %v12561 = vsel %vm41, %v7460, %v12525
  %v12562 = vsel %vm6442, %v12560, %v12531
  %v12563 = vsel %vm6442, %v12561, %v12533
  %v12564 = vsel %vm6444, %v12562, %v12539
  %v12565 = vsel %vm6444, %v12563, %v12541
  %v12566 = vsel %vm6446, %v12564, %v12547
  %v12567 = vsel %vm6446, %v12565, %v12549
  %v12568 = vsel %vm6448, %v12566, %v12555
  %v12569 = vsel %vm6448, %v12567, %v12557
  %12570 = vst.msk [vmem:[%s8] sm:$0xff] %vm6450, %v12568
  %12571 = vst.msk [vmem:[%s8 + $0x8] sm:$0xff] %vm6450, %v12569
  // Predicated region
  $region34: #{egcn_forward.1} parent=0 // pred_check
    _
  $region35: #{egcn_forward.1} parent=0 // pred_check_branch
    %12573 = sbr.rel (0) target = $region37
  $region36: #{egcn_forward.1} parent=0 // pred_region
    _
  $region37: #{egcn_forward.1} parent=0 // pred_fallthru
    _
  // Predicated region
  $region38: #{egcn_forward.1} parent=0 // pred_check
    _
  $region39: #{egcn_forward.1} parent=0 // pred_check_branch
    %12575 = sbr.rel (0) target = $region41
  $region40: #{egcn_forward.1} parent=0 // pred_region
    _
  $region41: #{egcn_forward.1} parent=0 // pred_fallthru
    _
  // Predicated region
  $region42: #{egcn_forward.1} parent=0 // pred_check
    _
  $region43: #{egcn_forward.1} parent=0 // pred_check_branch
    %12577 = sbr.rel (0) target = $region45
  $region44: #{egcn_forward.1} parent=0 // pred_region
    _
  $region45: #{egcn_forward.1} parent=0 // pred_fallthru
    _
  // Predicated region
  $region46: #{egcn_forward.1} parent=0 // pred_check
    _
  $region47: #{egcn_forward.1} parent=0 // pred_check_branch
    %12579 = sbr.rel (0) target = $region49
  $region48: #{egcn_forward.1} parent=0 // pred_region
    _
  $region49: #{egcn_forward.1} parent=0 // pred_fallthru
    _

</llo_original>
